<compile_context>
chip_gen: v6e
topology: v6e:2x2x1
jax: 0.10.0
libtpu: 0.0.40
codegen_flags: <defaults>
</compile_context>

<pallas_src>
import jax
import jax.numpy as jnp
from jax.experimental import pallas as pl
from jax.experimental.pallas import tpu as pltpu


def residual_block_kernel(x_ref, xtop_ref, xbot_ref, w1_ref, b1_ref, w2_ref,
                          b2_ref, out_ref, pad1_ref, h1p_ref, col_ref):
    # x_ref    : (1, RB, W, Cp)   bf16 current output-row block of the input
    # xtop_ref : (1, 2, W, Cp)    bf16 two rows above the block (clamped read)
    # xbot_ref : (1, 2, W, Cp)    bf16 two rows below the block (clamped read)
    # w*_ref   : (9*Cp, Cp)       bf16 tap-major conv weights, BN scale folded
    # b*_ref   : (1, Cp)          f32 folded BN bias
    # out_ref  : (1, RB, W, Cp)   bf16
    # pad1_ref : (RB+4, W+2, Cp)  VMEM scratch: conv1 input (2-row halo + cols)
    # h1p_ref  : (RB+2, W+2, Cp)  VMEM scratch: conv2 input (1-row halo + cols)
    # col_ref  : ((RB+2)*W, 9*Cp) VMEM scratch: im2col patch matrix
    r = pl.program_id(1)
    nr = pl.num_programs(1)
    RB, W, Cp = out_ref.shape[1], out_ref.shape[2], out_ref.shape[3]
    cdt = pad1_ref.dtype
    M1 = (RB + 2) * W          # conv1 rows (incl. 1-row halo each side)
    M2 = RB * W                # conv2 / output rows

    # ---- conv1 input assembly: row block + 2-row halo + zero columns --------
    # width-1 zero columns re-written every step (cheap, parallel-grid safe;
    # never touched by the interior/halo writes below).
    pad1_ref[:, 0:1, :] = jnp.zeros((RB + 4, 1, Cp), cdt)
    pad1_ref[:, W + 1:W + 2, :] = jnp.zeros((RB + 4, 1, Cp), cdt)
    # halo rows: real neighbor rows, or zeros at the image borders only.
    top = jnp.where(r == 0, jnp.zeros_like(xtop_ref[0]), xtop_ref[0])
    bot = jnp.where(r == nr - 1, jnp.zeros_like(xbot_ref[0]), xbot_ref[0])
    pad1_ref[0:2, 1:W + 1, :] = top
    pad1_ref[RB + 2:RB + 4, 1:W + 1, :] = bot
    pad1_ref[2:RB + 2, 1:W + 1, :] = x_ref[0]

    def im2col(src_ref, rows):
        # Pack the 9 shifted taps side-by-side along the lane axis so each 3x3
        # conv is ONE MXU matmul with K = 9*Cp.
        # TODO(synk): pre-shift the 3 kw planes with pltpu.roll (XLU slot) so
        # these become aligned full-vreg copies instead of sublane-offset
        # slice+reshape copies.
        m = rows * W
        for t in range(9):
            kh, kw = t // 3, t % 3
            col_ref[:m, t * Cp:(t + 1) * Cp] = (
                src_ref[kh:kh + rows, kw:kw + W, :].reshape(m, Cp))

    # ---- conv1 (+ folded BN1) + ReLU over RB+2 rows --------------------------
    im2col(pad1_ref, RB + 2)
    h1 = jnp.dot(col_ref[...], w1_ref[...], preferred_element_type=jnp.float32)
    h1 = jnp.maximum(h1 + b1_ref[...], 0.0)                    # (M1, Cp) f32

    # ---- conv2 input assembly -------------------------------------------------
    h1p_ref[:, 0:1, :] = jnp.zeros((RB + 2, 1, Cp), cdt)
    h1p_ref[:, W + 1:W + 2, :] = jnp.zeros((RB + 2, 1, Cp), cdt)
    h1p_ref[:, 1:W + 1, :] = h1.reshape(RB + 2, W, Cp).astype(cdt)

    # conv2's SAME-padding rows at the image borders must be exact zeros
    # (overwrite the conv1-of-zeros halo rows, which would otherwise be relu(b1)).
    @pl.when(r == 0)
    def _():
        h1p_ref[0:1, :, :] = jnp.zeros((1, W + 2, Cp), cdt)

    @pl.when(r == nr - 1)
    def _():
        h1p_ref[RB + 1:RB + 2, :, :] = jnp.zeros((1, W + 2, Cp), cdt)

    # ---- conv2 (+ folded BN2) + residual + ReLU -------------------------------
    im2col(h1p_ref, RB)
    out = jnp.dot(col_ref[:M2, :], w2_ref[...], preferred_element_type=jnp.float32)
    res = x_ref[0].reshape(M2, Cp).astype(jnp.float32)
    out = jnp.maximum(out + b2_ref[...] + res, 0.0)
    out_ref[0] = out.reshape(RB, W, Cp).astype(out_ref.dtype)   # bf16 store


def _pick_row_block(H):
    # Prefer ~8 output rows per block (even, divides H) so there are several
    # grid steps per image; fall back to the whole image.
    for rb in (8, 16, 32, 4, 2):
        if H % rb == 0 and rb < H:
            return rb
    return H


def residual_block(x_nchw, w1, cb1, g1, be1, m1, v1,
                   w2, cb2, g2, be2, m2, v2,
                   *, eps=1e-5, compute_dtype=jnp.bfloat16):
    """ResidualBlock forward (eval-mode BatchNorm), stride=1, no downsample.

    x_nchw : (N, C, H, W) float32 (PyTorch layout).
    w1, w2 : (Cout, Cin, 3, 3) PyTorch OIHW conv weights; cb* conv biases.
    g/be/m/v : BN gamma / beta / running_mean / running_var per conv.
    Returns (N, Cout, H, W) float32.
    """
    N, Cin, H, W = x_nchw.shape
    Cout = w1.shape[0]
    assert w1.shape == (Cout, Cin, 3, 3) and w2.shape == (Cout, Cout, 3, 3)
    # TODO(synk): downsample / stride>1 residual path not implemented.
    assert Cin == Cout, "identity residual path requires in_channels == out_channels"

    LANE = 128
    Cp = ((Cout + LANE - 1) // LANE) * LANE          # lane-dense channel count

    def fold(w, cb, g, be, m, v):
        # eval-mode BN folded into the conv:  y = conv(x, w*s) + ((cb - m)*s + be)
        s = g / jnp.sqrt(v + eps)
        wf = w * s[:, None, None, None]
        bf = (cb - m) * s + be
        # OIHW -> HWIO -> tap-major (9, Cin, Cout), zero-pad channels, flatten K
        whwio = jnp.transpose(wf, (2, 3, 1, 0)).reshape(9, Cin, Cout)
        whwio = jnp.pad(whwio, ((0, 0), (0, Cp - Cin), (0, Cp - Cout)))
        wk = whwio.reshape(9 * Cp, Cp).astype(compute_dtype)
        bk = jnp.pad(bf, (0, Cp - Cout)).reshape(1, Cp).astype(jnp.float32)
        return wk, bk
    # TODO(synk): for Cin=Cout=64 stages, pack two taps per 128-lane group so K
    # pads to 640 instead of 1152 (halves the wasted MXU work for that stage).

    w1k, b1k = fold(w1, cb1, g1, be1, m1, v1)
    w2k, b2k = fold(w2, cb2, g2, be2, m2, v2)

    # NCHW -> NHWC with the channel zero-pad fused into the same XLA copy
    # (no separate pad pass over HBM); bf16 matmul operands.
    xh = jnp.transpose(x_nchw, (0, 2, 3, 1))
    xh = jnp.pad(xh, ((0, 0), (0, 0), (0, 0), (0, Cp - Cin))).astype(compute_dtype)

    RB = _pick_row_block(H)
    nr = H // RB
    halo_hi = max(H // 2 - 1, 0)      # last valid block index for 2-row halo blocks
    itemsize = jnp.dtype(compute_dtype).itemsize

    flops = 2 * (N * nr * (RB + 2) * W + N * H * W) * (9 * Cp) * Cp
    bytes_accessed = (N * nr * (RB + 4) * W * Cp * itemsize   # input (+halo re-reads)
                      + 2 * 9 * Cp * Cp * itemsize            # weights
                      + 2 * Cp * 4                            # biases
                      + N * H * W * Cp * itemsize)            # bf16 output

    # Explicit VMEM budget (scoped default is only 16/32 MiB); weights are
    # single-buffered via pl.Buffered(1).  Capped at 64 MiB (v7x physical).
    vmem_need = (
        2 * RB * W * Cp * itemsize            # x row block (double-buffered)
        + 2 * 2 * 2 * W * Cp * itemsize       # top/bottom halo rows
        + 2 * RB * W * Cp * itemsize          # output block (double-buffered)
        + 2 * 9 * Cp * Cp * itemsize          # w1, w2 (single-buffered)
        + 2 * 2 * Cp * 4                      # biases
        + (RB + 4) * (W + 2) * Cp * itemsize  # pad1 scratch
        + (RB + 2) * (W + 2) * Cp * itemsize  # h1 pad scratch
        + (RB + 2) * W * 9 * Cp * itemsize)   # im2col scratch
    vmem_limit = int(min(64 << 20, max(32 << 20, 2 * vmem_need)))

    out = pl.pallas_call(
        residual_block_kernel,
        out_shape=jax.ShapeDtypeStruct((N, H, W, Cp), compute_dtype),
        grid_spec=pltpu.PrefetchScalarGridSpec(
            num_scalar_prefetch=0,
            grid=(N, nr),
            in_specs=[
                pl.BlockSpec((1, RB, W, Cp), lambda n, r: (n, r, 0, 0)),
                pl.BlockSpec((1, 2, W, Cp),
                             lambda n, r: (n, jnp.maximum(r * (RB // 2) - 1, 0), 0, 0)),
                pl.BlockSpec((1, 2, W, Cp),
                             lambda n, r: (n, jnp.minimum((r + 1) * (RB // 2), halo_hi), 0, 0)),
                pl.BlockSpec((9 * Cp, Cp), lambda n, r: (0, 0),
                             pipeline_mode=pl.Buffered(1)),
                pl.BlockSpec((1, Cp), lambda n, r: (0, 0)),
                pl.BlockSpec((9 * Cp, Cp), lambda n, r: (0, 0),
                             pipeline_mode=pl.Buffered(1)),
                pl.BlockSpec((1, Cp), lambda n, r: (0, 0)),
            ],
            out_specs=pl.BlockSpec((1, RB, W, Cp), lambda n, r: (n, r, 0, 0)),
            scratch_shapes=[
                pltpu.VMEM((RB + 4, W + 2, Cp), compute_dtype),   # conv1 halo scratch
                pltpu.VMEM((RB + 2, W + 2, Cp), compute_dtype),   # conv2 input scratch
                pltpu.VMEM(((RB + 2) * W, 9 * Cp), compute_dtype),  # im2col patches
            ],
        ),
        compiler_params=pltpu.CompilerParams(
            dimension_semantics=("parallel", "parallel"),
            vmem_limit_bytes=vmem_limit),
        cost_estimate=pl.CostEstimate(
            flops=flops, transcendentals=0, bytes_accessed=bytes_accessed),
    )(xh, xh, xh, w1k, b1k, w2k, b2k)

    # drop channel padding, NHWC -> NCHW, back to f32 (fused into one copy).
    return jnp.transpose(out[..., :Cout], (0, 3, 1, 2)).astype(jnp.float32)


def reference_forward(x_nchw, w1, cb1, g1, be1, m1, v1,
                      w2, cb2, g2, be2, m2, v2,
                      *, eps=1e-5, compute_dtype=jnp.bfloat16):
    """Pure-JAX ResidualBlock forward (eval-mode BN) using the same operand
    precision as the kernel (bf16 folded weights / activations, f32 accumulate,
    bf16 output store) so the comparison is tight."""
    def fold(w, cb, g, be, m, v):
        s = g / jnp.sqrt(v + eps)
        return w * s[:, None, None, None], (cb - m) * s + be

    w1f, b1f = fold(w1, cb1, g1, be1, m1, v1)
    w2f, b2f = fold(w2, cb2, g2, be2, m2, v2)

    def conv(a, w):                                   # a: NHWC bf16, w: OIHW f32
        wh = jnp.transpose(w, (2, 3, 1, 0)).astype(compute_dtype)   # HWIO bf16
        return jax.lax.conv_general_dilated(
            a, wh, window_strides=(1, 1), padding="SAME",
            dimension_numbers=("NHWC", "HWIO", "NHWC"),
            preferred_element_type=jnp.float32)

    xh = jnp.transpose(x_nchw, (0, 2, 3, 1)).astype(compute_dtype)
    h = jnp.maximum(conv(xh, w1f) + b1f, 0.0)
    h = conv(h.astype(compute_dtype), w2f) + b2f + xh.astype(jnp.float32)
    h = jnp.maximum(h, 0.0).astype(compute_dtype)     # mirror the bf16 store
    return jnp.transpose(h, (0, 3, 1, 2)).astype(jnp.float32)


if __name__ == "__main__":
    N, C, H, W = 2, 4, 16, 16        # in_channels == out_channels, stride=1
    eps = 1e-5

    key = jax.random.PRNGKey(0)
    ks = jax.random.split(key, 13)

    x = jax.random.normal(ks[0], (N, C, H, W), jnp.float32)

    # conv1 + BN1 parameters (PyTorch OIHW layout)
    w1 = 0.2 * jax.random.normal(ks[1], (C, C, 3, 3), jnp.float32)
    cb1 = 0.1 * jax.random.normal(ks[2], (C,), jnp.float32)
    g1 = 1.0 + 0.1 * jax.random.normal(ks[3], (C,), jnp.float32)
    be1 = 0.1 * jax.random.normal(ks[4], (C,), jnp.float32)
    m1 = 0.1 * jax.random.normal(ks[5], (C,), jnp.float32)
    v1 = 0.5 + jnp.abs(jax.random.normal(ks[6], (C,), jnp.float32))

    # conv2 + BN2 parameters
    w2 = 0.2 * jax.random.normal(ks[7], (C, C, 3, 3), jnp.float32)
    cb2 = 0.1 * jax.random.normal(ks[8], (C,), jnp.float32)
    g2 = 1.0 + 0.1 * jax.random.normal(ks[9], (C,), jnp.float32)
    be2 = 0.1 * jax.random.normal(ks[10], (C,), jnp.float32)
    m2 = 0.1 * jax.random.normal(ks[11], (C,), jnp.float32)
    v2 = 0.5 + jnp.abs(jax.random.normal(ks[12], (C,), jnp.float32))

    out = residual_block(x, w1, cb1, g1, be1, m1, v1,
                         w2, cb2, g2, be2, m2, v2, eps=eps)
    out = jax.block_until_ready(out)

    ref = reference_forward(x, w1, cb1, g1, be1, m1, v1,
                            w2, cb2, g2, be2, m2, v2, eps=eps)
    ref = jax.block_until_ready(ref)

    assert out.shape == (N, C, H, W)
    max_err = float(jnp.max(jnp.abs(out - ref)))
    assert jnp.allclose(out, ref, atol=1e-2, rtol=1e-2), \
        f"mismatch vs reference (max abs err {max_err})"
    print("KERNEL_OK")
</pallas_src>

<mosaic_0001>
module attributes {stable_mosaic.version = 11 : i64} {
  func.func @residual_block_kernel(%arg0: i32, %arg1: i32, %arg2: memref<1x8x16x128xbf16, #tpu.memory_space<vmem>>, %arg3: memref<1x2x16x128xbf16, #tpu.memory_space<vmem>>, %arg4: memref<1x2x16x128xbf16, #tpu.memory_space<vmem>>, %arg5: memref<1152x128xbf16, #tpu.memory_space<vmem>>, %arg6: memref<1x128xf32, #tpu.memory_space<vmem>>, %arg7: memref<1152x128xbf16, #tpu.memory_space<vmem>>, %arg8: memref<1x128xf32, #tpu.memory_space<vmem>>, %arg9: memref<1x8x16x128xbf16, #tpu.memory_space<vmem>>, %arg10: memref<12x18x128xbf16, #tpu.memory_space<vmem>>, %arg11: memref<10x18x128xbf16, #tpu.memory_space<vmem>>, %arg12: memref<160x1152xbf16, #tpu.memory_space<vmem>>) attributes {dimension_semantics = [#tpu.dimension_semantics<parallel>, #tpu.dimension_semantics<parallel>], iteration_bounds = array<i64: 2, 2>, scalar_prefetch = 0 : i64, scratch_operands = 3 : i64, tpu.core_type = #tpu.core_type<tc>, window_params = [{transform_indices = @transform_0, window_bounds = array<i64: 1, 8, 16, 128>}, {transform_indices = @transform_1, window_bounds = array<i64: 1, 2, 16, 128>}, {transform_indices = @transform_2, window_bounds = array<i64: 1, 2, 16, 128>}, {pipeline_mode = #tpu.pipeline_mode<synchronous>, transform_indices = @transform_3, window_bounds = array<i64: 1152, 128>}, {pipeline_mode = #tpu.pipeline_mode<synchronous>, transform_indices = @transform_4, window_bounds = array<i64: 1, 128>}, {pipeline_mode = #tpu.pipeline_mode<synchronous>, transform_indices = @transform_5, window_bounds = array<i64: 1152, 128>}, {pipeline_mode = #tpu.pipeline_mode<synchronous>, transform_indices = @transform_6, window_bounds = array<i64: 1, 128>}, {transform_indices = @transform_7, window_bounds = array<i64: 1, 8, 16, 128>}]} {
    %cst = arith.constant 0.000000e+00 : bf16
    %0 = vector.broadcast %cst : bf16 to vector<12x1x128xbf16>
    %c0 = arith.constant 0 : index
    %c0_0 = arith.constant 0 : index
    %c0_1 = arith.constant 0 : index
    %1 = vector.load %arg10[%c0, %c0_0, %c0_1] : memref<12x18x128xbf16, #tpu.memory_space<vmem>>, vector<12x1x128xbf16>
    tpu.vector_store %arg10[%c0, %c0_0, %c0_1], %0 {strides = array<i32>} : memref<12x18x128xbf16, #tpu.memory_space<vmem>>, vector<12x1x128xbf16>,
    %cst_2 = arith.constant 0.000000e+00 : bf16
    %2 = vector.broadcast %cst_2 : bf16 to vector<12x1x128xbf16>
    %c0_3 = arith.constant 0 : index
    %c17 = arith.constant 17 : index
    %c0_4 = arith.constant 0 : index
    %3 = vector.load %arg10[%c0_3, %c17, %c0_4] : memref<12x18x128xbf16, #tpu.memory_space<vmem>>, vector<12x1x128xbf16>
    tpu.vector_store %arg10[%c0_3, %c17, %c0_4], %2 {strides = array<i32>} : memref<12x18x128xbf16, #tpu.memory_space<vmem>>, vector<12x1x128xbf16>,
    %c0_i32 = arith.constant 0 : i32
    %4 = arith.cmpi eq, %arg1, %c0_i32 : i32
    %cst_5 = arith.constant 0.000000e+00 : bf16
    %5 = vector.broadcast %cst_5 : bf16 to vector<2x16x128xbf16>
    %c0_6 = arith.constant 0 : index
    %c0_7 = arith.constant 0 : index
    %c0_8 = arith.constant 0 : index
    %c0_9 = arith.constant 0 : index
    %6 = vector.load %arg3[%c0_6, %c0_7, %c0_8, %c0_9] : memref<1x2x16x128xbf16, #tpu.memory_space<vmem>>, vector<1x2x16x128xbf16>
    %7 = vector.shape_cast %6 : vector<1x2x16x128xbf16> to vector<2x16x128xbf16>
    %8 = arith.select %4, %5, %7 : vector<2x16x128xbf16>
    %c1_i32 = arith.constant 1 : i32
    %9 = arith.cmpi eq, %arg1, %c1_i32 : i32
    %cst_10 = arith.constant 0.000000e+00 : bf16
    %10 = vector.broadcast %cst_10 : bf16 to vector<2x16x128xbf16>
    %c0_11 = arith.constant 0 : index
    %c0_12 = arith.constant 0 : index
    %c0_13 = arith.constant 0 : index
    %c0_14 = arith.constant 0 : index
    %11 = vector.load %arg4[%c0_11, %c0_12, %c0_13, %c0_14] : memref<1x2x16x128xbf16, #tpu.memory_space<vmem>>, vector<1x2x16x128xbf16>
    %12 = vector.shape_cast %11 : vector<1x2x16x128xbf16> to vector<2x16x128xbf16>
    %13 = arith.select %9, %10, %12 : vector<2x16x128xbf16>
    %c0_15 = arith.constant 0 : index
    %c1 = arith.constant 1 : index
    %c0_16 = arith.constant 0 : index
    %14 = vector.load %arg10[%c0_15, %c1, %c0_16] : memref<12x18x128xbf16, #tpu.memory_space<vmem>>, vector<2x16x128xbf16>
    tpu.vector_store %arg10[%c0_15, %c1, %c0_16], %8 {strides = array<i32>} : memref<12x18x128xbf16, #tpu.memory_space<vmem>>, vector<2x16x128xbf16>,
    %c10 = arith.constant 10 : index
    %c1_17 = arith.constant 1 : index
    %c0_18 = arith.constant 0 : index
    %15 = vector.load %arg10[%c10, %c1_17, %c0_18] : memref<12x18x128xbf16, #tpu.memory_space<vmem>>, vector<2x16x128xbf16>
    tpu.vector_store %arg10[%c10, %c1_17, %c0_18], %13 {strides = array<i32>} : memref<12x18x128xbf16, #tpu.memory_space<vmem>>, vector<2x16x128xbf16>,
    %c0_19 = arith.constant 0 : index
    %c0_20 = arith.constant 0 : index
    %c0_21 = arith.constant 0 : index
    %c0_22 = arith.constant 0 : index
    %16 = vector.load %arg2[%c0_19, %c0_20, %c0_21, %c0_22] : memref<1x8x16x128xbf16, #tpu.memory_space<vmem>>, vector<1x8x16x128xbf16>
    %17 = vector.shape_cast %16 : vector<1x8x16x128xbf16> to vector<8x16x128xbf16>
    %c2 = arith.constant 2 : index
    %c1_23 = arith.constant 1 : index
    %c0_24 = arith.constant 0 : index
    %18 = vector.load %arg10[%c2, %c1_23, %c0_24] : memref<12x18x128xbf16, #tpu.memory_space<vmem>>, vector<8x16x128xbf16>
    tpu.vector_store %arg10[%c2, %c1_23, %c0_24], %17 {strides = array<i32>} : memref<12x18x128xbf16, #tpu.memory_space<vmem>>, vector<8x16x128xbf16>,
    %c0_25 = arith.constant 0 : index
    %c0_26 = arith.constant 0 : index
    %c0_27 = arith.constant 0 : index
    %19 = vector.load %arg10[%c0_25, %c0_26, %c0_27] : memref<12x18x128xbf16, #tpu.memory_space<vmem>>, vector<10x16x128xbf16>
    %20 = vector.shape_cast %19 : vector<10x16x128xbf16> to vector<160x128xbf16>
    %c0_28 = arith.constant 0 : index
    %c0_29 = arith.constant 0 : index
    %21 = vector.load %arg12[%c0_28, %c0_29] : memref<160x1152xbf16, #tpu.memory_space<vmem>>, vector<160x128xbf16>
    tpu.vector_store %arg12[%c0_28, %c0_29], %20 {strides = array<i32>} : memref<160x1152xbf16, #tpu.memory_space<vmem>>, vector<160x128xbf16>,
    %c0_30 = arith.constant 0 : index
    %c1_31 = arith.constant 1 : index
    %c0_32 = arith.constant 0 : index
    %22 = vector.load %arg10[%c0_30, %c1_31, %c0_32] : memref<12x18x128xbf16, #tpu.memory_space<vmem>>, vector<10x16x128xbf16>
    %23 = vector.shape_cast %22 : vector<10x16x128xbf16> to vector<160x128xbf16>
    %c0_33 = arith.constant 0 : index
    %c128 = arith.constant 128 : index
    %24 = vector.load %arg12[%c0_33, %c128] : memref<160x1152xbf16, #tpu.memory_space<vmem>>, vector<160x128xbf16>
    tpu.vector_store %arg12[%c0_33, %c128], %23 {strides = array<i32>} : memref<160x1152xbf16, #tpu.memory_space<vmem>>, vector<160x128xbf16>,
    %c0_34 = arith.constant 0 : index
    %c2_35 = arith.constant 2 : index
    %c0_36 = arith.constant 0 : index
    %25 = vector.load %arg10[%c0_34, %c2_35, %c0_36] : memref<12x18x128xbf16, #tpu.memory_space<vmem>>, vector<10x16x128xbf16>
    %26 = vector.shape_cast %25 : vector<10x16x128xbf16> to vector<160x128xbf16>
    %c0_37 = arith.constant 0 : index
    %c256 = arith.constant 256 : index
    %27 = vector.load %arg12[%c0_37, %c256] : memref<160x1152xbf16, #tpu.memory_space<vmem>>, vector<160x128xbf16>
    tpu.vector_store %arg12[%c0_37, %c256], %26 {strides = array<i32>} : memref<160x1152xbf16, #tpu.memory_space<vmem>>, vector<160x128xbf16>,
    %c1_38 = arith.constant 1 : index
    %c0_39 = arith.constant 0 : index
    %c0_40 = arith.constant 0 : index
    %28 = vector.load %arg10[%c1_38, %c0_39, %c0_40] : memref<12x18x128xbf16, #tpu.memory_space<vmem>>, vector<10x16x128xbf16>
    %29 = vector.shape_cast %28 : vector<10x16x128xbf16> to vector<160x128xbf16>
    %c0_41 = arith.constant 0 : index
    %c384 = arith.constant 384 : index
    %30 = vector.load %arg12[%c0_41, %c384] : memref<160x1152xbf16, #tpu.memory_space<vmem>>, vector<160x128xbf16>
    tpu.vector_store %arg12[%c0_41, %c384], %29 {strides = array<i32>} : memref<160x1152xbf16, #tpu.memory_space<vmem>>, vector<160x128xbf16>,
    %c1_42 = arith.constant 1 : index
    %c1_43 = arith.constant 1 : index
    %c0_44 = arith.constant 0 : index
    %31 = vector.load %arg10[%c1_42, %c1_43, %c0_44] : memref<12x18x128xbf16, #tpu.memory_space<vmem>>, vector<10x16x128xbf16>
    %32 = vector.shape_cast %31 : vector<10x16x128xbf16> to vector<160x128xbf16>
    %c0_45 = arith.constant 0 : index
    %c512 = arith.constant 512 : index
    %33 = vector.load %arg12[%c0_45, %c512] : memref<160x1152xbf16, #tpu.memory_space<vmem>>, vector<160x128xbf16>
    tpu.vector_store %arg12[%c0_45, %c512], %32 {strides = array<i32>} : memref<160x1152xbf16, #tpu.memory_space<vmem>>, vector<160x128xbf16>,
    %c1_46 = arith.constant 1 : index
    %c2_47 = arith.constant 2 : index
    %c0_48 = arith.constant 0 : index
    %34 = vector.load %arg10[%c1_46, %c2_47, %c0_48] : memref<12x18x128xbf16, #tpu.memory_space<vmem>>, vector<10x16x128xbf16>
    %35 = vector.shape_cast %34 : vector<10x16x128xbf16> to vector<160x128xbf16>
    %c0_49 = arith.constant 0 : index
    %c640 = arith.constant 640 : index
    %36 = vector.load %arg12[%c0_49, %c640] : memref<160x1152xbf16, #tpu.memory_space<vmem>>, vector<160x128xbf16>
    tpu.vector_store %arg12[%c0_49, %c640], %35 {strides = array<i32>} : memref<160x1152xbf16, #tpu.memory_space<vmem>>, vector<160x128xbf16>,
    %c2_50 = arith.constant 2 : index
    %c0_51 = arith.constant 0 : index
    %c0_52 = arith.constant 0 : index
    %37 = vector.load %arg10[%c2_50, %c0_51, %c0_52] : memref<12x18x128xbf16, #tpu.memory_space<vmem>>, vector<10x16x128xbf16>
    %38 = vector.shape_cast %37 : vector<10x16x128xbf16> to vector<160x128xbf16>
    %c0_53 = arith.constant 0 : index
    %c768 = arith.constant 768 : index
    %39 = vector.load %arg12[%c0_53, %c768] : memref<160x1152xbf16, #tpu.memory_space<vmem>>, vector<160x128xbf16>
    tpu.vector_store %arg12[%c0_53, %c768], %38 {strides = array<i32>} : memref<160x1152xbf16, #tpu.memory_space<vmem>>, vector<160x128xbf16>,
    %c2_54 = arith.constant 2 : index
    %c1_55 = arith.constant 1 : index
    %c0_56 = arith.constant 0 : index
    %40 = vector.load %arg10[%c2_54, %c1_55, %c0_56] : memref<12x18x128xbf16, #tpu.memory_space<vmem>>, vector<10x16x128xbf16>
    %41 = vector.shape_cast %40 : vector<10x16x128xbf16> to vector<160x128xbf16>
    %c0_57 = arith.constant 0 : index
    %c896 = arith.constant 896 : index
    %42 = vector.load %arg12[%c0_57, %c896] : memref<160x1152xbf16, #tpu.memory_space<vmem>>, vector<160x128xbf16>
    tpu.vector_store %arg12[%c0_57, %c896], %41 {strides = array<i32>} : memref<160x1152xbf16, #tpu.memory_space<vmem>>, vector<160x128xbf16>,
    %c2_58 = arith.constant 2 : index
    %c2_59 = arith.constant 2 : index
    %c0_60 = arith.constant 0 : index
    %43 = vector.load %arg10[%c2_58, %c2_59, %c0_60] : memref<12x18x128xbf16, #tpu.memory_space<vmem>>, vector<10x16x128xbf16>
    %44 = vector.shape_cast %43 : vector<10x16x128xbf16> to vector<160x128xbf16>
    %c0_61 = arith.constant 0 : index
    %c1024 = arith.constant 1024 : index
    %45 = vector.load %arg12[%c0_61, %c1024] : memref<160x1152xbf16, #tpu.memory_space<vmem>>, vector<160x128xbf16>
    tpu.vector_store %arg12[%c0_61, %c1024], %44 {strides = array<i32>} : memref<160x1152xbf16, #tpu.memory_space<vmem>>, vector<160x128xbf16>,
    %c0_62 = arith.constant 0 : index
    %c0_63 = arith.constant 0 : index
    %46 = vector.load %arg12[%c0_62, %c0_63] : memref<160x1152xbf16, #tpu.memory_space<vmem>>, vector<160x1152xbf16>
    %c0_64 = arith.constant 0 : index
    %c0_65 = arith.constant 0 : index
    %47 = vector.load %arg5[%c0_64, %c0_65] : memref<1152x128xbf16, #tpu.memory_space<vmem>>, vector<1152x128xbf16>
    %cst_66 = arith.constant dense<0.000000e+00> : vector<160x128xf32>
    %48 = tpu.matmul %46, %47, %cst_66 {dimension_numbers = #tpu.dot_dimension_numbers<[1], [0], [0], [1], [0, 0, 1, 1], [], []>} : vector<160x1152xbf16>, vector<1152x128xbf16>, vector<160x128xf32> -> vector<160x128xf32>
    %c0_67 = arith.constant 0 : index
    %c0_68 = arith.constant 0 : index
    %49 = vector.load %arg6[%c0_67, %c0_68] : memref<1x128xf32, #tpu.memory_space<vmem>>, vector<1x128xf32>
    %50 = vector.broadcast %49 : vector<1x128xf32> to vector<160x128xf32>
    %51 = arith.addf %48, %50 : vector<160x128xf32>
    %cst_69 = arith.constant 0.000000e+00 : f32
    %52 = vector.broadcast %cst_69 : f32 to vector<160x128xf32>
    %53 = arith.maximumf %51, %52 : vector<160x128xf32>
    %cst_70 = arith.constant 0.000000e+00 : bf16
    %54 = vector.broadcast %cst_70 : bf16 to vector<10x1x128xbf16>
    %c0_71 = arith.constant 0 : index
    %c0_72 = arith.constant 0 : index
    %c0_73 = arith.constant 0 : index
    %55 = vector.load %arg11[%c0_71, %c0_72, %c0_73] : memref<10x18x128xbf16, #tpu.memory_space<vmem>>, vector<10x1x128xbf16>
    tpu.vector_store %arg11[%c0_71, %c0_72, %c0_73], %54 {strides = array<i32>} : memref<10x18x128xbf16, #tpu.memory_space<vmem>>, vector<10x1x128xbf16>,
    %cst_74 = arith.constant 0.000000e+00 : bf16
    %56 = vector.broadcast %cst_74 : bf16 to vector<10x1x128xbf16>
    %c0_75 = arith.constant 0 : index
    %c17_76 = arith.constant 17 : index
    %c0_77 = arith.constant 0 : index
    %57 = vector.load %arg11[%c0_75, %c17_76, %c0_77] : memref<10x18x128xbf16, #tpu.memory_space<vmem>>, vector<10x1x128xbf16>
    tpu.vector_store %arg11[%c0_75, %c17_76, %c0_77], %56 {strides = array<i32>} : memref<10x18x128xbf16, #tpu.memory_space<vmem>>, vector<10x1x128xbf16>,
    %58 = vector.shape_cast %53 : vector<160x128xf32> to vector<10x16x128xf32>
    %59 = arith.truncf %58 : vector<10x16x128xf32> to vector<10x16x128xbf16>
    %c0_78 = arith.constant 0 : index
    %c1_79 = arith.constant 1 : index
    %c0_80 = arith.constant 0 : index
    %60 = vector.load %arg11[%c0_78, %c1_79, %c0_80] : memref<10x18x128xbf16, #tpu.memory_space<vmem>>, vector<10x16x128xbf16>
    tpu.vector_store %arg11[%c0_78, %c1_79, %c0_80], %59 {strides = array<i32>} : memref<10x18x128xbf16, #tpu.memory_space<vmem>>, vector<10x16x128xbf16>,
    %c0_i32_81 = arith.constant 0 : i32
    %61 = arith.cmpi eq, %arg1, %c0_i32_81 : i32
    %62 = arith.extui %61 : i1 to i32
    %c0_i32_82 = arith.constant 0 : i32
    %63 = arith.cmpi ne, %62, %c0_i32_82 : i32
    scf.if %63 {
      %cst_146 = arith.constant 0.000000e+00 : bf16
      %112 = vector.broadcast %cst_146 : bf16 to vector<1x18x128xbf16>
      %c0_147 = arith.constant 0 : index
      %c0_148 = arith.constant 0 : index
      %c0_149 = arith.constant 0 : index
      %113 = vector.load %arg11[%c0_147, %c0_148, %c0_149] : memref<10x18x128xbf16, #tpu.memory_space<vmem>>, vector<1x18x128xbf16>
      tpu.vector_store %arg11[%c0_147, %c0_148, %c0_149], %112 {strides = array<i32>} : memref<10x18x128xbf16, #tpu.memory_space<vmem>>, vector<1x18x128xbf16>,
    } else {
    }
    %c1_i32_83 = arith.constant 1 : i32
    %64 = arith.cmpi eq, %arg1, %c1_i32_83 : i32
    %65 = arith.extui %64 : i1 to i32
    %c0_i32_84 = arith.constant 0 : i32
    %66 = arith.cmpi ne, %65, %c0_i32_84 : i32
    scf.if %66 {
      %cst_146 = arith.constant 0.000000e+00 : bf16
      %112 = vector.broadcast %cst_146 : bf16 to vector<1x18x128xbf16>
      %c9 = arith.constant 9 : index
      %c0_147 = arith.constant 0 : index
      %c0_148 = arith.constant 0 : index
      %113 = vector.load %arg11[%c9, %c0_147, %c0_148] : memref<10x18x128xbf16, #tpu.memory_space<vmem>>, vector<1x18x128xbf16>
      tpu.vector_store %arg11[%c9, %c0_147, %c0_148], %112 {strides = array<i32>} : memref<10x18x128xbf16, #tpu.memory_space<vmem>>, vector<1x18x128xbf16>,
    } else {
    }
    %c0_85 = arith.constant 0 : index
    %c0_86 = arith.constant 0 : index
    %c0_87 = arith.constant 0 : index
    %67 = vector.load %arg11[%c0_85, %c0_86, %c0_87] : memref<10x18x128xbf16, #tpu.memory_space<vmem>>, vector<8x16x128xbf16>
    %68 = vector.shape_cast %67 : vector<8x16x128xbf16> to vector<128x128xbf16>
    %c0_88 = arith.constant 0 : index
    %c0_89 = arith.constant 0 : index
    %69 = vector.load %arg12[%c0_88, %c0_89] : memref<160x1152xbf16, #tpu.memory_space<vmem>>, vector<128x128xbf16>
    tpu.vector_store %arg12[%c0_88, %c0_89], %68 {strides = array<i32>} : memref<160x1152xbf16, #tpu.memory_space<vmem>>, vector<128x128xbf16>,
    %c0_90 = arith.constant 0 : index
    %c1_91 = arith.constant 1 : index
    %c0_92 = arith.constant 0 : index
    %70 = vector.load %arg11[%c0_90, %c1_91, %c0_92] : memref<10x18x128xbf16, #tpu.memory_space<vmem>>, vector<8x16x128xbf16>
    %71 = vector.shape_cast %70 : vector<8x16x128xbf16> to vector<128x128xbf16>
    %c0_93 = arith.constant 0 : index
    %c128_94 = arith.constant 128 : index
    %72 = vector.load %arg12[%c0_93, %c128_94] : memref<160x1152xbf16, #tpu.memory_space<vmem>>, vector<128x128xbf16>
    tpu.vector_store %arg12[%c0_93, %c128_94], %71 {strides = array<i32>} : memref<160x1152xbf16, #tpu.memory_space<vmem>>, vector<128x128xbf16>,
    %c0_95 = arith.constant 0 : index
    %c2_96 = arith.constant 2 : index
    %c0_97 = arith.constant 0 : index
    %73 = vector.load %arg11[%c0_95, %c2_96, %c0_97] : memref<10x18x128xbf16, #tpu.memory_space<vmem>>, vector<8x16x128xbf16>
    %74 = vector.shape_cast %73 : vector<8x16x128xbf16> to vector<128x128xbf16>
    %c0_98 = arith.constant 0 : index
    %c256_99 = arith.constant 256 : index
    %75 = vector.load %arg12[%c0_98, %c256_99] : memref<160x1152xbf16, #tpu.memory_space<vmem>>, vector<128x128xbf16>
    tpu.vector_store %arg12[%c0_98, %c256_99], %74 {strides = array<i32>} : memref<160x1152xbf16, #tpu.memory_space<vmem>>, vector<128x128xbf16>,
    %c1_100 = arith.constant 1 : index
    %c0_101 = arith.constant 0 : index
    %c0_102 = arith.constant 0 : index
    %76 = vector.load %arg11[%c1_100, %c0_101, %c0_102] : memref<10x18x128xbf16, #tpu.memory_space<vmem>>, vector<8x16x128xbf16>
    %77 = vector.shape_cast %76 : vector<8x16x128xbf16> to vector<128x128xbf16>
    %c0_103 = arith.constant 0 : index
    %c384_104 = arith.constant 384 : index
    %78 = vector.load %arg12[%c0_103, %c384_104] : memref<160x1152xbf16, #tpu.memory_space<vmem>>, vector<128x128xbf16>
    tpu.vector_store %arg12[%c0_103, %c384_104], %77 {strides = array<i32>} : memref<160x1152xbf16, #tpu.memory_space<vmem>>, vector<128x128xbf16>,
    %c1_105 = arith.constant 1 : index
    %c1_106 = arith.constant 1 : index
    %c0_107 = arith.constant 0 : index
    %79 = vector.load %arg11[%c1_105, %c1_106, %c0_107] : memref<10x18x128xbf16, #tpu.memory_space<vmem>>, vector<8x16x128xbf16>
    %80 = vector.shape_cast %79 : vector<8x16x128xbf16> to vector<128x128xbf16>
    %c0_108 = arith.constant 0 : index
    %c512_109 = arith.constant 512 : index
    %81 = vector.load %arg12[%c0_108, %c512_109] : memref<160x1152xbf16, #tpu.memory_space<vmem>>, vector<128x128xbf16>
    tpu.vector_store %arg12[%c0_108, %c512_109], %80 {strides = array<i32>} : memref<160x1152xbf16, #tpu.memory_space<vmem>>, vector<128x128xbf16>,
    %c1_110 = arith.constant 1 : index
    %c2_111 = arith.constant 2 : index
    %c0_112 = arith.constant 0 : index
    %82 = vector.load %arg11[%c1_110, %c2_111, %c0_112] : memref<10x18x128xbf16, #tpu.memory_space<vmem>>, vector<8x16x128xbf16>
    %83 = vector.shape_cast %82 : vector<8x16x128xbf16> to vector<128x128xbf16>
    %c0_113 = arith.constant 0 : index
    %c640_114 = arith.constant 640 : index
    %84 = vector.load %arg12[%c0_113, %c640_114] : memref<160x1152xbf16, #tpu.memory_space<vmem>>, vector<128x128xbf16>
    tpu.vector_store %arg12[%c0_113, %c640_114], %83 {strides = array<i32>} : memref<160x1152xbf16, #tpu.memory_space<vmem>>, vector<128x128xbf16>,
    %c2_115 = arith.constant 2 : index
    %c0_116 = arith.constant 0 : index
    %c0_117 = arith.constant 0 : index
    %85 = vector.load %arg11[%c2_115, %c0_116, %c0_117] : memref<10x18x128xbf16, #tpu.memory_space<vmem>>, vector<8x16x128xbf16>
    %86 = vector.shape_cast %85 : vector<8x16x128xbf16> to vector<128x128xbf16>
    %c0_118 = arith.constant 0 : index
    %c768_119 = arith.constant 768 : index
    %87 = vector.load %arg12[%c0_118, %c768_119] : memref<160x1152xbf16, #tpu.memory_space<vmem>>, vector<128x128xbf16>
    tpu.vector_store %arg12[%c0_118, %c768_119], %86 {strides = array<i32>} : memref<160x1152xbf16, #tpu.memory_space<vmem>>, vector<128x128xbf16>,
    %c2_120 = arith.constant 2 : index
    %c1_121 = arith.constant 1 : index
    %c0_122 = arith.constant 0 : index
    %88 = vector.load %arg11[%c2_120, %c1_121, %c0_122] : memref<10x18x128xbf16, #tpu.memory_space<vmem>>, vector<8x16x128xbf16>
    %89 = vector.shape_cast %88 : vector<8x16x128xbf16> to vector<128x128xbf16>
    %c0_123 = arith.constant 0 : index
    %c896_124 = arith.constant 896 : index
    %90 = vector.load %arg12[%c0_123, %c896_124] : memref<160x1152xbf16, #tpu.memory_space<vmem>>, vector<128x128xbf16>
    tpu.vector_store %arg12[%c0_123, %c896_124], %89 {strides = array<i32>} : memref<160x1152xbf16, #tpu.memory_space<vmem>>, vector<128x128xbf16>,
    %c2_125 = arith.constant 2 : index
    %c2_126 = arith.constant 2 : index
    %c0_127 = arith.constant 0 : index
    %91 = vector.load %arg11[%c2_125, %c2_126, %c0_127] : memref<10x18x128xbf16, #tpu.memory_space<vmem>>, vector<8x16x128xbf16>
    %92 = vector.shape_cast %91 : vector<8x16x128xbf16> to vector<128x128xbf16>
    %c0_128 = arith.constant 0 : index
    %c1024_129 = arith.constant 1024 : index
    %93 = vector.load %arg12[%c0_128, %c1024_129] : memref<160x1152xbf16, #tpu.memory_space<vmem>>, vector<128x128xbf16>
    tpu.vector_store %arg12[%c0_128, %c1024_129], %92 {strides = array<i32>} : memref<160x1152xbf16, #tpu.memory_space<vmem>>, vector<128x128xbf16>,
    %c0_130 = arith.constant 0 : index
    %c0_131 = arith.constant 0 : index
    %94 = vector.load %arg12[%c0_130, %c0_131] : memref<160x1152xbf16, #tpu.memory_space<vmem>>, vector<128x1152xbf16>
    %c0_132 = arith.constant 0 : index
    %c0_133 = arith.constant 0 : index
    %95 = vector.load %arg7[%c0_132, %c0_133] : memref<1152x128xbf16, #tpu.memory_space<vmem>>, vector<1152x128xbf16>
    %cst_134 = arith.constant dense<0.000000e+00> : vector<128x128xf32>
    %96 = tpu.matmul %94, %95, %cst_134 {dimension_numbers = #tpu.dot_dimension_numbers<[1], [0], [0], [1], [0, 0, 1, 1], [], []>} : vector<128x1152xbf16>, vector<1152x128xbf16>, vector<128x128xf32> -> vector<128x128xf32>
    %c0_135 = arith.constant 0 : index
    %c0_136 = arith.constant 0 : index
    %c0_137 = arith.constant 0 : index
    %c0_138 = arith.constant 0 : index
    %97 = vector.load %arg2[%c0_135, %c0_136, %c0_137, %c0_138] : memref<1x8x16x128xbf16, #tpu.memory_space<vmem>>, vector<1x8x16x128xbf16>
    %98 = vector.shape_cast %97 : vector<1x8x16x128xbf16> to vector<8x16x128xbf16>
    %99 = vector.shape_cast %98 : vector<8x16x128xbf16> to vector<128x128xbf16>
    %100 = arith.extf %99 : vector<128x128xbf16> to vector<128x128xf32>
    %c0_139 = arith.constant 0 : index
    %c0_140 = arith.constant 0 : index
    %101 = vector.load %arg8[%c0_139, %c0_140] : memref<1x128xf32, #tpu.memory_space<vmem>>, vector<1x128xf32>
    %102 = vector.broadcast %101 : vector<1x128xf32> to vector<128x128xf32>
    %103 = arith.addf %96, %102 : vector<128x128xf32>
    %104 = arith.addf %103, %100 : vector<128x128xf32>
    %cst_141 = arith.constant 0.000000e+00 : f32
    %105 = vector.broadcast %cst_141 : f32 to vector<128x128xf32>
    %106 = arith.maximumf %104, %105 : vector<128x128xf32>
    %107 = vector.shape_cast %106 : vector<128x128xf32> to vector<8x16x128xf32>
    %108 = arith.truncf %107 : vector<8x16x128xf32> to vector<8x16x128xbf16>
    %c0_142 = arith.constant 0 : index
    %c0_143 = arith.constant 0 : index
    %c0_144 = arith.constant 0 : index
    %c0_145 = arith.constant 0 : index
    %109 = vector.load %arg9[%c0_142, %c0_143, %c0_144, %c0_145] : memref<1x8x16x128xbf16, #tpu.memory_space<vmem>>, vector<1x8x16x128xbf16>
    %110 = vector.shape_cast %109 : vector<1x8x16x128xbf16> to vector<8x16x128xbf16>
    %111 = vector.shape_cast %108 : vector<8x16x128xbf16> to vector<1x8x16x128xbf16>
    tpu.vector_store %arg9[%c0_142, %c0_143, %c0_144, %c0_145], %111 {strides = array<i32>} : memref<1x8x16x128xbf16, #tpu.memory_space<vmem>>, vector<1x8x16x128xbf16>,
    return
  }
  func.func @transform_0(%arg0: i32, %arg1: i32) -> (i32, i32, i32, i32) {
    %c0_i32 = arith.constant 0 : i32
    %c0_i32_0 = arith.constant 0 : i32
    %c0_i32_1 = arith.constant 0 : i32
    return %arg0, %arg1, %c0_i32, %c0_i32_0 : i32, i32, i32, i32
  }
  func.func @transform_1(%arg0: i32, %arg1: i32) -> (i32, i32, i32, i32) {
    %c4_i32 = arith.constant 4 : i32
    %0 = arith.muli %arg1, %c4_i32 : i32
    %c1_i32 = arith.constant 1 : i32
    %1 = arith.subi %0, %c1_i32 : i32
    %c0_i32 = arith.constant 0 : i32
    %2 = arith.maxsi %1, %c0_i32 : i32
    %c0_i32_0 = arith.constant 0 : i32
    %c0_i32_1 = arith.constant 0 : i32
    %c0_i32_2 = arith.constant 0 : i32
    return %arg0, %2, %c0_i32_0, %c0_i32_1 : i32, i32, i32, i32
  }
  func.func @transform_2(%arg0: i32, %arg1: i32) -> (i32, i32, i32, i32) {
    %c1_i32 = arith.constant 1 : i32
    %0 = arith.addi %arg1, %c1_i32 : i32
    %c4_i32 = arith.constant 4 : i32
    %1 = arith.muli %0, %c4_i32 : i32
    %c7_i32 = arith.constant 7 : i32
    %2 = arith.minsi %1, %c7_i32 : i32
    %c0_i32 = arith.constant 0 : i32
    %c0_i32_0 = arith.constant 0 : i32
    %c0_i32_1 = arith.constant 0 : i32
    return %arg0, %2, %c0_i32, %c0_i32_0 : i32, i32, i32, i32
  }
  func.func @transform_3(%arg0: i32, %arg1: i32) -> (i32, i32) {
    %c0_i32 = arith.constant 0 : i32
    %c0_i32_0 = arith.constant 0 : i32
    %c0_i32_1 = arith.constant 0 : i32
    return %c0_i32, %c0_i32_0 : i32, i32
  }
  func.func @transform_4(%arg0: i32, %arg1: i32) -> (i32, i32) {
    %c0_i32 = arith.constant 0 : i32
    %c0_i32_0 = arith.constant 0 : i32
    %c0_i32_1 = arith.constant 0 : i32
    return %c0_i32, %c0_i32_0 : i32, i32
  }
  func.func @transform_5(%arg0: i32, %arg1: i32) -> (i32, i32) {
    %c0_i32 = arith.constant 0 : i32
    %c0_i32_0 = arith.constant 0 : i32
    %c0_i32_1 = arith.constant 0 : i32
    return %c0_i32, %c0_i32_0 : i32, i32
  }
  func.func @transform_6(%arg0: i32, %arg1: i32) -> (i32, i32) {
    %c0_i32 = arith.constant 0 : i32
    %c0_i32_0 = arith.constant 0 : i32
    %c0_i32_1 = arith.constant 0 : i32
    return %c0_i32, %c0_i32_0 : i32, i32
  }
  func.func @transform_7(%arg0: i32, %arg1: i32) -> (i32, i32, i32, i32) {
    %c0_i32 = arith.constant 0 : i32
    %c0_i32_0 = arith.constant 0 : i32
    %c0_i32_1 = arith.constant 0 : i32
    return %arg0, %arg1, %c0_i32, %c0_i32_0 : i32, i32, i32, i32
  }
}

</mosaic_0001>

<llo_original>
// kernel: tpu_custom_call.1
$region0: #{tpu_custom_call.1}
  #allocation0 [shape = 'u32[]', space=smem, size = 0x4, offset = 0x4, fixed_abs, tag = 'smem constant byte address 0x4 - core index']
  #allocation1 [shape = 'u32[144,128]{1,0:T(1,128)}', space=vmem, size = 0x12000, scoped, tag = 'internal scratch']
  #allocation2 [shape = 'bf16[12,18,128]{2,1,0:T(8,128)(2,1)}', space=vmem, size = 0x12000, scoped, tag = 'scratch operand']
  #allocation3 [shape = 'bf16[10,18,128]{2,1,0:T(8,128)(2,1)}', space=vmem, size = 0xf000, scoped, tag = 'scratch operand']
  #allocation4 [shape = 'bf16[160,1152]{1,0:T(8,128)(2,1)}', space=vmem, size = 0x5a000, scoped, tag = 'scratch operand']
  %s0 = inlined_call_operand.hbm [shape: bf16[2,16,16,128], index: 0, kind: input, shape index: {}]
  %s1 = inlined_call_operand.hbm [shape: bf16[2,16,16,128], index: 1, kind: input, shape index: {}]
  %s2 = inlined_call_operand.hbm [shape: bf16[2,16,16,128], index: 2, kind: input, shape index: {}]
  %s3 = inlined_call_operand.hbm [shape: bf16[1152,128], index: 3, kind: input, shape index: {}]
  %s4 = inlined_call_operand.vmem [shape: f32[1,128], index: 4, kind: input, shape index: {}]
  %s5 = inlined_call_operand.hbm [shape: bf16[1152,128], index: 5, kind: input, shape index: {}]
  %s6 = inlined_call_operand.vmem [shape: f32[1,128], index: 6, kind: input, shape index: {}]
  %s7 = inlined_call_operand.hbm [shape: bf16[2,16,16,128], index: 7, kind: output, shape index: {}]
  %s8 = sld [smem:[#allocation0]]
  $region89: #{tpu_custom_call.1} parent=0
    _
  %s10 = ssub.s32 1, %s8
  %s11 = scalar_select 0, %s10, %s8
  $region1: #{tpu_custom_call.1} parent=0
    #allocation5 [shape = 'u8[65536]{0}', space=vmem, size = 0x10000, scoped, tag = 'input window, operand 0']
    #allocation6 [shape = 's32[2]{0}', space=sflag, size = 0x8, scoped, tag = 'scoped memory for tpu_custom_call.1']
    #allocation7 [shape = 's32[2]{0}', space=sflag, size = 0x8, scoped, tag = 'scoped memory for tpu_custom_call.1']
    #allocation8 [shape = 'u8[16384]{0}', space=vmem, size = 0x4000, scoped, tag = 'input window, operand 1']
    #allocation9 [shape = 's32[2]{0}', space=sflag, size = 0x8, scoped, tag = 'scoped memory for tpu_custom_call.1']
    #allocation10 [shape = 'u8[16384]{0}', space=vmem, size = 0x4000, scoped, tag = 'input window, operand 2']
    #allocation11 [shape = 'u8[294912]{0}', space=vmem, size = 0x48000, scoped, tag = 'input window, operand 3, single buffered']
    #allocation12 [shape = 's32[1]{0}', space=sflag, size = 0x4, scoped, tag = 'scoped memory for tpu_custom_call.1']
    #allocation13 [shape = 'u8[294912]{0}', space=vmem, size = 0x48000, scoped, tag = 'input window, operand 5, single buffered']
    #allocation14 [shape = 'u8[65536]{0}', space=vmem, size = 0x10000, scoped, tag = 'output window, operand 0']
    %12 = vsyncpa [#allocation6], 0
    %s13 = scalar_lea.sflag [#allocation6], 1
    %14 = vsyncpa %s13, 0
    %15 = vsyncpa [#allocation9], 0
    %s16 = scalar_lea.sflag [#allocation9], 1
    %17 = vsyncpa %s16, 0
    %18 = vsyncpa [#allocation12], 0
    %19 = vsyncpa [#allocation7], 0
    %s20 = scalar_lea.sflag [#allocation7], 1
    %21 = vsyncpa %s20, 0
    loop: start=0, step=1, limit=6
    $region2: #{tpu_custom_call.1} parent=1 // loop_pre_header
      _
    $region3: #{tpu_custom_call.1} parent=1 // loop_header
      %s23 = sphi 0, %s27
      %p24 = scmp.ge.s32.totalorder %s23, 6
      %s30 = sphi 0, %s42
      %s31 = sphi 0, %s38
      %s32 = sphi 0, %s30
      %s33 = sphi 0, %s31
      %s34 = sphi 0, %s32
      %s35 = sphi 0, %s33
      %s47 = sphi 0, %s49
      %s50 = sphi 0, %s47
      %s51 = sphi 0, %s50
      %s67 = sphi 0, %s51
      %s83 = sphi 0, %s85
      %s86 = sphi 0, %s83
      %s87 = sphi 0, %s86
      %s103 = sphi 0, %s87
      %s119 = sphi 0, %s121
      %s122 = sphi 0, %s119
      %s123 = sphi 0, %s122
      %s139 = sphi 0, %s123
      %s143 = sphi 0, %s143
      %s145 = sphi 0, %s143
      %s146 = sphi 0, %s145
      %s160 = sphi 0, %s146
      %s164 = sphi 0, %s164
      %s166 = sphi 0, %s164
      %s167 = sphi 0, %s166
      %s181 = sphi 0, %s167
      %s185 = sphi 0, %s185
      %s187 = sphi 0, %s185
      %s188 = sphi 0, %s187
      %s202 = sphi 0, %s188
      %s206 = sphi 0, %s206
      %s208 = sphi 0, %s206
      %s209 = sphi 0, %s208
      %s223 = sphi 0, %s209
      %s231 = sphi 0, %s233
      %s234 = sphi 0, %s231
      %s235 = sphi 0, %s234
      %s251 = sphi 0, %s235
    $region4: #{tpu_custom_call.1} parent=1 // loop_header_branch
      %26 = sbr.rel (%p24) target = $region8
    $region5: #{tpu_custom_call.1} parent=1 // loop_body
      %s28 = ssub.s32 %s23, 1
      %s29 = ssub.s32 %s23, 2
      %s36 = sadd.s32 1, %s31
      %p37 = scmp.ge.s32.totalorder %s36, 2
      %s38 = scalar_select %p37, 0, %s36
      %s39 = sadd.s32 1, %s30
      %s40 = scalar_select %p37, %s39, %s30
      %p41 = scmp.ge.s32.totalorder %s40, 2
      %s42 = scalar_select %p41, 0, %s40
      %s43 = ssub.s32 %s30, %s42
      %s44 = ssub.s32 %s31, %s38
      %s45 = sor.u32 %s43, %s44
      %p46 = scmp.eq.s32.totalorder %s45, 0
      %s48 = sadd.s32 %s47, 1
      %s49 = scalar_select %p46, %s47, %s48
      %p52 = pneg %p46
      %p53 = scmp.eq.s32.totalorder %s23, 3
      %p54 = por %p52, %p53
      %p55 = scmp.ne.s32.totalorder %s47, %s50
      %p56 = scmp.eq.s32.totalorder %s23, 0
      %p57 = por %p55, %p56
      %p58 = scmp.ne.s32.totalorder %s47, %s50
      %p59 = scmp.eq.s32.totalorder %s28, 3
      %p60 = por %p58, %p59
      %p61 = scmp.ne.s32.totalorder %s50, %s51
      %p62 = scmp.eq.s32.totalorder %s28, 0
      %p63 = por %p61, %p62
      %p64 = scmp.ne.s32.totalorder %s50, %s51
      %p65 = scmp.eq.s32.totalorder %s29, 3
      %p66 = por %p64, %p65
      %p68 = scmp.ne.s32.totalorder %s51, %s67
      %p69 = scmp.eq.s32.totalorder %s29, 0
      %p70 = por %p68, %p69
      %s71 = smul.u32 %s31, 4
      %s72 = ssub.s32 %s71, 1
      %p73 = scmp.gt.s32.totalorder %s72, 0
      %s74 = scalar_select %p73, %s72, 0
      %s75 = smul.u32 %s38, 4
      %s76 = ssub.s32 %s75, 1
      %p77 = scmp.gt.s32.totalorder %s76, 0
      %s78 = scalar_select %p77, %s76, 0
      %s79 = ssub.s32 %s30, %s42
      %s80 = ssub.s32 %s74, %s78
      %s81 = sor.u32 %s79, %s80
      %p82 = scmp.eq.s32.totalorder %s81, 0
      %s84 = sadd.s32 %s83, 1
      %s85 = scalar_select %p82, %s83, %s84
      %p88 = pneg %p82
      %p89 = scmp.eq.s32.totalorder %s23, 3
      %p90 = por %p88, %p89
      %p91 = scmp.ne.s32.totalorder %s83, %s86
      %p92 = scmp.eq.s32.totalorder %s23, 0
      %p93 = por %p91, %p92
      %p94 = scmp.ne.s32.totalorder %s83, %s86
      %p95 = scmp.eq.s32.totalorder %s28, 3
      %p96 = por %p94, %p95
      %p97 = scmp.ne.s32.totalorder %s86, %s87
      %p98 = scmp.eq.s32.totalorder %s28, 0
      %p99 = por %p97, %p98
      %p100 = scmp.ne.s32.totalorder %s86, %s87
      %p101 = scmp.eq.s32.totalorder %s29, 3
      %p102 = por %p100, %p101
      %p104 = scmp.ne.s32.totalorder %s87, %s103
      %p105 = scmp.eq.s32.totalorder %s29, 0
      %p106 = por %p104, %p105
      %s107 = sadd.s32 %s31, 1
      %s108 = smul.u32 %s107, 4
      %p109 = scmp.lt.s32.totalorder %s108, 7
      %s110 = scalar_select %p109, %s108, 7
      %s111 = sadd.s32 %s38, 1
      %s112 = smul.u32 %s111, 4
      %p113 = scmp.lt.s32.totalorder %s112, 7
      %s114 = scalar_select %p113, %s112, 7
      %s115 = ssub.s32 %s30, %s42
      %s116 = ssub.s32 %s110, %s114
      %s117 = sor.u32 %s115, %s116
      %p118 = scmp.eq.s32.totalorder %s117, 0
      %s120 = sadd.s32 %s119, 1
      %s121 = scalar_select %p118, %s119, %s120
      %p124 = pneg %p118
      %p125 = scmp.eq.s32.totalorder %s23, 3
      %p126 = por %p124, %p125
      %p127 = scmp.ne.s32.totalorder %s119, %s122
      %p128 = scmp.eq.s32.totalorder %s23, 0
      %p129 = por %p127, %p128
      %p130 = scmp.ne.s32.totalorder %s119, %s122
      %p131 = scmp.eq.s32.totalorder %s28, 3
      %p132 = por %p130, %p131
      %p133 = scmp.ne.s32.totalorder %s122, %s123
      %p134 = scmp.eq.s32.totalorder %s28, 0
      %p135 = por %p133, %p134
      %p136 = scmp.ne.s32.totalorder %s122, %s123
      %p137 = scmp.eq.s32.totalorder %s29, 3
      %p138 = por %p136, %p137
      %p140 = scmp.ne.s32.totalorder %s123, %s139
      %p141 = scmp.eq.s32.totalorder %s29, 0
      %p142 = por %p140, %p141
      %s144 = sadd.s32 %s143, 1
      %p147 = scmp.eq.s32.totalorder %s23, 3
      %p148 = scmp.ne.s32.totalorder %s143, %s145
      %p149 = scmp.eq.s32.totalorder %s23, 0
      %p150 = por %p148, %p149
      %p151 = scmp.ne.s32.totalorder %s143, %s145
      %p152 = scmp.eq.s32.totalorder %s28, 3
      %p153 = por %p151, %p152
      %p154 = scmp.ne.s32.totalorder %s145, %s146
      %p155 = scmp.eq.s32.totalorder %s28, 0
      %p156 = por %p154, %p155
      %p157 = scmp.ne.s32.totalorder %s145, %s146
      %p158 = scmp.eq.s32.totalorder %s29, 3
      %p159 = por %p157, %p158
      %p161 = scmp.ne.s32.totalorder %s146, %s160
      %p162 = scmp.eq.s32.totalorder %s29, 0
      %p163 = por %p161, %p162
      %s165 = sadd.s32 %s164, 1
      %p168 = scmp.eq.s32.totalorder %s23, 3
      %p169 = scmp.ne.s32.totalorder %s164, %s166
      %p170 = scmp.eq.s32.totalorder %s23, 0
      %p171 = por %p169, %p170
      %p172 = scmp.ne.s32.totalorder %s164, %s166
      %p173 = scmp.eq.s32.totalorder %s28, 3
      %p174 = por %p172, %p173
      %p175 = scmp.ne.s32.totalorder %s166, %s167
      %p176 = scmp.eq.s32.totalorder %s28, 0
      %p177 = por %p175, %p176
      %p178 = scmp.ne.s32.totalorder %s166, %s167
      %p179 = scmp.eq.s32.totalorder %s29, 3
      %p180 = por %p178, %p179
      %p182 = scmp.ne.s32.totalorder %s167, %s181
      %p183 = scmp.eq.s32.totalorder %s29, 0
      %p184 = por %p182, %p183
      %s186 = sadd.s32 %s185, 1
      %p189 = scmp.eq.s32.totalorder %s23, 3
      %p190 = scmp.ne.s32.totalorder %s185, %s187
      %p191 = scmp.eq.s32.totalorder %s23, 0
      %p192 = por %p190, %p191
      %p193 = scmp.ne.s32.totalorder %s185, %s187
      %p194 = scmp.eq.s32.totalorder %s28, 3
      %p195 = por %p193, %p194
      %p196 = scmp.ne.s32.totalorder %s187, %s188
      %p197 = scmp.eq.s32.totalorder %s28, 0
      %p198 = por %p196, %p197
      %p199 = scmp.ne.s32.totalorder %s187, %s188
      %p200 = scmp.eq.s32.totalorder %s29, 3
      %p201 = por %p199, %p200
      %p203 = scmp.ne.s32.totalorder %s188, %s202
      %p204 = scmp.eq.s32.totalorder %s29, 0
      %p205 = por %p203, %p204
      %s207 = sadd.s32 %s206, 1
      %p210 = scmp.eq.s32.totalorder %s23, 3
      %p211 = scmp.ne.s32.totalorder %s206, %s208
      %p212 = scmp.eq.s32.totalorder %s23, 0
      %p213 = por %p211, %p212
      %p214 = scmp.ne.s32.totalorder %s206, %s208
      %p215 = scmp.eq.s32.totalorder %s28, 3
      %p216 = por %p214, %p215
      %p217 = scmp.ne.s32.totalorder %s208, %s209
      %p218 = scmp.eq.s32.totalorder %s28, 0
      %p219 = por %p217, %p218
      %p220 = scmp.ne.s32.totalorder %s208, %s209
      %p221 = scmp.eq.s32.totalorder %s29, 3
      %p222 = por %p220, %p221
      %p224 = scmp.ne.s32.totalorder %s209, %s223
      %p225 = scmp.eq.s32.totalorder %s29, 0
      %p226 = por %p224, %p225
      %s227 = ssub.s32 %s30, %s42
      %s228 = ssub.s32 %s31, %s38
      %s229 = sor.u32 %s227, %s228
      %p230 = scmp.eq.s32.totalorder %s229, 0
      %s232 = sadd.s32 %s231, 1
      %s233 = scalar_select %p230, %s231, %s232
      %p236 = pneg %p230
      %p237 = scmp.eq.s32.totalorder %s23, 3
      %p238 = por %p236, %p237
      %p239 = scmp.ne.s32.totalorder %s231, %s234
      %p240 = scmp.eq.s32.totalorder %s23, 0
      %p241 = por %p239, %p240
      %p242 = scmp.ne.s32.totalorder %s231, %s234
      %p243 = scmp.eq.s32.totalorder %s28, 3
      %p244 = por %p242, %p243
      %p245 = scmp.ne.s32.totalorder %s234, %s235
      %p246 = scmp.eq.s32.totalorder %s28, 0
      %p247 = por %p245, %p246
      %p248 = scmp.ne.s32.totalorder %s234, %s235
      %p249 = scmp.eq.s32.totalorder %s29, 3
      %p250 = por %p248, %p249
      %p252 = scmp.ne.s32.totalorder %s235, %s251
      %p253 = scmp.eq.s32.totalorder %s29, 0
      %p254 = por %p252, %p253
      %p255 = scmp.le.s32.totalorder 1, %s23
      %p256 = scmp.lt.s32.totalorder %s23, 5
      %p257 = pnand %p255, %p256
      %p258 = pneg %p257
      // Predicated region
      $region9: #{tpu_custom_call.1} parent=5 // pred_check
        _
      $region10: #{tpu_custom_call.1} parent=5 // pred_check_branch
        %260 = sbr.rel (%p257) target = $region12
      $region11: #{tpu_custom_call.1} parent=5 // pred_region
        %s261 = ssub.s32 %s23, 1
        // Predicated region
        $region13: #{tpu_custom_call.1} parent=11 // pred_check
          %p262 = pneg %p156
        $region14: #{tpu_custom_call.1} parent=11 // pred_check_branch
          %264 = sbr.rel (%p262) target = $region16
        $region15: #{tpu_custom_call.1} parent=11 // pred_region
          %s266 = ssub.s32 9216, 9216
          %267 = vsyncadd [#allocation12], %s266
          %s268 = sshll.u32 [#allocation11], 4
          %s269 = int_to_ptr.vmem [resolvable:$true] %s268
          %274 = dma.hbm_to_vmem [thread:$0]  %s3, 9216, %s269, [#allocation12], 64, 64, 4
        $region16: #{tpu_custom_call.1} parent=11 // pred_fallthru
          _
        // Predicated region
        $region17: #{tpu_custom_call.1} parent=11 // pred_check
          %p275 = pneg %p177
        $region18: #{tpu_custom_call.1} parent=11 // pred_check_branch
          %277 = sbr.rel (%p275) target = $region20
        $region19: #{tpu_custom_call.1} parent=11 // pred_region
          _
        $region20: #{tpu_custom_call.1} parent=11 // pred_fallthru
          _
        // Predicated region
        $region21: #{tpu_custom_call.1} parent=11 // pred_check
          %p278 = pneg %p198
        $region22: #{tpu_custom_call.1} parent=11 // pred_check_branch
          %280 = sbr.rel (%p278) target = $region24
        $region23: #{tpu_custom_call.1} parent=11 // pred_region
          %s282 = ssub.s32 9216, 9216
          %283 = vsyncadd [#allocation12], %s282
          %s284 = sshll.u32 [#allocation13], 4
          %s285 = int_to_ptr.vmem [resolvable:$true] %s284
          %290 = dma.hbm_to_vmem [thread:$0]  %s5, 9216, %s285, [#allocation12], 64, 64, 4
        $region24: #{tpu_custom_call.1} parent=11 // pred_fallthru
          _
        // Predicated region
        $region25: #{tpu_custom_call.1} parent=11 // pred_check
          %p291 = pneg %p219
        $region26: #{tpu_custom_call.1} parent=11 // pred_check_branch
          %293 = sbr.rel (%p291) target = $region28
        $region27: #{tpu_custom_call.1} parent=11 // pred_region
          _
        $region28: #{tpu_custom_call.1} parent=11 // pred_fallthru
          _
      $region12: #{tpu_custom_call.1} parent=5 // pred_fallthru
        _
      %p294 = scmp.lt.s32.totalorder %s23, 4
      // Predicated region
      $region29: #{tpu_custom_call.1} parent=5 // pred_check
        %p295 = pneg %p294
      $region30: #{tpu_custom_call.1} parent=5 // pred_check_branch
        %297 = sbr.rel (%p295) target = $region32
      $region31: #{tpu_custom_call.1} parent=5 // pred_region
        // Predicated region
        $region33: #{tpu_custom_call.1} parent=31 // pred_check
          %p298 = pneg %p57
        $region34: #{tpu_custom_call.1} parent=31 // pred_check_branch
          %300 = sbr.rel (%p298) target = $region36
        $region35: #{tpu_custom_call.1} parent=31 // pred_region
          %s301 = sand.u32 %s47, 1
          %s302 = scalar_lea.sflag [#allocation6], %s301
          %s303 = sand.u32 %s47, 1
          %s304 = smul.addr %s303, 64
          %s305 = scalar_lea.vmem [#allocation5], %s304
          %s306 = smul.u32 8, %s31
          %s308 = ssub.s32 1024, 1024
          %309 = vsyncadd %s302, %s308
          %s310 = smul.addr %s306, 2
          %s311 = smul.addr %s30, 32
          %s312 = sadd.s32 %s310, %s311
          %s313 = smul.addr %s312, 64
          %s314 = scalar_lea.hbm %s0, %s313
          %s315 = sshll.u32 %s305, 4
          %s316 = int_to_ptr.vmem [resolvable:$true] %s315
          %321 = dma.hbm_to_vmem [thread:$0]  %s314, 1024, %s316, %s302, 64, 64, 4
        $region36: #{tpu_custom_call.1} parent=31 // pred_fallthru
          _
        // Predicated region
        $region37: #{tpu_custom_call.1} parent=31 // pred_check
          %p322 = pneg %p93
        $region38: #{tpu_custom_call.1} parent=31 // pred_check_branch
          %324 = sbr.rel (%p322) target = $region40
        $region39: #{tpu_custom_call.1} parent=31 // pred_region
          %s325 = sand.u32 %s23, 1
          %s326 = scalar_lea.sflag [#allocation9], %s325
          %s327 = sand.u32 %s83, 1
          %s328 = smul.addr %s327, 16
          %s329 = scalar_lea.vmem [#allocation8], %s328
          %s330 = smul.u32 %s31, 4
          %s331 = ssub.s32 %s330, 1
          %p332 = scmp.gt.s32.totalorder %s331, 0
          %s333 = scalar_select %p332, %s331, 0
          %s334 = smul.u32 2, %s333
          %s336 = ssub.s32 256, 256
          %337 = vsyncadd %s326, %s336
          %s338 = smul.addr %s334, 2
          %s339 = smul.addr %s30, 32
          %s340 = sadd.s32 %s338, %s339
          %s341 = smul.addr %s340, 64
          %s342 = scalar_lea.hbm %s1, %s341
          %s343 = sshll.u32 %s329, 4
          %s344 = int_to_ptr.vmem [resolvable:$true] %s343
          %349 = dma.hbm_to_vmem [thread:$0]  %s342, 256, %s344, %s326, 64, 64, 4
        $region40: #{tpu_custom_call.1} parent=31 // pred_fallthru
          _
        // Predicated region
        $region41: #{tpu_custom_call.1} parent=31 // pred_check
          %p350 = pneg %p129
        $region42: #{tpu_custom_call.1} parent=31 // pred_check_branch
          %352 = sbr.rel (%p350) target = $region44
        $region43: #{tpu_custom_call.1} parent=31 // pred_region
          %s353 = sand.u32 %s23, 1
          %s354 = scalar_lea.sflag [#allocation9], %s353
          %s355 = sand.u32 %s119, 1
          %s356 = smul.addr %s355, 16
          %s357 = scalar_lea.vmem [#allocation10], %s356
          %s358 = sadd.s32 %s31, 1
          %s359 = smul.u32 %s358, 4
          %p360 = scmp.lt.s32.totalorder %s359, 7
          %s361 = scalar_select %p360, %s359, 7
          %s362 = smul.u32 2, %s361
          %s364 = ssub.s32 256, 256
          %365 = vsyncadd %s354, %s364
          %s366 = smul.addr %s362, 2
          %s367 = smul.addr %s30, 32
          %s368 = sadd.s32 %s366, %s367
          %s369 = smul.addr %s368, 64
          %s370 = scalar_lea.hbm %s2, %s369
          %s371 = sshll.u32 %s357, 4
          %s372 = int_to_ptr.vmem [resolvable:$true] %s371
          %377 = dma.hbm_to_vmem [thread:$0]  %s370, 256, %s372, %s354, 64, 64, 4
        $region44: #{tpu_custom_call.1} parent=31 // pred_fallthru
          _
      $region32: #{tpu_custom_call.1} parent=5 // pred_fallthru
        _
      %p378 = scmp.le.s32.totalorder 1, %s23
      %p379 = scmp.lt.s32.totalorder %s23, 5
      %p380 = pnand %p378, %p379
      %p381 = pneg %p380
      // Predicated region
      $region45: #{tpu_custom_call.1} parent=5 // pred_check
        _
      $region46: #{tpu_custom_call.1} parent=5 // pred_check_branch
        %383 = sbr.rel (%p380) target = $region48
      $region47: #{tpu_custom_call.1} parent=5 // pred_region
        %s384 = ssub.s32 %s23, 1
        %s385 = sand.u32 %s50, 1
        %s386 = scalar_lea.sflag [#allocation6], %s385
        %s387 = sand.u32 %s50, 1
        %s388 = smul.addr %s387, 64
        %s389 = scalar_lea.vmem [#allocation5], %s388
        // Predicated region
        $region49: #{tpu_custom_call.1} parent=47 // pred_check
          %p390 = pneg %p63
        $region50: #{tpu_custom_call.1} parent=47 // pred_check_branch
          %392 = sbr.rel (%p390) target = $region52
        $region51: #{tpu_custom_call.1} parent=47 // pred_region
          %393 = dma.done %s386, 1024
        $region52: #{tpu_custom_call.1} parent=47 // pred_fallthru
          _
        %s394 = sand.u32 %s28, 1
        %s395 = scalar_lea.sflag [#allocation9], %s394
        %s396 = sand.u32 %s86, 1
        %s397 = smul.addr %s396, 16
        %s398 = scalar_lea.vmem [#allocation8], %s397
        // Predicated region
        $region53: #{tpu_custom_call.1} parent=47 // pred_check
          %p399 = pneg %p99
        $region54: #{tpu_custom_call.1} parent=47 // pred_check_branch
          %401 = sbr.rel (%p399) target = $region56
        $region55: #{tpu_custom_call.1} parent=47 // pred_region
          %402 = dma.done %s395, 256
        $region56: #{tpu_custom_call.1} parent=47 // pred_fallthru
          _
        %s403 = sand.u32 %s28, 1
        %s404 = scalar_lea.sflag [#allocation9], %s403
        %s405 = sand.u32 %s122, 1
        %s406 = smul.addr %s405, 16
        %s407 = scalar_lea.vmem [#allocation10], %s406
        // Predicated region
        $region57: #{tpu_custom_call.1} parent=47 // pred_check
          %p408 = pneg %p135
        $region58: #{tpu_custom_call.1} parent=47 // pred_check_branch
          %410 = sbr.rel (%p408) target = $region60
        $region59: #{tpu_custom_call.1} parent=47 // pred_region
          %411 = dma.done %s404, 256
        $region60: #{tpu_custom_call.1} parent=47 // pred_fallthru
          _
        // Predicated region
        $region61: #{tpu_custom_call.1} parent=47 // pred_check
          %p412 = pneg %p156
        $region62: #{tpu_custom_call.1} parent=47 // pred_check_branch
          %414 = sbr.rel (%p412) target = $region64
        $region63: #{tpu_custom_call.1} parent=47 // pred_region
          %415 = dma.done [#allocation12], 9216
        $region64: #{tpu_custom_call.1} parent=47 // pred_fallthru
          _
        // Predicated region
        $region65: #{tpu_custom_call.1} parent=47 // pred_check
          %p416 = pneg %p198
        $region66: #{tpu_custom_call.1} parent=47 // pred_check_branch
          %418 = sbr.rel (%p416) target = $region68
        $region67: #{tpu_custom_call.1} parent=47 // pred_region
          %419 = dma.done [#allocation12], 9216
        $region68: #{tpu_custom_call.1} parent=47 // pred_fallthru
          _
        %s420 = sand.u32 %s50, 1
        %s421 = scalar_lea.sflag [#allocation6], %s420
        %s422 = sand.u32 %s50, 1
        %s423 = smul.addr %s422, 64
        %s424 = scalar_lea.vmem [#allocation5], %s423
        %p425 = pneg %p63
        %p426 = pneg %p60
        %s427 = sand.u32 %s28, 1
        %s428 = scalar_lea.sflag [#allocation9], %s427
        %s429 = sand.u32 %s86, 1
        %s430 = smul.addr %s429, 16
        %s431 = scalar_lea.vmem [#allocation8], %s430
        %p432 = pneg %p99
        %p433 = pneg %p96
        %s434 = sand.u32 %s28, 1
        %s435 = scalar_lea.sflag [#allocation9], %s434
        %s436 = sand.u32 %s122, 1
        %s437 = smul.addr %s436, 16
        %s438 = scalar_lea.vmem [#allocation10], %s437
        %p439 = pneg %p135
        %p440 = pneg %p132
        %p441 = pneg %p156
        %p442 = pneg %p153
        %p443 = pneg %p177
        %p444 = pneg %p174
        %p445 = pneg %p198
        %p446 = pneg %p195
        %p447 = pneg %p219
        %p448 = pneg %p216
        %p449 = pneg %p247
        %p450 = pneg %p244
        %s451 = sand.u32 %s234, 1
        %s452 = scalar_lea.sflag [#allocation7], %s451
        %s453 = sand.u32 %s234, 1
        %s454 = smul.addr %s453, 64
        %s455 = scalar_lea.vmem [#allocation14], %s454
        %s456 = smul.u32 8, %s33
        %s457 = smul.u32 %s33, 4
        %s458 = ssub.s32 %s457, 1
        %p459 = scmp.gt.s32.totalorder %s458, 0
        %s460 = scalar_select %p459, %s458, 0
        %s461 = smul.u32 2, %s460
        %s462 = sadd.s32 %s33, 1
        %s463 = smul.u32 %s462, 4
        %p464 = scmp.lt.s32.totalorder %s463, 7
        %s465 = scalar_select %p464, %s463, 7
        %s466 = smul.u32 2, %s465
        %s467 = smul.u32 8, %s33
        %vm469 = vcmask 1040384
        %vm470 = vsmask.f32 256
        %vm471 = vmand %vm469, %vm470
        %v472 = vld [vmem:[#allocation2] sm:$0x1]
        %v473 = vsel %vm471, 0, %v472
        %474 = vst [vmem:[#allocation2] sm:$0x1] %v473
        %v475 = vld [vmem:[#allocation2 + $0xc] sm:$0x1]
        %v476 = vsel %vm471, 0, %v475
        %477 = vst [vmem:[#allocation2 + $0xc] sm:$0x1] %v476
        %v478 = vld [vmem:[#allocation2 + $0x18] sm:$0x1]
        %v479 = vsel %vm471, 0, %v478
        %480 = vst [vmem:[#allocation2 + $0x18] sm:$0x1] %v479
        %v481 = vld [vmem:[#allocation2 + $0x24] sm:$0x1]
        %v482 = vsel %vm471, 0, %v481
        %483 = vst [vmem:[#allocation2 + $0x24] sm:$0x1] %v482
        %v484 = vld [vmem:[#allocation2 + $0x30] sm:$0x1]
        %v485 = vsel %vm471, 0, %v484
        %486 = vst [vmem:[#allocation2 + $0x30] sm:$0x1] %v485
        %v487 = vld [vmem:[#allocation2 + $0x3c] sm:$0x1]
        %v488 = vsel %vm471, 0, %v487
        %489 = vst [vmem:[#allocation2 + $0x3c] sm:$0x1] %v488
        %v490 = vld [vmem:[#allocation2 + $0x48] sm:$0x1]
        %v491 = vsel %vm471, 0, %v490
        %492 = vst [vmem:[#allocation2 + $0x48] sm:$0x1] %v491
        %v493 = vld [vmem:[#allocation2 + $0x54] sm:$0x1]
        %v494 = vsel %vm471, 0, %v493
        %495 = vst [vmem:[#allocation2 + $0x54] sm:$0x1] %v494
        %v496 = vld [vmem:[#allocation2 + $0x60] sm:$0x1]
        %v497 = vsel %vm471, 0, %v496
        %498 = vst [vmem:[#allocation2 + $0x60] sm:$0x1] %v497
        %v499 = vld [vmem:[#allocation2 + $0x6c] sm:$0x1]
        %v500 = vsel %vm471, 0, %v499
        %501 = vst [vmem:[#allocation2 + $0x6c] sm:$0x1] %v500
        %v502 = vld [vmem:[#allocation2 + $0x78] sm:$0x1]
        %v503 = vsel %vm471, 0, %v502
        %504 = vst [vmem:[#allocation2 + $0x78] sm:$0x1] %v503
        %v505 = vld [vmem:[#allocation2 + $0x84] sm:$0x1]
        %v506 = vsel %vm471, 0, %v505
        %507 = vst [vmem:[#allocation2 + $0x84] sm:$0x1] %v506
        %vm508 = vsmask.f32 7938
        %vm509 = vmand %vm469, %vm508
        %v510 = vld [vmem:[#allocation2 + $0x8] sm:$0x1]
        %v511 = vsel %vm509, 0, %v510
        %512 = vst [vmem:[#allocation2 + $0x8] sm:$0x1] %v511
        %v513 = vld [vmem:[#allocation2 + $0x14] sm:$0x1]
        %v514 = vsel %vm509, 0, %v513
        %515 = vst [vmem:[#allocation2 + $0x14] sm:$0x1] %v514
        %v516 = vld [vmem:[#allocation2 + $0x20] sm:$0x1]
        %v517 = vsel %vm509, 0, %v516
        %518 = vst [vmem:[#allocation2 + $0x20] sm:$0x1] %v517
        %v519 = vld [vmem:[#allocation2 + $0x2c] sm:$0x1]
        %v520 = vsel %vm509, 0, %v519
        %521 = vst [vmem:[#allocation2 + $0x2c] sm:$0x1] %v520
        %v522 = vld [vmem:[#allocation2 + $0x38] sm:$0x1]
        %v523 = vsel %vm509, 0, %v522
        %524 = vst [vmem:[#allocation2 + $0x38] sm:$0x1] %v523
        %v525 = vld [vmem:[#allocation2 + $0x44] sm:$0x1]
        %v526 = vsel %vm509, 0, %v525
        %527 = vst [vmem:[#allocation2 + $0x44] sm:$0x1] %v526
        %v528 = vld [vmem:[#allocation2 + $0x50] sm:$0x1]
        %v529 = vsel %vm509, 0, %v528
        %530 = vst [vmem:[#allocation2 + $0x50] sm:$0x1] %v529
        %v531 = vld [vmem:[#allocation2 + $0x5c] sm:$0x1]
        %v532 = vsel %vm509, 0, %v531
        %533 = vst [vmem:[#allocation2 + $0x5c] sm:$0x1] %v532
        %v534 = vld [vmem:[#allocation2 + $0x68] sm:$0x1]
        %v535 = vsel %vm509, 0, %v534
        %536 = vst [vmem:[#allocation2 + $0x68] sm:$0x1] %v535
        %v537 = vld [vmem:[#allocation2 + $0x74] sm:$0x1]
        %v538 = vsel %vm509, 0, %v537
        %539 = vst [vmem:[#allocation2 + $0x74] sm:$0x1] %v538
        %v540 = vld [vmem:[#allocation2 + $0x80] sm:$0x1]
        %v541 = vsel %vm509, 0, %v540
        %542 = vst [vmem:[#allocation2 + $0x80] sm:$0x1] %v541
        %v543 = vld [vmem:[#allocation2 + $0x8c] sm:$0x1]
        %v544 = vsel %vm509, 0, %v543
        %545 = vst [vmem:[#allocation2 + $0x8c] sm:$0x1] %v544
        %p546 = scmp.eq.s32.totalorder %s33, 0
        %v547 = vld [vmem:[%s398] sm:$0xf]
        %v548 = vld [vmem:[%s398 + $0x4] sm:$0xf]
        %v549 = vld [vmem:[%s398 + $0x8] sm:$0xf]
        %v550 = vld [vmem:[%s398 + $0xc] sm:$0xf]
        %s551 = scalar_select %p546, 1, 0
        %v552 = vstv %s551
        %vm553 = vcmp.eq.s32.totalorder %v552, 1
        %v554 = vsel %vm553, 0, %v547
        %v555 = vsel %vm553, 0, %v548
        %v556 = vsel %vm553, 0, %v549
        %v557 = vsel %vm553, 0, %v550
        %p558 = scmp.eq.s32.totalorder %s33, 1
        %v559 = vld [vmem:[%s407] sm:$0xf]
        %v560 = vld [vmem:[%s407 + $0x4] sm:$0xf]
        %v561 = vld [vmem:[%s407 + $0x8] sm:$0xf]
        %v562 = vld [vmem:[%s407 + $0xc] sm:$0xf]
        %s563 = scalar_select %p558, 1, 0
        %v564 = vstv %s563
        %vm565 = vcmp.eq.s32.totalorder %v564, 1
        %v566 = vsel %vm565, 0, %v559
        %v567 = vsel %vm565, 0, %v560
        %v568 = vsel %vm565, 0, %v561
        %v569 = vsel %vm565, 0, %v562
        %vm570 = vsmask.f32 4368
        %vm571 = vmor %vm470, %vm570
        %v573 = vshrl.u32 %v554, 16
        %v575 = vrot.slane %v573, 7
        %v576 = vshll.u32 %v554, 16
        %v578 = vor.u32 %v575, %v576
        %v579 = vrot.slane %v575, 4
        %v581 = vshrl.u32 %v555, 16
        %v583 = vrot.slane %v581, 7
        %v584 = vshll.u32 %v555, 16
        %v586 = vor.u32 %v583, %v584
        %v587 = vsel %vm571, %v579, %v586
        %v588 = vrot.slane %v583, 4
        %v590 = vshrl.u32 %v556, 16
        %v592 = vrot.slane %v590, 7
        %v593 = vshll.u32 %v556, 16
        %v595 = vor.u32 %v592, %v593
        %v596 = vrot.slane %v592, 4
        %v598 = vshrl.u32 %v557, 16
        %v600 = vrot.slane %v598, 7
        %v601 = vshll.u32 %v557, 16
        %v603 = vor.u32 %v600, %v601
        %v604 = vsel %vm571, %v596, %v603
        %v605 = vrot.slane %v600, 4
        %vm612 = vcmask 1043456
        %vm613 = vmand %vm612, %vm508
        %v614 = vld [vmem:[#allocation2] sm:$0xf]
        %v615 = vsel %vm613, %v578, %v614
        %616 = vst [vmem:[#allocation2] sm:$0xf] %v615
        %617 = vst [vmem:[#allocation2 + $0x4] sm:$0xf] %v587
        %v618 = vld [vmem:[#allocation2 + $0x8] sm:$0x1]
        %v619 = vsel %vm471, %v588, %v618
        %620 = vst [vmem:[#allocation2 + $0x8] sm:$0x1] %v619
        %v621 = vld [vmem:[#allocation2 + $0xc] sm:$0xf]
        %v622 = vsel %vm613, %v595, %v621
        %623 = vst [vmem:[#allocation2 + $0xc] sm:$0xf] %v622
        %624 = vst [vmem:[#allocation2 + $0x10] sm:$0xf] %v604
        %v625 = vld [vmem:[#allocation2 + $0x14] sm:$0x1]
        %v626 = vsel %vm471, %v605, %v625
        %627 = vst [vmem:[#allocation2 + $0x14] sm:$0x1] %v626
        %v629 = vshrl.u32 %v566, 16
        %v631 = vrot.slane %v629, 7
        %v632 = vshll.u32 %v566, 16
        %v634 = vor.u32 %v631, %v632
        %v635 = vrot.slane %v631, 4
        %v637 = vshrl.u32 %v567, 16
        %v639 = vrot.slane %v637, 7
        %v640 = vshll.u32 %v567, 16
        %v642 = vor.u32 %v639, %v640
        %v643 = vsel %vm571, %v635, %v642
        %v644 = vrot.slane %v639, 4
        %v646 = vshrl.u32 %v568, 16
        %v648 = vrot.slane %v646, 7
        %v649 = vshll.u32 %v568, 16
        %v651 = vor.u32 %v648, %v649
        %v652 = vrot.slane %v648, 4
        %v654 = vshrl.u32 %v569, 16
        %v656 = vrot.slane %v654, 7
        %v657 = vshll.u32 %v569, 16
        %v659 = vor.u32 %v656, %v657
        %v660 = vsel %vm571, %v652, %v659
        %v661 = vrot.slane %v656, 4
        %s668 = scalar_lea.vmem [#allocation2], 120
        %v669 = vld [vmem:[%s668] sm:$0xf]
        %v670 = vsel %vm613, %v634, %v669
        %671 = vst [vmem:[%s668] sm:$0xf] %v670
        %672 = vst [vmem:[%s668 + $0x4] sm:$0xf] %v643
        %v673 = vld [vmem:[%s668 + $0x8] sm:$0x1]
        %v674 = vsel %vm471, %v644, %v673
        %675 = vst [vmem:[%s668 + $0x8] sm:$0x1] %v674
        %v676 = vld [vmem:[%s668 + $0xc] sm:$0xf]
        %v677 = vsel %vm613, %v651, %v676
        %678 = vst [vmem:[%s668 + $0xc] sm:$0xf] %v677
        %679 = vst [vmem:[%s668 + $0x10] sm:$0xf] %v660
        %v680 = vld [vmem:[%s668 + $0x14] sm:$0x1]
        %v681 = vsel %vm471, %v661, %v680
        %682 = vst [vmem:[%s668 + $0x14] sm:$0x1] %v681
        %v683 = vld [vmem:[%s389] sm:$0xf]
        %v684 = vld [vmem:[%s389 + $0x4] sm:$0xf]
        %v685 = vld [vmem:[%s389 + $0x8] sm:$0xf]
        %v686 = vld [vmem:[%s389 + $0xc] sm:$0xf]
        %v687 = vld [vmem:[%s389 + $0x10] sm:$0xf]
        %v688 = vld [vmem:[%s389 + $0x14] sm:$0xf]
        %v689 = vld [vmem:[%s389 + $0x18] sm:$0xf]
        %v690 = vld [vmem:[%s389 + $0x1c] sm:$0xf]
        %v691 = vld [vmem:[%s389 + $0x20] sm:$0xf]
        %v692 = vld [vmem:[%s389 + $0x24] sm:$0xf]
        %v693 = vld [vmem:[%s389 + $0x28] sm:$0xf]
        %v694 = vld [vmem:[%s389 + $0x2c] sm:$0xf]
        %v695 = vld [vmem:[%s389 + $0x30] sm:$0xf]
        %v696 = vld [vmem:[%s389 + $0x34] sm:$0xf]
        %v697 = vld [vmem:[%s389 + $0x38] sm:$0xf]
        %v698 = vld [vmem:[%s389 + $0x3c] sm:$0xf]
        %v700 = vshrl.u32 %v683, 16
        %v702 = vrot.slane %v700, 7
        %v703 = vshll.u32 %v683, 16
        %v705 = vor.u32 %v702, %v703
        %v706 = vrot.slane %v702, 4
        %v708 = vshrl.u32 %v684, 16
        %v710 = vrot.slane %v708, 7
        %v711 = vshll.u32 %v684, 16
        %v713 = vor.u32 %v710, %v711
        %v714 = vsel %vm571, %v706, %v713
        %v715 = vrot.slane %v710, 4
        %v717 = vshrl.u32 %v685, 16
        %v719 = vrot.slane %v717, 7
        %v720 = vshll.u32 %v685, 16
        %v722 = vor.u32 %v719, %v720
        %v723 = vrot.slane %v719, 4
        %v725 = vshrl.u32 %v686, 16
        %v727 = vrot.slane %v725, 7
        %v728 = vshll.u32 %v686, 16
        %v730 = vor.u32 %v727, %v728
        %v731 = vsel %vm571, %v723, %v730
        %v732 = vrot.slane %v727, 4
        %v734 = vshrl.u32 %v687, 16
        %v736 = vrot.slane %v734, 7
        %v737 = vshll.u32 %v687, 16
        %v739 = vor.u32 %v736, %v737
        %v740 = vrot.slane %v736, 4
        %v742 = vshrl.u32 %v688, 16
        %v744 = vrot.slane %v742, 7
        %v745 = vshll.u32 %v688, 16
        %v747 = vor.u32 %v744, %v745
        %v748 = vsel %vm571, %v740, %v747
        %v749 = vrot.slane %v744, 4
        %v751 = vshrl.u32 %v689, 16
        %v753 = vrot.slane %v751, 7
        %v754 = vshll.u32 %v689, 16
        %v756 = vor.u32 %v753, %v754
        %v757 = vrot.slane %v753, 4
        %v759 = vshrl.u32 %v690, 16
        %v761 = vrot.slane %v759, 7
        %v762 = vshll.u32 %v690, 16
        %v764 = vor.u32 %v761, %v762
        %v765 = vsel %vm571, %v757, %v764
        %v766 = vrot.slane %v761, 4
        %v768 = vshrl.u32 %v691, 16
        %v770 = vrot.slane %v768, 7
        %v771 = vshll.u32 %v691, 16
        %v773 = vor.u32 %v770, %v771
        %v774 = vrot.slane %v770, 4
        %v776 = vshrl.u32 %v692, 16
        %v778 = vrot.slane %v776, 7
        %v779 = vshll.u32 %v692, 16
        %v781 = vor.u32 %v778, %v779
        %v782 = vsel %vm571, %v774, %v781
        %v783 = vrot.slane %v778, 4
        %v785 = vshrl.u32 %v693, 16
        %v787 = vrot.slane %v785, 7
        %v788 = vshll.u32 %v693, 16
        %v790 = vor.u32 %v787, %v788
        %v791 = vrot.slane %v787, 4
        %v793 = vshrl.u32 %v694, 16
        %v795 = vrot.slane %v793, 7
        %v796 = vshll.u32 %v694, 16
        %v798 = vor.u32 %v795, %v796
        %v799 = vsel %vm571, %v791, %v798
        %v800 = vrot.slane %v795, 4
        %v802 = vshrl.u32 %v695, 16
        %v804 = vrot.slane %v802, 7
        %v805 = vshll.u32 %v695, 16
        %v807 = vor.u32 %v804, %v805
        %v808 = vrot.slane %v804, 4
        %v810 = vshrl.u32 %v696, 16
        %v812 = vrot.slane %v810, 7
        %v813 = vshll.u32 %v696, 16
        %v815 = vor.u32 %v812, %v813
        %v816 = vsel %vm571, %v808, %v815
        %v817 = vrot.slane %v812, 4
        %v819 = vshrl.u32 %v697, 16
        %v821 = vrot.slane %v819, 7
        %v822 = vshll.u32 %v697, 16
        %v824 = vor.u32 %v821, %v822
        %v825 = vrot.slane %v821, 4
        %v827 = vshrl.u32 %v698, 16
        %v829 = vrot.slane %v827, 7
        %v830 = vshll.u32 %v698, 16
        %v832 = vor.u32 %v829, %v830
        %v833 = vsel %vm571, %v825, %v832
        %v834 = vrot.slane %v829, 4
        %s859 = scalar_lea.vmem [#allocation2], 24
        %v860 = vld [vmem:[%s859] sm:$0xf]
        %v861 = vsel %vm613, %v705, %v860
        %862 = vst [vmem:[%s859] sm:$0xf] %v861
        %863 = vst [vmem:[%s859 + $0x4] sm:$0xf] %v714
        %v864 = vld [vmem:[%s859 + $0x8] sm:$0x1]
        %v865 = vsel %vm471, %v715, %v864
        %866 = vst [vmem:[%s859 + $0x8] sm:$0x1] %v865
        %v867 = vld [vmem:[%s859 + $0xc] sm:$0xf]
        %v868 = vsel %vm613, %v722, %v867
        %869 = vst [vmem:[%s859 + $0xc] sm:$0xf] %v868
        %870 = vst [vmem:[%s859 + $0x10] sm:$0xf] %v731
        %v871 = vld [vmem:[%s859 + $0x14] sm:$0x1]
        %v872 = vsel %vm471, %v732, %v871
        %873 = vst [vmem:[%s859 + $0x14] sm:$0x1] %v872
        %v874 = vld [vmem:[%s859 + $0x18] sm:$0xf]
        %v875 = vsel %vm613, %v739, %v874
        %876 = vst [vmem:[%s859 + $0x18] sm:$0xf] %v875
        %877 = vst [vmem:[%s859 + $0x1c] sm:$0xf] %v748
        %v878 = vld [vmem:[%s859 + $0x20] sm:$0x1]
        %v879 = vsel %vm471, %v749, %v878
        %880 = vst [vmem:[%s859 + $0x20] sm:$0x1] %v879
        %v881 = vld [vmem:[%s859 + $0x24] sm:$0xf]
        %v882 = vsel %vm613, %v756, %v881
        %883 = vst [vmem:[%s859 + $0x24] sm:$0xf] %v882
        %884 = vst [vmem:[%s859 + $0x28] sm:$0xf] %v765
        %v885 = vld [vmem:[%s859 + $0x2c] sm:$0x1]
        %v886 = vsel %vm471, %v766, %v885
        %887 = vst [vmem:[%s859 + $0x2c] sm:$0x1] %v886
        %v888 = vld [vmem:[%s859 + $0x30] sm:$0xf]
        %v889 = vsel %vm613, %v773, %v888
        %890 = vst [vmem:[%s859 + $0x30] sm:$0xf] %v889
        %891 = vst [vmem:[%s859 + $0x34] sm:$0xf] %v782
        %v892 = vld [vmem:[%s859 + $0x38] sm:$0x1]
        %v893 = vsel %vm471, %v783, %v892
        %894 = vst [vmem:[%s859 + $0x38] sm:$0x1] %v893
        %v895 = vld [vmem:[%s859 + $0x3c] sm:$0xf]
        %v896 = vsel %vm613, %v790, %v895
        %897 = vst [vmem:[%s859 + $0x3c] sm:$0xf] %v896
        %898 = vst [vmem:[%s859 + $0x40] sm:$0xf] %v799
        %v899 = vld [vmem:[%s859 + $0x44] sm:$0x1]
        %v900 = vsel %vm471, %v800, %v899
        %901 = vst [vmem:[%s859 + $0x44] sm:$0x1] %v900
        %v902 = vld [vmem:[%s859 + $0x48] sm:$0xf]
        %v903 = vsel %vm613, %v807, %v902
        %904 = vst [vmem:[%s859 + $0x48] sm:$0xf] %v903
        %905 = vst [vmem:[%s859 + $0x4c] sm:$0xf] %v816
        %v906 = vld [vmem:[%s859 + $0x50] sm:$0x1]
        %v907 = vsel %vm471, %v817, %v906
        %908 = vst [vmem:[%s859 + $0x50] sm:$0x1] %v907
        %v909 = vld [vmem:[%s859 + $0x54] sm:$0xf]
        %v910 = vsel %vm613, %v824, %v909
        %911 = vst [vmem:[%s859 + $0x54] sm:$0xf] %v910
        %912 = vst [vmem:[%s859 + $0x58] sm:$0xf] %v833
        %v913 = vld [vmem:[%s859 + $0x5c] sm:$0x1]
        %v914 = vsel %vm471, %v834, %v913
        %915 = vst [vmem:[%s859 + $0x5c] sm:$0x1] %v914
        %v916 = vld [vmem:[#allocation2] sm:$0xf]
        %v917 = vld [vmem:[#allocation2 + $0x4] sm:$0xf]
        %v918 = vld [vmem:[#allocation2 + $0xc] sm:$0xf]
        %v919 = vld [vmem:[#allocation2 + $0x10] sm:$0xf]
        %v920 = vld [vmem:[#allocation2 + $0x18] sm:$0xf]
        %v921 = vld [vmem:[#allocation2 + $0x1c] sm:$0xf]
        %v922 = vld [vmem:[#allocation2 + $0x24] sm:$0xf]
        %v923 = vld [vmem:[#allocation2 + $0x28] sm:$0xf]
        %v924 = vld [vmem:[#allocation2 + $0x30] sm:$0xf]
        %v925 = vld [vmem:[#allocation2 + $0x34] sm:$0xf]
        %v926 = vld [vmem:[#allocation2 + $0x3c] sm:$0xf]
        %v927 = vld [vmem:[#allocation2 + $0x40] sm:$0xf]
        %v928 = vld [vmem:[#allocation2 + $0x48] sm:$0xf]
        %v929 = vld [vmem:[#allocation2 + $0x4c] sm:$0xf]
        %v930 = vld [vmem:[#allocation2 + $0x54] sm:$0xf]
        %v931 = vld [vmem:[#allocation2 + $0x58] sm:$0xf]
        %v932 = vld [vmem:[#allocation2 + $0x60] sm:$0xf]
        %v933 = vld [vmem:[#allocation2 + $0x64] sm:$0xf]
        %v934 = vld [vmem:[#allocation2 + $0x6c] sm:$0xf]
        %v935 = vld [vmem:[#allocation2 + $0x70] sm:$0xf]
        %936 = vst [vmem:[#allocation4] sm:$0xf] %v916
        %937 = vst [vmem:[#allocation4 + $0x24] sm:$0xf] %v917
        %938 = vst [vmem:[#allocation4 + $0x48] sm:$0xf] %v918
        %939 = vst [vmem:[#allocation4 + $0x6c] sm:$0xf] %v919
        %940 = vst [vmem:[#allocation4 + $0x90] sm:$0xf] %v920
        %941 = vst [vmem:[#allocation4 + $0xb4] sm:$0xf] %v921
        %942 = vst [vmem:[#allocation4 + $0xd8] sm:$0xf] %v922
        %943 = vst [vmem:[#allocation4 + $0xfc] sm:$0xf] %v923
        %944 = vst [vmem:[#allocation4 + $0x120] sm:$0xf] %v924
        %945 = vst [vmem:[#allocation4 + $0x144] sm:$0xf] %v925
        %946 = vst [vmem:[#allocation4 + $0x168] sm:$0xf] %v926
        %947 = vst [vmem:[#allocation4 + $0x18c] sm:$0xf] %v927
        %948 = vst [vmem:[#allocation4 + $0x1b0] sm:$0xf] %v928
        %949 = vst [vmem:[#allocation4 + $0x1d4] sm:$0xf] %v929
        %950 = vst [vmem:[#allocation4 + $0x1f8] sm:$0xf] %v930
        %951 = vst [vmem:[#allocation4 + $0x21c] sm:$0xf] %v931
        %952 = vst [vmem:[#allocation4 + $0x240] sm:$0xf] %v932
        %953 = vst [vmem:[#allocation4 + $0x264] sm:$0xf] %v933
        %954 = vst [vmem:[#allocation4 + $0x288] sm:$0xf] %v934
        %955 = vst [vmem:[#allocation4 + $0x2ac] sm:$0xf] %v935
        %v956 = vld [vmem:[#allocation2] sm:$0xf]
        %v957 = vld [vmem:[#allocation2 + $0x4] sm:$0xf]
        %v958 = vld [vmem:[#allocation2 + $0x8] sm:$0x1]
        %v959 = vld [vmem:[#allocation2 + $0xc] sm:$0xf]
        %v960 = vld [vmem:[#allocation2 + $0x10] sm:$0xf]
        %v961 = vld [vmem:[#allocation2 + $0x14] sm:$0x1]
        %v962 = vld [vmem:[#allocation2 + $0x18] sm:$0xf]
        %v963 = vld [vmem:[#allocation2 + $0x1c] sm:$0xf]
        %v964 = vld [vmem:[#allocation2 + $0x20] sm:$0x1]
        %v965 = vld [vmem:[#allocation2 + $0x24] sm:$0xf]
        %v966 = vld [vmem:[#allocation2 + $0x28] sm:$0xf]
        %v967 = vld [vmem:[#allocation2 + $0x2c] sm:$0x1]
        %v968 = vld [vmem:[#allocation2 + $0x30] sm:$0xf]
        %v969 = vld [vmem:[#allocation2 + $0x34] sm:$0xf]
        %v970 = vld [vmem:[#allocation2 + $0x38] sm:$0x1]
        %v971 = vld [vmem:[#allocation2 + $0x3c] sm:$0xf]
        %v972 = vld [vmem:[#allocation2 + $0x40] sm:$0xf]
        %v973 = vld [vmem:[#allocation2 + $0x44] sm:$0x1]
        %v974 = vld [vmem:[#allocation2 + $0x48] sm:$0xf]
        %v975 = vld [vmem:[#allocation2 + $0x4c] sm:$0xf]
        %v976 = vld [vmem:[#allocation2 + $0x50] sm:$0x1]
        %v977 = vld [vmem:[#allocation2 + $0x54] sm:$0xf]
        %v978 = vld [vmem:[#allocation2 + $0x58] sm:$0xf]
        %v979 = vld [vmem:[#allocation2 + $0x5c] sm:$0x1]
        %v980 = vld [vmem:[#allocation2 + $0x60] sm:$0xf]
        %v981 = vld [vmem:[#allocation2 + $0x64] sm:$0xf]
        %v982 = vld [vmem:[#allocation2 + $0x68] sm:$0x1]
        %v983 = vld [vmem:[#allocation2 + $0x6c] sm:$0xf]
        %v984 = vld [vmem:[#allocation2 + $0x70] sm:$0xf]
        %v985 = vld [vmem:[#allocation2 + $0x74] sm:$0x1]
        %vm986 = vsmask.f32 3328
        %vm987 = vsmask.f32 7440
        %vm988 = vmor %vm986, %vm987
        %v990 = vshrl.u32 %v956, 16
        %v992 = vrot.slane %v990, 4
        %v993 = vshll.u32 %v956, 16
        %v995 = vrot.slane %v993, 5
        %v996 = vor.u32 %v992, %v995
        %v997 = vrot.slane %v996, 4
        %v999 = vshll.u32 %v957, 16
        %v1001 = vrot.slane %v999, 5
        %v1002 = vsel %vm988, %v997, %v1001
        %v1003 = vshrl.u32 %v957, 16
        %v1005 = vrot.slane %v1003, 4
        %v1006 = vor.u32 %v1005, %v1001
        %v1007 = vrot.slane %v1006, 4
        %v1009 = vshll.u32 %v958, 16
        %v1011 = vrot.slane %v1009, 5
        %v1012 = vsel %vm988, %v1007, %v1011
        %v1014 = vshrl.u32 %v959, 16
        %v1016 = vrot.slane %v1014, 4
        %v1017 = vshll.u32 %v959, 16
        %v1019 = vrot.slane %v1017, 5
        %v1020 = vor.u32 %v1016, %v1019
        %v1021 = vrot.slane %v1020, 4
        %v1023 = vshll.u32 %v960, 16
        %v1025 = vrot.slane %v1023, 5
        %v1026 = vsel %vm988, %v1021, %v1025
        %v1027 = vshrl.u32 %v960, 16
        %v1029 = vrot.slane %v1027, 4
        %v1030 = vor.u32 %v1029, %v1025
        %v1031 = vrot.slane %v1030, 4
        %v1033 = vshll.u32 %v961, 16
        %v1035 = vrot.slane %v1033, 5
        %v1036 = vsel %vm988, %v1031, %v1035
        %v1038 = vshrl.u32 %v962, 16
        %v1040 = vrot.slane %v1038, 4
        %v1041 = vshll.u32 %v962, 16
        %v1043 = vrot.slane %v1041, 5
        %v1044 = vor.u32 %v1040, %v1043
        %v1045 = vrot.slane %v1044, 4
        %v1047 = vshll.u32 %v963, 16
        %v1049 = vrot.slane %v1047, 5
        %v1050 = vsel %vm988, %v1045, %v1049
        %v1051 = vshrl.u32 %v963, 16
        %v1053 = vrot.slane %v1051, 4
        %v1054 = vor.u32 %v1053, %v1049
        %v1055 = vrot.slane %v1054, 4
        %v1057 = vshll.u32 %v964, 16
        %v1059 = vrot.slane %v1057, 5
        %v1060 = vsel %vm988, %v1055, %v1059
        %v1062 = vshrl.u32 %v965, 16
        %v1064 = vrot.slane %v1062, 4
        %v1065 = vshll.u32 %v965, 16
        %v1067 = vrot.slane %v1065, 5
        %v1068 = vor.u32 %v1064, %v1067
        %v1069 = vrot.slane %v1068, 4
        %v1071 = vshll.u32 %v966, 16
        %v1073 = vrot.slane %v1071, 5
        %v1074 = vsel %vm988, %v1069, %v1073
        %v1075 = vshrl.u32 %v966, 16
        %v1077 = vrot.slane %v1075, 4
        %v1078 = vor.u32 %v1077, %v1073
        %v1079 = vrot.slane %v1078, 4
        %v1081 = vshll.u32 %v967, 16
        %v1083 = vrot.slane %v1081, 5
        %v1084 = vsel %vm988, %v1079, %v1083
        %v1086 = vshrl.u32 %v968, 16
        %v1088 = vrot.slane %v1086, 4
        %v1089 = vshll.u32 %v968, 16
        %v1091 = vrot.slane %v1089, 5
        %v1092 = vor.u32 %v1088, %v1091
        %v1093 = vrot.slane %v1092, 4
        %v1095 = vshll.u32 %v969, 16
        %v1097 = vrot.slane %v1095, 5
        %v1098 = vsel %vm988, %v1093, %v1097
        %v1099 = vshrl.u32 %v969, 16
        %v1101 = vrot.slane %v1099, 4
        %v1102 = vor.u32 %v1101, %v1097
        %v1103 = vrot.slane %v1102, 4
        %v1105 = vshll.u32 %v970, 16
        %v1107 = vrot.slane %v1105, 5
        %v1108 = vsel %vm988, %v1103, %v1107
        %v1110 = vshrl.u32 %v971, 16
        %v1112 = vrot.slane %v1110, 4
        %v1113 = vshll.u32 %v971, 16
        %v1115 = vrot.slane %v1113, 5
        %v1116 = vor.u32 %v1112, %v1115
        %v1117 = vrot.slane %v1116, 4
        %v1119 = vshll.u32 %v972, 16
        %v1121 = vrot.slane %v1119, 5
        %v1122 = vsel %vm988, %v1117, %v1121
        %v1123 = vshrl.u32 %v972, 16
        %v1125 = vrot.slane %v1123, 4
        %v1126 = vor.u32 %v1125, %v1121
        %v1127 = vrot.slane %v1126, 4
        %v1129 = vshll.u32 %v973, 16
        %v1131 = vrot.slane %v1129, 5
        %v1132 = vsel %vm988, %v1127, %v1131
        %v1134 = vshrl.u32 %v974, 16
        %v1136 = vrot.slane %v1134, 4
        %v1137 = vshll.u32 %v974, 16
        %v1139 = vrot.slane %v1137, 5
        %v1140 = vor.u32 %v1136, %v1139
        %v1141 = vrot.slane %v1140, 4
        %v1143 = vshll.u32 %v975, 16
        %v1145 = vrot.slane %v1143, 5
        %v1146 = vsel %vm988, %v1141, %v1145
        %v1147 = vshrl.u32 %v975, 16
        %v1149 = vrot.slane %v1147, 4
        %v1150 = vor.u32 %v1149, %v1145
        %v1151 = vrot.slane %v1150, 4
        %v1153 = vshll.u32 %v976, 16
        %v1155 = vrot.slane %v1153, 5
        %v1156 = vsel %vm988, %v1151, %v1155
        %v1158 = vshrl.u32 %v977, 16
        %v1160 = vrot.slane %v1158, 4
        %v1161 = vshll.u32 %v977, 16
        %v1163 = vrot.slane %v1161, 5
        %v1164 = vor.u32 %v1160, %v1163
        %v1165 = vrot.slane %v1164, 4
        %v1167 = vshll.u32 %v978, 16
        %v1169 = vrot.slane %v1167, 5
        %v1170 = vsel %vm988, %v1165, %v1169
        %v1171 = vshrl.u32 %v978, 16
        %v1173 = vrot.slane %v1171, 4
        %v1174 = vor.u32 %v1173, %v1169
        %v1175 = vrot.slane %v1174, 4
        %v1177 = vshll.u32 %v979, 16
        %v1179 = vrot.slane %v1177, 5
        %v1180 = vsel %vm988, %v1175, %v1179
        %v1182 = vshrl.u32 %v980, 16
        %v1184 = vrot.slane %v1182, 4
        %v1185 = vshll.u32 %v980, 16
        %v1187 = vrot.slane %v1185, 5
        %v1188 = vor.u32 %v1184, %v1187
        %v1189 = vrot.slane %v1188, 4
        %v1191 = vshll.u32 %v981, 16
        %v1193 = vrot.slane %v1191, 5
        %v1194 = vsel %vm988, %v1189, %v1193
        %v1195 = vshrl.u32 %v981, 16
        %v1197 = vrot.slane %v1195, 4
        %v1198 = vor.u32 %v1197, %v1193
        %v1199 = vrot.slane %v1198, 4
        %v1201 = vshll.u32 %v982, 16
        %v1203 = vrot.slane %v1201, 5
        %v1204 = vsel %vm988, %v1199, %v1203
        %v1206 = vshrl.u32 %v983, 16
        %v1208 = vrot.slane %v1206, 4
        %v1209 = vshll.u32 %v983, 16
        %v1211 = vrot.slane %v1209, 5
        %v1212 = vor.u32 %v1208, %v1211
        %v1213 = vrot.slane %v1212, 4
        %v1215 = vshll.u32 %v984, 16
        %v1217 = vrot.slane %v1215, 5
        %v1218 = vsel %vm988, %v1213, %v1217
        %v1219 = vshrl.u32 %v984, 16
        %v1221 = vrot.slane %v1219, 4
        %v1222 = vor.u32 %v1221, %v1217
        %v1223 = vrot.slane %v1222, 4
        %v1225 = vshll.u32 %v985, 16
        %v1227 = vrot.slane %v1225, 5
        %v1228 = vsel %vm988, %v1223, %v1227
        %1249 = vst [vmem:[#allocation4 + $0x4] sm:$0xf] %v1002
        %1250 = vst [vmem:[#allocation4 + $0x28] sm:$0xf] %v1012
        %1251 = vst [vmem:[#allocation4 + $0x4c] sm:$0xf] %v1026
        %1252 = vst [vmem:[#allocation4 + $0x70] sm:$0xf] %v1036
        %1253 = vst [vmem:[#allocation4 + $0x94] sm:$0xf] %v1050
        %1254 = vst [vmem:[#allocation4 + $0xb8] sm:$0xf] %v1060
        %1255 = vst [vmem:[#allocation4 + $0xdc] sm:$0xf] %v1074
        %1256 = vst [vmem:[#allocation4 + $0x100] sm:$0xf] %v1084
        %1257 = vst [vmem:[#allocation4 + $0x124] sm:$0xf] %v1098
        %1258 = vst [vmem:[#allocation4 + $0x148] sm:$0xf] %v1108
        %1259 = vst [vmem:[#allocation4 + $0x16c] sm:$0xf] %v1122
        %1260 = vst [vmem:[#allocation4 + $0x190] sm:$0xf] %v1132
        %1261 = vst [vmem:[#allocation4 + $0x1b4] sm:$0xf] %v1146
        %1262 = vst [vmem:[#allocation4 + $0x1d8] sm:$0xf] %v1156
        %1263 = vst [vmem:[#allocation4 + $0x1fc] sm:$0xf] %v1170
        %1264 = vst [vmem:[#allocation4 + $0x220] sm:$0xf] %v1180
        %1265 = vst [vmem:[#allocation4 + $0x244] sm:$0xf] %v1194
        %1266 = vst [vmem:[#allocation4 + $0x268] sm:$0xf] %v1204
        %1267 = vst [vmem:[#allocation4 + $0x28c] sm:$0xf] %v1218
        %1268 = vst [vmem:[#allocation4 + $0x2b0] sm:$0xf] %v1228
        %v1269 = vld [vmem:[#allocation2] sm:$0xe]
        %v1270 = vld [vmem:[#allocation2 + $0x4] sm:$0xf]
        %v1271 = vld [vmem:[#allocation2 + $0x8] sm:$0x1]
        %v1272 = vld [vmem:[#allocation2 + $0xc] sm:$0xe]
        %v1273 = vld [vmem:[#allocation2 + $0x10] sm:$0xf]
        %v1274 = vld [vmem:[#allocation2 + $0x14] sm:$0x1]
        %v1275 = vld [vmem:[#allocation2 + $0x18] sm:$0xe]
        %v1276 = vld [vmem:[#allocation2 + $0x1c] sm:$0xf]
        %v1277 = vld [vmem:[#allocation2 + $0x20] sm:$0x1]
        %v1278 = vld [vmem:[#allocation2 + $0x24] sm:$0xe]
        %v1279 = vld [vmem:[#allocation2 + $0x28] sm:$0xf]
        %v1280 = vld [vmem:[#allocation2 + $0x2c] sm:$0x1]
        %v1281 = vld [vmem:[#allocation2 + $0x30] sm:$0xe]
        %v1282 = vld [vmem:[#allocation2 + $0x34] sm:$0xf]
        %v1283 = vld [vmem:[#allocation2 + $0x38] sm:$0x1]
        %v1284 = vld [vmem:[#allocation2 + $0x3c] sm:$0xe]
        %v1285 = vld [vmem:[#allocation2 + $0x40] sm:$0xf]
        %v1286 = vld [vmem:[#allocation2 + $0x44] sm:$0x1]
        %v1287 = vld [vmem:[#allocation2 + $0x48] sm:$0xe]
        %v1288 = vld [vmem:[#allocation2 + $0x4c] sm:$0xf]
        %v1289 = vld [vmem:[#allocation2 + $0x50] sm:$0x1]
        %v1290 = vld [vmem:[#allocation2 + $0x54] sm:$0xe]
        %v1291 = vld [vmem:[#allocation2 + $0x58] sm:$0xf]
        %v1292 = vld [vmem:[#allocation2 + $0x5c] sm:$0x1]
        %v1293 = vld [vmem:[#allocation2 + $0x60] sm:$0xe]
        %v1294 = vld [vmem:[#allocation2 + $0x64] sm:$0xf]
        %v1295 = vld [vmem:[#allocation2 + $0x68] sm:$0x1]
        %v1296 = vld [vmem:[#allocation2 + $0x6c] sm:$0xe]
        %v1297 = vld [vmem:[#allocation2 + $0x70] sm:$0xf]
        %v1298 = vld [vmem:[#allocation2 + $0x74] sm:$0x1]
        %vm1329 = vcmask 1042432
        %vm1330 = vcmask 1046532
        %vm1331 = vmor %vm1329, %vm1330
        %v1332 = vrot.slane %v1269, 5
        %v1333 = vrot.slane %v1332, 4
        %v1334 = vrot.slane %v1270, 5
        %v1335 = vsel %vm1331, %v1333, %v1334
        %v1336 = vrot.slane %v1334, 4
        %v1337 = vrot.slane %v1271, 5
        %v1338 = vsel %vm1331, %v1336, %v1337
        %v1339 = vrot.slane %v1272, 5
        %v1340 = vrot.slane %v1339, 4
        %v1341 = vrot.slane %v1273, 5
        %v1342 = vsel %vm1331, %v1340, %v1341
        %v1343 = vrot.slane %v1341, 4
        %v1344 = vrot.slane %v1274, 5
        %v1345 = vsel %vm1331, %v1343, %v1344
        %v1346 = vrot.slane %v1275, 5
        %v1347 = vrot.slane %v1346, 4
        %v1348 = vrot.slane %v1276, 5
        %v1349 = vsel %vm1331, %v1347, %v1348
        %v1350 = vrot.slane %v1348, 4
        %v1351 = vrot.slane %v1277, 5
        %v1352 = vsel %vm1331, %v1350, %v1351
        %v1353 = vrot.slane %v1278, 5
        %v1354 = vrot.slane %v1353, 4
        %v1355 = vrot.slane %v1279, 5
        %v1356 = vsel %vm1331, %v1354, %v1355
        %v1357 = vrot.slane %v1355, 4
        %v1358 = vrot.slane %v1280, 5
        %v1359 = vsel %vm1331, %v1357, %v1358
        %v1360 = vrot.slane %v1281, 5
        %v1361 = vrot.slane %v1360, 4
        %v1362 = vrot.slane %v1282, 5
        %v1363 = vsel %vm1331, %v1361, %v1362
        %v1364 = vrot.slane %v1362, 4
        %v1365 = vrot.slane %v1283, 5
        %v1366 = vsel %vm1331, %v1364, %v1365
        %v1367 = vrot.slane %v1284, 5
        %v1368 = vrot.slane %v1367, 4
        %v1369 = vrot.slane %v1285, 5
        %v1370 = vsel %vm1331, %v1368, %v1369
        %v1371 = vrot.slane %v1369, 4
        %v1372 = vrot.slane %v1286, 5
        %v1373 = vsel %vm1331, %v1371, %v1372
        %v1374 = vrot.slane %v1287, 5
        %v1375 = vrot.slane %v1374, 4
        %v1376 = vrot.slane %v1288, 5
        %v1377 = vsel %vm1331, %v1375, %v1376
        %v1378 = vrot.slane %v1376, 4
        %v1379 = vrot.slane %v1289, 5
        %v1380 = vsel %vm1331, %v1378, %v1379
        %v1381 = vrot.slane %v1290, 5
        %v1382 = vrot.slane %v1381, 4
        %v1383 = vrot.slane %v1291, 5
        %v1384 = vsel %vm1331, %v1382, %v1383
        %v1385 = vrot.slane %v1383, 4
        %v1386 = vrot.slane %v1292, 5
        %v1387 = vsel %vm1331, %v1385, %v1386
        %v1388 = vrot.slane %v1293, 5
        %v1389 = vrot.slane %v1388, 4
        %v1390 = vrot.slane %v1294, 5
        %v1391 = vsel %vm1331, %v1389, %v1390
        %v1392 = vrot.slane %v1390, 4
        %v1393 = vrot.slane %v1295, 5
        %v1394 = vsel %vm1331, %v1392, %v1393
        %v1395 = vrot.slane %v1296, 5
        %v1396 = vrot.slane %v1395, 4
        %v1397 = vrot.slane %v1297, 5
        %v1398 = vsel %vm1331, %v1396, %v1397
        %v1399 = vrot.slane %v1397, 4
        %v1400 = vrot.slane %v1298, 5
        %v1401 = vsel %vm1331, %v1399, %v1400
        %1422 = vst [vmem:[#allocation4 + $0x8] sm:$0xf] %v1335
        %1423 = vst [vmem:[#allocation4 + $0x2c] sm:$0xf] %v1338
        %1424 = vst [vmem:[#allocation4 + $0x50] sm:$0xf] %v1342
        %1425 = vst [vmem:[#allocation4 + $0x74] sm:$0xf] %v1345
        %1426 = vst [vmem:[#allocation4 + $0x98] sm:$0xf] %v1349
        %1427 = vst [vmem:[#allocation4 + $0xbc] sm:$0xf] %v1352
        %1428 = vst [vmem:[#allocation4 + $0xe0] sm:$0xf] %v1356
        %1429 = vst [vmem:[#allocation4 + $0x104] sm:$0xf] %v1359
        %1430 = vst [vmem:[#allocation4 + $0x128] sm:$0xf] %v1363
        %1431 = vst [vmem:[#allocation4 + $0x14c] sm:$0xf] %v1366
        %1432 = vst [vmem:[#allocation4 + $0x170] sm:$0xf] %v1370
        %1433 = vst [vmem:[#allocation4 + $0x194] sm:$0xf] %v1373
        %1434 = vst [vmem:[#allocation4 + $0x1b8] sm:$0xf] %v1377
        %1435 = vst [vmem:[#allocation4 + $0x1dc] sm:$0xf] %v1380
        %1436 = vst [vmem:[#allocation4 + $0x200] sm:$0xf] %v1384
        %1437 = vst [vmem:[#allocation4 + $0x224] sm:$0xf] %v1387
        %1438 = vst [vmem:[#allocation4 + $0x248] sm:$0xf] %v1391
        %1439 = vst [vmem:[#allocation4 + $0x26c] sm:$0xf] %v1394
        %1440 = vst [vmem:[#allocation4 + $0x290] sm:$0xf] %v1398
        %1441 = vst [vmem:[#allocation4 + $0x2b4] sm:$0xf] %v1401
        %s1442 = scalar_lea.vmem [#allocation2], 12
        %v1443 = vld [vmem:[%s1442] sm:$0xf]
        %v1444 = vld [vmem:[%s1442 + $0x4] sm:$0xf]
        %v1445 = vld [vmem:[%s1442 + $0xc] sm:$0xf]
        %v1446 = vld [vmem:[%s1442 + $0x10] sm:$0xf]
        %v1447 = vld [vmem:[%s1442 + $0x18] sm:$0xf]
        %v1448 = vld [vmem:[%s1442 + $0x1c] sm:$0xf]
        %v1449 = vld [vmem:[%s1442 + $0x24] sm:$0xf]
        %v1450 = vld [vmem:[%s1442 + $0x28] sm:$0xf]
        %v1451 = vld [vmem:[%s1442 + $0x30] sm:$0xf]
        %v1452 = vld [vmem:[%s1442 + $0x34] sm:$0xf]
        %v1453 = vld [vmem:[%s1442 + $0x3c] sm:$0xf]
        %v1454 = vld [vmem:[%s1442 + $0x40] sm:$0xf]
        %v1455 = vld [vmem:[%s1442 + $0x48] sm:$0xf]
        %v1456 = vld [vmem:[%s1442 + $0x4c] sm:$0xf]
        %v1457 = vld [vmem:[%s1442 + $0x54] sm:$0xf]
        %v1458 = vld [vmem:[%s1442 + $0x58] sm:$0xf]
        %v1459 = vld [vmem:[%s1442 + $0x60] sm:$0xf]
        %v1460 = vld [vmem:[%s1442 + $0x64] sm:$0xf]
        %v1461 = vld [vmem:[%s1442 + $0x6c] sm:$0xf]
        %v1462 = vld [vmem:[%s1442 + $0x70] sm:$0xf]
        %1463 = vst [vmem:[#allocation4 + $0xc] sm:$0xf] %v1443
        %1464 = vst [vmem:[#allocation4 + $0x30] sm:$0xf] %v1444
        %1465 = vst [vmem:[#allocation4 + $0x54] sm:$0xf] %v1445
        %1466 = vst [vmem:[#allocation4 + $0x78] sm:$0xf] %v1446
        %1467 = vst [vmem:[#allocation4 + $0x9c] sm:$0xf] %v1447
        %1468 = vst [vmem:[#allocation4 + $0xc0] sm:$0xf] %v1448
        %1469 = vst [vmem:[#allocation4 + $0xe4] sm:$0xf] %v1449
        %1470 = vst [vmem:[#allocation4 + $0x108] sm:$0xf] %v1450
        %1471 = vst [vmem:[#allocation4 + $0x12c] sm:$0xf] %v1451
        %1472 = vst [vmem:[#allocation4 + $0x150] sm:$0xf] %v1452
        %1473 = vst [vmem:[#allocation4 + $0x174] sm:$0xf] %v1453
        %1474 = vst [vmem:[#allocation4 + $0x198] sm:$0xf] %v1454
        %1475 = vst [vmem:[#allocation4 + $0x1bc] sm:$0xf] %v1455
        %1476 = vst [vmem:[#allocation4 + $0x1e0] sm:$0xf] %v1456
        %1477 = vst [vmem:[#allocation4 + $0x204] sm:$0xf] %v1457
        %1478 = vst [vmem:[#allocation4 + $0x228] sm:$0xf] %v1458
        %1479 = vst [vmem:[#allocation4 + $0x24c] sm:$0xf] %v1459
        %1480 = vst [vmem:[#allocation4 + $0x270] sm:$0xf] %v1460
        %1481 = vst [vmem:[#allocation4 + $0x294] sm:$0xf] %v1461
        %1482 = vst [vmem:[#allocation4 + $0x2b8] sm:$0xf] %v1462
        %v1483 = vld [vmem:[%s1442] sm:$0xf]
        %v1484 = vld [vmem:[%s1442 + $0x4] sm:$0xf]
        %v1485 = vld [vmem:[%s1442 + $0x8] sm:$0x1]
        %v1486 = vld [vmem:[%s1442 + $0xc] sm:$0xf]
        %v1487 = vld [vmem:[%s1442 + $0x10] sm:$0xf]
        %v1488 = vld [vmem:[%s1442 + $0x14] sm:$0x1]
        %v1489 = vld [vmem:[%s1442 + $0x18] sm:$0xf]
        %v1490 = vld [vmem:[%s1442 + $0x1c] sm:$0xf]
        %v1491 = vld [vmem:[%s1442 + $0x20] sm:$0x1]
        %v1492 = vld [vmem:[%s1442 + $0x24] sm:$0xf]
        %v1493 = vld [vmem:[%s1442 + $0x28] sm:$0xf]
        %v1494 = vld [vmem:[%s1442 + $0x2c] sm:$0x1]
        %v1495 = vld [vmem:[%s1442 + $0x30] sm:$0xf]
        %v1496 = vld [vmem:[%s1442 + $0x34] sm:$0xf]
        %v1497 = vld [vmem:[%s1442 + $0x38] sm:$0x1]
        %v1498 = vld [vmem:[%s1442 + $0x3c] sm:$0xf]
        %v1499 = vld [vmem:[%s1442 + $0x40] sm:$0xf]
        %v1500 = vld [vmem:[%s1442 + $0x44] sm:$0x1]
        %v1501 = vld [vmem:[%s1442 + $0x48] sm:$0xf]
        %v1502 = vld [vmem:[%s1442 + $0x4c] sm:$0xf]
        %v1503 = vld [vmem:[%s1442 + $0x50] sm:$0x1]
        %v1504 = vld [vmem:[%s1442 + $0x54] sm:$0xf]
        %v1505 = vld [vmem:[%s1442 + $0x58] sm:$0xf]
        %v1506 = vld [vmem:[%s1442 + $0x5c] sm:$0x1]
        %v1507 = vld [vmem:[%s1442 + $0x60] sm:$0xf]
        %v1508 = vld [vmem:[%s1442 + $0x64] sm:$0xf]
        %v1509 = vld [vmem:[%s1442 + $0x68] sm:$0x1]
        %v1510 = vld [vmem:[%s1442 + $0x6c] sm:$0xf]
        %v1511 = vld [vmem:[%s1442 + $0x70] sm:$0xf]
        %v1512 = vld [vmem:[%s1442 + $0x74] sm:$0x1]
        %v1514 = vshrl.u32 %v1483, 16
        %v1516 = vrot.slane %v1514, 4
        %v1517 = vshll.u32 %v1483, 16
        %v1519 = vrot.slane %v1517, 5
        %v1520 = vor.u32 %v1516, %v1519
        %v1521 = vrot.slane %v1520, 4
        %v1523 = vshll.u32 %v1484, 16
        %v1525 = vrot.slane %v1523, 5
        %v1526 = vsel %vm988, %v1521, %v1525
        %v1527 = vshrl.u32 %v1484, 16
        %v1529 = vrot.slane %v1527, 4
        %v1530 = vor.u32 %v1529, %v1525
        %v1531 = vrot.slane %v1530, 4
        %v1533 = vshll.u32 %v1485, 16
        %v1535 = vrot.slane %v1533, 5
        %v1536 = vsel %vm988, %v1531, %v1535
        %v1538 = vshrl.u32 %v1486, 16
        %v1540 = vrot.slane %v1538, 4
        %v1541 = vshll.u32 %v1486, 16
        %v1543 = vrot.slane %v1541, 5
        %v1544 = vor.u32 %v1540, %v1543
        %v1545 = vrot.slane %v1544, 4
        %v1547 = vshll.u32 %v1487, 16
        %v1549 = vrot.slane %v1547, 5
        %v1550 = vsel %vm988, %v1545, %v1549
        %v1551 = vshrl.u32 %v1487, 16
        %v1553 = vrot.slane %v1551, 4
        %v1554 = vor.u32 %v1553, %v1549
        %v1555 = vrot.slane %v1554, 4
        %v1557 = vshll.u32 %v1488, 16
        %v1559 = vrot.slane %v1557, 5
        %v1560 = vsel %vm988, %v1555, %v1559
        %v1562 = vshrl.u32 %v1489, 16
        %v1564 = vrot.slane %v1562, 4
        %v1565 = vshll.u32 %v1489, 16
        %v1567 = vrot.slane %v1565, 5
        %v1568 = vor.u32 %v1564, %v1567
        %v1569 = vrot.slane %v1568, 4
        %v1571 = vshll.u32 %v1490, 16
        %v1573 = vrot.slane %v1571, 5
        %v1574 = vsel %vm988, %v1569, %v1573
        %v1575 = vshrl.u32 %v1490, 16
        %v1577 = vrot.slane %v1575, 4
        %v1578 = vor.u32 %v1577, %v1573
        %v1579 = vrot.slane %v1578, 4
        %v1581 = vshll.u32 %v1491, 16
        %v1583 = vrot.slane %v1581, 5
        %v1584 = vsel %vm988, %v1579, %v1583
        %v1586 = vshrl.u32 %v1492, 16
        %v1588 = vrot.slane %v1586, 4
        %v1589 = vshll.u32 %v1492, 16
        %v1591 = vrot.slane %v1589, 5
        %v1592 = vor.u32 %v1588, %v1591
        %v1593 = vrot.slane %v1592, 4
        %v1595 = vshll.u32 %v1493, 16
        %v1597 = vrot.slane %v1595, 5
        %v1598 = vsel %vm988, %v1593, %v1597
        %v1599 = vshrl.u32 %v1493, 16
        %v1601 = vrot.slane %v1599, 4
        %v1602 = vor.u32 %v1601, %v1597
        %v1603 = vrot.slane %v1602, 4
        %v1605 = vshll.u32 %v1494, 16
        %v1607 = vrot.slane %v1605, 5
        %v1608 = vsel %vm988, %v1603, %v1607
        %v1610 = vshrl.u32 %v1495, 16
        %v1612 = vrot.slane %v1610, 4
        %v1613 = vshll.u32 %v1495, 16
        %v1615 = vrot.slane %v1613, 5
        %v1616 = vor.u32 %v1612, %v1615
        %v1617 = vrot.slane %v1616, 4
        %v1619 = vshll.u32 %v1496, 16
        %v1621 = vrot.slane %v1619, 5
        %v1622 = vsel %vm988, %v1617, %v1621
        %v1623 = vshrl.u32 %v1496, 16
        %v1625 = vrot.slane %v1623, 4
        %v1626 = vor.u32 %v1625, %v1621
        %v1627 = vrot.slane %v1626, 4
        %v1629 = vshll.u32 %v1497, 16
        %v1631 = vrot.slane %v1629, 5
        %v1632 = vsel %vm988, %v1627, %v1631
        %v1634 = vshrl.u32 %v1498, 16
        %v1636 = vrot.slane %v1634, 4
        %v1637 = vshll.u32 %v1498, 16
        %v1639 = vrot.slane %v1637, 5
        %v1640 = vor.u32 %v1636, %v1639
        %v1641 = vrot.slane %v1640, 4
        %v1643 = vshll.u32 %v1499, 16
        %v1645 = vrot.slane %v1643, 5
        %v1646 = vsel %vm988, %v1641, %v1645
        %v1647 = vshrl.u32 %v1499, 16
        %v1649 = vrot.slane %v1647, 4
        %v1650 = vor.u32 %v1649, %v1645
        %v1651 = vrot.slane %v1650, 4
        %v1653 = vshll.u32 %v1500, 16
        %v1655 = vrot.slane %v1653, 5
        %v1656 = vsel %vm988, %v1651, %v1655
        %v1658 = vshrl.u32 %v1501, 16
        %v1660 = vrot.slane %v1658, 4
        %v1661 = vshll.u32 %v1501, 16
        %v1663 = vrot.slane %v1661, 5
        %v1664 = vor.u32 %v1660, %v1663
        %v1665 = vrot.slane %v1664, 4
        %v1667 = vshll.u32 %v1502, 16
        %v1669 = vrot.slane %v1667, 5
        %v1670 = vsel %vm988, %v1665, %v1669
        %v1671 = vshrl.u32 %v1502, 16
        %v1673 = vrot.slane %v1671, 4
        %v1674 = vor.u32 %v1673, %v1669
        %v1675 = vrot.slane %v1674, 4
        %v1677 = vshll.u32 %v1503, 16
        %v1679 = vrot.slane %v1677, 5
        %v1680 = vsel %vm988, %v1675, %v1679
        %v1682 = vshrl.u32 %v1504, 16
        %v1684 = vrot.slane %v1682, 4
        %v1685 = vshll.u32 %v1504, 16
        %v1687 = vrot.slane %v1685, 5
        %v1688 = vor.u32 %v1684, %v1687
        %v1689 = vrot.slane %v1688, 4
        %v1691 = vshll.u32 %v1505, 16
        %v1693 = vrot.slane %v1691, 5
        %v1694 = vsel %vm988, %v1689, %v1693
        %v1695 = vshrl.u32 %v1505, 16
        %v1697 = vrot.slane %v1695, 4
        %v1698 = vor.u32 %v1697, %v1693
        %v1699 = vrot.slane %v1698, 4
        %v1701 = vshll.u32 %v1506, 16
        %v1703 = vrot.slane %v1701, 5
        %v1704 = vsel %vm988, %v1699, %v1703
        %v1706 = vshrl.u32 %v1507, 16
        %v1708 = vrot.slane %v1706, 4
        %v1709 = vshll.u32 %v1507, 16
        %v1711 = vrot.slane %v1709, 5
        %v1712 = vor.u32 %v1708, %v1711
        %v1713 = vrot.slane %v1712, 4
        %v1715 = vshll.u32 %v1508, 16
        %v1717 = vrot.slane %v1715, 5
        %v1718 = vsel %vm988, %v1713, %v1717
        %v1719 = vshrl.u32 %v1508, 16
        %v1721 = vrot.slane %v1719, 4
        %v1722 = vor.u32 %v1721, %v1717
        %v1723 = vrot.slane %v1722, 4
        %v1725 = vshll.u32 %v1509, 16
        %v1727 = vrot.slane %v1725, 5
        %v1728 = vsel %vm988, %v1723, %v1727
        %v1730 = vshrl.u32 %v1510, 16
        %v1732 = vrot.slane %v1730, 4
        %v1733 = vshll.u32 %v1510, 16
        %v1735 = vrot.slane %v1733, 5
        %v1736 = vor.u32 %v1732, %v1735
        %v1737 = vrot.slane %v1736, 4
        %v1739 = vshll.u32 %v1511, 16
        %v1741 = vrot.slane %v1739, 5
        %v1742 = vsel %vm988, %v1737, %v1741
        %v1743 = vshrl.u32 %v1511, 16
        %v1745 = vrot.slane %v1743, 4
        %v1746 = vor.u32 %v1745, %v1741
        %v1747 = vrot.slane %v1746, 4
        %v1749 = vshll.u32 %v1512, 16
        %v1751 = vrot.slane %v1749, 5
        %v1752 = vsel %vm988, %v1747, %v1751
        %1773 = vst [vmem:[#allocation4 + $0x10] sm:$0xf] %v1526
        %1774 = vst [vmem:[#allocation4 + $0x34] sm:$0xf] %v1536
        %1775 = vst [vmem:[#allocation4 + $0x58] sm:$0xf] %v1550
        %1776 = vst [vmem:[#allocation4 + $0x7c] sm:$0xf] %v1560
        %1777 = vst [vmem:[#allocation4 + $0xa0] sm:$0xf] %v1574
        %1778 = vst [vmem:[#allocation4 + $0xc4] sm:$0xf] %v1584
        %1779 = vst [vmem:[#allocation4 + $0xe8] sm:$0xf] %v1598
        %1780 = vst [vmem:[#allocation4 + $0x10c] sm:$0xf] %v1608
        %1781 = vst [vmem:[#allocation4 + $0x130] sm:$0xf] %v1622
        %1782 = vst [vmem:[#allocation4 + $0x154] sm:$0xf] %v1632
        %1783 = vst [vmem:[#allocation4 + $0x178] sm:$0xf] %v1646
        %1784 = vst [vmem:[#allocation4 + $0x19c] sm:$0xf] %v1656
        %1785 = vst [vmem:[#allocation4 + $0x1c0] sm:$0xf] %v1670
        %1786 = vst [vmem:[#allocation4 + $0x1e4] sm:$0xf] %v1680
        %1787 = vst [vmem:[#allocation4 + $0x208] sm:$0xf] %v1694
        %1788 = vst [vmem:[#allocation4 + $0x22c] sm:$0xf] %v1704
        %1789 = vst [vmem:[#allocation4 + $0x250] sm:$0xf] %v1718
        %1790 = vst [vmem:[#allocation4 + $0x274] sm:$0xf] %v1728
        %1791 = vst [vmem:[#allocation4 + $0x298] sm:$0xf] %v1742
        %1792 = vst [vmem:[#allocation4 + $0x2bc] sm:$0xf] %v1752
        %v1793 = vld [vmem:[%s1442] sm:$0xe]
        %v1794 = vld [vmem:[%s1442 + $0x4] sm:$0xf]
        %v1795 = vld [vmem:[%s1442 + $0x8] sm:$0x1]
        %v1796 = vld [vmem:[%s1442 + $0xc] sm:$0xe]
        %v1797 = vld [vmem:[%s1442 + $0x10] sm:$0xf]
        %v1798 = vld [vmem:[%s1442 + $0x14] sm:$0x1]
        %v1799 = vld [vmem:[%s1442 + $0x18] sm:$0xe]
        %v1800 = vld [vmem:[%s1442 + $0x1c] sm:$0xf]
        %v1801 = vld [vmem:[%s1442 + $0x20] sm:$0x1]
        %v1802 = vld [vmem:[%s1442 + $0x24] sm:$0xe]
        %v1803 = vld [vmem:[%s1442 + $0x28] sm:$0xf]
        %v1804 = vld [vmem:[%s1442 + $0x2c] sm:$0x1]
        %v1805 = vld [vmem:[%s1442 + $0x30] sm:$0xe]
        %v1806 = vld [vmem:[%s1442 + $0x34] sm:$0xf]
        %v1807 = vld [vmem:[%s1442 + $0x38] sm:$0x1]
        %v1808 = vld [vmem:[%s1442 + $0x3c] sm:$0xe]
        %v1809 = vld [vmem:[%s1442 + $0x40] sm:$0xf]
        %v1810 = vld [vmem:[%s1442 + $0x44] sm:$0x1]
        %v1811 = vld [vmem:[%s1442 + $0x48] sm:$0xe]
        %v1812 = vld [vmem:[%s1442 + $0x4c] sm:$0xf]
        %v1813 = vld [vmem:[%s1442 + $0x50] sm:$0x1]
        %v1814 = vld [vmem:[%s1442 + $0x54] sm:$0xe]
        %v1815 = vld [vmem:[%s1442 + $0x58] sm:$0xf]
        %v1816 = vld [vmem:[%s1442 + $0x5c] sm:$0x1]
        %v1817 = vld [vmem:[%s1442 + $0x60] sm:$0xe]
        %v1818 = vld [vmem:[%s1442 + $0x64] sm:$0xf]
        %v1819 = vld [vmem:[%s1442 + $0x68] sm:$0x1]
        %v1820 = vld [vmem:[%s1442 + $0x6c] sm:$0xe]
        %v1821 = vld [vmem:[%s1442 + $0x70] sm:$0xf]
        %v1822 = vld [vmem:[%s1442 + $0x74] sm:$0x1]
        %v1853 = vrot.slane %v1793, 5
        %v1854 = vrot.slane %v1853, 4
        %v1855 = vrot.slane %v1794, 5
        %v1856 = vsel %vm1331, %v1854, %v1855
        %v1857 = vrot.slane %v1855, 4
        %v1858 = vrot.slane %v1795, 5
        %v1859 = vsel %vm1331, %v1857, %v1858
        %v1860 = vrot.slane %v1796, 5
        %v1861 = vrot.slane %v1860, 4
        %v1862 = vrot.slane %v1797, 5
        %v1863 = vsel %vm1331, %v1861, %v1862
        %v1864 = vrot.slane %v1862, 4
        %v1865 = vrot.slane %v1798, 5
        %v1866 = vsel %vm1331, %v1864, %v1865
        %v1867 = vrot.slane %v1799, 5
        %v1868 = vrot.slane %v1867, 4
        %v1869 = vrot.slane %v1800, 5
        %v1870 = vsel %vm1331, %v1868, %v1869
        %v1871 = vrot.slane %v1869, 4
        %v1872 = vrot.slane %v1801, 5
        %v1873 = vsel %vm1331, %v1871, %v1872
        %v1874 = vrot.slane %v1802, 5
        %v1875 = vrot.slane %v1874, 4
        %v1876 = vrot.slane %v1803, 5
        %v1877 = vsel %vm1331, %v1875, %v1876
        %v1878 = vrot.slane %v1876, 4
        %v1879 = vrot.slane %v1804, 5
        %v1880 = vsel %vm1331, %v1878, %v1879
        %v1881 = vrot.slane %v1805, 5
        %v1882 = vrot.slane %v1881, 4
        %v1883 = vrot.slane %v1806, 5
        %v1884 = vsel %vm1331, %v1882, %v1883
        %v1885 = vrot.slane %v1883, 4
        %v1886 = vrot.slane %v1807, 5
        %v1887 = vsel %vm1331, %v1885, %v1886
        %v1888 = vrot.slane %v1808, 5
        %v1889 = vrot.slane %v1888, 4
        %v1890 = vrot.slane %v1809, 5
        %v1891 = vsel %vm1331, %v1889, %v1890
        %v1892 = vrot.slane %v1890, 4
        %v1893 = vrot.slane %v1810, 5
        %v1894 = vsel %vm1331, %v1892, %v1893
        %v1895 = vrot.slane %v1811, 5
        %v1896 = vrot.slane %v1895, 4
        %v1897 = vrot.slane %v1812, 5
        %v1898 = vsel %vm1331, %v1896, %v1897
        %v1899 = vrot.slane %v1897, 4
        %v1900 = vrot.slane %v1813, 5
        %v1901 = vsel %vm1331, %v1899, %v1900
        %v1902 = vrot.slane %v1814, 5
        %v1903 = vrot.slane %v1902, 4
        %v1904 = vrot.slane %v1815, 5
        %v1905 = vsel %vm1331, %v1903, %v1904
        %v1906 = vrot.slane %v1904, 4
        %v1907 = vrot.slane %v1816, 5
        %v1908 = vsel %vm1331, %v1906, %v1907
        %v1909 = vrot.slane %v1817, 5
        %v1910 = vrot.slane %v1909, 4
        %v1911 = vrot.slane %v1818, 5
        %v1912 = vsel %vm1331, %v1910, %v1911
        %v1913 = vrot.slane %v1911, 4
        %v1914 = vrot.slane %v1819, 5
        %v1915 = vsel %vm1331, %v1913, %v1914
        %v1916 = vrot.slane %v1820, 5
        %v1917 = vrot.slane %v1916, 4
        %v1918 = vrot.slane %v1821, 5
        %v1919 = vsel %vm1331, %v1917, %v1918
        %v1920 = vrot.slane %v1918, 4
        %v1921 = vrot.slane %v1822, 5
        %v1922 = vsel %vm1331, %v1920, %v1921
        %1943 = vst [vmem:[#allocation4 + $0x14] sm:$0xf] %v1856
        %1944 = vst [vmem:[#allocation4 + $0x38] sm:$0xf] %v1859
        %1945 = vst [vmem:[#allocation4 + $0x5c] sm:$0xf] %v1863
        %1946 = vst [vmem:[#allocation4 + $0x80] sm:$0xf] %v1866
        %1947 = vst [vmem:[#allocation4 + $0xa4] sm:$0xf] %v1870
        %1948 = vst [vmem:[#allocation4 + $0xc8] sm:$0xf] %v1873
        %1949 = vst [vmem:[#allocation4 + $0xec] sm:$0xf] %v1877
        %1950 = vst [vmem:[#allocation4 + $0x110] sm:$0xf] %v1880
        %1951 = vst [vmem:[#allocation4 + $0x134] sm:$0xf] %v1884
        %1952 = vst [vmem:[#allocation4 + $0x158] sm:$0xf] %v1887
        %1953 = vst [vmem:[#allocation4 + $0x17c] sm:$0xf] %v1891
        %1954 = vst [vmem:[#allocation4 + $0x1a0] sm:$0xf] %v1894
        %1955 = vst [vmem:[#allocation4 + $0x1c4] sm:$0xf] %v1898
        %1956 = vst [vmem:[#allocation4 + $0x1e8] sm:$0xf] %v1901
        %1957 = vst [vmem:[#allocation4 + $0x20c] sm:$0xf] %v1905
        %1958 = vst [vmem:[#allocation4 + $0x230] sm:$0xf] %v1908
        %1959 = vst [vmem:[#allocation4 + $0x254] sm:$0xf] %v1912
        %1960 = vst [vmem:[#allocation4 + $0x278] sm:$0xf] %v1915
        %1961 = vst [vmem:[#allocation4 + $0x29c] sm:$0xf] %v1919
        %1962 = vst [vmem:[#allocation4 + $0x2c0] sm:$0xf] %v1922
        %v1963 = vld [vmem:[%s859] sm:$0xf]
        %v1964 = vld [vmem:[%s859 + $0x4] sm:$0xf]
        %v1965 = vld [vmem:[%s859 + $0xc] sm:$0xf]
        %v1966 = vld [vmem:[%s859 + $0x10] sm:$0xf]
        %v1967 = vld [vmem:[%s859 + $0x18] sm:$0xf]
        %v1968 = vld [vmem:[%s859 + $0x1c] sm:$0xf]
        %v1969 = vld [vmem:[%s859 + $0x24] sm:$0xf]
        %v1970 = vld [vmem:[%s859 + $0x28] sm:$0xf]
        %v1971 = vld [vmem:[%s859 + $0x30] sm:$0xf]
        %v1972 = vld [vmem:[%s859 + $0x34] sm:$0xf]
        %v1973 = vld [vmem:[%s859 + $0x3c] sm:$0xf]
        %v1974 = vld [vmem:[%s859 + $0x40] sm:$0xf]
        %v1975 = vld [vmem:[%s859 + $0x48] sm:$0xf]
        %v1976 = vld [vmem:[%s859 + $0x4c] sm:$0xf]
        %v1977 = vld [vmem:[%s859 + $0x54] sm:$0xf]
        %v1978 = vld [vmem:[%s859 + $0x58] sm:$0xf]
        %v1979 = vld [vmem:[%s859 + $0x60] sm:$0xf]
        %v1980 = vld [vmem:[%s859 + $0x64] sm:$0xf]
        %v1981 = vld [vmem:[%s859 + $0x6c] sm:$0xf]
        %v1982 = vld [vmem:[%s859 + $0x70] sm:$0xf]
        %1983 = vst [vmem:[#allocation4 + $0x18] sm:$0xf] %v1963
        %1984 = vst [vmem:[#allocation4 + $0x3c] sm:$0xf] %v1964
        %1985 = vst [vmem:[#allocation4 + $0x60] sm:$0xf] %v1965
        %1986 = vst [vmem:[#allocation4 + $0x84] sm:$0xf] %v1966
        %1987 = vst [vmem:[#allocation4 + $0xa8] sm:$0xf] %v1967
        %1988 = vst [vmem:[#allocation4 + $0xcc] sm:$0xf] %v1968
        %1989 = vst [vmem:[#allocation4 + $0xf0] sm:$0xf] %v1969
        %1990 = vst [vmem:[#allocation4 + $0x114] sm:$0xf] %v1970
        %1991 = vst [vmem:[#allocation4 + $0x138] sm:$0xf] %v1971
        %1992 = vst [vmem:[#allocation4 + $0x15c] sm:$0xf] %v1972
        %1993 = vst [vmem:[#allocation4 + $0x180] sm:$0xf] %v1973
        %1994 = vst [vmem:[#allocation4 + $0x1a4] sm:$0xf] %v1974
        %1995 = vst [vmem:[#allocation4 + $0x1c8] sm:$0xf] %v1975
        %1996 = vst [vmem:[#allocation4 + $0x1ec] sm:$0xf] %v1976
        %1997 = vst [vmem:[#allocation4 + $0x210] sm:$0xf] %v1977
        %1998 = vst [vmem:[#allocation4 + $0x234] sm:$0xf] %v1978
        %1999 = vst [vmem:[#allocation4 + $0x258] sm:$0xf] %v1979
        %2000 = vst [vmem:[#allocation4 + $0x27c] sm:$0xf] %v1980
        %2001 = vst [vmem:[#allocation4 + $0x2a0] sm:$0xf] %v1981
        %2002 = vst [vmem:[#allocation4 + $0x2c4] sm:$0xf] %v1982
        %v2003 = vld [vmem:[%s859] sm:$0xf]
        %v2004 = vld [vmem:[%s859 + $0x4] sm:$0xf]
        %v2005 = vld [vmem:[%s859 + $0x8] sm:$0x1]
        %v2006 = vld [vmem:[%s859 + $0xc] sm:$0xf]
        %v2007 = vld [vmem:[%s859 + $0x10] sm:$0xf]
        %v2008 = vld [vmem:[%s859 + $0x14] sm:$0x1]
        %v2009 = vld [vmem:[%s859 + $0x18] sm:$0xf]
        %v2010 = vld [vmem:[%s859 + $0x1c] sm:$0xf]
        %v2011 = vld [vmem:[%s859 + $0x20] sm:$0x1]
        %v2012 = vld [vmem:[%s859 + $0x24] sm:$0xf]
        %v2013 = vld [vmem:[%s859 + $0x28] sm:$0xf]
        %v2014 = vld [vmem:[%s859 + $0x2c] sm:$0x1]
        %v2015 = vld [vmem:[%s859 + $0x30] sm:$0xf]
        %v2016 = vld [vmem:[%s859 + $0x34] sm:$0xf]
        %v2017 = vld [vmem:[%s859 + $0x38] sm:$0x1]
        %v2018 = vld [vmem:[%s859 + $0x3c] sm:$0xf]
        %v2019 = vld [vmem:[%s859 + $0x40] sm:$0xf]
        %v2020 = vld [vmem:[%s859 + $0x44] sm:$0x1]
        %v2021 = vld [vmem:[%s859 + $0x48] sm:$0xf]
        %v2022 = vld [vmem:[%s859 + $0x4c] sm:$0xf]
        %v2023 = vld [vmem:[%s859 + $0x50] sm:$0x1]
        %v2024 = vld [vmem:[%s859 + $0x54] sm:$0xf]
        %v2025 = vld [vmem:[%s859 + $0x58] sm:$0xf]
        %v2026 = vld [vmem:[%s859 + $0x5c] sm:$0x1]
        %v2027 = vld [vmem:[%s859 + $0x60] sm:$0xf]
        %v2028 = vld [vmem:[%s859 + $0x64] sm:$0xf]
        %v2029 = vld [vmem:[%s859 + $0x68] sm:$0x1]
        %v2030 = vld [vmem:[%s859 + $0x6c] sm:$0xf]
        %v2031 = vld [vmem:[%s859 + $0x70] sm:$0xf]
        %v2032 = vld [vmem:[%s859 + $0x74] sm:$0x1]
        %v2034 = vshrl.u32 %v2003, 16
        %v2036 = vrot.slane %v2034, 4
        %v2037 = vshll.u32 %v2003, 16
        %v2039 = vrot.slane %v2037, 5
        %v2040 = vor.u32 %v2036, %v2039
        %v2041 = vrot.slane %v2040, 4
        %v2043 = vshll.u32 %v2004, 16
        %v2045 = vrot.slane %v2043, 5
        %v2046 = vsel %vm988, %v2041, %v2045
        %v2047 = vshrl.u32 %v2004, 16
        %v2049 = vrot.slane %v2047, 4
        %v2050 = vor.u32 %v2049, %v2045
        %v2051 = vrot.slane %v2050, 4
        %v2053 = vshll.u32 %v2005, 16
        %v2055 = vrot.slane %v2053, 5
        %v2056 = vsel %vm988, %v2051, %v2055
        %v2058 = vshrl.u32 %v2006, 16
        %v2060 = vrot.slane %v2058, 4
        %v2061 = vshll.u32 %v2006, 16
        %v2063 = vrot.slane %v2061, 5
        %v2064 = vor.u32 %v2060, %v2063
        %v2065 = vrot.slane %v2064, 4
        %v2067 = vshll.u32 %v2007, 16
        %v2069 = vrot.slane %v2067, 5
        %v2070 = vsel %vm988, %v2065, %v2069
        %v2071 = vshrl.u32 %v2007, 16
        %v2073 = vrot.slane %v2071, 4
        %v2074 = vor.u32 %v2073, %v2069
        %v2075 = vrot.slane %v2074, 4
        %v2077 = vshll.u32 %v2008, 16
        %v2079 = vrot.slane %v2077, 5
        %v2080 = vsel %vm988, %v2075, %v2079
        %v2082 = vshrl.u32 %v2009, 16
        %v2084 = vrot.slane %v2082, 4
        %v2085 = vshll.u32 %v2009, 16
        %v2087 = vrot.slane %v2085, 5
        %v2088 = vor.u32 %v2084, %v2087
        %v2089 = vrot.slane %v2088, 4
        %v2091 = vshll.u32 %v2010, 16
        %v2093 = vrot.slane %v2091, 5
        %v2094 = vsel %vm988, %v2089, %v2093
        %v2095 = vshrl.u32 %v2010, 16
        %v2097 = vrot.slane %v2095, 4
        %v2098 = vor.u32 %v2097, %v2093
        %v2099 = vrot.slane %v2098, 4
        %v2101 = vshll.u32 %v2011, 16
        %v2103 = vrot.slane %v2101, 5
        %v2104 = vsel %vm988, %v2099, %v2103
        %v2106 = vshrl.u32 %v2012, 16
        %v2108 = vrot.slane %v2106, 4
        %v2109 = vshll.u32 %v2012, 16
        %v2111 = vrot.slane %v2109, 5
        %v2112 = vor.u32 %v2108, %v2111
        %v2113 = vrot.slane %v2112, 4
        %v2115 = vshll.u32 %v2013, 16
        %v2117 = vrot.slane %v2115, 5
        %v2118 = vsel %vm988, %v2113, %v2117
        %v2119 = vshrl.u32 %v2013, 16
        %v2121 = vrot.slane %v2119, 4
        %v2122 = vor.u32 %v2121, %v2117
        %v2123 = vrot.slane %v2122, 4
        %v2125 = vshll.u32 %v2014, 16
        %v2127 = vrot.slane %v2125, 5
        %v2128 = vsel %vm988, %v2123, %v2127
        %v2130 = vshrl.u32 %v2015, 16
        %v2132 = vrot.slane %v2130, 4
        %v2133 = vshll.u32 %v2015, 16
        %v2135 = vrot.slane %v2133, 5
        %v2136 = vor.u32 %v2132, %v2135
        %v2137 = vrot.slane %v2136, 4
        %v2139 = vshll.u32 %v2016, 16
        %v2141 = vrot.slane %v2139, 5
        %v2142 = vsel %vm988, %v2137, %v2141
        %v2143 = vshrl.u32 %v2016, 16
        %v2145 = vrot.slane %v2143, 4
        %v2146 = vor.u32 %v2145, %v2141
        %v2147 = vrot.slane %v2146, 4
        %v2149 = vshll.u32 %v2017, 16
        %v2151 = vrot.slane %v2149, 5
        %v2152 = vsel %vm988, %v2147, %v2151
        %v2154 = vshrl.u32 %v2018, 16
        %v2156 = vrot.slane %v2154, 4
        %v2157 = vshll.u32 %v2018, 16
        %v2159 = vrot.slane %v2157, 5
        %v2160 = vor.u32 %v2156, %v2159
        %v2161 = vrot.slane %v2160, 4
        %v2163 = vshll.u32 %v2019, 16
        %v2165 = vrot.slane %v2163, 5
        %v2166 = vsel %vm988, %v2161, %v2165
        %v2167 = vshrl.u32 %v2019, 16
        %v2169 = vrot.slane %v2167, 4
        %v2170 = vor.u32 %v2169, %v2165
        %v2171 = vrot.slane %v2170, 4
        %v2173 = vshll.u32 %v2020, 16
        %v2175 = vrot.slane %v2173, 5
        %v2176 = vsel %vm988, %v2171, %v2175
        %v2178 = vshrl.u32 %v2021, 16
        %v2180 = vrot.slane %v2178, 4
        %v2181 = vshll.u32 %v2021, 16
        %v2183 = vrot.slane %v2181, 5
        %v2184 = vor.u32 %v2180, %v2183
        %v2185 = vrot.slane %v2184, 4
        %v2187 = vshll.u32 %v2022, 16
        %v2189 = vrot.slane %v2187, 5
        %v2190 = vsel %vm988, %v2185, %v2189
        %v2191 = vshrl.u32 %v2022, 16
        %v2193 = vrot.slane %v2191, 4
        %v2194 = vor.u32 %v2193, %v2189
        %v2195 = vrot.slane %v2194, 4
        %v2197 = vshll.u32 %v2023, 16
        %v2199 = vrot.slane %v2197, 5
        %v2200 = vsel %vm988, %v2195, %v2199
        %v2202 = vshrl.u32 %v2024, 16
        %v2204 = vrot.slane %v2202, 4
        %v2205 = vshll.u32 %v2024, 16
        %v2207 = vrot.slane %v2205, 5
        %v2208 = vor.u32 %v2204, %v2207
        %v2209 = vrot.slane %v2208, 4
        %v2211 = vshll.u32 %v2025, 16
        %v2213 = vrot.slane %v2211, 5
        %v2214 = vsel %vm988, %v2209, %v2213
        %v2215 = vshrl.u32 %v2025, 16
        %v2217 = vrot.slane %v2215, 4
        %v2218 = vor.u32 %v2217, %v2213
        %v2219 = vrot.slane %v2218, 4
        %v2221 = vshll.u32 %v2026, 16
        %v2223 = vrot.slane %v2221, 5
        %v2224 = vsel %vm988, %v2219, %v2223
        %v2226 = vshrl.u32 %v2027, 16
        %v2228 = vrot.slane %v2226, 4
        %v2229 = vshll.u32 %v2027, 16
        %v2231 = vrot.slane %v2229, 5
        %v2232 = vor.u32 %v2228, %v2231
        %v2233 = vrot.slane %v2232, 4
        %v2235 = vshll.u32 %v2028, 16
        %v2237 = vrot.slane %v2235, 5
        %v2238 = vsel %vm988, %v2233, %v2237
        %v2239 = vshrl.u32 %v2028, 16
        %v2241 = vrot.slane %v2239, 4
        %v2242 = vor.u32 %v2241, %v2237
        %v2243 = vrot.slane %v2242, 4
        %v2245 = vshll.u32 %v2029, 16
        %v2247 = vrot.slane %v2245, 5
        %v2248 = vsel %vm988, %v2243, %v2247
        %v2250 = vshrl.u32 %v2030, 16
        %v2252 = vrot.slane %v2250, 4
        %v2253 = vshll.u32 %v2030, 16
        %v2255 = vrot.slane %v2253, 5
        %v2256 = vor.u32 %v2252, %v2255
        %v2257 = vrot.slane %v2256, 4
        %v2259 = vshll.u32 %v2031, 16
        %v2261 = vrot.slane %v2259, 5
        %v2262 = vsel %vm988, %v2257, %v2261
        %v2263 = vshrl.u32 %v2031, 16
        %v2265 = vrot.slane %v2263, 4
        %v2266 = vor.u32 %v2265, %v2261
        %v2267 = vrot.slane %v2266, 4
        %v2269 = vshll.u32 %v2032, 16
        %v2271 = vrot.slane %v2269, 5
        %v2272 = vsel %vm988, %v2267, %v2271
        %2293 = vst [vmem:[#allocation4 + $0x1c] sm:$0xf] %v2046
        %2294 = vst [vmem:[#allocation4 + $0x40] sm:$0xf] %v2056
        %2295 = vst [vmem:[#allocation4 + $0x64] sm:$0xf] %v2070
        %2296 = vst [vmem:[#allocation4 + $0x88] sm:$0xf] %v2080
        %2297 = vst [vmem:[#allocation4 + $0xac] sm:$0xf] %v2094
        %2298 = vst [vmem:[#allocation4 + $0xd0] sm:$0xf] %v2104
        %2299 = vst [vmem:[#allocation4 + $0xf4] sm:$0xf] %v2118
        %2300 = vst [vmem:[#allocation4 + $0x118] sm:$0xf] %v2128
        %2301 = vst [vmem:[#allocation4 + $0x13c] sm:$0xf] %v2142
        %2302 = vst [vmem:[#allocation4 + $0x160] sm:$0xf] %v2152
        %2303 = vst [vmem:[#allocation4 + $0x184] sm:$0xf] %v2166
        %2304 = vst [vmem:[#allocation4 + $0x1a8] sm:$0xf] %v2176
        %2305 = vst [vmem:[#allocation4 + $0x1cc] sm:$0xf] %v2190
        %2306 = vst [vmem:[#allocation4 + $0x1f0] sm:$0xf] %v2200
        %2307 = vst [vmem:[#allocation4 + $0x214] sm:$0xf] %v2214
        %2308 = vst [vmem:[#allocation4 + $0x238] sm:$0xf] %v2224
        %2309 = vst [vmem:[#allocation4 + $0x25c] sm:$0xf] %v2238
        %2310 = vst [vmem:[#allocation4 + $0x280] sm:$0xf] %v2248
        %2311 = vst [vmem:[#allocation4 + $0x2a4] sm:$0xf] %v2262
        %2312 = vst [vmem:[#allocation4 + $0x2c8] sm:$0xf] %v2272
        %v2313 = vld [vmem:[%s859] sm:$0xe]
        %v2314 = vld [vmem:[%s859 + $0x4] sm:$0xf]
        %v2315 = vld [vmem:[%s859 + $0x8] sm:$0x1]
        %v2316 = vld [vmem:[%s859 + $0xc] sm:$0xe]
        %v2317 = vld [vmem:[%s859 + $0x10] sm:$0xf]
        %v2318 = vld [vmem:[%s859 + $0x14] sm:$0x1]
        %v2319 = vld [vmem:[%s859 + $0x18] sm:$0xe]
        %v2320 = vld [vmem:[%s859 + $0x1c] sm:$0xf]
        %v2321 = vld [vmem:[%s859 + $0x20] sm:$0x1]
        %v2322 = vld [vmem:[%s859 + $0x24] sm:$0xe]
        %v2323 = vld [vmem:[%s859 + $0x28] sm:$0xf]
        %v2324 = vld [vmem:[%s859 + $0x2c] sm:$0x1]
        %v2325 = vld [vmem:[%s859 + $0x30] sm:$0xe]
        %v2326 = vld [vmem:[%s859 + $0x34] sm:$0xf]
        %v2327 = vld [vmem:[%s859 + $0x38] sm:$0x1]
        %v2328 = vld [vmem:[%s859 + $0x3c] sm:$0xe]
        %v2329 = vld [vmem:[%s859 + $0x40] sm:$0xf]
        %v2330 = vld [vmem:[%s859 + $0x44] sm:$0x1]
        %v2331 = vld [vmem:[%s859 + $0x48] sm:$0xe]
        %v2332 = vld [vmem:[%s859 + $0x4c] sm:$0xf]
        %v2333 = vld [vmem:[%s859 + $0x50] sm:$0x1]
        %v2334 = vld [vmem:[%s859 + $0x54] sm:$0xe]
        %v2335 = vld [vmem:[%s859 + $0x58] sm:$0xf]
        %v2336 = vld [vmem:[%s859 + $0x5c] sm:$0x1]
        %v2337 = vld [vmem:[%s859 + $0x60] sm:$0xe]
        %v2338 = vld [vmem:[%s859 + $0x64] sm:$0xf]
        %v2339 = vld [vmem:[%s859 + $0x68] sm:$0x1]
        %v2340 = vld [vmem:[%s859 + $0x6c] sm:$0xe]
        %v2341 = vld [vmem:[%s859 + $0x70] sm:$0xf]
        %v2342 = vld [vmem:[%s859 + $0x74] sm:$0x1]
        %v2373 = vrot.slane %v2313, 5
        %v2374 = vrot.slane %v2373, 4
        %v2375 = vrot.slane %v2314, 5
        %v2376 = vsel %vm1331, %v2374, %v2375
        %v2377 = vrot.slane %v2375, 4
        %v2378 = vrot.slane %v2315, 5
        %v2379 = vsel %vm1331, %v2377, %v2378
        %v2380 = vrot.slane %v2316, 5
        %v2381 = vrot.slane %v2380, 4
        %v2382 = vrot.slane %v2317, 5
        %v2383 = vsel %vm1331, %v2381, %v2382
        %v2384 = vrot.slane %v2382, 4
        %v2385 = vrot.slane %v2318, 5
        %v2386 = vsel %vm1331, %v2384, %v2385
        %v2387 = vrot.slane %v2319, 5
        %v2388 = vrot.slane %v2387, 4
        %v2389 = vrot.slane %v2320, 5
        %v2390 = vsel %vm1331, %v2388, %v2389
        %v2391 = vrot.slane %v2389, 4
        %v2392 = vrot.slane %v2321, 5
        %v2393 = vsel %vm1331, %v2391, %v2392
        %v2394 = vrot.slane %v2322, 5
        %v2395 = vrot.slane %v2394, 4
        %v2396 = vrot.slane %v2323, 5
        %v2397 = vsel %vm1331, %v2395, %v2396
        %v2398 = vrot.slane %v2396, 4
        %v2399 = vrot.slane %v2324, 5
        %v2400 = vsel %vm1331, %v2398, %v2399
        %v2401 = vrot.slane %v2325, 5
        %v2402 = vrot.slane %v2401, 4
        %v2403 = vrot.slane %v2326, 5
        %v2404 = vsel %vm1331, %v2402, %v2403
        %v2405 = vrot.slane %v2403, 4
        %v2406 = vrot.slane %v2327, 5
        %v2407 = vsel %vm1331, %v2405, %v2406
        %v2408 = vrot.slane %v2328, 5
        %v2409 = vrot.slane %v2408, 4
        %v2410 = vrot.slane %v2329, 5
        %v2411 = vsel %vm1331, %v2409, %v2410
        %v2412 = vrot.slane %v2410, 4
        %v2413 = vrot.slane %v2330, 5
        %v2414 = vsel %vm1331, %v2412, %v2413
        %v2415 = vrot.slane %v2331, 5
        %v2416 = vrot.slane %v2415, 4
        %v2417 = vrot.slane %v2332, 5
        %v2418 = vsel %vm1331, %v2416, %v2417
        %v2419 = vrot.slane %v2417, 4
        %v2420 = vrot.slane %v2333, 5
        %v2421 = vsel %vm1331, %v2419, %v2420
        %v2422 = vrot.slane %v2334, 5
        %v2423 = vrot.slane %v2422, 4
        %v2424 = vrot.slane %v2335, 5
        %v2425 = vsel %vm1331, %v2423, %v2424
        %v2426 = vrot.slane %v2424, 4
        %v2427 = vrot.slane %v2336, 5
        %v2428 = vsel %vm1331, %v2426, %v2427
        %v2429 = vrot.slane %v2337, 5
        %v2430 = vrot.slane %v2429, 4
        %v2431 = vrot.slane %v2338, 5
        %v2432 = vsel %vm1331, %v2430, %v2431
        %v2433 = vrot.slane %v2431, 4
        %v2434 = vrot.slane %v2339, 5
        %v2435 = vsel %vm1331, %v2433, %v2434
        %v2436 = vrot.slane %v2340, 5
        %v2437 = vrot.slane %v2436, 4
        %v2438 = vrot.slane %v2341, 5
        %v2439 = vsel %vm1331, %v2437, %v2438
        %v2440 = vrot.slane %v2438, 4
        %v2441 = vrot.slane %v2342, 5
        %v2442 = vsel %vm1331, %v2440, %v2441
        %2463 = vst [vmem:[#allocation4 + $0x20] sm:$0xf] %v2376
        %2464 = vst [vmem:[#allocation4 + $0x44] sm:$0xf] %v2379
        %2465 = vst [vmem:[#allocation4 + $0x68] sm:$0xf] %v2383
        %2466 = vst [vmem:[#allocation4 + $0x8c] sm:$0xf] %v2386
        %2467 = vst [vmem:[#allocation4 + $0xb0] sm:$0xf] %v2390
        %2468 = vst [vmem:[#allocation4 + $0xd4] sm:$0xf] %v2393
        %2469 = vst [vmem:[#allocation4 + $0xf8] sm:$0xf] %v2397
        %2470 = vst [vmem:[#allocation4 + $0x11c] sm:$0xf] %v2400
        %2471 = vst [vmem:[#allocation4 + $0x140] sm:$0xf] %v2404
        %2472 = vst [vmem:[#allocation4 + $0x164] sm:$0xf] %v2407
        %2473 = vst [vmem:[#allocation4 + $0x188] sm:$0xf] %v2411
        %2474 = vst [vmem:[#allocation4 + $0x1ac] sm:$0xf] %v2414
        %2475 = vst [vmem:[#allocation4 + $0x1d0] sm:$0xf] %v2418
        %2476 = vst [vmem:[#allocation4 + $0x1f4] sm:$0xf] %v2421
        %2477 = vst [vmem:[#allocation4 + $0x218] sm:$0xf] %v2425
        %2478 = vst [vmem:[#allocation4 + $0x23c] sm:$0xf] %v2428
        %2479 = vst [vmem:[#allocation4 + $0x260] sm:$0xf] %v2432
        %2480 = vst [vmem:[#allocation4 + $0x284] sm:$0xf] %v2435
        %2481 = vst [vmem:[#allocation4 + $0x2a8] sm:$0xf] %v2439
        %2482 = vst [vmem:[#allocation4 + $0x2cc] sm:$0xf] %v2442
        %v2483 = vld [vmem:[#allocation4] sm:$0xff]
        %v2484 = vld [vmem:[#allocation4 + $0x8] sm:$0xff]
        %v2485 = vld [vmem:[#allocation4 + $0x10] sm:$0xff]
        %v2486 = vld [vmem:[#allocation4 + $0x18] sm:$0xff]
        %v2487 = vld [vmem:[#allocation4 + $0x20] sm:$0xf]
        %v2488 = vld [vmem:[#allocation4 + $0x24] sm:$0xff]
        %v2489 = vld [vmem:[#allocation4 + $0x2c] sm:$0xff]
        %v2490 = vld [vmem:[#allocation4 + $0x34] sm:$0xff]
        %v2491 = vld [vmem:[#allocation4 + $0x3c] sm:$0xff]
        %v2492 = vld [vmem:[#allocation4 + $0x44] sm:$0xf]
        %v2493 = vld [vmem:[#allocation4 + $0x48] sm:$0xff]
        %v2494 = vld [vmem:[#allocation4 + $0x50] sm:$0xff]
        %v2495 = vld [vmem:[#allocation4 + $0x58] sm:$0xff]
        %v2496 = vld [vmem:[#allocation4 + $0x60] sm:$0xff]
        %v2497 = vld [vmem:[#allocation4 + $0x68] sm:$0xf]
        %v2498 = vld [vmem:[#allocation4 + $0x6c] sm:$0xff]
        %v2499 = vld [vmem:[#allocation4 + $0x74] sm:$0xff]
        %v2500 = vld [vmem:[#allocation4 + $0x7c] sm:$0xff]
        %v2501 = vld [vmem:[#allocation4 + $0x84] sm:$0xff]
        %v2502 = vld [vmem:[#allocation4 + $0x8c] sm:$0xf]
        %v2503 = vld [vmem:[#allocation4 + $0x90] sm:$0xff]
        %v2504 = vld [vmem:[#allocation4 + $0x98] sm:$0xff]
        %v2505 = vld [vmem:[#allocation4 + $0xa0] sm:$0xff]
        %v2506 = vld [vmem:[#allocation4 + $0xa8] sm:$0xff]
        %v2507 = vld [vmem:[#allocation4 + $0xb0] sm:$0xf]
        %v2508 = vld [vmem:[#allocation4 + $0xb4] sm:$0xff]
        %v2509 = vld [vmem:[#allocation4 + $0xbc] sm:$0xff]
        %v2510 = vld [vmem:[#allocation4 + $0xc4] sm:$0xff]
        %v2511 = vld [vmem:[#allocation4 + $0xcc] sm:$0xff]
        %v2512 = vld [vmem:[#allocation4 + $0xd4] sm:$0xf]
        %v2513 = vld [vmem:[#allocation4 + $0xd8] sm:$0xff]
        %v2514 = vld [vmem:[#allocation4 + $0xe0] sm:$0xff]
        %v2515 = vld [vmem:[#allocation4 + $0xe8] sm:$0xff]
        %v2516 = vld [vmem:[#allocation4 + $0xf0] sm:$0xff]
        %v2517 = vld [vmem:[#allocation4 + $0xf8] sm:$0xf]
        %v2518 = vld [vmem:[#allocation4 + $0xfc] sm:$0xff]
        %v2519 = vld [vmem:[#allocation4 + $0x104] sm:$0xff]
        %v2520 = vld [vmem:[#allocation4 + $0x10c] sm:$0xff]
        %v2521 = vld [vmem:[#allocation4 + $0x114] sm:$0xff]
        %v2522 = vld [vmem:[#allocation4 + $0x11c] sm:$0xf]
        %v2523 = vld [vmem:[#allocation4 + $0x120] sm:$0xff]
        %v2524 = vld [vmem:[#allocation4 + $0x128] sm:$0xff]
        %v2525 = vld [vmem:[#allocation4 + $0x130] sm:$0xff]
        %v2526 = vld [vmem:[#allocation4 + $0x138] sm:$0xff]
        %v2527 = vld [vmem:[#allocation4 + $0x140] sm:$0xf]
        %v2528 = vld [vmem:[#allocation4 + $0x144] sm:$0xff]
        %v2529 = vld [vmem:[#allocation4 + $0x14c] sm:$0xff]
        %v2530 = vld [vmem:[#allocation4 + $0x154] sm:$0xff]
        %v2531 = vld [vmem:[#allocation4 + $0x15c] sm:$0xff]
        %v2532 = vld [vmem:[#allocation4 + $0x164] sm:$0xf]
        %v2533 = vld [vmem:[#allocation4 + $0x168] sm:$0xff]
        %v2534 = vld [vmem:[#allocation4 + $0x170] sm:$0xff]
        %v2535 = vld [vmem:[#allocation4 + $0x178] sm:$0xff]
        %v2536 = vld [vmem:[#allocation4 + $0x180] sm:$0xff]
        %v2537 = vld [vmem:[#allocation4 + $0x188] sm:$0xf]
        %v2538 = vld [vmem:[#allocation4 + $0x18c] sm:$0xff]
        %v2539 = vld [vmem:[#allocation4 + $0x194] sm:$0xff]
        %v2540 = vld [vmem:[#allocation4 + $0x19c] sm:$0xff]
        %v2541 = vld [vmem:[#allocation4 + $0x1a4] sm:$0xff]
        %v2542 = vld [vmem:[#allocation4 + $0x1ac] sm:$0xf]
        %v2543 = vld [vmem:[#allocation4 + $0x1b0] sm:$0xff]
        %v2544 = vld [vmem:[#allocation4 + $0x1b8] sm:$0xff]
        %v2545 = vld [vmem:[#allocation4 + $0x1c0] sm:$0xff]
        %v2546 = vld [vmem:[#allocation4 + $0x1c8] sm:$0xff]
        %v2547 = vld [vmem:[#allocation4 + $0x1d0] sm:$0xf]
        %v2548 = vld [vmem:[#allocation4 + $0x1d4] sm:$0xff]
        %v2549 = vld [vmem:[#allocation4 + $0x1dc] sm:$0xff]
        %v2550 = vld [vmem:[#allocation4 + $0x1e4] sm:$0xff]
        %v2551 = vld [vmem:[#allocation4 + $0x1ec] sm:$0xff]
        %v2552 = vld [vmem:[#allocation4 + $0x1f4] sm:$0xf]
        %v2553 = vld [vmem:[#allocation4 + $0x1f8] sm:$0xff]
        %v2554 = vld [vmem:[#allocation4 + $0x200] sm:$0xff]
        %v2555 = vld [vmem:[#allocation4 + $0x208] sm:$0xff]
        %v2556 = vld [vmem:[#allocation4 + $0x210] sm:$0xff]
        %v2557 = vld [vmem:[#allocation4 + $0x218] sm:$0xf]
        %v2558 = vld [vmem:[#allocation4 + $0x21c] sm:$0xff]
        %v2559 = vld [vmem:[#allocation4 + $0x224] sm:$0xff]
        %v2560 = vld [vmem:[#allocation4 + $0x22c] sm:$0xff]
        %v2561 = vld [vmem:[#allocation4 + $0x234] sm:$0xff]
        %v2562 = vld [vmem:[#allocation4 + $0x23c] sm:$0xf]
        %v2563 = vld [vmem:[#allocation4 + $0x240] sm:$0xff]
        %v2564 = vld [vmem:[#allocation4 + $0x248] sm:$0xff]
        %v2565 = vld [vmem:[#allocation4 + $0x250] sm:$0xff]
        %v2566 = vld [vmem:[#allocation4 + $0x258] sm:$0xff]
        %v2567 = vld [vmem:[#allocation4 + $0x260] sm:$0xf]
        %v2568 = vld [vmem:[#allocation4 + $0x264] sm:$0xff]
        %v2569 = vld [vmem:[#allocation4 + $0x26c] sm:$0xff]
        %v2570 = vld [vmem:[#allocation4 + $0x274] sm:$0xff]
        %v2571 = vld [vmem:[#allocation4 + $0x27c] sm:$0xff]
        %v2572 = vld [vmem:[#allocation4 + $0x284] sm:$0xf]
        %v2573 = vld [vmem:[#allocation4 + $0x288] sm:$0xff]
        %v2574 = vld [vmem:[#allocation4 + $0x290] sm:$0xff]
        %v2575 = vld [vmem:[#allocation4 + $0x298] sm:$0xff]
        %v2576 = vld [vmem:[#allocation4 + $0x2a0] sm:$0xff]
        %v2577 = vld [vmem:[#allocation4 + $0x2a8] sm:$0xf]
        %v2578 = vld [vmem:[#allocation4 + $0x2ac] sm:$0xff]
        %v2579 = vld [vmem:[#allocation4 + $0x2b4] sm:$0xff]
        %v2580 = vld [vmem:[#allocation4 + $0x2bc] sm:$0xff]
        %v2581 = vld [vmem:[#allocation4 + $0x2c4] sm:$0xff]
        %v2582 = vld [vmem:[#allocation4 + $0x2cc] sm:$0xf]
        %v2583 = vld [vmem:[#allocation11] sm:$0xf]
        %v2584 = vld [vmem:[#allocation11 + $0x4] sm:$0xf]
        %v2585 = vld [vmem:[#allocation11 + $0x8] sm:$0xf]
        %v2586 = vld [vmem:[#allocation11 + $0xc] sm:$0xf]
        %v2587 = vld [vmem:[#allocation11 + $0x10] sm:$0xf]
        %v2588 = vld [vmem:[#allocation11 + $0x14] sm:$0xf]
        %v2589 = vld [vmem:[#allocation11 + $0x18] sm:$0xf]
        %v2590 = vld [vmem:[#allocation11 + $0x1c] sm:$0xf]
        %v2591 = vld [vmem:[#allocation11 + $0x20] sm:$0xf]
        %v2592 = vld [vmem:[#allocation11 + $0x24] sm:$0xf]
        %v2593 = vld [vmem:[#allocation11 + $0x28] sm:$0xf]
        %v2594 = vld [vmem:[#allocation11 + $0x2c] sm:$0xf]
        %v2595 = vld [vmem:[#allocation11 + $0x30] sm:$0xf]
        %v2596 = vld [vmem:[#allocation11 + $0x34] sm:$0xf]
        %v2597 = vld [vmem:[#allocation11 + $0x38] sm:$0xf]
        %v2598 = vld [vmem:[#allocation11 + $0x3c] sm:$0xf]
        %v2599 = vld [vmem:[#allocation11 + $0x40] sm:$0xf]
        %v2600 = vld [vmem:[#allocation11 + $0x44] sm:$0xf]
        %v2601 = vld [vmem:[#allocation11 + $0x48] sm:$0xf]
        %v2602 = vld [vmem:[#allocation11 + $0x4c] sm:$0xf]
        %v2603 = vld [vmem:[#allocation11 + $0x50] sm:$0xf]
        %v2604 = vld [vmem:[#allocation11 + $0x54] sm:$0xf]
        %v2605 = vld [vmem:[#allocation11 + $0x58] sm:$0xf]
        %v2606 = vld [vmem:[#allocation11 + $0x5c] sm:$0xf]
        %v2607 = vld [vmem:[#allocation11 + $0x60] sm:$0xf]
        %v2608 = vld [vmem:[#allocation11 + $0x64] sm:$0xf]
        %v2609 = vld [vmem:[#allocation11 + $0x68] sm:$0xf]
        %v2610 = vld [vmem:[#allocation11 + $0x6c] sm:$0xf]
        %v2611 = vld [vmem:[#allocation11 + $0x70] sm:$0xf]
        %v2612 = vld [vmem:[#allocation11 + $0x74] sm:$0xf]
        %v2613 = vld [vmem:[#allocation11 + $0x78] sm:$0xf]
        %v2614 = vld [vmem:[#allocation11 + $0x7c] sm:$0xf]
        %v2615 = vld [vmem:[#allocation11 + $0x80] sm:$0xf]
        %v2616 = vld [vmem:[#allocation11 + $0x84] sm:$0xf]
        %v2617 = vld [vmem:[#allocation11 + $0x88] sm:$0xf]
        %v2618 = vld [vmem:[#allocation11 + $0x8c] sm:$0xf]
        %v2619 = vld [vmem:[#allocation11 + $0x90] sm:$0xf]
        %v2620 = vld [vmem:[#allocation11 + $0x94] sm:$0xf]
        %v2621 = vld [vmem:[#allocation11 + $0x98] sm:$0xf]
        %v2622 = vld [vmem:[#allocation11 + $0x9c] sm:$0xf]
        %v2623 = vld [vmem:[#allocation11 + $0xa0] sm:$0xf]
        %v2624 = vld [vmem:[#allocation11 + $0xa4] sm:$0xf]
        %v2625 = vld [vmem:[#allocation11 + $0xa8] sm:$0xf]
        %v2626 = vld [vmem:[#allocation11 + $0xac] sm:$0xf]
        %v2627 = vld [vmem:[#allocation11 + $0xb0] sm:$0xf]
        %v2628 = vld [vmem:[#allocation11 + $0xb4] sm:$0xf]
        %v2629 = vld [vmem:[#allocation11 + $0xb8] sm:$0xf]
        %v2630 = vld [vmem:[#allocation11 + $0xbc] sm:$0xf]
        %v2631 = vld [vmem:[#allocation11 + $0xc0] sm:$0xf]
        %v2632 = vld [vmem:[#allocation11 + $0xc4] sm:$0xf]
        %v2633 = vld [vmem:[#allocation11 + $0xc8] sm:$0xf]
        %v2634 = vld [vmem:[#allocation11 + $0xcc] sm:$0xf]
        %v2635 = vld [vmem:[#allocation11 + $0xd0] sm:$0xf]
        %v2636 = vld [vmem:[#allocation11 + $0xd4] sm:$0xf]
        %v2637 = vld [vmem:[#allocation11 + $0xd8] sm:$0xf]
        %v2638 = vld [vmem:[#allocation11 + $0xdc] sm:$0xf]
        %v2639 = vld [vmem:[#allocation11 + $0xe0] sm:$0xf]
        %v2640 = vld [vmem:[#allocation11 + $0xe4] sm:$0xf]
        %v2641 = vld [vmem:[#allocation11 + $0xe8] sm:$0xf]
        %v2642 = vld [vmem:[#allocation11 + $0xec] sm:$0xf]
        %v2643 = vld [vmem:[#allocation11 + $0xf0] sm:$0xf]
        %v2644 = vld [vmem:[#allocation11 + $0xf4] sm:$0xf]
        %v2645 = vld [vmem:[#allocation11 + $0xf8] sm:$0xf]
        %v2646 = vld [vmem:[#allocation11 + $0xfc] sm:$0xf]
        %v2647 = vld [vmem:[#allocation11 + $0x100] sm:$0xf]
        %v2648 = vld [vmem:[#allocation11 + $0x104] sm:$0xf]
        %v2649 = vld [vmem:[#allocation11 + $0x108] sm:$0xf]
        %v2650 = vld [vmem:[#allocation11 + $0x10c] sm:$0xf]
        %v2651 = vld [vmem:[#allocation11 + $0x110] sm:$0xf]
        %v2652 = vld [vmem:[#allocation11 + $0x114] sm:$0xf]
        %v2653 = vld [vmem:[#allocation11 + $0x118] sm:$0xf]
        %v2654 = vld [vmem:[#allocation11 + $0x11c] sm:$0xf]
        %v2655 = vld [vmem:[#allocation11 + $0x120] sm:$0xf]
        %v2656 = vld [vmem:[#allocation11 + $0x124] sm:$0xf]
        %v2657 = vld [vmem:[#allocation11 + $0x128] sm:$0xf]
        %v2658 = vld [vmem:[#allocation11 + $0x12c] sm:$0xf]
        %v2659 = vld [vmem:[#allocation11 + $0x130] sm:$0xf]
        %v2660 = vld [vmem:[#allocation11 + $0x134] sm:$0xf]
        %v2661 = vld [vmem:[#allocation11 + $0x138] sm:$0xf]
        %v2662 = vld [vmem:[#allocation11 + $0x13c] sm:$0xf]
        %v2663 = vld [vmem:[#allocation11 + $0x140] sm:$0xf]
        %v2664 = vld [vmem:[#allocation11 + $0x144] sm:$0xf]
        %v2665 = vld [vmem:[#allocation11 + $0x148] sm:$0xf]
        %v2666 = vld [vmem:[#allocation11 + $0x14c] sm:$0xf]
        %v2667 = vld [vmem:[#allocation11 + $0x150] sm:$0xf]
        %v2668 = vld [vmem:[#allocation11 + $0x154] sm:$0xf]
        %v2669 = vld [vmem:[#allocation11 + $0x158] sm:$0xf]
        %v2670 = vld [vmem:[#allocation11 + $0x15c] sm:$0xf]
        %v2671 = vld [vmem:[#allocation11 + $0x160] sm:$0xf]
        %v2672 = vld [vmem:[#allocation11 + $0x164] sm:$0xf]
        %v2673 = vld [vmem:[#allocation11 + $0x168] sm:$0xf]
        %v2674 = vld [vmem:[#allocation11 + $0x16c] sm:$0xf]
        %v2675 = vld [vmem:[#allocation11 + $0x170] sm:$0xf]
        %v2676 = vld [vmem:[#allocation11 + $0x174] sm:$0xf]
        %v2677 = vld [vmem:[#allocation11 + $0x178] sm:$0xf]
        %v2678 = vld [vmem:[#allocation11 + $0x17c] sm:$0xf]
        %v2679 = vld [vmem:[#allocation11 + $0x180] sm:$0xf]
        %v2680 = vld [vmem:[#allocation11 + $0x184] sm:$0xf]
        %v2681 = vld [vmem:[#allocation11 + $0x188] sm:$0xf]
        %v2682 = vld [vmem:[#allocation11 + $0x18c] sm:$0xf]
        %v2683 = vld [vmem:[#allocation11 + $0x190] sm:$0xf]
        %v2684 = vld [vmem:[#allocation11 + $0x194] sm:$0xf]
        %v2685 = vld [vmem:[#allocation11 + $0x198] sm:$0xf]
        %v2686 = vld [vmem:[#allocation11 + $0x19c] sm:$0xf]
        %v2687 = vld [vmem:[#allocation11 + $0x1a0] sm:$0xf]
        %v2688 = vld [vmem:[#allocation11 + $0x1a4] sm:$0xf]
        %v2689 = vld [vmem:[#allocation11 + $0x1a8] sm:$0xf]
        %v2690 = vld [vmem:[#allocation11 + $0x1ac] sm:$0xf]
        %v2691 = vld [vmem:[#allocation11 + $0x1b0] sm:$0xf]
        %v2692 = vld [vmem:[#allocation11 + $0x1b4] sm:$0xf]
        %v2693 = vld [vmem:[#allocation11 + $0x1b8] sm:$0xf]
        %v2694 = vld [vmem:[#allocation11 + $0x1bc] sm:$0xf]
        %v2695 = vld [vmem:[#allocation11 + $0x1c0] sm:$0xf]
        %v2696 = vld [vmem:[#allocation11 + $0x1c4] sm:$0xf]
        %v2697 = vld [vmem:[#allocation11 + $0x1c8] sm:$0xf]
        %v2698 = vld [vmem:[#allocation11 + $0x1cc] sm:$0xf]
        %v2699 = vld [vmem:[#allocation11 + $0x1d0] sm:$0xf]
        %v2700 = vld [vmem:[#allocation11 + $0x1d4] sm:$0xf]
        %v2701 = vld [vmem:[#allocation11 + $0x1d8] sm:$0xf]
        %v2702 = vld [vmem:[#allocation11 + $0x1dc] sm:$0xf]
        %v2703 = vld [vmem:[#allocation11 + $0x1e0] sm:$0xf]
        %v2704 = vld [vmem:[#allocation11 + $0x1e4] sm:$0xf]
        %v2705 = vld [vmem:[#allocation11 + $0x1e8] sm:$0xf]
        %v2706 = vld [vmem:[#allocation11 + $0x1ec] sm:$0xf]
        %v2707 = vld [vmem:[#allocation11 + $0x1f0] sm:$0xf]
        %v2708 = vld [vmem:[#allocation11 + $0x1f4] sm:$0xf]
        %v2709 = vld [vmem:[#allocation11 + $0x1f8] sm:$0xf]
        %v2710 = vld [vmem:[#allocation11 + $0x1fc] sm:$0xf]
        %v2711 = vld [vmem:[#allocation11 + $0x200] sm:$0xf]
        %v2712 = vld [vmem:[#allocation11 + $0x204] sm:$0xf]
        %v2713 = vld [vmem:[#allocation11 + $0x208] sm:$0xf]
        %v2714 = vld [vmem:[#allocation11 + $0x20c] sm:$0xf]
        %v2715 = vld [vmem:[#allocation11 + $0x210] sm:$0xf]
        %v2716 = vld [vmem:[#allocation11 + $0x214] sm:$0xf]
        %v2717 = vld [vmem:[#allocation11 + $0x218] sm:$0xf]
        %v2718 = vld [vmem:[#allocation11 + $0x21c] sm:$0xf]
        %v2719 = vld [vmem:[#allocation11 + $0x220] sm:$0xf]
        %v2720 = vld [vmem:[#allocation11 + $0x224] sm:$0xf]
        %v2721 = vld [vmem:[#allocation11 + $0x228] sm:$0xf]
        %v2722 = vld [vmem:[#allocation11 + $0x22c] sm:$0xf]
        %v2723 = vld [vmem:[#allocation11 + $0x230] sm:$0xf]
        %v2724 = vld [vmem:[#allocation11 + $0x234] sm:$0xf]
        %v2725 = vld [vmem:[#allocation11 + $0x238] sm:$0xf]
        %v2726 = vld [vmem:[#allocation11 + $0x23c] sm:$0xf]
        %v2727 = vld [vmem:[%s4] sm:$0x1]
        %v2729 = vlaneseq
        %v2730 = vshrl.u32 %v2729, 7
        %v2731 = vsub.s32 0, %v2730
        %v2732 = vrot.slane %v2727, %v2731
        %v2834 = vunpack.c.l.b16 %v2483
        %v2835 = vunpack.c.h.b16 %v2483
        %v2836 = vunpack.c.l.b16 %v2484
        %v2837 = vunpack.c.h.b16 %v2484
        %v2838 = vunpack.c.l.b16 %v2485
        %v2839 = vunpack.c.h.b16 %v2485
        %v2840 = vunpack.c.l.b16 %v2486
        %v2841 = vunpack.c.h.b16 %v2486
        %v2842 = vunpack.c.l.b16 %v2487
        %v2843 = vunpack.c.l.b16 %v2488
        %v2844 = vunpack.c.h.b16 %v2488
        %v2845 = vunpack.c.l.b16 %v2489
        %v2846 = vunpack.c.h.b16 %v2489
        %v2847 = vunpack.c.l.b16 %v2490
        %v2848 = vunpack.c.h.b16 %v2490
        %v2849 = vunpack.c.l.b16 %v2491
        %v2850 = vunpack.c.h.b16 %v2491
        %v2851 = vunpack.c.l.b16 %v2492
        %v2852 = vunpack.c.l.b16 %v2493
        %v2853 = vunpack.c.h.b16 %v2493
        %v2854 = vunpack.c.l.b16 %v2494
        %v2855 = vunpack.c.h.b16 %v2494
        %v2856 = vunpack.c.l.b16 %v2495
        %v2857 = vunpack.c.h.b16 %v2495
        %v2858 = vunpack.c.l.b16 %v2496
        %v2859 = vunpack.c.h.b16 %v2496
        %v2860 = vunpack.c.l.b16 %v2497
        %v2861 = vunpack.c.l.b16 %v2498
        %v2862 = vunpack.c.h.b16 %v2498
        %v2863 = vunpack.c.l.b16 %v2499
        %v2864 = vunpack.c.h.b16 %v2499
        %v2865 = vunpack.c.l.b16 %v2500
        %v2866 = vunpack.c.h.b16 %v2500
        %v2867 = vunpack.c.l.b16 %v2501
        %v2868 = vunpack.c.h.b16 %v2501
        %v2869 = vunpack.c.l.b16 %v2502
        %v2870 = vunpack.c.l.b16 %v2503
        %v2871 = vunpack.c.h.b16 %v2503
        %v2872 = vunpack.c.l.b16 %v2504
        %v2873 = vunpack.c.h.b16 %v2504
        %v2874 = vunpack.c.l.b16 %v2505
        %v2875 = vunpack.c.h.b16 %v2505
        %v2876 = vunpack.c.l.b16 %v2506
        %v2877 = vunpack.c.h.b16 %v2506
        %v2878 = vunpack.c.l.b16 %v2507
        %v2879 = vunpack.c.l.b16 %v2508
        %v2880 = vunpack.c.h.b16 %v2508
        %v2881 = vunpack.c.l.b16 %v2509
        %v2882 = vunpack.c.h.b16 %v2509
        %v2883 = vunpack.c.l.b16 %v2510
        %v2884 = vunpack.c.h.b16 %v2510
        %v2885 = vunpack.c.l.b16 %v2511
        %v2886 = vunpack.c.h.b16 %v2511
        %v2887 = vunpack.c.l.b16 %v2512
        %v2888 = vunpack.c.l.b16 %v2513
        %v2889 = vunpack.c.h.b16 %v2513
        %v2890 = vunpack.c.l.b16 %v2514
        %v2891 = vunpack.c.h.b16 %v2514
        %v2892 = vunpack.c.l.b16 %v2515
        %v2893 = vunpack.c.h.b16 %v2515
        %v2894 = vunpack.c.l.b16 %v2516
        %v2895 = vunpack.c.h.b16 %v2516
        %v2896 = vunpack.c.l.b16 %v2517
        %v2897 = vunpack.c.l.b16 %v2518
        %v2898 = vunpack.c.h.b16 %v2518
        %v2899 = vunpack.c.l.b16 %v2519
        %v2900 = vunpack.c.h.b16 %v2519
        %v2901 = vunpack.c.l.b16 %v2520
        %v2902 = vunpack.c.h.b16 %v2520
        %v2903 = vunpack.c.l.b16 %v2521
        %v2904 = vunpack.c.h.b16 %v2521
        %v2905 = vunpack.c.l.b16 %v2522
        %v2906 = vunpack.c.l.b16 %v2523
        %v2907 = vunpack.c.h.b16 %v2523
        %v2908 = vunpack.c.l.b16 %v2524
        %v2909 = vunpack.c.h.b16 %v2524
        %v2910 = vunpack.c.l.b16 %v2525
        %v2911 = vunpack.c.h.b16 %v2525
        %v2912 = vunpack.c.l.b16 %v2526
        %v2913 = vunpack.c.h.b16 %v2526
        %v2914 = vunpack.c.l.b16 %v2527
        %v2915 = vunpack.c.l.b16 %v2528
        %v2916 = vunpack.c.h.b16 %v2528
        %v2917 = vunpack.c.l.b16 %v2529
        %v2918 = vunpack.c.h.b16 %v2529
        %v2919 = vunpack.c.l.b16 %v2530
        %v2920 = vunpack.c.h.b16 %v2530
        %v2921 = vunpack.c.l.b16 %v2531
        %v2922 = vunpack.c.h.b16 %v2531
        %v2923 = vunpack.c.l.b16 %v2532
        %v2924 = vunpack.c.l.b16 %v2533
        %v2925 = vunpack.c.h.b16 %v2533
        %v2926 = vunpack.c.l.b16 %v2534
        %v2927 = vunpack.c.h.b16 %v2534
        %v2928 = vunpack.c.l.b16 %v2535
        %v2929 = vunpack.c.h.b16 %v2535
        %v2930 = vunpack.c.l.b16 %v2536
        %v2931 = vunpack.c.h.b16 %v2536
        %v2932 = vunpack.c.l.b16 %v2537
        %v2933 = vunpack.c.l.b16 %v2538
        %v2934 = vunpack.c.h.b16 %v2538
        %v2935 = vunpack.c.l.b16 %v2539
        %v2936 = vunpack.c.h.b16 %v2539
        %v2937 = vunpack.c.l.b16 %v2540
        %v2938 = vunpack.c.h.b16 %v2540
        %v2939 = vunpack.c.l.b16 %v2541
        %v2940 = vunpack.c.h.b16 %v2541
        %v2941 = vunpack.c.l.b16 %v2542
        %v2942 = vunpack.c.l.b16 %v2543
        %v2943 = vunpack.c.h.b16 %v2543
        %v2944 = vunpack.c.l.b16 %v2544
        %v2945 = vunpack.c.h.b16 %v2544
        %v2946 = vunpack.c.l.b16 %v2545
        %v2947 = vunpack.c.h.b16 %v2545
        %v2948 = vunpack.c.l.b16 %v2546
        %v2949 = vunpack.c.h.b16 %v2546
        %v2950 = vunpack.c.l.b16 %v2547
        %v2951 = vunpack.c.l.b16 %v2548
        %v2952 = vunpack.c.h.b16 %v2548
        %v2953 = vunpack.c.l.b16 %v2549
        %v2954 = vunpack.c.h.b16 %v2549
        %v2955 = vunpack.c.l.b16 %v2550
        %v2956 = vunpack.c.h.b16 %v2550
        %v2957 = vunpack.c.l.b16 %v2551
        %v2958 = vunpack.c.h.b16 %v2551
        %v2959 = vunpack.c.l.b16 %v2552
        %v2960 = vunpack.c.l.b16 %v2553
        %v2961 = vunpack.c.h.b16 %v2553
        %v2962 = vunpack.c.l.b16 %v2554
        %v2963 = vunpack.c.h.b16 %v2554
        %v2964 = vunpack.c.l.b16 %v2555
        %v2965 = vunpack.c.h.b16 %v2555
        %v2966 = vunpack.c.l.b16 %v2556
        %v2967 = vunpack.c.h.b16 %v2556
        %v2968 = vunpack.c.l.b16 %v2557
        %v2969 = vunpack.c.l.b16 %v2558
        %v2970 = vunpack.c.h.b16 %v2558
        %v2971 = vunpack.c.l.b16 %v2559
        %v2972 = vunpack.c.h.b16 %v2559
        %v2973 = vunpack.c.l.b16 %v2560
        %v2974 = vunpack.c.h.b16 %v2560
        %v2975 = vunpack.c.l.b16 %v2561
        %v2976 = vunpack.c.h.b16 %v2561
        %v2977 = vunpack.c.l.b16 %v2562
        %v2978 = vunpack.c.l.b16 %v2563
        %v2979 = vunpack.c.h.b16 %v2563
        %v2980 = vunpack.c.l.b16 %v2564
        %v2981 = vunpack.c.h.b16 %v2564
        %v2982 = vunpack.c.l.b16 %v2565
        %v2983 = vunpack.c.h.b16 %v2565
        %v2984 = vunpack.c.l.b16 %v2566
        %v2985 = vunpack.c.h.b16 %v2566
        %v2986 = vunpack.c.l.b16 %v2567
        %v2987 = vunpack.c.l.b16 %v2568
        %v2988 = vunpack.c.h.b16 %v2568
        %v2989 = vunpack.c.l.b16 %v2569
        %v2990 = vunpack.c.h.b16 %v2569
        %v2991 = vunpack.c.l.b16 %v2570
        %v2992 = vunpack.c.h.b16 %v2570
        %v2993 = vunpack.c.l.b16 %v2571
        %v2994 = vunpack.c.h.b16 %v2571
        %v2995 = vunpack.c.l.b16 %v2572
        %v2996 = vunpack.c.l.b16 %v2573
        %v2997 = vunpack.c.h.b16 %v2573
        %v2998 = vunpack.c.l.b16 %v2574
        %v2999 = vunpack.c.h.b16 %v2574
        %v3000 = vunpack.c.l.b16 %v2575
        %v3001 = vunpack.c.h.b16 %v2575
        %v3002 = vunpack.c.l.b16 %v2576
        %v3003 = vunpack.c.h.b16 %v2576
        %v3004 = vunpack.c.l.b16 %v2577
        %v3005 = vunpack.c.l.b16 %v2578
        %v3006 = vunpack.c.h.b16 %v2578
        %v3007 = vunpack.c.l.b16 %v2579
        %v3008 = vunpack.c.h.b16 %v2579
        %v3009 = vunpack.c.l.b16 %v2580
        %v3010 = vunpack.c.h.b16 %v2580
        %v3011 = vunpack.c.l.b16 %v2581
        %v3012 = vunpack.c.h.b16 %v2581
        %v3013 = vunpack.c.l.b16 %v2582
        %v3014 = vpack.c.b16 %v2843, %v2834
        %v3015 = vpack.c.b16 %v2844, %v2835
        %v3016 = vpack.c.b16 %v2845, %v2836
        %v3017 = vpack.c.b16 %v2846, %v2837
        %v3018 = vpack.c.b16 %v2847, %v2838
        %v3019 = vpack.c.b16 %v2848, %v2839
        %v3020 = vpack.c.b16 %v2849, %v2840
        %v3021 = vpack.c.b16 %v2850, %v2841
        %v3022 = vpack.c.b16 %v2851, %v2842
        %v3023 = vpack.c.b16 %v2861, %v2852
        %v3024 = vpack.c.b16 %v2862, %v2853
        %v3025 = vpack.c.b16 %v2863, %v2854
        %v3026 = vpack.c.b16 %v2864, %v2855
        %v3027 = vpack.c.b16 %v2865, %v2856
        %v3028 = vpack.c.b16 %v2866, %v2857
        %v3029 = vpack.c.b16 %v2867, %v2858
        %v3030 = vpack.c.b16 %v2868, %v2859
        %v3031 = vpack.c.b16 %v2869, %v2860
        %v3032 = vpack.c.b16 %v2879, %v2870
        %v3033 = vpack.c.b16 %v2880, %v2871
        %v3034 = vpack.c.b16 %v2881, %v2872
        %v3035 = vpack.c.b16 %v2882, %v2873
        %v3036 = vpack.c.b16 %v2883, %v2874
        %v3037 = vpack.c.b16 %v2884, %v2875
        %v3038 = vpack.c.b16 %v2885, %v2876
        %v3039 = vpack.c.b16 %v2886, %v2877
        %v3040 = vpack.c.b16 %v2887, %v2878
        %v3041 = vpack.c.b16 %v2897, %v2888
        %v3042 = vpack.c.b16 %v2898, %v2889
        %v3043 = vpack.c.b16 %v2899, %v2890
        %v3044 = vpack.c.b16 %v2900, %v2891
        %v3045 = vpack.c.b16 %v2901, %v2892
        %v3046 = vpack.c.b16 %v2902, %v2893
        %v3047 = vpack.c.b16 %v2903, %v2894
        %v3048 = vpack.c.b16 %v2904, %v2895
        %v3049 = vpack.c.b16 %v2905, %v2896
        %v3050 = vpack.c.b16 %v2915, %v2906
        %v3051 = vpack.c.b16 %v2916, %v2907
        %v3052 = vpack.c.b16 %v2917, %v2908
        %v3053 = vpack.c.b16 %v2918, %v2909
        %v3054 = vpack.c.b16 %v2919, %v2910
        %v3055 = vpack.c.b16 %v2920, %v2911
        %v3056 = vpack.c.b16 %v2921, %v2912
        %v3057 = vpack.c.b16 %v2922, %v2913
        %v3058 = vpack.c.b16 %v2923, %v2914
        %v3059 = vpack.c.b16 %v2933, %v2924
        %v3060 = vpack.c.b16 %v2934, %v2925
        %v3061 = vpack.c.b16 %v2935, %v2926
        %v3062 = vpack.c.b16 %v2936, %v2927
        %v3063 = vpack.c.b16 %v2937, %v2928
        %v3064 = vpack.c.b16 %v2938, %v2929
        %v3065 = vpack.c.b16 %v2939, %v2930
        %v3066 = vpack.c.b16 %v2940, %v2931
        %v3067 = vpack.c.b16 %v2941, %v2932
        %v3068 = vpack.c.b16 %v2951, %v2942
        %v3069 = vpack.c.b16 %v2952, %v2943
        %v3070 = vpack.c.b16 %v2953, %v2944
        %v3071 = vpack.c.b16 %v2954, %v2945
        %v3072 = vpack.c.b16 %v2955, %v2946
        %v3073 = vpack.c.b16 %v2956, %v2947
        %v3074 = vpack.c.b16 %v2957, %v2948
        %v3075 = vpack.c.b16 %v2958, %v2949
        %v3076 = vpack.c.b16 %v2959, %v2950
        %v3077 = vpack.c.b16 %v2969, %v2960
        %v3078 = vpack.c.b16 %v2970, %v2961
        %v3079 = vpack.c.b16 %v2971, %v2962
        %v3080 = vpack.c.b16 %v2972, %v2963
        %v3081 = vpack.c.b16 %v2973, %v2964
        %v3082 = vpack.c.b16 %v2974, %v2965
        %v3083 = vpack.c.b16 %v2975, %v2966
        %v3084 = vpack.c.b16 %v2976, %v2967
        %v3085 = vpack.c.b16 %v2977, %v2968
        %v3086 = vpack.c.b16 %v2987, %v2978
        %v3087 = vpack.c.b16 %v2988, %v2979
        %v3088 = vpack.c.b16 %v2989, %v2980
        %v3089 = vpack.c.b16 %v2990, %v2981
        %v3090 = vpack.c.b16 %v2991, %v2982
        %v3091 = vpack.c.b16 %v2992, %v2983
        %v3092 = vpack.c.b16 %v2993, %v2984
        %v3093 = vpack.c.b16 %v2994, %v2985
        %v3094 = vpack.c.b16 %v2995, %v2986
        %v3095 = vpack.c.b16 %v3005, %v2996
        %v3096 = vpack.c.b16 %v3006, %v2997
        %v3097 = vpack.c.b16 %v3007, %v2998
        %v3098 = vpack.c.b16 %v3008, %v2999
        %v3099 = vpack.c.b16 %v3009, %v3000
        %v3100 = vpack.c.b16 %v3010, %v3001
        %v3101 = vpack.c.b16 %v3011, %v3002
        %v3102 = vpack.c.b16 %v3012, %v3003
        %v3103 = vpack.c.b16 %v3013, %v3004
        %v3338 = vunpack.c.l.b16 %v2583
        %v3339 = vunpack.c.l.b16 %v2584
        %v3340 = vunpack.c.l.b16 %v2585
        %v3341 = vunpack.c.l.b16 %v2586
        %v3342 = vunpack.c.l.b16 %v2587
        %v3343 = vunpack.c.l.b16 %v2588
        %v3344 = vunpack.c.l.b16 %v2589
        %v3345 = vunpack.c.l.b16 %v2590
        %v3346 = vunpack.c.l.b16 %v2591
        %v3347 = vunpack.c.l.b16 %v2592
        %v3348 = vunpack.c.l.b16 %v2593
        %v3349 = vunpack.c.l.b16 %v2594
        %v3350 = vunpack.c.l.b16 %v2595
        %v3351 = vunpack.c.l.b16 %v2596
        %v3352 = vunpack.c.l.b16 %v2597
        %v3353 = vunpack.c.l.b16 %v2598
        %v3354 = vunpack.c.l.b16 %v2599
        %v3355 = vunpack.c.l.b16 %v2600
        %v3356 = vunpack.c.l.b16 %v2601
        %v3357 = vunpack.c.l.b16 %v2602
        %v3358 = vunpack.c.l.b16 %v2603
        %v3359 = vunpack.c.l.b16 %v2604
        %v3360 = vunpack.c.l.b16 %v2605
        %v3361 = vunpack.c.l.b16 %v2606
        %v3362 = vunpack.c.l.b16 %v2607
        %v3363 = vunpack.c.l.b16 %v2608
        %v3364 = vunpack.c.l.b16 %v2609
        %v3365 = vunpack.c.l.b16 %v2610
        %v3366 = vunpack.c.l.b16 %v2611
        %v3367 = vunpack.c.l.b16 %v2612
        %v3368 = vunpack.c.l.b16 %v2613
        %v3369 = vunpack.c.l.b16 %v2614
        %v3370 = vunpack.c.l.b16 %v2615
        %v3371 = vunpack.c.l.b16 %v2616
        %v3372 = vunpack.c.l.b16 %v2617
        %v3373 = vunpack.c.l.b16 %v2618
        %v3374 = vunpack.c.l.b16 %v2619
        %v3375 = vunpack.c.l.b16 %v2620
        %v3376 = vunpack.c.l.b16 %v2621
        %v3377 = vunpack.c.l.b16 %v2622
        %v3378 = vunpack.c.l.b16 %v2623
        %v3379 = vunpack.c.l.b16 %v2624
        %v3380 = vunpack.c.l.b16 %v2625
        %v3381 = vunpack.c.l.b16 %v2626
        %v3382 = vunpack.c.l.b16 %v2627
        %v3383 = vunpack.c.l.b16 %v2628
        %v3384 = vunpack.c.l.b16 %v2629
        %v3385 = vunpack.c.l.b16 %v2630
        %v3386 = vunpack.c.l.b16 %v2631
        %v3387 = vunpack.c.l.b16 %v2632
        %v3388 = vunpack.c.l.b16 %v2633
        %v3389 = vunpack.c.l.b16 %v2634
        %v3390 = vunpack.c.l.b16 %v2635
        %v3391 = vunpack.c.l.b16 %v2636
        %v3392 = vunpack.c.l.b16 %v2637
        %v3393 = vunpack.c.l.b16 %v2638
        %v3394 = vunpack.c.l.b16 %v2639
        %v3395 = vunpack.c.l.b16 %v2640
        %v3396 = vunpack.c.l.b16 %v2641
        %v3397 = vunpack.c.l.b16 %v2642
        %v3398 = vunpack.c.l.b16 %v2643
        %v3399 = vunpack.c.l.b16 %v2644
        %v3400 = vunpack.c.l.b16 %v2645
        %v3401 = vunpack.c.l.b16 %v2646
        %v3402 = vunpack.c.l.b16 %v2647
        %v3403 = vunpack.c.l.b16 %v2648
        %v3404 = vunpack.c.l.b16 %v2649
        %v3405 = vunpack.c.l.b16 %v2650
        %v3406 = vunpack.c.l.b16 %v2651
        %v3407 = vunpack.c.l.b16 %v2652
        %v3408 = vunpack.c.l.b16 %v2653
        %v3409 = vunpack.c.l.b16 %v2654
        %v3410 = vunpack.c.l.b16 %v2655
        %v3411 = vunpack.c.l.b16 %v2656
        %v3412 = vunpack.c.l.b16 %v2657
        %v3413 = vunpack.c.l.b16 %v2658
        %v3414 = vunpack.c.l.b16 %v2659
        %v3415 = vunpack.c.l.b16 %v2660
        %v3416 = vunpack.c.l.b16 %v2661
        %v3417 = vunpack.c.l.b16 %v2662
        %v3418 = vunpack.c.l.b16 %v2663
        %v3419 = vunpack.c.l.b16 %v2664
        %v3420 = vunpack.c.l.b16 %v2665
        %v3421 = vunpack.c.l.b16 %v2666
        %v3422 = vunpack.c.l.b16 %v2667
        %v3423 = vunpack.c.l.b16 %v2668
        %v3424 = vunpack.c.l.b16 %v2669
        %v3425 = vunpack.c.l.b16 %v2670
        %v3426 = vunpack.c.l.b16 %v2671
        %v3427 = vunpack.c.l.b16 %v2672
        %v3428 = vunpack.c.l.b16 %v2673
        %v3429 = vunpack.c.l.b16 %v2674
        %v3430 = vunpack.c.l.b16 %v2675
        %v3431 = vunpack.c.l.b16 %v2676
        %v3432 = vunpack.c.l.b16 %v2677
        %v3433 = vunpack.c.l.b16 %v2678
        %v3434 = vunpack.c.l.b16 %v2679
        %v3435 = vunpack.c.l.b16 %v2680
        %v3436 = vunpack.c.l.b16 %v2681
        %v3437 = vunpack.c.l.b16 %v2682
        %v3438 = vunpack.c.l.b16 %v2683
        %v3439 = vunpack.c.l.b16 %v2684
        %v3440 = vunpack.c.l.b16 %v2685
        %v3441 = vunpack.c.l.b16 %v2686
        %v3442 = vunpack.c.l.b16 %v2687
        %v3443 = vunpack.c.l.b16 %v2688
        %v3444 = vunpack.c.l.b16 %v2689
        %v3445 = vunpack.c.l.b16 %v2690
        %v3446 = vunpack.c.l.b16 %v2691
        %v3447 = vunpack.c.l.b16 %v2692
        %v3448 = vunpack.c.l.b16 %v2693
        %v3449 = vunpack.c.l.b16 %v2694
        %v3450 = vunpack.c.l.b16 %v2695
        %v3451 = vunpack.c.l.b16 %v2696
        %v3452 = vunpack.c.l.b16 %v2697
        %v3453 = vunpack.c.l.b16 %v2698
        %v3454 = vunpack.c.l.b16 %v2699
        %v3455 = vunpack.c.l.b16 %v2700
        %v3456 = vunpack.c.l.b16 %v2701
        %v3457 = vunpack.c.l.b16 %v2702
        %v3458 = vunpack.c.l.b16 %v2703
        %v3459 = vunpack.c.l.b16 %v2704
        %v3460 = vunpack.c.l.b16 %v2705
        %v3461 = vunpack.c.l.b16 %v2706
        %v3462 = vunpack.c.l.b16 %v2707
        %v3463 = vunpack.c.l.b16 %v2708
        %v3464 = vunpack.c.l.b16 %v2709
        %v3465 = vunpack.c.l.b16 %v2710
        %v3466 = vunpack.c.l.b16 %v2711
        %v3467 = vunpack.c.l.b16 %v2712
        %v3468 = vunpack.c.l.b16 %v2713
        %v3469 = vunpack.c.l.b16 %v2714
        %v3470 = vunpack.c.l.b16 %v2715
        %v3471 = vunpack.c.l.b16 %v2716
        %v3472 = vunpack.c.l.b16 %v2717
        %v3473 = vunpack.c.l.b16 %v2718
        %v3474 = vunpack.c.l.b16 %v2719
        %v3475 = vunpack.c.l.b16 %v2720
        %v3476 = vunpack.c.l.b16 %v2721
        %v3477 = vunpack.c.l.b16 %v2722
        %v3478 = vunpack.c.l.b16 %v2723
        %v3479 = vunpack.c.l.b16 %v2724
        %v3480 = vunpack.c.l.b16 %v2725
        %v3481 = vunpack.c.l.b16 %v2726
        %v3482 = vpack.c.b16 %v3339, %v3338
        %v3483 = vpack.c.b16 %v3341, %v3340
        %v3484 = vpack.c.b16 %v3343, %v3342
        %v3485 = vpack.c.b16 %v3345, %v3344
        %v3486 = vpack.c.b16 %v3347, %v3346
        %v3487 = vpack.c.b16 %v3349, %v3348
        %v3488 = vpack.c.b16 %v3351, %v3350
        %v3489 = vpack.c.b16 %v3353, %v3352
        %v3490 = vpack.c.b16 %v3355, %v3354
        %v3491 = vpack.c.b16 %v3357, %v3356
        %v3492 = vpack.c.b16 %v3359, %v3358
        %v3493 = vpack.c.b16 %v3361, %v3360
        %v3494 = vpack.c.b16 %v3363, %v3362
        %v3495 = vpack.c.b16 %v3365, %v3364
        %v3496 = vpack.c.b16 %v3367, %v3366
        %v3497 = vpack.c.b16 %v3369, %v3368
        %v3498 = vpack.c.b16 %v3371, %v3370
        %v3499 = vpack.c.b16 %v3373, %v3372
        %v3500 = vpack.c.b16 %v3375, %v3374
        %v3501 = vpack.c.b16 %v3377, %v3376
        %v3502 = vpack.c.b16 %v3379, %v3378
        %v3503 = vpack.c.b16 %v3381, %v3380
        %v3504 = vpack.c.b16 %v3383, %v3382
        %v3505 = vpack.c.b16 %v3385, %v3384
        %v3506 = vpack.c.b16 %v3387, %v3386
        %v3507 = vpack.c.b16 %v3389, %v3388
        %v3508 = vpack.c.b16 %v3391, %v3390
        %v3509 = vpack.c.b16 %v3393, %v3392
        %v3510 = vpack.c.b16 %v3395, %v3394
        %v3511 = vpack.c.b16 %v3397, %v3396
        %v3512 = vpack.c.b16 %v3399, %v3398
        %v3513 = vpack.c.b16 %v3401, %v3400
        %v3514 = vpack.c.b16 %v3403, %v3402
        %v3515 = vpack.c.b16 %v3405, %v3404
        %v3516 = vpack.c.b16 %v3407, %v3406
        %v3517 = vpack.c.b16 %v3409, %v3408
        %v3518 = vpack.c.b16 %v3411, %v3410
        %v3519 = vpack.c.b16 %v3413, %v3412
        %v3520 = vpack.c.b16 %v3415, %v3414
        %v3521 = vpack.c.b16 %v3417, %v3416
        %v3522 = vpack.c.b16 %v3419, %v3418
        %v3523 = vpack.c.b16 %v3421, %v3420
        %v3524 = vpack.c.b16 %v3423, %v3422
        %v3525 = vpack.c.b16 %v3425, %v3424
        %v3526 = vpack.c.b16 %v3427, %v3426
        %v3527 = vpack.c.b16 %v3429, %v3428
        %v3528 = vpack.c.b16 %v3431, %v3430
        %v3529 = vpack.c.b16 %v3433, %v3432
        %v3530 = vpack.c.b16 %v3435, %v3434
        %v3531 = vpack.c.b16 %v3437, %v3436
        %v3532 = vpack.c.b16 %v3439, %v3438
        %v3533 = vpack.c.b16 %v3441, %v3440
        %v3534 = vpack.c.b16 %v3443, %v3442
        %v3535 = vpack.c.b16 %v3445, %v3444
        %v3536 = vpack.c.b16 %v3447, %v3446
        %v3537 = vpack.c.b16 %v3449, %v3448
        %v3538 = vpack.c.b16 %v3451, %v3450
        %v3539 = vpack.c.b16 %v3453, %v3452
        %v3540 = vpack.c.b16 %v3455, %v3454
        %v3541 = vpack.c.b16 %v3457, %v3456
        %v3542 = vpack.c.b16 %v3459, %v3458
        %v3543 = vpack.c.b16 %v3461, %v3460
        %v3544 = vpack.c.b16 %v3463, %v3462
        %v3545 = vpack.c.b16 %v3465, %v3464
        %v3546 = vpack.c.b16 %v3467, %v3466
        %v3547 = vpack.c.b16 %v3469, %v3468
        %v3548 = vpack.c.b16 %v3471, %v3470
        %v3549 = vpack.c.b16 %v3473, %v3472
        %v3550 = vpack.c.b16 %v3475, %v3474
        %v3551 = vpack.c.b16 %v3477, %v3476
        %v3552 = vpack.c.b16 %v3479, %v3478
        %v3553 = vpack.c.b16 %v3481, %v3480
        %3626 = vmatprep.subr.bf16.mxu0 0
        %3627 = vmatpush1.bf16.msra.mxu0 %v3489
        %3628 = vmatprep.subr.bf16.mxu0 0
        %3629 = vmatpush1.bf16.msra.mxu0 %v3488
        %3630 = vmatprep.subr.bf16.mxu0 0
        %3631 = vmatpush1.bf16.msra.mxu0 %v3487
        %3632 = vmatprep.subr.bf16.mxu0 0
        %3633 = vmatpush1.bf16.msra.mxu0 %v3486
        %3634 = vmatprep.subr.bf16.mxu0 0
        %3635 = vmatpush1.bf16.msra.mxu0 %v3485
        %3636 = vmatprep.subr.bf16.mxu0 0
        %3637 = vmatpush1.bf16.msra.mxu0 %v3484
        %3638 = vmatprep.subr.bf16.mxu0 0
        %3639 = vmatpush1.bf16.msra.mxu0 %v3483
        %3640 = vmatprep.subr.bf16.mxu0 0
        %3641 = vmatpush1.bf16.msra.mxu0 %v3482
        %3642 = vmatprep.subr.bf16.mxu0 0
        %3643 = vmatpush2.bf16.msra.mxu0 %v3497
        %3644 = vmatprep.subr.bf16.mxu0 0
        %3645 = vmatpush2.bf16.msra.mxu0 %v3496
        %3646 = vmatprep.subr.bf16.mxu0 0
        %3647 = vmatpush2.bf16.msra.mxu0 %v3495
        %3648 = vmatprep.subr.bf16.mxu0 0
        %3649 = vmatpush2.bf16.msra.mxu0 %v3494
        %3650 = vmatprep.subr.bf16.mxu0 0
        %3651 = vmatpush2.bf16.msra.mxu0 %v3493
        %3652 = vmatprep.subr.bf16.mxu0 0
        %3653 = vmatpush2.bf16.msra.mxu0 %v3492
        %3654 = vmatprep.subr.bf16.mxu0 0
        %3655 = vmatpush2.bf16.msra.mxu0 %v3491
        %3656 = vmatprep.subr.bf16.mxu0 0
        %3657 = vmatpush2.bf16.msra.mxu0 %v3490
        %3658 = vmatprep.mubr.bf16.mxu0 %v3015
        %3659 = vmatmul.mubr.bf16.gmra.mxu0 %v3014
        %v3660 = vpop.f32.mrf.mxu0
        %v3661 = vadd.f32 %v2732, %v3660
        %v3662 = vpop.f32.mrf.mxu0
        %v3663 = vpop.f32.mrf.mxu0
        %v3664 = vadd.f32 %v2732, %v3663
        %v3665 = vpop.f32.mrf.mxu0
        %3666 = vmatprep.mubr.bf16.mxu0 %v3024
        %3667 = vmatmul.mubr.bf16.gmra.mxu0 %v3023
        %v3668 = vpop.f32.mrf.mxu0
        %v3669 = vadd.f32 %v2732, %v3668
        %v3670 = vpop.f32.mrf.mxu0
        %v3671 = vpop.f32.mrf.mxu0
        %v3672 = vadd.f32 %v2732, %v3671
        %v3673 = vpop.f32.mrf.mxu0
        %3674 = vmatprep.mubr.bf16.mxu0 %v3033
        %3675 = vmatmul.mubr.bf16.gmra.mxu0 %v3032
        %v3676 = vpop.f32.mrf.mxu0
        %v3677 = vadd.f32 %v2732, %v3676
        %v3678 = vpop.f32.mrf.mxu0
        %v3679 = vpop.f32.mrf.mxu0
        %v3680 = vadd.f32 %v2732, %v3679
        %v3681 = vpop.f32.mrf.mxu0
        %3682 = vmatprep.mubr.bf16.mxu0 %v3042
        %3683 = vmatmul.mubr.bf16.gmra.mxu0 %v3041
        %v3684 = vpop.f32.mrf.mxu0
        %v3685 = vadd.f32 %v2732, %v3684
        %v3686 = vpop.f32.mrf.mxu0
        %v3687 = vpop.f32.mrf.mxu0
        %v3688 = vadd.f32 %v2732, %v3687
        %v3689 = vpop.f32.mrf.mxu0
        %3690 = vmatprep.mubr.bf16.mxu0 %v3051
        %3691 = vmatmul.mubr.bf16.gmra.mxu0 %v3050
        %v3692 = vpop.f32.mrf.mxu0
        %v3693 = vadd.f32 %v2732, %v3692
        %v3694 = vpop.f32.mrf.mxu0
        %v3695 = vpop.f32.mrf.mxu0
        %v3696 = vadd.f32 %v2732, %v3695
        %v3697 = vpop.f32.mrf.mxu0
        %3698 = vmatprep.mubr.bf16.mxu0 %v3060
        %3699 = vmatmul.mubr.bf16.gmra.mxu0 %v3059
        %v3700 = vpop.f32.mrf.mxu0
        %v3701 = vadd.f32 %v2732, %v3700
        %v3702 = vpop.f32.mrf.mxu0
        %v3703 = vpop.f32.mrf.mxu0
        %v3704 = vadd.f32 %v2732, %v3703
        %v3705 = vpop.f32.mrf.mxu0
        %3706 = vmatprep.mubr.bf16.mxu0 %v3069
        %3707 = vmatmul.mubr.bf16.gmra.mxu0 %v3068
        %v3708 = vpop.f32.mrf.mxu0
        %v3709 = vadd.f32 %v2732, %v3708
        %v3710 = vpop.f32.mrf.mxu0
        %v3711 = vpop.f32.mrf.mxu0
        %v3712 = vadd.f32 %v2732, %v3711
        %v3713 = vpop.f32.mrf.mxu0
        %3714 = vmatprep.mubr.bf16.mxu0 %v3078
        %3715 = vmatmul.mubr.bf16.gmra.mxu0 %v3077
        %v3716 = vpop.f32.mrf.mxu0
        %v3717 = vadd.f32 %v2732, %v3716
        %v3718 = vpop.f32.mrf.mxu0
        %v3719 = vpop.f32.mrf.mxu0
        %v3720 = vadd.f32 %v2732, %v3719
        %v3721 = vpop.f32.mrf.mxu0
        %3722 = vmatprep.mubr.bf16.mxu0 %v3087
        %3723 = vmatmul.mubr.bf16.gmra.mxu0 %v3086
        %v3724 = vpop.f32.mrf.mxu0
        %v3725 = vadd.f32 %v2732, %v3724
        %v3726 = vpop.f32.mrf.mxu0
        %v3727 = vpop.f32.mrf.mxu0
        %v3728 = vadd.f32 %v2732, %v3727
        %v3729 = vpop.f32.mrf.mxu0
        %3730 = vmatprep.mubr.bf16.mxu0 %v3096
        %3731 = vmatmul.mubr.bf16.gmra.mxu0 %v3095
        %v3732 = vpop.f32.mrf.mxu0
        %v3733 = vadd.f32 %v2732, %v3732
        %v3734 = vpop.f32.mrf.mxu0
        %v3735 = vpop.f32.mrf.mxu0
        %v3736 = vadd.f32 %v2732, %v3735
        %v3737 = vpop.f32.mrf.mxu0
        %3738 = vdwg.mxu0
        %3739 = vmatprep.subr.bf16.mxu0 0
        %3740 = vmatpush1.bf16.msra.mxu0 %v3505
        %3741 = vmatprep.subr.bf16.mxu0 0
        %3742 = vmatpush1.bf16.msra.mxu0 %v3504
        %3743 = vmatprep.subr.bf16.mxu0 0
        %3744 = vmatpush1.bf16.msra.mxu0 %v3503
        %3745 = vmatprep.subr.bf16.mxu0 0
        %3746 = vmatpush1.bf16.msra.mxu0 %v3502
        %3747 = vmatprep.subr.bf16.mxu0 0
        %3748 = vmatpush1.bf16.msra.mxu0 %v3501
        %3749 = vmatprep.subr.bf16.mxu0 0
        %3750 = vmatpush1.bf16.msra.mxu0 %v3500
        %3751 = vmatprep.subr.bf16.mxu0 0
        %3752 = vmatpush1.bf16.msra.mxu0 %v3499
        %3753 = vmatprep.subr.bf16.mxu0 0
        %3754 = vmatpush1.bf16.msra.mxu0 %v3498
        %3755 = vmatprep.subr.bf16.mxu0 0
        %3756 = vmatpush2.bf16.msra.mxu0 %v3513
        %3757 = vmatprep.subr.bf16.mxu0 0
        %3758 = vmatpush2.bf16.msra.mxu0 %v3512
        %3759 = vmatprep.subr.bf16.mxu0 0
        %3760 = vmatpush2.bf16.msra.mxu0 %v3511
        %3761 = vmatprep.subr.bf16.mxu0 0
        %3762 = vmatpush2.bf16.msra.mxu0 %v3510
        %3763 = vmatprep.subr.bf16.mxu0 0
        %3764 = vmatpush2.bf16.msra.mxu0 %v3509
        %3765 = vmatprep.subr.bf16.mxu0 0
        %3766 = vmatpush2.bf16.msra.mxu0 %v3508
        %3767 = vmatprep.subr.bf16.mxu0 0
        %3768 = vmatpush2.bf16.msra.mxu0 %v3507
        %3769 = vmatprep.subr.bf16.mxu0 0
        %3770 = vmatpush2.bf16.msra.mxu0 %v3506
        %3771 = vmatprep.mubr.bf16.mxu0 %v3017
        %3772 = vmatmul.mubr.bf16.gmra.mxu0 %v3016
        %v3773 = vpop.f32.mrf.mxu0
        %v3774 = vadd.f32 %v3661, %v3773
        %v3775 = vpop.f32.mrf.mxu0
        %v3776 = vpop.f32.mrf.mxu0
        %v3777 = vadd.f32 %v3664, %v3776
        %v3778 = vpop.f32.mrf.mxu0
        %3779 = vmatprep.mubr.bf16.mxu0 %v3026
        %3780 = vmatmul.mubr.bf16.gmra.mxu0 %v3025
        %v3781 = vpop.f32.mrf.mxu0
        %v3782 = vadd.f32 %v3669, %v3781
        %v3783 = vpop.f32.mrf.mxu0
        %v3784 = vpop.f32.mrf.mxu0
        %v3785 = vadd.f32 %v3672, %v3784
        %v3786 = vpop.f32.mrf.mxu0
        %3787 = vmatprep.mubr.bf16.mxu0 %v3035
        %3788 = vmatmul.mubr.bf16.gmra.mxu0 %v3034
        %v3789 = vpop.f32.mrf.mxu0
        %v3790 = vadd.f32 %v3677, %v3789
        %v3791 = vpop.f32.mrf.mxu0
        %v3792 = vpop.f32.mrf.mxu0
        %v3793 = vadd.f32 %v3680, %v3792
        %v3794 = vpop.f32.mrf.mxu0
        %3795 = vmatprep.mubr.bf16.mxu0 %v3044
        %3796 = vmatmul.mubr.bf16.gmra.mxu0 %v3043
        %v3797 = vpop.f32.mrf.mxu0
        %v3798 = vadd.f32 %v3685, %v3797
        %v3799 = vpop.f32.mrf.mxu0
        %v3800 = vpop.f32.mrf.mxu0
        %v3801 = vadd.f32 %v3688, %v3800
        %v3802 = vpop.f32.mrf.mxu0
        %3803 = vmatprep.mubr.bf16.mxu0 %v3053
        %3804 = vmatmul.mubr.bf16.gmra.mxu0 %v3052
        %v3805 = vpop.f32.mrf.mxu0
        %v3806 = vadd.f32 %v3693, %v3805
        %v3807 = vpop.f32.mrf.mxu0
        %v3808 = vpop.f32.mrf.mxu0
        %v3809 = vadd.f32 %v3696, %v3808
        %v3810 = vpop.f32.mrf.mxu0
        %3811 = vmatprep.mubr.bf16.mxu0 %v3062
        %3812 = vmatmul.mubr.bf16.gmra.mxu0 %v3061
        %v3813 = vpop.f32.mrf.mxu0
        %v3814 = vadd.f32 %v3701, %v3813
        %v3815 = vpop.f32.mrf.mxu0
        %v3816 = vpop.f32.mrf.mxu0
        %v3817 = vadd.f32 %v3704, %v3816
        %v3818 = vpop.f32.mrf.mxu0
        %3819 = vmatprep.mubr.bf16.mxu0 %v3071
        %3820 = vmatmul.mubr.bf16.gmra.mxu0 %v3070
        %v3821 = vpop.f32.mrf.mxu0
        %v3822 = vadd.f32 %v3709, %v3821
        %v3823 = vpop.f32.mrf.mxu0
        %v3824 = vpop.f32.mrf.mxu0
        %v3825 = vadd.f32 %v3712, %v3824
        %v3826 = vpop.f32.mrf.mxu0
        %3827 = vmatprep.mubr.bf16.mxu0 %v3080
        %3828 = vmatmul.mubr.bf16.gmra.mxu0 %v3079
        %v3829 = vpop.f32.mrf.mxu0
        %v3830 = vadd.f32 %v3717, %v3829
        %v3831 = vpop.f32.mrf.mxu0
        %v3832 = vpop.f32.mrf.mxu0
        %v3833 = vadd.f32 %v3720, %v3832
        %v3834 = vpop.f32.mrf.mxu0
        %3835 = vmatprep.mubr.bf16.mxu0 %v3089
        %3836 = vmatmul.mubr.bf16.gmra.mxu0 %v3088
        %v3837 = vpop.f32.mrf.mxu0
        %v3838 = vadd.f32 %v3725, %v3837
        %v3839 = vpop.f32.mrf.mxu0
        %v3840 = vpop.f32.mrf.mxu0
        %v3841 = vadd.f32 %v3728, %v3840
        %v3842 = vpop.f32.mrf.mxu0
        %3843 = vmatprep.mubr.bf16.mxu0 %v3098
        %3844 = vmatmul.mubr.bf16.gmra.mxu0 %v3097
        %v3845 = vpop.f32.mrf.mxu0
        %v3846 = vadd.f32 %v3733, %v3845
        %v3847 = vpop.f32.mrf.mxu0
        %v3848 = vpop.f32.mrf.mxu0
        %v3849 = vadd.f32 %v3736, %v3848
        %v3850 = vpop.f32.mrf.mxu0
        %3851 = vdwg.mxu0
        %3852 = vmatprep.subr.bf16.mxu0 0
        %3853 = vmatpush1.bf16.msra.mxu0 %v3521
        %3854 = vmatprep.subr.bf16.mxu0 0
        %3855 = vmatpush1.bf16.msra.mxu0 %v3520
        %3856 = vmatprep.subr.bf16.mxu0 0
        %3857 = vmatpush1.bf16.msra.mxu0 %v3519
        %3858 = vmatprep.subr.bf16.mxu0 0
        %3859 = vmatpush1.bf16.msra.mxu0 %v3518
        %3860 = vmatprep.subr.bf16.mxu0 0
        %3861 = vmatpush1.bf16.msra.mxu0 %v3517
        %3862 = vmatprep.subr.bf16.mxu0 0
        %3863 = vmatpush1.bf16.msra.mxu0 %v3516
        %3864 = vmatprep.subr.bf16.mxu0 0
        %3865 = vmatpush1.bf16.msra.mxu0 %v3515
        %3866 = vmatprep.subr.bf16.mxu0 0
        %3867 = vmatpush1.bf16.msra.mxu0 %v3514
        %3868 = vmatprep.subr.bf16.mxu0 0
        %3869 = vmatpush2.bf16.msra.mxu0 %v3529
        %3870 = vmatprep.subr.bf16.mxu0 0
        %3871 = vmatpush2.bf16.msra.mxu0 %v3528
        %3872 = vmatprep.subr.bf16.mxu0 0
        %3873 = vmatpush2.bf16.msra.mxu0 %v3527
        %3874 = vmatprep.subr.bf16.mxu0 0
        %3875 = vmatpush2.bf16.msra.mxu0 %v3526
        %3876 = vmatprep.subr.bf16.mxu0 0
        %3877 = vmatpush2.bf16.msra.mxu0 %v3525
        %3878 = vmatprep.subr.bf16.mxu0 0
        %3879 = vmatpush2.bf16.msra.mxu0 %v3524
        %3880 = vmatprep.subr.bf16.mxu0 0
        %3881 = vmatpush2.bf16.msra.mxu0 %v3523
        %3882 = vmatprep.subr.bf16.mxu0 0
        %3883 = vmatpush2.bf16.msra.mxu0 %v3522
        %3884 = vmatprep.mubr.bf16.mxu0 %v3019
        %3885 = vmatmul.mubr.bf16.gmra.mxu0 %v3018
        %v3886 = vpop.f32.mrf.mxu0
        %v3887 = vadd.f32 %v3774, %v3886
        %v3888 = vpop.f32.mrf.mxu0
        %v3889 = vpop.f32.mrf.mxu0
        %v3890 = vadd.f32 %v3777, %v3889
        %v3891 = vpop.f32.mrf.mxu0
        %3892 = vmatprep.mubr.bf16.mxu0 %v3028
        %3893 = vmatmul.mubr.bf16.gmra.mxu0 %v3027
        %v3894 = vpop.f32.mrf.mxu0
        %v3895 = vadd.f32 %v3782, %v3894
        %v3896 = vpop.f32.mrf.mxu0
        %v3897 = vpop.f32.mrf.mxu0
        %v3898 = vadd.f32 %v3785, %v3897
        %v3899 = vpop.f32.mrf.mxu0
        %3900 = vmatprep.mubr.bf16.mxu0 %v3037
        %3901 = vmatmul.mubr.bf16.gmra.mxu0 %v3036
        %v3902 = vpop.f32.mrf.mxu0
        %v3903 = vadd.f32 %v3790, %v3902
        %v3904 = vpop.f32.mrf.mxu0
        %v3905 = vpop.f32.mrf.mxu0
        %v3906 = vadd.f32 %v3793, %v3905
        %v3907 = vpop.f32.mrf.mxu0
        %3908 = vmatprep.mubr.bf16.mxu0 %v3046
        %3909 = vmatmul.mubr.bf16.gmra.mxu0 %v3045
        %v3910 = vpop.f32.mrf.mxu0
        %v3911 = vadd.f32 %v3798, %v3910
        %v3912 = vpop.f32.mrf.mxu0
        %v3913 = vpop.f32.mrf.mxu0
        %v3914 = vadd.f32 %v3801, %v3913
        %v3915 = vpop.f32.mrf.mxu0
        %3916 = vmatprep.mubr.bf16.mxu0 %v3055
        %3917 = vmatmul.mubr.bf16.gmra.mxu0 %v3054
        %v3918 = vpop.f32.mrf.mxu0
        %v3919 = vadd.f32 %v3806, %v3918
        %v3920 = vpop.f32.mrf.mxu0
        %v3921 = vpop.f32.mrf.mxu0
        %v3922 = vadd.f32 %v3809, %v3921
        %v3923 = vpop.f32.mrf.mxu0
        %3924 = vmatprep.mubr.bf16.mxu0 %v3064
        %3925 = vmatmul.mubr.bf16.gmra.mxu0 %v3063
        %v3926 = vpop.f32.mrf.mxu0
        %v3927 = vadd.f32 %v3814, %v3926
        %v3928 = vpop.f32.mrf.mxu0
        %v3929 = vpop.f32.mrf.mxu0
        %v3930 = vadd.f32 %v3817, %v3929
        %v3931 = vpop.f32.mrf.mxu0
        %3932 = vmatprep.mubr.bf16.mxu0 %v3073
        %3933 = vmatmul.mubr.bf16.gmra.mxu0 %v3072
        %v3934 = vpop.f32.mrf.mxu0
        %v3935 = vadd.f32 %v3822, %v3934
        %v3936 = vpop.f32.mrf.mxu0
        %v3937 = vpop.f32.mrf.mxu0
        %v3938 = vadd.f32 %v3825, %v3937
        %v3939 = vpop.f32.mrf.mxu0
        %3940 = vmatprep.mubr.bf16.mxu0 %v3082
        %3941 = vmatmul.mubr.bf16.gmra.mxu0 %v3081
        %v3942 = vpop.f32.mrf.mxu0
        %v3943 = vadd.f32 %v3830, %v3942
        %v3944 = vpop.f32.mrf.mxu0
        %v3945 = vpop.f32.mrf.mxu0
        %v3946 = vadd.f32 %v3833, %v3945
        %v3947 = vpop.f32.mrf.mxu0
        %3948 = vmatprep.mubr.bf16.mxu0 %v3091
        %3949 = vmatmul.mubr.bf16.gmra.mxu0 %v3090
        %v3950 = vpop.f32.mrf.mxu0
        %v3951 = vadd.f32 %v3838, %v3950
        %v3952 = vpop.f32.mrf.mxu0
        %v3953 = vpop.f32.mrf.mxu0
        %v3954 = vadd.f32 %v3841, %v3953
        %v3955 = vpop.f32.mrf.mxu0
        %3956 = vmatprep.mubr.bf16.mxu0 %v3100
        %3957 = vmatmul.mubr.bf16.gmra.mxu0 %v3099
        %v3958 = vpop.f32.mrf.mxu0
        %v3959 = vadd.f32 %v3846, %v3958
        %v3960 = vpop.f32.mrf.mxu0
        %v3961 = vpop.f32.mrf.mxu0
        %v3962 = vadd.f32 %v3849, %v3961
        %v3963 = vpop.f32.mrf.mxu0
        %3964 = vdwg.mxu0
        %3965 = vmatprep.subr.bf16.mxu0 0
        %3966 = vmatpush1.bf16.msra.mxu0 %v3537
        %3967 = vmatprep.subr.bf16.mxu0 0
        %3968 = vmatpush1.bf16.msra.mxu0 %v3536
        %3969 = vmatprep.subr.bf16.mxu0 0
        %3970 = vmatpush1.bf16.msra.mxu0 %v3535
        %3971 = vmatprep.subr.bf16.mxu0 0
        %3972 = vmatpush1.bf16.msra.mxu0 %v3534
        %3973 = vmatprep.subr.bf16.mxu0 0
        %3974 = vmatpush1.bf16.msra.mxu0 %v3533
        %3975 = vmatprep.subr.bf16.mxu0 0
        %3976 = vmatpush1.bf16.msra.mxu0 %v3532
        %3977 = vmatprep.subr.bf16.mxu0 0
        %3978 = vmatpush1.bf16.msra.mxu0 %v3531
        %3979 = vmatprep.subr.bf16.mxu0 0
        %3980 = vmatpush1.bf16.msra.mxu0 %v3530
        %3981 = vmatprep.subr.bf16.mxu0 0
        %3982 = vmatpush2.bf16.msra.mxu0 %v3545
        %3983 = vmatprep.subr.bf16.mxu0 0
        %3984 = vmatpush2.bf16.msra.mxu0 %v3544
        %3985 = vmatprep.subr.bf16.mxu0 0
        %3986 = vmatpush2.bf16.msra.mxu0 %v3543
        %3987 = vmatprep.subr.bf16.mxu0 0
        %3988 = vmatpush2.bf16.msra.mxu0 %v3542
        %3989 = vmatprep.subr.bf16.mxu0 0
        %3990 = vmatpush2.bf16.msra.mxu0 %v3541
        %3991 = vmatprep.subr.bf16.mxu0 0
        %3992 = vmatpush2.bf16.msra.mxu0 %v3540
        %3993 = vmatprep.subr.bf16.mxu0 0
        %3994 = vmatpush2.bf16.msra.mxu0 %v3539
        %3995 = vmatprep.subr.bf16.mxu0 0
        %3996 = vmatpush2.bf16.msra.mxu0 %v3538
        %3997 = vmatprep.mubr.bf16.mxu0 %v3021
        %3998 = vmatmul.mubr.bf16.gmra.mxu0 %v3020
        %v3999 = vpop.f32.mrf.mxu0
        %v4000 = vadd.f32 %v3887, %v3999
        %v4001 = vpop.f32.mrf.mxu0
        %v4002 = vpop.f32.mrf.mxu0
        %v4003 = vadd.f32 %v3890, %v4002
        %v4004 = vpop.f32.mrf.mxu0
        %4005 = vmatprep.mubr.bf16.mxu0 %v3030
        %4006 = vmatmul.mubr.bf16.gmra.mxu0 %v3029
        %v4007 = vpop.f32.mrf.mxu0
        %v4008 = vadd.f32 %v3895, %v4007
        %v4009 = vpop.f32.mrf.mxu0
        %v4010 = vpop.f32.mrf.mxu0
        %v4011 = vadd.f32 %v3898, %v4010
        %v4012 = vpop.f32.mrf.mxu0
        %4013 = vmatprep.mubr.bf16.mxu0 %v3039
        %4014 = vmatmul.mubr.bf16.gmra.mxu0 %v3038
        %v4015 = vpop.f32.mrf.mxu0
        %v4016 = vadd.f32 %v3903, %v4015
        %v4017 = vpop.f32.mrf.mxu0
        %v4018 = vpop.f32.mrf.mxu0
        %v4019 = vadd.f32 %v3906, %v4018
        %v4020 = vpop.f32.mrf.mxu0
        %4021 = vmatprep.mubr.bf16.mxu0 %v3048
        %4022 = vmatmul.mubr.bf16.gmra.mxu0 %v3047
        %v4023 = vpop.f32.mrf.mxu0
        %v4024 = vadd.f32 %v3911, %v4023
        %v4025 = vpop.f32.mrf.mxu0
        %v4026 = vpop.f32.mrf.mxu0
        %v4027 = vadd.f32 %v3914, %v4026
        %v4028 = vpop.f32.mrf.mxu0
        %4029 = vmatprep.mubr.bf16.mxu0 %v3057
        %4030 = vmatmul.mubr.bf16.gmra.mxu0 %v3056
        %v4031 = vpop.f32.mrf.mxu0
        %v4032 = vadd.f32 %v3919, %v4031
        %v4033 = vpop.f32.mrf.mxu0
        %v4034 = vpop.f32.mrf.mxu0
        %v4035 = vadd.f32 %v3922, %v4034
        %v4036 = vpop.f32.mrf.mxu0
        %4037 = vmatprep.mubr.bf16.mxu0 %v3066
        %4038 = vmatmul.mubr.bf16.gmra.mxu0 %v3065
        %v4039 = vpop.f32.mrf.mxu0
        %v4040 = vadd.f32 %v3927, %v4039
        %v4041 = vpop.f32.mrf.mxu0
        %v4042 = vpop.f32.mrf.mxu0
        %v4043 = vadd.f32 %v3930, %v4042
        %v4044 = vpop.f32.mrf.mxu0
        %4045 = vmatprep.mubr.bf16.mxu0 %v3075
        %4046 = vmatmul.mubr.bf16.gmra.mxu0 %v3074
        %v4047 = vpop.f32.mrf.mxu0
        %v4048 = vadd.f32 %v3935, %v4047
        %v4049 = vpop.f32.mrf.mxu0
        %v4050 = vpop.f32.mrf.mxu0
        %v4051 = vadd.f32 %v3938, %v4050
        %v4052 = vpop.f32.mrf.mxu0
        %4053 = vmatprep.mubr.bf16.mxu0 %v3084
        %4054 = vmatmul.mubr.bf16.gmra.mxu0 %v3083
        %v4055 = vpop.f32.mrf.mxu0
        %v4056 = vadd.f32 %v3943, %v4055
        %v4057 = vpop.f32.mrf.mxu0
        %v4058 = vpop.f32.mrf.mxu0
        %v4059 = vadd.f32 %v3946, %v4058
        %v4060 = vpop.f32.mrf.mxu0
        %4061 = vmatprep.mubr.bf16.mxu0 %v3093
        %4062 = vmatmul.mubr.bf16.gmra.mxu0 %v3092
        %v4063 = vpop.f32.mrf.mxu0
        %v4064 = vadd.f32 %v3951, %v4063
        %v4065 = vpop.f32.mrf.mxu0
        %v4066 = vpop.f32.mrf.mxu0
        %v4067 = vadd.f32 %v3954, %v4066
        %v4068 = vpop.f32.mrf.mxu0
        %4069 = vmatprep.mubr.bf16.mxu0 %v3102
        %4070 = vmatmul.mubr.bf16.gmra.mxu0 %v3101
        %v4071 = vpop.f32.mrf.mxu0
        %v4072 = vadd.f32 %v3959, %v4071
        %v4073 = vpop.f32.mrf.mxu0
        %v4074 = vpop.f32.mrf.mxu0
        %v4075 = vadd.f32 %v3962, %v4074
        %v4076 = vpop.f32.mrf.mxu0
        %4077 = vdwg.mxu0
        %4078 = vmatprep.subr.bf16.mxu0 0
        %4079 = vmatpush1.bf16.msra.mxu0 %v3553
        %4080 = vmatprep.subr.bf16.mxu0 0
        %4081 = vmatpush1.bf16.msra.mxu0 %v3552
        %4082 = vmatprep.subr.bf16.mxu0 0
        %4083 = vmatpush1.bf16.msra.mxu0 %v3551
        %4084 = vmatprep.subr.bf16.mxu0 0
        %4085 = vmatpush1.bf16.msra.mxu0 %v3550
        %4086 = vmatprep.subr.bf16.mxu0 0
        %4087 = vmatpush1.bf16.msra.mxu0 %v3549
        %4088 = vmatprep.subr.bf16.mxu0 0
        %4089 = vmatpush1.bf16.msra.mxu0 %v3548
        %4090 = vmatprep.subr.bf16.mxu0 0
        %4091 = vmatpush1.bf16.msra.mxu0 %v3547
        %4092 = vmatprep.subr.bf16.mxu0 0
        %4093 = vmatpush1.bf16.msra.mxu0 %v3546
        %4094 = vmatprep.subr.bf16.mxu0 0
        %4095 = vmatpush2.bf16.msra.mxu0 0
        %4096 = vmatprep.subr.bf16.mxu0 0
        %4097 = vmatpush2.bf16.msra.mxu0 0
        %4098 = vmatprep.subr.bf16.mxu0 0
        %4099 = vmatpush2.bf16.msra.mxu0 0
        %4100 = vmatprep.subr.bf16.mxu0 0
        %4101 = vmatpush2.bf16.msra.mxu0 0
        %4102 = vmatprep.subr.bf16.mxu0 0
        %4103 = vmatpush2.bf16.msra.mxu0 0
        %4104 = vmatprep.subr.bf16.mxu0 0
        %4105 = vmatpush2.bf16.msra.mxu0 0
        %4106 = vmatprep.subr.bf16.mxu0 0
        %4107 = vmatpush2.bf16.msra.mxu0 0
        %4108 = vmatprep.subr.bf16.mxu0 0
        %4109 = vmatpush2.bf16.msra.mxu0 0
        %4110 = vmatprep.mubr.bf16.mxu0 0
        %4111 = vmatmul.mubr.bf16.gmra.mxu0 %v3022
        %v4112 = vpop.f32.mrf.mxu0
        %v4113 = vadd.f32 %v4000, %v4112
        %v4114 = vpop.f32.mrf.mxu0
        %v4115 = vpop.f32.mrf.mxu0
        %v4116 = vadd.f32 %v4003, %v4115
        %v4117 = vpop.f32.mrf.mxu0
        %4118 = vmatprep.mubr.bf16.mxu0 0
        %4119 = vmatmul.mubr.bf16.gmra.mxu0 %v3031
        %v4120 = vpop.f32.mrf.mxu0
        %v4121 = vadd.f32 %v4008, %v4120
        %v4122 = vpop.f32.mrf.mxu0
        %v4123 = vpop.f32.mrf.mxu0
        %v4124 = vadd.f32 %v4011, %v4123
        %v4125 = vpop.f32.mrf.mxu0
        %4126 = vmatprep.mubr.bf16.mxu0 0
        %4127 = vmatmul.mubr.bf16.gmra.mxu0 %v3040
        %v4128 = vpop.f32.mrf.mxu0
        %v4129 = vadd.f32 %v4016, %v4128
        %v4130 = vpop.f32.mrf.mxu0
        %v4131 = vpop.f32.mrf.mxu0
        %v4132 = vadd.f32 %v4019, %v4131
        %v4133 = vpop.f32.mrf.mxu0
        %4134 = vmatprep.mubr.bf16.mxu0 0
        %4135 = vmatmul.mubr.bf16.gmra.mxu0 %v3049
        %v4136 = vpop.f32.mrf.mxu0
        %v4137 = vadd.f32 %v4024, %v4136
        %v4138 = vpop.f32.mrf.mxu0
        %v4139 = vpop.f32.mrf.mxu0
        %v4140 = vadd.f32 %v4027, %v4139
        %v4141 = vpop.f32.mrf.mxu0
        %4142 = vmatprep.mubr.bf16.mxu0 0
        %4143 = vmatmul.mubr.bf16.gmra.mxu0 %v3058
        %v4144 = vpop.f32.mrf.mxu0
        %v4145 = vadd.f32 %v4032, %v4144
        %v4146 = vpop.f32.mrf.mxu0
        %v4147 = vpop.f32.mrf.mxu0
        %v4148 = vadd.f32 %v4035, %v4147
        %v4149 = vpop.f32.mrf.mxu0
        %4150 = vmatprep.mubr.bf16.mxu0 0
        %4151 = vmatmul.mubr.bf16.gmra.mxu0 %v3067
        %v4152 = vpop.f32.mrf.mxu0
        %v4153 = vadd.f32 %v4040, %v4152
        %v4154 = vpop.f32.mrf.mxu0
        %v4155 = vpop.f32.mrf.mxu0
        %v4156 = vadd.f32 %v4043, %v4155
        %v4157 = vpop.f32.mrf.mxu0
        %4158 = vmatprep.mubr.bf16.mxu0 0
        %4159 = vmatmul.mubr.bf16.gmra.mxu0 %v3076
        %v4160 = vpop.f32.mrf.mxu0
        %v4161 = vadd.f32 %v4048, %v4160
        %v4162 = vpop.f32.mrf.mxu0
        %v4163 = vpop.f32.mrf.mxu0
        %v4164 = vadd.f32 %v4051, %v4163
        %v4165 = vpop.f32.mrf.mxu0
        %4166 = vmatprep.mubr.bf16.mxu0 0
        %4167 = vmatmul.mubr.bf16.gmra.mxu0 %v3085
        %v4168 = vpop.f32.mrf.mxu0
        %v4169 = vadd.f32 %v4056, %v4168
        %v4170 = vpop.f32.mrf.mxu0
        %v4171 = vpop.f32.mrf.mxu0
        %v4172 = vadd.f32 %v4059, %v4171
        %v4173 = vpop.f32.mrf.mxu0
        %4174 = vmatprep.mubr.bf16.mxu0 0
        %4175 = vmatmul.mubr.bf16.gmra.mxu0 %v3094
        %v4176 = vpop.f32.mrf.mxu0
        %v4177 = vadd.f32 %v4064, %v4176
        %v4178 = vpop.f32.mrf.mxu0
        %v4179 = vpop.f32.mrf.mxu0
        %v4180 = vadd.f32 %v4067, %v4179
        %v4181 = vpop.f32.mrf.mxu0
        %4182 = vmatprep.mubr.bf16.mxu0 0
        %4183 = vmatmul.mubr.bf16.gmra.mxu0 %v3103
        %v4184 = vpop.f32.mrf.mxu0
        %v4185 = vadd.f32 %v4072, %v4184
        %v4186 = vpop.f32.mrf.mxu0
        %v4187 = vpop.f32.mrf.mxu0
        %v4188 = vadd.f32 %v4075, %v4187
        %v4189 = vpop.f32.mrf.mxu0
        %4190 = vdwg.mxu0
        %v4191 = vmax.f32 %v4113, 0.0
        %v4192 = vmax.f32 %v4116, 0.0
        %v4193 = vmax.f32 %v4121, 0.0
        %v4194 = vmax.f32 %v4124, 0.0
        %v4195 = vmax.f32 %v4129, 0.0
        %v4196 = vmax.f32 %v4132, 0.0
        %v4197 = vmax.f32 %v4137, 0.0
        %v4198 = vmax.f32 %v4140, 0.0
        %v4199 = vmax.f32 %v4145, 0.0
        %v4200 = vmax.f32 %v4148, 0.0
        %v4201 = vmax.f32 %v4153, 0.0
        %v4202 = vmax.f32 %v4156, 0.0
        %v4203 = vmax.f32 %v4161, 0.0
        %v4204 = vmax.f32 %v4164, 0.0
        %v4205 = vmax.f32 %v4169, 0.0
        %v4206 = vmax.f32 %v4172, 0.0
        %v4207 = vmax.f32 %v4177, 0.0
        %v4208 = vmax.f32 %v4180, 0.0
        %v4209 = vmax.f32 %v4185, 0.0
        %v4210 = vmax.f32 %v4188, 0.0
        %v4211 = vld [vmem:[#allocation3] sm:$0x1]
        %v4212 = vsel %vm471, 0, %v4211
        %4213 = vst [vmem:[#allocation3] sm:$0x1] %v4212
        %v4214 = vld [vmem:[#allocation3 + $0xc] sm:$0x1]
        %v4215 = vsel %vm471, 0, %v4214
        %4216 = vst [vmem:[#allocation3 + $0xc] sm:$0x1] %v4215
        %v4217 = vld [vmem:[#allocation3 + $0x18] sm:$0x1]
        %v4218 = vsel %vm471, 0, %v4217
        %4219 = vst [vmem:[#allocation3 + $0x18] sm:$0x1] %v4218
        %v4220 = vld [vmem:[#allocation3 + $0x24] sm:$0x1]
        %v4221 = vsel %vm471, 0, %v4220
        %4222 = vst [vmem:[#allocation3 + $0x24] sm:$0x1] %v4221
        %v4223 = vld [vmem:[#allocation3 + $0x30] sm:$0x1]
        %v4224 = vsel %vm471, 0, %v4223
        %4225 = vst [vmem:[#allocation3 + $0x30] sm:$0x1] %v4224
        %v4226 = vld [vmem:[#allocation3 + $0x3c] sm:$0x1]
        %v4227 = vsel %vm471, 0, %v4226
        %4228 = vst [vmem:[#allocation3 + $0x3c] sm:$0x1] %v4227
        %v4229 = vld [vmem:[#allocation3 + $0x48] sm:$0x1]
        %v4230 = vsel %vm471, 0, %v4229
        %4231 = vst [vmem:[#allocation3 + $0x48] sm:$0x1] %v4230
        %v4232 = vld [vmem:[#allocation3 + $0x54] sm:$0x1]
        %v4233 = vsel %vm471, 0, %v4232
        %4234 = vst [vmem:[#allocation3 + $0x54] sm:$0x1] %v4233
        %v4235 = vld [vmem:[#allocation3 + $0x60] sm:$0x1]
        %v4236 = vsel %vm471, 0, %v4235
        %4237 = vst [vmem:[#allocation3 + $0x60] sm:$0x1] %v4236
        %v4238 = vld [vmem:[#allocation3 + $0x6c] sm:$0x1]
        %v4239 = vsel %vm471, 0, %v4238
        %4240 = vst [vmem:[#allocation3 + $0x6c] sm:$0x1] %v4239
        %v4241 = vld [vmem:[#allocation3 + $0x8] sm:$0x1]
        %v4242 = vsel %vm509, 0, %v4241
        %4243 = vst [vmem:[#allocation3 + $0x8] sm:$0x1] %v4242
        %v4244 = vld [vmem:[#allocation3 + $0x14] sm:$0x1]
        %v4245 = vsel %vm509, 0, %v4244
        %4246 = vst [vmem:[#allocation3 + $0x14] sm:$0x1] %v4245
        %v4247 = vld [vmem:[#allocation3 + $0x20] sm:$0x1]
        %v4248 = vsel %vm509, 0, %v4247
        %4249 = vst [vmem:[#allocation3 + $0x20] sm:$0x1] %v4248
        %v4250 = vld [vmem:[#allocation3 + $0x2c] sm:$0x1]
        %v4251 = vsel %vm509, 0, %v4250
        %4252 = vst [vmem:[#allocation3 + $0x2c] sm:$0x1] %v4251
        %v4253 = vld [vmem:[#allocation3 + $0x38] sm:$0x1]
        %v4254 = vsel %vm509, 0, %v4253
        %4255 = vst [vmem:[#allocation3 + $0x38] sm:$0x1] %v4254
        %v4256 = vld [vmem:[#allocation3 + $0x44] sm:$0x1]
        %v4257 = vsel %vm509, 0, %v4256
        %4258 = vst [vmem:[#allocation3 + $0x44] sm:$0x1] %v4257
        %v4259 = vld [vmem:[#allocation3 + $0x50] sm:$0x1]
        %v4260 = vsel %vm509, 0, %v4259
        %4261 = vst [vmem:[#allocation3 + $0x50] sm:$0x1] %v4260
        %v4262 = vld [vmem:[#allocation3 + $0x5c] sm:$0x1]
        %v4263 = vsel %vm509, 0, %v4262
        %4264 = vst [vmem:[#allocation3 + $0x5c] sm:$0x1] %v4263
        %v4265 = vld [vmem:[#allocation3 + $0x68] sm:$0x1]
        %v4266 = vsel %vm509, 0, %v4265
        %4267 = vst [vmem:[#allocation3 + $0x68] sm:$0x1] %v4266
        %v4268 = vld [vmem:[#allocation3 + $0x74] sm:$0x1]
        %v4269 = vsel %vm509, 0, %v4268
        %4270 = vst [vmem:[#allocation3 + $0x74] sm:$0x1] %v4269
        %v4271 = vpack.c.bf16 %v4192, %v4191
        %v4272 = vpack.c.bf16 %v4194, %v4193
        %v4273 = vpack.c.bf16 %v4196, %v4195
        %v4274 = vpack.c.bf16 %v4198, %v4197
        %v4275 = vpack.c.bf16 %v4200, %v4199
        %v4276 = vpack.c.bf16 %v4202, %v4201
        %v4277 = vpack.c.bf16 %v4204, %v4203
        %v4278 = vpack.c.bf16 %v4206, %v4205
        %v4279 = vpack.c.bf16 %v4208, %v4207
        %v4280 = vpack.c.bf16 %v4210, %v4209
        %v4291 = vunpack.c.l.b16 %v4271
        %v4292 = vunpack.c.h.b16 %v4271
        %v4293 = vunpack.c.l.b16 %v4272
        %v4294 = vunpack.c.h.b16 %v4272
        %v4295 = vunpack.c.l.b16 %v4273
        %v4296 = vunpack.c.h.b16 %v4273
        %v4297 = vunpack.c.l.b16 %v4274
        %v4298 = vunpack.c.h.b16 %v4274
        %v4299 = vunpack.c.l.b16 %v4275
        %v4300 = vunpack.c.h.b16 %v4275
        %v4301 = vunpack.c.l.b16 %v4276
        %v4302 = vunpack.c.h.b16 %v4276
        %v4303 = vunpack.c.l.b16 %v4277
        %v4304 = vunpack.c.h.b16 %v4277
        %v4305 = vunpack.c.l.b16 %v4278
        %v4306 = vunpack.c.h.b16 %v4278
        %v4307 = vunpack.c.l.b16 %v4279
        %v4308 = vunpack.c.h.b16 %v4279
        %v4309 = vunpack.c.l.b16 %v4280
        %v4310 = vunpack.c.h.b16 %v4280
        %v4311 = vpack.c.b16 %v4291, %v4291
        %v4312 = vpack.c.b16 %v4292, %v4292
        %v4313 = vpack.c.b16 %v4293, %v4293
        %v4314 = vpack.c.b16 %v4294, %v4294
        %v4315 = vpack.c.b16 %v4295, %v4295
        %v4316 = vpack.c.b16 %v4296, %v4296
        %v4317 = vpack.c.b16 %v4297, %v4297
        %v4318 = vpack.c.b16 %v4298, %v4298
        %v4319 = vpack.c.b16 %v4299, %v4299
        %v4320 = vpack.c.b16 %v4300, %v4300
        %v4321 = vpack.c.b16 %v4301, %v4301
        %v4322 = vpack.c.b16 %v4302, %v4302
        %v4323 = vpack.c.b16 %v4303, %v4303
        %v4324 = vpack.c.b16 %v4304, %v4304
        %v4325 = vpack.c.b16 %v4305, %v4305
        %v4326 = vpack.c.b16 %v4306, %v4306
        %v4327 = vpack.c.b16 %v4307, %v4307
        %v4328 = vpack.c.b16 %v4308, %v4308
        %v4329 = vpack.c.b16 %v4309, %v4309
        %v4330 = vpack.c.b16 %v4310, %v4310
        %v4332 = vshrl.u32 %v4311, 16
        %v4334 = vrot.slane %v4332, 7
        %v4335 = vshll.u32 %v4311, 16
        %v4337 = vor.u32 %v4334, %v4335
        %v4338 = vrot.slane %v4334, 4
        %v4340 = vshrl.u32 %v4312, 16
        %v4342 = vrot.slane %v4340, 7
        %v4343 = vshll.u32 %v4312, 16
        %v4345 = vor.u32 %v4342, %v4343
        %v4346 = vsel %vm571, %v4338, %v4345
        %v4347 = vrot.slane %v4342, 4
        %v4349 = vshrl.u32 %v4313, 16
        %v4351 = vrot.slane %v4349, 7
        %v4352 = vshll.u32 %v4313, 16
        %v4354 = vor.u32 %v4351, %v4352
        %v4355 = vrot.slane %v4351, 4
        %v4357 = vshrl.u32 %v4314, 16
        %v4359 = vrot.slane %v4357, 7
        %v4360 = vshll.u32 %v4314, 16
        %v4362 = vor.u32 %v4359, %v4360
        %v4363 = vsel %vm571, %v4355, %v4362
        %v4364 = vrot.slane %v4359, 4
        %v4366 = vshrl.u32 %v4315, 16
        %v4368 = vrot.slane %v4366, 7
        %v4369 = vshll.u32 %v4315, 16
        %v4371 = vor.u32 %v4368, %v4369
        %v4372 = vrot.slane %v4368, 4
        %v4374 = vshrl.u32 %v4316, 16
        %v4376 = vrot.slane %v4374, 7
        %v4377 = vshll.u32 %v4316, 16
        %v4379 = vor.u32 %v4376, %v4377
        %v4380 = vsel %vm571, %v4372, %v4379
        %v4381 = vrot.slane %v4376, 4
        %v4383 = vshrl.u32 %v4317, 16
        %v4385 = vrot.slane %v4383, 7
        %v4386 = vshll.u32 %v4317, 16
        %v4388 = vor.u32 %v4385, %v4386
        %v4389 = vrot.slane %v4385, 4
        %v4391 = vshrl.u32 %v4318, 16
        %v4393 = vrot.slane %v4391, 7
        %v4394 = vshll.u32 %v4318, 16
        %v4396 = vor.u32 %v4393, %v4394
        %v4397 = vsel %vm571, %v4389, %v4396
        %v4398 = vrot.slane %v4393, 4
        %v4400 = vshrl.u32 %v4319, 16
        %v4402 = vrot.slane %v4400, 7
        %v4403 = vshll.u32 %v4319, 16
        %v4405 = vor.u32 %v4402, %v4403
        %v4406 = vrot.slane %v4402, 4
        %v4408 = vshrl.u32 %v4320, 16
        %v4410 = vrot.slane %v4408, 7
        %v4411 = vshll.u32 %v4320, 16
        %v4413 = vor.u32 %v4410, %v4411
        %v4414 = vsel %vm571, %v4406, %v4413
        %v4415 = vrot.slane %v4410, 4
        %v4417 = vshrl.u32 %v4321, 16
        %v4419 = vrot.slane %v4417, 7
        %v4420 = vshll.u32 %v4321, 16
        %v4422 = vor.u32 %v4419, %v4420
        %v4423 = vrot.slane %v4419, 4
        %v4425 = vshrl.u32 %v4322, 16
        %v4427 = vrot.slane %v4425, 7
        %v4428 = vshll.u32 %v4322, 16
        %v4430 = vor.u32 %v4427, %v4428
        %v4431 = vsel %vm571, %v4423, %v4430
        %v4432 = vrot.slane %v4427, 4
        %v4434 = vshrl.u32 %v4323, 16
        %v4436 = vrot.slane %v4434, 7
        %v4437 = vshll.u32 %v4323, 16
        %v4439 = vor.u32 %v4436, %v4437
        %v4440 = vrot.slane %v4436, 4
        %v4442 = vshrl.u32 %v4324, 16
        %v4444 = vrot.slane %v4442, 7
        %v4445 = vshll.u32 %v4324, 16
        %v4447 = vor.u32 %v4444, %v4445
        %v4448 = vsel %vm571, %v4440, %v4447
        %v4449 = vrot.slane %v4444, 4
        %v4451 = vshrl.u32 %v4325, 16
        %v4453 = vrot.slane %v4451, 7
        %v4454 = vshll.u32 %v4325, 16
        %v4456 = vor.u32 %v4453, %v4454
        %v4457 = vrot.slane %v4453, 4
        %v4459 = vshrl.u32 %v4326, 16
        %v4461 = vrot.slane %v4459, 7
        %v4462 = vshll.u32 %v4326, 16
        %v4464 = vor.u32 %v4461, %v4462
        %v4465 = vsel %vm571, %v4457, %v4464
        %v4466 = vrot.slane %v4461, 4
        %v4468 = vshrl.u32 %v4327, 16
        %v4470 = vrot.slane %v4468, 7
        %v4471 = vshll.u32 %v4327, 16
        %v4473 = vor.u32 %v4470, %v4471
        %v4474 = vrot.slane %v4470, 4
        %v4476 = vshrl.u32 %v4328, 16
        %v4478 = vrot.slane %v4476, 7
        %v4479 = vshll.u32 %v4328, 16
        %v4481 = vor.u32 %v4478, %v4479
        %v4482 = vsel %vm571, %v4474, %v4481
        %v4483 = vrot.slane %v4478, 4
        %v4485 = vshrl.u32 %v4329, 16
        %v4487 = vrot.slane %v4485, 7
        %v4488 = vshll.u32 %v4329, 16
        %v4490 = vor.u32 %v4487, %v4488
        %v4491 = vrot.slane %v4487, 4
        %v4493 = vshrl.u32 %v4330, 16
        %v4495 = vrot.slane %v4493, 7
        %v4496 = vshll.u32 %v4330, 16
        %v4498 = vor.u32 %v4495, %v4496
        %v4499 = vsel %vm571, %v4491, %v4498
        %v4500 = vrot.slane %v4495, 4
        %v4531 = vld [vmem:[#allocation3] sm:$0xf]
        %v4532 = vsel %vm613, %v4337, %v4531
        %4533 = vst [vmem:[#allocation3] sm:$0xf] %v4532
        %4534 = vst [vmem:[#allocation3 + $0x4] sm:$0xf] %v4346
        %v4535 = vld [vmem:[#allocation3 + $0x8] sm:$0x1]
        %v4536 = vsel %vm471, %v4347, %v4535
        %4537 = vst [vmem:[#allocation3 + $0x8] sm:$0x1] %v4536
        %v4538 = vld [vmem:[#allocation3 + $0xc] sm:$0xf]
        %v4539 = vsel %vm613, %v4354, %v4538
        %4540 = vst [vmem:[#allocation3 + $0xc] sm:$0xf] %v4539
        %4541 = vst [vmem:[#allocation3 + $0x10] sm:$0xf] %v4363
        %v4542 = vld [vmem:[#allocation3 + $0x14] sm:$0x1]
        %v4543 = vsel %vm471, %v4364, %v4542
        %4544 = vst [vmem:[#allocation3 + $0x14] sm:$0x1] %v4543
        %v4545 = vld [vmem:[#allocation3 + $0x18] sm:$0xf]
        %v4546 = vsel %vm613, %v4371, %v4545
        %4547 = vst [vmem:[#allocation3 + $0x18] sm:$0xf] %v4546
        %4548 = vst [vmem:[#allocation3 + $0x1c] sm:$0xf] %v4380
        %v4549 = vld [vmem:[#allocation3 + $0x20] sm:$0x1]
        %v4550 = vsel %vm471, %v4381, %v4549
        %4551 = vst [vmem:[#allocation3 + $0x20] sm:$0x1] %v4550
        %v4552 = vld [vmem:[#allocation3 + $0x24] sm:$0xf]
        %v4553 = vsel %vm613, %v4388, %v4552
        %4554 = vst [vmem:[#allocation3 + $0x24] sm:$0xf] %v4553
        %4555 = vst [vmem:[#allocation3 + $0x28] sm:$0xf] %v4397
        %v4556 = vld [vmem:[#allocation3 + $0x2c] sm:$0x1]
        %v4557 = vsel %vm471, %v4398, %v4556
        %4558 = vst [vmem:[#allocation3 + $0x2c] sm:$0x1] %v4557
        %v4559 = vld [vmem:[#allocation3 + $0x30] sm:$0xf]
        %v4560 = vsel %vm613, %v4405, %v4559
        %4561 = vst [vmem:[#allocation3 + $0x30] sm:$0xf] %v4560
        %4562 = vst [vmem:[#allocation3 + $0x34] sm:$0xf] %v4414
        %v4563 = vld [vmem:[#allocation3 + $0x38] sm:$0x1]
        %v4564 = vsel %vm471, %v4415, %v4563
        %4565 = vst [vmem:[#allocation3 + $0x38] sm:$0x1] %v4564
        %v4566 = vld [vmem:[#allocation3 + $0x3c] sm:$0xf]
        %v4567 = vsel %vm613, %v4422, %v4566
        %4568 = vst [vmem:[#allocation3 + $0x3c] sm:$0xf] %v4567
        %4569 = vst [vmem:[#allocation3 + $0x40] sm:$0xf] %v4431
        %v4570 = vld [vmem:[#allocation3 + $0x44] sm:$0x1]
        %v4571 = vsel %vm471, %v4432, %v4570
        %4572 = vst [vmem:[#allocation3 + $0x44] sm:$0x1] %v4571
        %v4573 = vld [vmem:[#allocation3 + $0x48] sm:$0xf]
        %v4574 = vsel %vm613, %v4439, %v4573
        %4575 = vst [vmem:[#allocation3 + $0x48] sm:$0xf] %v4574
        %4576 = vst [vmem:[#allocation3 + $0x4c] sm:$0xf] %v4448
        %v4577 = vld [vmem:[#allocation3 + $0x50] sm:$0x1]
        %v4578 = vsel %vm471, %v4449, %v4577
        %4579 = vst [vmem:[#allocation3 + $0x50] sm:$0x1] %v4578
        %v4580 = vld [vmem:[#allocation3 + $0x54] sm:$0xf]
        %v4581 = vsel %vm613, %v4456, %v4580
        %4582 = vst [vmem:[#allocation3 + $0x54] sm:$0xf] %v4581
        %4583 = vst [vmem:[#allocation3 + $0x58] sm:$0xf] %v4465
        %v4584 = vld [vmem:[#allocation3 + $0x5c] sm:$0x1]
        %v4585 = vsel %vm471, %v4466, %v4584
        %4586 = vst [vmem:[#allocation3 + $0x5c] sm:$0x1] %v4585
        %v4587 = vld [vmem:[#allocation3 + $0x60] sm:$0xf]
        %v4588 = vsel %vm613, %v4473, %v4587
        %4589 = vst [vmem:[#allocation3 + $0x60] sm:$0xf] %v4588
        %4590 = vst [vmem:[#allocation3 + $0x64] sm:$0xf] %v4482
        %v4591 = vld [vmem:[#allocation3 + $0x68] sm:$0x1]
        %v4592 = vsel %vm471, %v4483, %v4591
        %4593 = vst [vmem:[#allocation3 + $0x68] sm:$0x1] %v4592
        %v4594 = vld [vmem:[#allocation3 + $0x6c] sm:$0xf]
        %v4595 = vsel %vm613, %v4490, %v4594
        %4596 = vst [vmem:[#allocation3 + $0x6c] sm:$0xf] %v4595
        %4597 = vst [vmem:[#allocation3 + $0x70] sm:$0xf] %v4499
        %v4598 = vld [vmem:[#allocation3 + $0x74] sm:$0x1]
        %v4599 = vsel %vm471, %v4500, %v4598
        %4600 = vst [vmem:[#allocation3 + $0x74] sm:$0x1] %v4599
        // Predicated region
        $region69: #{tpu_custom_call.1} parent=47 // pred_check
          %p4601 = pneg %p546
        $region70: #{tpu_custom_call.1} parent=47 // pred_check_branch
          %4603 = sbr.rel (%p4601) target = $region72
        $region71: #{tpu_custom_call.1} parent=47 // pred_region
          %4604 = vst [vmem:[#allocation3] sm:$0xf] 0
          %4605 = vst [vmem:[#allocation3 + $0x4] sm:$0xf] 0
          %4606 = vst [vmem:[#allocation3 + $0x8] sm:$0x1] 0
        $region72: #{tpu_custom_call.1} parent=47 // pred_fallthru
          _
        // Predicated region
        $region73: #{tpu_custom_call.1} parent=47 // pred_check
          %p4607 = pneg %p558
        $region74: #{tpu_custom_call.1} parent=47 // pred_check_branch
          %4609 = sbr.rel (%p4607) target = $region76
        $region75: #{tpu_custom_call.1} parent=47 // pred_region
          %s4610 = scalar_lea.vmem [#allocation3], 108
          %4611 = vst [vmem:[%s4610] sm:$0xf] 0
          %4612 = vst [vmem:[%s4610 + $0x4] sm:$0xf] 0
          %4613 = vst [vmem:[%s4610 + $0x8] sm:$0x1] 0
        $region76: #{tpu_custom_call.1} parent=47 // pred_fallthru
          _
        %v4614 = vld [vmem:[#allocation3] sm:$0xf]
        %v4615 = vld [vmem:[#allocation3 + $0x4] sm:$0xf]
        %v4616 = vld [vmem:[#allocation3 + $0xc] sm:$0xf]
        %v4617 = vld [vmem:[#allocation3 + $0x10] sm:$0xf]
        %v4618 = vld [vmem:[#allocation3 + $0x18] sm:$0xf]
        %v4619 = vld [vmem:[#allocation3 + $0x1c] sm:$0xf]
        %v4620 = vld [vmem:[#allocation3 + $0x24] sm:$0xf]
        %v4621 = vld [vmem:[#allocation3 + $0x28] sm:$0xf]
        %v4622 = vld [vmem:[#allocation3 + $0x30] sm:$0xf]
        %v4623 = vld [vmem:[#allocation3 + $0x34] sm:$0xf]
        %v4624 = vld [vmem:[#allocation3 + $0x3c] sm:$0xf]
        %v4625 = vld [vmem:[#allocation3 + $0x40] sm:$0xf]
        %v4626 = vld [vmem:[#allocation3 + $0x48] sm:$0xf]
        %v4627 = vld [vmem:[#allocation3 + $0x4c] sm:$0xf]
        %v4628 = vld [vmem:[#allocation3 + $0x54] sm:$0xf]
        %v4629 = vld [vmem:[#allocation3 + $0x58] sm:$0xf]
        %4630 = vst [vmem:[#allocation4] sm:$0xf] %v4614
        %4631 = vst [vmem:[#allocation4 + $0x24] sm:$0xf] %v4615
        %4632 = vst [vmem:[#allocation4 + $0x48] sm:$0xf] %v4616
        %4633 = vst [vmem:[#allocation4 + $0x6c] sm:$0xf] %v4617
        %4634 = vst [vmem:[#allocation4 + $0x90] sm:$0xf] %v4618
        %4635 = vst [vmem:[#allocation4 + $0xb4] sm:$0xf] %v4619
        %4636 = vst [vmem:[#allocation4 + $0xd8] sm:$0xf] %v4620
        %4637 = vst [vmem:[#allocation4 + $0xfc] sm:$0xf] %v4621
        %4638 = vst [vmem:[#allocation4 + $0x120] sm:$0xf] %v4622
        %4639 = vst [vmem:[#allocation4 + $0x144] sm:$0xf] %v4623
        %4640 = vst [vmem:[#allocation4 + $0x168] sm:$0xf] %v4624
        %4641 = vst [vmem:[#allocation4 + $0x18c] sm:$0xf] %v4625
        %4642 = vst [vmem:[#allocation4 + $0x1b0] sm:$0xf] %v4626
        %4643 = vst [vmem:[#allocation4 + $0x1d4] sm:$0xf] %v4627
        %4644 = vst [vmem:[#allocation4 + $0x1f8] sm:$0xf] %v4628
        %4645 = vst [vmem:[#allocation4 + $0x21c] sm:$0xf] %v4629
        %v4646 = vld [vmem:[#allocation3] sm:$0xf]
        %v4647 = vld [vmem:[#allocation3 + $0x4] sm:$0xf]
        %v4648 = vld [vmem:[#allocation3 + $0x8] sm:$0x1]
        %v4649 = vld [vmem:[#allocation3 + $0xc] sm:$0xf]
        %v4650 = vld [vmem:[#allocation3 + $0x10] sm:$0xf]
        %v4651 = vld [vmem:[#allocation3 + $0x14] sm:$0x1]
        %v4652 = vld [vmem:[#allocation3 + $0x18] sm:$0xf]
        %v4653 = vld [vmem:[#allocation3 + $0x1c] sm:$0xf]
        %v4654 = vld [vmem:[#allocation3 + $0x20] sm:$0x1]
        %v4655 = vld [vmem:[#allocation3 + $0x24] sm:$0xf]
        %v4656 = vld [vmem:[#allocation3 + $0x28] sm:$0xf]
        %v4657 = vld [vmem:[#allocation3 + $0x2c] sm:$0x1]
        %v4658 = vld [vmem:[#allocation3 + $0x30] sm:$0xf]
        %v4659 = vld [vmem:[#allocation3 + $0x34] sm:$0xf]
        %v4660 = vld [vmem:[#allocation3 + $0x38] sm:$0x1]
        %v4661 = vld [vmem:[#allocation3 + $0x3c] sm:$0xf]
        %v4662 = vld [vmem:[#allocation3 + $0x40] sm:$0xf]
        %v4663 = vld [vmem:[#allocation3 + $0x44] sm:$0x1]
        %v4664 = vld [vmem:[#allocation3 + $0x48] sm:$0xf]
        %v4665 = vld [vmem:[#allocation3 + $0x4c] sm:$0xf]
        %v4666 = vld [vmem:[#allocation3 + $0x50] sm:$0x1]
        %v4667 = vld [vmem:[#allocation3 + $0x54] sm:$0xf]
        %v4668 = vld [vmem:[#allocation3 + $0x58] sm:$0xf]
        %v4669 = vld [vmem:[#allocation3 + $0x5c] sm:$0x1]
        %v4671 = vshrl.u32 %v4646, 16
        %v4673 = vrot.slane %v4671, 4
        %v4674 = vshll.u32 %v4646, 16
        %v4676 = vrot.slane %v4674, 5
        %v4677 = vor.u32 %v4673, %v4676
        %v4678 = vrot.slane %v4677, 4
        %v4680 = vshll.u32 %v4647, 16
        %v4682 = vrot.slane %v4680, 5
        %v4683 = vsel %vm988, %v4678, %v4682
        %v4684 = vshrl.u32 %v4647, 16
        %v4686 = vrot.slane %v4684, 4
        %v4687 = vor.u32 %v4686, %v4682
        %v4688 = vrot.slane %v4687, 4
        %v4690 = vshll.u32 %v4648, 16
        %v4692 = vrot.slane %v4690, 5
        %v4693 = vsel %vm988, %v4688, %v4692
        %v4695 = vshrl.u32 %v4649, 16
        %v4697 = vrot.slane %v4695, 4
        %v4698 = vshll.u32 %v4649, 16
        %v4700 = vrot.slane %v4698, 5
        %v4701 = vor.u32 %v4697, %v4700
        %v4702 = vrot.slane %v4701, 4
        %v4704 = vshll.u32 %v4650, 16
        %v4706 = vrot.slane %v4704, 5
        %v4707 = vsel %vm988, %v4702, %v4706
        %v4708 = vshrl.u32 %v4650, 16
        %v4710 = vrot.slane %v4708, 4
        %v4711 = vor.u32 %v4710, %v4706
        %v4712 = vrot.slane %v4711, 4
        %v4714 = vshll.u32 %v4651, 16
        %v4716 = vrot.slane %v4714, 5
        %v4717 = vsel %vm988, %v4712, %v4716
        %v4719 = vshrl.u32 %v4652, 16
        %v4721 = vrot.slane %v4719, 4
        %v4722 = vshll.u32 %v4652, 16
        %v4724 = vrot.slane %v4722, 5
        %v4725 = vor.u32 %v4721, %v4724
        %v4726 = vrot.slane %v4725, 4
        %v4728 = vshll.u32 %v4653, 16
        %v4730 = vrot.slane %v4728, 5
        %v4731 = vsel %vm988, %v4726, %v4730
        %v4732 = vshrl.u32 %v4653, 16
        %v4734 = vrot.slane %v4732, 4
        %v4735 = vor.u32 %v4734, %v4730
        %v4736 = vrot.slane %v4735, 4
        %v4738 = vshll.u32 %v4654, 16
        %v4740 = vrot.slane %v4738, 5
        %v4741 = vsel %vm988, %v4736, %v4740
        %v4743 = vshrl.u32 %v4655, 16
        %v4745 = vrot.slane %v4743, 4
        %v4746 = vshll.u32 %v4655, 16
        %v4748 = vrot.slane %v4746, 5
        %v4749 = vor.u32 %v4745, %v4748
        %v4750 = vrot.slane %v4749, 4
        %v4752 = vshll.u32 %v4656, 16
        %v4754 = vrot.slane %v4752, 5
        %v4755 = vsel %vm988, %v4750, %v4754
        %v4756 = vshrl.u32 %v4656, 16
        %v4758 = vrot.slane %v4756, 4
        %v4759 = vor.u32 %v4758, %v4754
        %v4760 = vrot.slane %v4759, 4
        %v4762 = vshll.u32 %v4657, 16
        %v4764 = vrot.slane %v4762, 5
        %v4765 = vsel %vm988, %v4760, %v4764
        %v4767 = vshrl.u32 %v4658, 16
        %v4769 = vrot.slane %v4767, 4
        %v4770 = vshll.u32 %v4658, 16
        %v4772 = vrot.slane %v4770, 5
        %v4773 = vor.u32 %v4769, %v4772
        %v4774 = vrot.slane %v4773, 4
        %v4776 = vshll.u32 %v4659, 16
        %v4778 = vrot.slane %v4776, 5
        %v4779 = vsel %vm988, %v4774, %v4778
        %v4780 = vshrl.u32 %v4659, 16
        %v4782 = vrot.slane %v4780, 4
        %v4783 = vor.u32 %v4782, %v4778
        %v4784 = vrot.slane %v4783, 4
        %v4786 = vshll.u32 %v4660, 16
        %v4788 = vrot.slane %v4786, 5
        %v4789 = vsel %vm988, %v4784, %v4788
        %v4791 = vshrl.u32 %v4661, 16
        %v4793 = vrot.slane %v4791, 4
        %v4794 = vshll.u32 %v4661, 16
        %v4796 = vrot.slane %v4794, 5
        %v4797 = vor.u32 %v4793, %v4796
        %v4798 = vrot.slane %v4797, 4
        %v4800 = vshll.u32 %v4662, 16
        %v4802 = vrot.slane %v4800, 5
        %v4803 = vsel %vm988, %v4798, %v4802
        %v4804 = vshrl.u32 %v4662, 16
        %v4806 = vrot.slane %v4804, 4
        %v4807 = vor.u32 %v4806, %v4802
        %v4808 = vrot.slane %v4807, 4
        %v4810 = vshll.u32 %v4663, 16
        %v4812 = vrot.slane %v4810, 5
        %v4813 = vsel %vm988, %v4808, %v4812
        %v4815 = vshrl.u32 %v4664, 16
        %v4817 = vrot.slane %v4815, 4
        %v4818 = vshll.u32 %v4664, 16
        %v4820 = vrot.slane %v4818, 5
        %v4821 = vor.u32 %v4817, %v4820
        %v4822 = vrot.slane %v4821, 4
        %v4824 = vshll.u32 %v4665, 16
        %v4826 = vrot.slane %v4824, 5
        %v4827 = vsel %vm988, %v4822, %v4826
        %v4828 = vshrl.u32 %v4665, 16
        %v4830 = vrot.slane %v4828, 4
        %v4831 = vor.u32 %v4830, %v4826
        %v4832 = vrot.slane %v4831, 4
        %v4834 = vshll.u32 %v4666, 16
        %v4836 = vrot.slane %v4834, 5
        %v4837 = vsel %vm988, %v4832, %v4836
        %v4839 = vshrl.u32 %v4667, 16
        %v4841 = vrot.slane %v4839, 4
        %v4842 = vshll.u32 %v4667, 16
        %v4844 = vrot.slane %v4842, 5
        %v4845 = vor.u32 %v4841, %v4844
        %v4846 = vrot.slane %v4845, 4
        %v4848 = vshll.u32 %v4668, 16
        %v4850 = vrot.slane %v4848, 5
        %v4851 = vsel %vm988, %v4846, %v4850
        %v4852 = vshrl.u32 %v4668, 16
        %v4854 = vrot.slane %v4852, 4
        %v4855 = vor.u32 %v4854, %v4850
        %v4856 = vrot.slane %v4855, 4
        %v4858 = vshll.u32 %v4669, 16
        %v4860 = vrot.slane %v4858, 5
        %v4861 = vsel %vm988, %v4856, %v4860
        %4878 = vst [vmem:[#allocation4 + $0x4] sm:$0xf] %v4683
        %4879 = vst [vmem:[#allocation4 + $0x28] sm:$0xf] %v4693
        %4880 = vst [vmem:[#allocation4 + $0x4c] sm:$0xf] %v4707
        %4881 = vst [vmem:[#allocation4 + $0x70] sm:$0xf] %v4717
        %4882 = vst [vmem:[#allocation4 + $0x94] sm:$0xf] %v4731
        %4883 = vst [vmem:[#allocation4 + $0xb8] sm:$0xf] %v4741
        %4884 = vst [vmem:[#allocation4 + $0xdc] sm:$0xf] %v4755
        %4885 = vst [vmem:[#allocation4 + $0x100] sm:$0xf] %v4765
        %4886 = vst [vmem:[#allocation4 + $0x124] sm:$0xf] %v4779
        %4887 = vst [vmem:[#allocation4 + $0x148] sm:$0xf] %v4789
        %4888 = vst [vmem:[#allocation4 + $0x16c] sm:$0xf] %v4803
        %4889 = vst [vmem:[#allocation4 + $0x190] sm:$0xf] %v4813
        %4890 = vst [vmem:[#allocation4 + $0x1b4] sm:$0xf] %v4827
        %4891 = vst [vmem:[#allocation4 + $0x1d8] sm:$0xf] %v4837
        %4892 = vst [vmem:[#allocation4 + $0x1fc] sm:$0xf] %v4851
        %4893 = vst [vmem:[#allocation4 + $0x220] sm:$0xf] %v4861
        %v4894 = vld [vmem:[#allocation3] sm:$0xe]
        %v4895 = vld [vmem:[#allocation3 + $0x4] sm:$0xf]
        %v4896 = vld [vmem:[#allocation3 + $0x8] sm:$0x1]
        %v4897 = vld [vmem:[#allocation3 + $0xc] sm:$0xe]
        %v4898 = vld [vmem:[#allocation3 + $0x10] sm:$0xf]
        %v4899 = vld [vmem:[#allocation3 + $0x14] sm:$0x1]
        %v4900 = vld [vmem:[#allocation3 + $0x18] sm:$0xe]
        %v4901 = vld [vmem:[#allocation3 + $0x1c] sm:$0xf]
        %v4902 = vld [vmem:[#allocation3 + $0x20] sm:$0x1]
        %v4903 = vld [vmem:[#allocation3 + $0x24] sm:$0xe]
        %v4904 = vld [vmem:[#allocation3 + $0x28] sm:$0xf]
        %v4905 = vld [vmem:[#allocation3 + $0x2c] sm:$0x1]
        %v4906 = vld [vmem:[#allocation3 + $0x30] sm:$0xe]
        %v4907 = vld [vmem:[#allocation3 + $0x34] sm:$0xf]
        %v4908 = vld [vmem:[#allocation3 + $0x38] sm:$0x1]
        %v4909 = vld [vmem:[#allocation3 + $0x3c] sm:$0xe]
        %v4910 = vld [vmem:[#allocation3 + $0x40] sm:$0xf]
        %v4911 = vld [vmem:[#allocation3 + $0x44] sm:$0x1]
        %v4912 = vld [vmem:[#allocation3 + $0x48] sm:$0xe]
        %v4913 = vld [vmem:[#allocation3 + $0x4c] sm:$0xf]
        %v4914 = vld [vmem:[#allocation3 + $0x50] sm:$0x1]
        %v4915 = vld [vmem:[#allocation3 + $0x54] sm:$0xe]
        %v4916 = vld [vmem:[#allocation3 + $0x58] sm:$0xf]
        %v4917 = vld [vmem:[#allocation3 + $0x5c] sm:$0x1]
        %v4942 = vrot.slane %v4894, 5
        %v4943 = vrot.slane %v4942, 4
        %v4944 = vrot.slane %v4895, 5
        %v4945 = vsel %vm1331, %v4943, %v4944
        %v4946 = vrot.slane %v4944, 4
        %v4947 = vrot.slane %v4896, 5
        %v4948 = vsel %vm1331, %v4946, %v4947
        %v4949 = vrot.slane %v4897, 5
        %v4950 = vrot.slane %v4949, 4
        %v4951 = vrot.slane %v4898, 5
        %v4952 = vsel %vm1331, %v4950, %v4951
        %v4953 = vrot.slane %v4951, 4
        %v4954 = vrot.slane %v4899, 5
        %v4955 = vsel %vm1331, %v4953, %v4954
        %v4956 = vrot.slane %v4900, 5
        %v4957 = vrot.slane %v4956, 4
        %v4958 = vrot.slane %v4901, 5
        %v4959 = vsel %vm1331, %v4957, %v4958
        %v4960 = vrot.slane %v4958, 4
        %v4961 = vrot.slane %v4902, 5
        %v4962 = vsel %vm1331, %v4960, %v4961
        %v4963 = vrot.slane %v4903, 5
        %v4964 = vrot.slane %v4963, 4
        %v4965 = vrot.slane %v4904, 5
        %v4966 = vsel %vm1331, %v4964, %v4965
        %v4967 = vrot.slane %v4965, 4
        %v4968 = vrot.slane %v4905, 5
        %v4969 = vsel %vm1331, %v4967, %v4968
        %v4970 = vrot.slane %v4906, 5
        %v4971 = vrot.slane %v4970, 4
        %v4972 = vrot.slane %v4907, 5
        %v4973 = vsel %vm1331, %v4971, %v4972
        %v4974 = vrot.slane %v4972, 4
        %v4975 = vrot.slane %v4908, 5
        %v4976 = vsel %vm1331, %v4974, %v4975
        %v4977 = vrot.slane %v4909, 5
        %v4978 = vrot.slane %v4977, 4
        %v4979 = vrot.slane %v4910, 5
        %v4980 = vsel %vm1331, %v4978, %v4979
        %v4981 = vrot.slane %v4979, 4
        %v4982 = vrot.slane %v4911, 5
        %v4983 = vsel %vm1331, %v4981, %v4982
        %v4984 = vrot.slane %v4912, 5
        %v4985 = vrot.slane %v4984, 4
        %v4986 = vrot.slane %v4913, 5
        %v4987 = vsel %vm1331, %v4985, %v4986
        %v4988 = vrot.slane %v4986, 4
        %v4989 = vrot.slane %v4914, 5
        %v4990 = vsel %vm1331, %v4988, %v4989
        %v4991 = vrot.slane %v4915, 5
        %v4992 = vrot.slane %v4991, 4
        %v4993 = vrot.slane %v4916, 5
        %v4994 = vsel %vm1331, %v4992, %v4993
        %v4995 = vrot.slane %v4993, 4
        %v4996 = vrot.slane %v4917, 5
        %v4997 = vsel %vm1331, %v4995, %v4996
        %5014 = vst [vmem:[#allocation4 + $0x8] sm:$0xf] %v4945
        %5015 = vst [vmem:[#allocation4 + $0x2c] sm:$0xf] %v4948
        %5016 = vst [vmem:[#allocation4 + $0x50] sm:$0xf] %v4952
        %5017 = vst [vmem:[#allocation4 + $0x74] sm:$0xf] %v4955
        %5018 = vst [vmem:[#allocation4 + $0x98] sm:$0xf] %v4959
        %5019 = vst [vmem:[#allocation4 + $0xbc] sm:$0xf] %v4962
        %5020 = vst [vmem:[#allocation4 + $0xe0] sm:$0xf] %v4966
        %5021 = vst [vmem:[#allocation4 + $0x104] sm:$0xf] %v4969
        %5022 = vst [vmem:[#allocation4 + $0x128] sm:$0xf] %v4973
        %5023 = vst [vmem:[#allocation4 + $0x14c] sm:$0xf] %v4976
        %5024 = vst [vmem:[#allocation4 + $0x170] sm:$0xf] %v4980
        %5025 = vst [vmem:[#allocation4 + $0x194] sm:$0xf] %v4983
        %5026 = vst [vmem:[#allocation4 + $0x1b8] sm:$0xf] %v4987
        %5027 = vst [vmem:[#allocation4 + $0x1dc] sm:$0xf] %v4990
        %5028 = vst [vmem:[#allocation4 + $0x200] sm:$0xf] %v4994
        %5029 = vst [vmem:[#allocation4 + $0x224] sm:$0xf] %v4997
        %s5030 = scalar_lea.vmem [#allocation3], 12
        %v5031 = vld [vmem:[%s5030] sm:$0xf]
        %v5032 = vld [vmem:[%s5030 + $0x4] sm:$0xf]
        %v5033 = vld [vmem:[%s5030 + $0xc] sm:$0xf]
        %v5034 = vld [vmem:[%s5030 + $0x10] sm:$0xf]
        %v5035 = vld [vmem:[%s5030 + $0x18] sm:$0xf]
        %v5036 = vld [vmem:[%s5030 + $0x1c] sm:$0xf]
        %v5037 = vld [vmem:[%s5030 + $0x24] sm:$0xf]
        %v5038 = vld [vmem:[%s5030 + $0x28] sm:$0xf]
        %v5039 = vld [vmem:[%s5030 + $0x30] sm:$0xf]
        %v5040 = vld [vmem:[%s5030 + $0x34] sm:$0xf]
        %v5041 = vld [vmem:[%s5030 + $0x3c] sm:$0xf]
        %v5042 = vld [vmem:[%s5030 + $0x40] sm:$0xf]
        %v5043 = vld [vmem:[%s5030 + $0x48] sm:$0xf]
        %v5044 = vld [vmem:[%s5030 + $0x4c] sm:$0xf]
        %v5045 = vld [vmem:[%s5030 + $0x54] sm:$0xf]
        %v5046 = vld [vmem:[%s5030 + $0x58] sm:$0xf]
        %5047 = vst [vmem:[#allocation4 + $0xc] sm:$0xf] %v5031
        %5048 = vst [vmem:[#allocation4 + $0x30] sm:$0xf] %v5032
        %5049 = vst [vmem:[#allocation4 + $0x54] sm:$0xf] %v5033
        %5050 = vst [vmem:[#allocation4 + $0x78] sm:$0xf] %v5034
        %5051 = vst [vmem:[#allocation4 + $0x9c] sm:$0xf] %v5035
        %5052 = vst [vmem:[#allocation4 + $0xc0] sm:$0xf] %v5036
        %5053 = vst [vmem:[#allocation4 + $0xe4] sm:$0xf] %v5037
        %5054 = vst [vmem:[#allocation4 + $0x108] sm:$0xf] %v5038
        %5055 = vst [vmem:[#allocation4 + $0x12c] sm:$0xf] %v5039
        %5056 = vst [vmem:[#allocation4 + $0x150] sm:$0xf] %v5040
        %5057 = vst [vmem:[#allocation4 + $0x174] sm:$0xf] %v5041
        %5058 = vst [vmem:[#allocation4 + $0x198] sm:$0xf] %v5042
        %5059 = vst [vmem:[#allocation4 + $0x1bc] sm:$0xf] %v5043
        %5060 = vst [vmem:[#allocation4 + $0x1e0] sm:$0xf] %v5044
        %5061 = vst [vmem:[#allocation4 + $0x204] sm:$0xf] %v5045
        %5062 = vst [vmem:[#allocation4 + $0x228] sm:$0xf] %v5046
        %v5063 = vld [vmem:[%s5030] sm:$0xf]
        %v5064 = vld [vmem:[%s5030 + $0x4] sm:$0xf]
        %v5065 = vld [vmem:[%s5030 + $0x8] sm:$0x1]
        %v5066 = vld [vmem:[%s5030 + $0xc] sm:$0xf]
        %v5067 = vld [vmem:[%s5030 + $0x10] sm:$0xf]
        %v5068 = vld [vmem:[%s5030 + $0x14] sm:$0x1]
        %v5069 = vld [vmem:[%s5030 + $0x18] sm:$0xf]
        %v5070 = vld [vmem:[%s5030 + $0x1c] sm:$0xf]
        %v5071 = vld [vmem:[%s5030 + $0x20] sm:$0x1]
        %v5072 = vld [vmem:[%s5030 + $0x24] sm:$0xf]
        %v5073 = vld [vmem:[%s5030 + $0x28] sm:$0xf]
        %v5074 = vld [vmem:[%s5030 + $0x2c] sm:$0x1]
        %v5075 = vld [vmem:[%s5030 + $0x30] sm:$0xf]
        %v5076 = vld [vmem:[%s5030 + $0x34] sm:$0xf]
        %v5077 = vld [vmem:[%s5030 + $0x38] sm:$0x1]
        %v5078 = vld [vmem:[%s5030 + $0x3c] sm:$0xf]
        %v5079 = vld [vmem:[%s5030 + $0x40] sm:$0xf]
        %v5080 = vld [vmem:[%s5030 + $0x44] sm:$0x1]
        %v5081 = vld [vmem:[%s5030 + $0x48] sm:$0xf]
        %v5082 = vld [vmem:[%s5030 + $0x4c] sm:$0xf]
        %v5083 = vld [vmem:[%s5030 + $0x50] sm:$0x1]
        %v5084 = vld [vmem:[%s5030 + $0x54] sm:$0xf]
        %v5085 = vld [vmem:[%s5030 + $0x58] sm:$0xf]
        %v5086 = vld [vmem:[%s5030 + $0x5c] sm:$0x1]
        %v5088 = vshrl.u32 %v5063, 16
        %v5090 = vrot.slane %v5088, 4
        %v5091 = vshll.u32 %v5063, 16
        %v5093 = vrot.slane %v5091, 5
        %v5094 = vor.u32 %v5090, %v5093
        %v5095 = vrot.slane %v5094, 4
        %v5097 = vshll.u32 %v5064, 16
        %v5099 = vrot.slane %v5097, 5
        %v5100 = vsel %vm988, %v5095, %v5099
        %v5101 = vshrl.u32 %v5064, 16
        %v5103 = vrot.slane %v5101, 4
        %v5104 = vor.u32 %v5103, %v5099
        %v5105 = vrot.slane %v5104, 4
        %v5107 = vshll.u32 %v5065, 16
        %v5109 = vrot.slane %v5107, 5
        %v5110 = vsel %vm988, %v5105, %v5109
        %v5112 = vshrl.u32 %v5066, 16
        %v5114 = vrot.slane %v5112, 4
        %v5115 = vshll.u32 %v5066, 16
        %v5117 = vrot.slane %v5115, 5
        %v5118 = vor.u32 %v5114, %v5117
        %v5119 = vrot.slane %v5118, 4
        %v5121 = vshll.u32 %v5067, 16
        %v5123 = vrot.slane %v5121, 5
        %v5124 = vsel %vm988, %v5119, %v5123
        %v5125 = vshrl.u32 %v5067, 16
        %v5127 = vrot.slane %v5125, 4
        %v5128 = vor.u32 %v5127, %v5123
        %v5129 = vrot.slane %v5128, 4
        %v5131 = vshll.u32 %v5068, 16
        %v5133 = vrot.slane %v5131, 5
        %v5134 = vsel %vm988, %v5129, %v5133
        %v5136 = vshrl.u32 %v5069, 16
        %v5138 = vrot.slane %v5136, 4
        %v5139 = vshll.u32 %v5069, 16
        %v5141 = vrot.slane %v5139, 5
        %v5142 = vor.u32 %v5138, %v5141
        %v5143 = vrot.slane %v5142, 4
        %v5145 = vshll.u32 %v5070, 16
        %v5147 = vrot.slane %v5145, 5
        %v5148 = vsel %vm988, %v5143, %v5147
        %v5149 = vshrl.u32 %v5070, 16
        %v5151 = vrot.slane %v5149, 4
        %v5152 = vor.u32 %v5151, %v5147
        %v5153 = vrot.slane %v5152, 4
        %v5155 = vshll.u32 %v5071, 16
        %v5157 = vrot.slane %v5155, 5
        %v5158 = vsel %vm988, %v5153, %v5157
        %v5160 = vshrl.u32 %v5072, 16
        %v5162 = vrot.slane %v5160, 4
        %v5163 = vshll.u32 %v5072, 16
        %v5165 = vrot.slane %v5163, 5
        %v5166 = vor.u32 %v5162, %v5165
        %v5167 = vrot.slane %v5166, 4
        %v5169 = vshll.u32 %v5073, 16
        %v5171 = vrot.slane %v5169, 5
        %v5172 = vsel %vm988, %v5167, %v5171
        %v5173 = vshrl.u32 %v5073, 16
        %v5175 = vrot.slane %v5173, 4
        %v5176 = vor.u32 %v5175, %v5171
        %v5177 = vrot.slane %v5176, 4
        %v5179 = vshll.u32 %v5074, 16
        %v5181 = vrot.slane %v5179, 5
        %v5182 = vsel %vm988, %v5177, %v5181
        %v5184 = vshrl.u32 %v5075, 16
        %v5186 = vrot.slane %v5184, 4
        %v5187 = vshll.u32 %v5075, 16
        %v5189 = vrot.slane %v5187, 5
        %v5190 = vor.u32 %v5186, %v5189
        %v5191 = vrot.slane %v5190, 4
        %v5193 = vshll.u32 %v5076, 16
        %v5195 = vrot.slane %v5193, 5
        %v5196 = vsel %vm988, %v5191, %v5195
        %v5197 = vshrl.u32 %v5076, 16
        %v5199 = vrot.slane %v5197, 4
        %v5200 = vor.u32 %v5199, %v5195
        %v5201 = vrot.slane %v5200, 4
        %v5203 = vshll.u32 %v5077, 16
        %v5205 = vrot.slane %v5203, 5
        %v5206 = vsel %vm988, %v5201, %v5205
        %v5208 = vshrl.u32 %v5078, 16
        %v5210 = vrot.slane %v5208, 4
        %v5211 = vshll.u32 %v5078, 16
        %v5213 = vrot.slane %v5211, 5
        %v5214 = vor.u32 %v5210, %v5213
        %v5215 = vrot.slane %v5214, 4
        %v5217 = vshll.u32 %v5079, 16
        %v5219 = vrot.slane %v5217, 5
        %v5220 = vsel %vm988, %v5215, %v5219
        %v5221 = vshrl.u32 %v5079, 16
        %v5223 = vrot.slane %v5221, 4
        %v5224 = vor.u32 %v5223, %v5219
        %v5225 = vrot.slane %v5224, 4
        %v5227 = vshll.u32 %v5080, 16
        %v5229 = vrot.slane %v5227, 5
        %v5230 = vsel %vm988, %v5225, %v5229
        %v5232 = vshrl.u32 %v5081, 16
        %v5234 = vrot.slane %v5232, 4
        %v5235 = vshll.u32 %v5081, 16
        %v5237 = vrot.slane %v5235, 5
        %v5238 = vor.u32 %v5234, %v5237
        %v5239 = vrot.slane %v5238, 4
        %v5241 = vshll.u32 %v5082, 16
        %v5243 = vrot.slane %v5241, 5
        %v5244 = vsel %vm988, %v5239, %v5243
        %v5245 = vshrl.u32 %v5082, 16
        %v5247 = vrot.slane %v5245, 4
        %v5248 = vor.u32 %v5247, %v5243
        %v5249 = vrot.slane %v5248, 4
        %v5251 = vshll.u32 %v5083, 16
        %v5253 = vrot.slane %v5251, 5
        %v5254 = vsel %vm988, %v5249, %v5253
        %v5256 = vshrl.u32 %v5084, 16
        %v5258 = vrot.slane %v5256, 4
        %v5259 = vshll.u32 %v5084, 16
        %v5261 = vrot.slane %v5259, 5
        %v5262 = vor.u32 %v5258, %v5261
        %v5263 = vrot.slane %v5262, 4
        %v5265 = vshll.u32 %v5085, 16
        %v5267 = vrot.slane %v5265, 5
        %v5268 = vsel %vm988, %v5263, %v5267
        %v5269 = vshrl.u32 %v5085, 16
        %v5271 = vrot.slane %v5269, 4
        %v5272 = vor.u32 %v5271, %v5267
        %v5273 = vrot.slane %v5272, 4
        %v5275 = vshll.u32 %v5086, 16
        %v5277 = vrot.slane %v5275, 5
        %v5278 = vsel %vm988, %v5273, %v5277
        %5295 = vst [vmem:[#allocation4 + $0x10] sm:$0xf] %v5100
        %5296 = vst [vmem:[#allocation4 + $0x34] sm:$0xf] %v5110
        %5297 = vst [vmem:[#allocation4 + $0x58] sm:$0xf] %v5124
        %5298 = vst [vmem:[#allocation4 + $0x7c] sm:$0xf] %v5134
        %5299 = vst [vmem:[#allocation4 + $0xa0] sm:$0xf] %v5148
        %5300 = vst [vmem:[#allocation4 + $0xc4] sm:$0xf] %v5158
        %5301 = vst [vmem:[#allocation4 + $0xe8] sm:$0xf] %v5172
        %5302 = vst [vmem:[#allocation4 + $0x10c] sm:$0xf] %v5182
        %5303 = vst [vmem:[#allocation4 + $0x130] sm:$0xf] %v5196
        %5304 = vst [vmem:[#allocation4 + $0x154] sm:$0xf] %v5206
        %5305 = vst [vmem:[#allocation4 + $0x178] sm:$0xf] %v5220
        %5306 = vst [vmem:[#allocation4 + $0x19c] sm:$0xf] %v5230
        %5307 = vst [vmem:[#allocation4 + $0x1c0] sm:$0xf] %v5244
        %5308 = vst [vmem:[#allocation4 + $0x1e4] sm:$0xf] %v5254
        %5309 = vst [vmem:[#allocation4 + $0x208] sm:$0xf] %v5268
        %5310 = vst [vmem:[#allocation4 + $0x22c] sm:$0xf] %v5278
        %v5311 = vld [vmem:[%s5030] sm:$0xe]
        %v5312 = vld [vmem:[%s5030 + $0x4] sm:$0xf]
        %v5313 = vld [vmem:[%s5030 + $0x8] sm:$0x1]
        %v5314 = vld [vmem:[%s5030 + $0xc] sm:$0xe]
        %v5315 = vld [vmem:[%s5030 + $0x10] sm:$0xf]
        %v5316 = vld [vmem:[%s5030 + $0x14] sm:$0x1]
        %v5317 = vld [vmem:[%s5030 + $0x18] sm:$0xe]
        %v5318 = vld [vmem:[%s5030 + $0x1c] sm:$0xf]
        %v5319 = vld [vmem:[%s5030 + $0x20] sm:$0x1]
        %v5320 = vld [vmem:[%s5030 + $0x24] sm:$0xe]
        %v5321 = vld [vmem:[%s5030 + $0x28] sm:$0xf]
        %v5322 = vld [vmem:[%s5030 + $0x2c] sm:$0x1]
        %v5323 = vld [vmem:[%s5030 + $0x30] sm:$0xe]
        %v5324 = vld [vmem:[%s5030 + $0x34] sm:$0xf]
        %v5325 = vld [vmem:[%s5030 + $0x38] sm:$0x1]
        %v5326 = vld [vmem:[%s5030 + $0x3c] sm:$0xe]
        %v5327 = vld [vmem:[%s5030 + $0x40] sm:$0xf]
        %v5328 = vld [vmem:[%s5030 + $0x44] sm:$0x1]
        %v5329 = vld [vmem:[%s5030 + $0x48] sm:$0xe]
        %v5330 = vld [vmem:[%s5030 + $0x4c] sm:$0xf]
        %v5331 = vld [vmem:[%s5030 + $0x50] sm:$0x1]
        %v5332 = vld [vmem:[%s5030 + $0x54] sm:$0xe]
        %v5333 = vld [vmem:[%s5030 + $0x58] sm:$0xf]
        %v5334 = vld [vmem:[%s5030 + $0x5c] sm:$0x1]
        %v5359 = vrot.slane %v5311, 5
        %v5360 = vrot.slane %v5359, 4
        %v5361 = vrot.slane %v5312, 5
        %v5362 = vsel %vm1331, %v5360, %v5361
        %v5363 = vrot.slane %v5361, 4
        %v5364 = vrot.slane %v5313, 5
        %v5365 = vsel %vm1331, %v5363, %v5364
        %v5366 = vrot.slane %v5314, 5
        %v5367 = vrot.slane %v5366, 4
        %v5368 = vrot.slane %v5315, 5
        %v5369 = vsel %vm1331, %v5367, %v5368
        %v5370 = vrot.slane %v5368, 4
        %v5371 = vrot.slane %v5316, 5
        %v5372 = vsel %vm1331, %v5370, %v5371
        %v5373 = vrot.slane %v5317, 5
        %v5374 = vrot.slane %v5373, 4
        %v5375 = vrot.slane %v5318, 5
        %v5376 = vsel %vm1331, %v5374, %v5375
        %v5377 = vrot.slane %v5375, 4
        %v5378 = vrot.slane %v5319, 5
        %v5379 = vsel %vm1331, %v5377, %v5378
        %v5380 = vrot.slane %v5320, 5
        %v5381 = vrot.slane %v5380, 4
        %v5382 = vrot.slane %v5321, 5
        %v5383 = vsel %vm1331, %v5381, %v5382
        %v5384 = vrot.slane %v5382, 4
        %v5385 = vrot.slane %v5322, 5
        %v5386 = vsel %vm1331, %v5384, %v5385
        %v5387 = vrot.slane %v5323, 5
        %v5388 = vrot.slane %v5387, 4
        %v5389 = vrot.slane %v5324, 5
        %v5390 = vsel %vm1331, %v5388, %v5389
        %v5391 = vrot.slane %v5389, 4
        %v5392 = vrot.slane %v5325, 5
        %v5393 = vsel %vm1331, %v5391, %v5392
        %v5394 = vrot.slane %v5326, 5
        %v5395 = vrot.slane %v5394, 4
        %v5396 = vrot.slane %v5327, 5
        %v5397 = vsel %vm1331, %v5395, %v5396
        %v5398 = vrot.slane %v5396, 4
        %v5399 = vrot.slane %v5328, 5
        %v5400 = vsel %vm1331, %v5398, %v5399
        %v5401 = vrot.slane %v5329, 5
        %v5402 = vrot.slane %v5401, 4
        %v5403 = vrot.slane %v5330, 5
        %v5404 = vsel %vm1331, %v5402, %v5403
        %v5405 = vrot.slane %v5403, 4
        %v5406 = vrot.slane %v5331, 5
        %v5407 = vsel %vm1331, %v5405, %v5406
        %v5408 = vrot.slane %v5332, 5
        %v5409 = vrot.slane %v5408, 4
        %v5410 = vrot.slane %v5333, 5
        %v5411 = vsel %vm1331, %v5409, %v5410
        %v5412 = vrot.slane %v5410, 4
        %v5413 = vrot.slane %v5334, 5
        %v5414 = vsel %vm1331, %v5412, %v5413
        %5431 = vst [vmem:[#allocation4 + $0x14] sm:$0xf] %v5362
        %5432 = vst [vmem:[#allocation4 + $0x38] sm:$0xf] %v5365
        %5433 = vst [vmem:[#allocation4 + $0x5c] sm:$0xf] %v5369
        %5434 = vst [vmem:[#allocation4 + $0x80] sm:$0xf] %v5372
        %5435 = vst [vmem:[#allocation4 + $0xa4] sm:$0xf] %v5376
        %5436 = vst [vmem:[#allocation4 + $0xc8] sm:$0xf] %v5379
        %5437 = vst [vmem:[#allocation4 + $0xec] sm:$0xf] %v5383
        %5438 = vst [vmem:[#allocation4 + $0x110] sm:$0xf] %v5386
        %5439 = vst [vmem:[#allocation4 + $0x134] sm:$0xf] %v5390
        %5440 = vst [vmem:[#allocation4 + $0x158] sm:$0xf] %v5393
        %5441 = vst [vmem:[#allocation4 + $0x17c] sm:$0xf] %v5397
        %5442 = vst [vmem:[#allocation4 + $0x1a0] sm:$0xf] %v5400
        %5443 = vst [vmem:[#allocation4 + $0x1c4] sm:$0xf] %v5404
        %5444 = vst [vmem:[#allocation4 + $0x1e8] sm:$0xf] %v5407
        %5445 = vst [vmem:[#allocation4 + $0x20c] sm:$0xf] %v5411
        %5446 = vst [vmem:[#allocation4 + $0x230] sm:$0xf] %v5414
        %s5447 = scalar_lea.vmem [#allocation3], 24
        %v5448 = vld [vmem:[%s5447] sm:$0xf]
        %v5449 = vld [vmem:[%s5447 + $0x4] sm:$0xf]
        %v5450 = vld [vmem:[%s5447 + $0xc] sm:$0xf]
        %v5451 = vld [vmem:[%s5447 + $0x10] sm:$0xf]
        %v5452 = vld [vmem:[%s5447 + $0x18] sm:$0xf]
        %v5453 = vld [vmem:[%s5447 + $0x1c] sm:$0xf]
        %v5454 = vld [vmem:[%s5447 + $0x24] sm:$0xf]
        %v5455 = vld [vmem:[%s5447 + $0x28] sm:$0xf]
        %v5456 = vld [vmem:[%s5447 + $0x30] sm:$0xf]
        %v5457 = vld [vmem:[%s5447 + $0x34] sm:$0xf]
        %v5458 = vld [vmem:[%s5447 + $0x3c] sm:$0xf]
        %v5459 = vld [vmem:[%s5447 + $0x40] sm:$0xf]
        %v5460 = vld [vmem:[%s5447 + $0x48] sm:$0xf]
        %v5461 = vld [vmem:[%s5447 + $0x4c] sm:$0xf]
        %v5462 = vld [vmem:[%s5447 + $0x54] sm:$0xf]
        %v5463 = vld [vmem:[%s5447 + $0x58] sm:$0xf]
        %5464 = vst [vmem:[#allocation4 + $0x18] sm:$0xf] %v5448
        %5465 = vst [vmem:[#allocation4 + $0x3c] sm:$0xf] %v5449
        %5466 = vst [vmem:[#allocation4 + $0x60] sm:$0xf] %v5450
        %5467 = vst [vmem:[#allocation4 + $0x84] sm:$0xf] %v5451
        %5468 = vst [vmem:[#allocation4 + $0xa8] sm:$0xf] %v5452
        %5469 = vst [vmem:[#allocation4 + $0xcc] sm:$0xf] %v5453
        %5470 = vst [vmem:[#allocation4 + $0xf0] sm:$0xf] %v5454
        %5471 = vst [vmem:[#allocation4 + $0x114] sm:$0xf] %v5455
        %5472 = vst [vmem:[#allocation4 + $0x138] sm:$0xf] %v5456
        %5473 = vst [vmem:[#allocation4 + $0x15c] sm:$0xf] %v5457
        %5474 = vst [vmem:[#allocation4 + $0x180] sm:$0xf] %v5458
        %5475 = vst [vmem:[#allocation4 + $0x1a4] sm:$0xf] %v5459
        %5476 = vst [vmem:[#allocation4 + $0x1c8] sm:$0xf] %v5460
        %5477 = vst [vmem:[#allocation4 + $0x1ec] sm:$0xf] %v5461
        %5478 = vst [vmem:[#allocation4 + $0x210] sm:$0xf] %v5462
        %5479 = vst [vmem:[#allocation4 + $0x234] sm:$0xf] %v5463
        %v5480 = vld [vmem:[%s5447] sm:$0xf]
        %v5481 = vld [vmem:[%s5447 + $0x4] sm:$0xf]
        %v5482 = vld [vmem:[%s5447 + $0x8] sm:$0x1]
        %v5483 = vld [vmem:[%s5447 + $0xc] sm:$0xf]
        %v5484 = vld [vmem:[%s5447 + $0x10] sm:$0xf]
        %v5485 = vld [vmem:[%s5447 + $0x14] sm:$0x1]
        %v5486 = vld [vmem:[%s5447 + $0x18] sm:$0xf]
        %v5487 = vld [vmem:[%s5447 + $0x1c] sm:$0xf]
        %v5488 = vld [vmem:[%s5447 + $0x20] sm:$0x1]
        %v5489 = vld [vmem:[%s5447 + $0x24] sm:$0xf]
        %v5490 = vld [vmem:[%s5447 + $0x28] sm:$0xf]
        %v5491 = vld [vmem:[%s5447 + $0x2c] sm:$0x1]
        %v5492 = vld [vmem:[%s5447 + $0x30] sm:$0xf]
        %v5493 = vld [vmem:[%s5447 + $0x34] sm:$0xf]
        %v5494 = vld [vmem:[%s5447 + $0x38] sm:$0x1]
        %v5495 = vld [vmem:[%s5447 + $0x3c] sm:$0xf]
        %v5496 = vld [vmem:[%s5447 + $0x40] sm:$0xf]
        %v5497 = vld [vmem:[%s5447 + $0x44] sm:$0x1]
        %v5498 = vld [vmem:[%s5447 + $0x48] sm:$0xf]
        %v5499 = vld [vmem:[%s5447 + $0x4c] sm:$0xf]
        %v5500 = vld [vmem:[%s5447 + $0x50] sm:$0x1]
        %v5501 = vld [vmem:[%s5447 + $0x54] sm:$0xf]
        %v5502 = vld [vmem:[%s5447 + $0x58] sm:$0xf]
        %v5503 = vld [vmem:[%s5447 + $0x5c] sm:$0x1]
        %v5505 = vshrl.u32 %v5480, 16
        %v5507 = vrot.slane %v5505, 4
        %v5508 = vshll.u32 %v5480, 16
        %v5510 = vrot.slane %v5508, 5
        %v5511 = vor.u32 %v5507, %v5510
        %v5512 = vrot.slane %v5511, 4
        %v5514 = vshll.u32 %v5481, 16
        %v5516 = vrot.slane %v5514, 5
        %v5517 = vsel %vm988, %v5512, %v5516
        %v5518 = vshrl.u32 %v5481, 16
        %v5520 = vrot.slane %v5518, 4
        %v5521 = vor.u32 %v5520, %v5516
        %v5522 = vrot.slane %v5521, 4
        %v5524 = vshll.u32 %v5482, 16
        %v5526 = vrot.slane %v5524, 5
        %v5527 = vsel %vm988, %v5522, %v5526
        %v5529 = vshrl.u32 %v5483, 16
        %v5531 = vrot.slane %v5529, 4
        %v5532 = vshll.u32 %v5483, 16
        %v5534 = vrot.slane %v5532, 5
        %v5535 = vor.u32 %v5531, %v5534
        %v5536 = vrot.slane %v5535, 4
        %v5538 = vshll.u32 %v5484, 16
        %v5540 = vrot.slane %v5538, 5
        %v5541 = vsel %vm988, %v5536, %v5540
        %v5542 = vshrl.u32 %v5484, 16
        %v5544 = vrot.slane %v5542, 4
        %v5545 = vor.u32 %v5544, %v5540
        %v5546 = vrot.slane %v5545, 4
        %v5548 = vshll.u32 %v5485, 16
        %v5550 = vrot.slane %v5548, 5
        %v5551 = vsel %vm988, %v5546, %v5550
        %v5553 = vshrl.u32 %v5486, 16
        %v5555 = vrot.slane %v5553, 4
        %v5556 = vshll.u32 %v5486, 16
        %v5558 = vrot.slane %v5556, 5
        %v5559 = vor.u32 %v5555, %v5558
        %v5560 = vrot.slane %v5559, 4
        %v5562 = vshll.u32 %v5487, 16
        %v5564 = vrot.slane %v5562, 5
        %v5565 = vsel %vm988, %v5560, %v5564
        %v5566 = vshrl.u32 %v5487, 16
        %v5568 = vrot.slane %v5566, 4
        %v5569 = vor.u32 %v5568, %v5564
        %v5570 = vrot.slane %v5569, 4
        %v5572 = vshll.u32 %v5488, 16
        %v5574 = vrot.slane %v5572, 5
        %v5575 = vsel %vm988, %v5570, %v5574
        %v5577 = vshrl.u32 %v5489, 16
        %v5579 = vrot.slane %v5577, 4
        %v5580 = vshll.u32 %v5489, 16
        %v5582 = vrot.slane %v5580, 5
        %v5583 = vor.u32 %v5579, %v5582
        %v5584 = vrot.slane %v5583, 4
        %v5586 = vshll.u32 %v5490, 16
        %v5588 = vrot.slane %v5586, 5
        %v5589 = vsel %vm988, %v5584, %v5588
        %v5590 = vshrl.u32 %v5490, 16
        %v5592 = vrot.slane %v5590, 4
        %v5593 = vor.u32 %v5592, %v5588
        %v5594 = vrot.slane %v5593, 4
        %v5596 = vshll.u32 %v5491, 16
        %v5598 = vrot.slane %v5596, 5
        %v5599 = vsel %vm988, %v5594, %v5598
        %v5601 = vshrl.u32 %v5492, 16
        %v5603 = vrot.slane %v5601, 4
        %v5604 = vshll.u32 %v5492, 16
        %v5606 = vrot.slane %v5604, 5
        %v5607 = vor.u32 %v5603, %v5606
        %v5608 = vrot.slane %v5607, 4
        %v5610 = vshll.u32 %v5493, 16
        %v5612 = vrot.slane %v5610, 5
        %v5613 = vsel %vm988, %v5608, %v5612
        %v5614 = vshrl.u32 %v5493, 16
        %v5616 = vrot.slane %v5614, 4
        %v5617 = vor.u32 %v5616, %v5612
        %v5618 = vrot.slane %v5617, 4
        %v5620 = vshll.u32 %v5494, 16
        %v5622 = vrot.slane %v5620, 5
        %v5623 = vsel %vm988, %v5618, %v5622
        %v5625 = vshrl.u32 %v5495, 16
        %v5627 = vrot.slane %v5625, 4
        %v5628 = vshll.u32 %v5495, 16
        %v5630 = vrot.slane %v5628, 5
        %v5631 = vor.u32 %v5627, %v5630
        %v5632 = vrot.slane %v5631, 4
        %v5634 = vshll.u32 %v5496, 16
        %v5636 = vrot.slane %v5634, 5
        %v5637 = vsel %vm988, %v5632, %v5636
        %v5638 = vshrl.u32 %v5496, 16
        %v5640 = vrot.slane %v5638, 4
        %v5641 = vor.u32 %v5640, %v5636
        %v5642 = vrot.slane %v5641, 4
        %v5644 = vshll.u32 %v5497, 16
        %v5646 = vrot.slane %v5644, 5
        %v5647 = vsel %vm988, %v5642, %v5646
        %v5649 = vshrl.u32 %v5498, 16
        %v5651 = vrot.slane %v5649, 4
        %v5652 = vshll.u32 %v5498, 16
        %v5654 = vrot.slane %v5652, 5
        %v5655 = vor.u32 %v5651, %v5654
        %v5656 = vrot.slane %v5655, 4
        %v5658 = vshll.u32 %v5499, 16
        %v5660 = vrot.slane %v5658, 5
        %v5661 = vsel %vm988, %v5656, %v5660
        %v5662 = vshrl.u32 %v5499, 16
        %v5664 = vrot.slane %v5662, 4
        %v5665 = vor.u32 %v5664, %v5660
        %v5666 = vrot.slane %v5665, 4
        %v5668 = vshll.u32 %v5500, 16
        %v5670 = vrot.slane %v5668, 5
        %v5671 = vsel %vm988, %v5666, %v5670
        %v5673 = vshrl.u32 %v5501, 16
        %v5675 = vrot.slane %v5673, 4
        %v5676 = vshll.u32 %v5501, 16
        %v5678 = vrot.slane %v5676, 5
        %v5679 = vor.u32 %v5675, %v5678
        %v5680 = vrot.slane %v5679, 4
        %v5682 = vshll.u32 %v5502, 16
        %v5684 = vrot.slane %v5682, 5
        %v5685 = vsel %vm988, %v5680, %v5684
        %v5686 = vshrl.u32 %v5502, 16
        %v5688 = vrot.slane %v5686, 4
        %v5689 = vor.u32 %v5688, %v5684
        %v5690 = vrot.slane %v5689, 4
        %v5692 = vshll.u32 %v5503, 16
        %v5694 = vrot.slane %v5692, 5
        %v5695 = vsel %vm988, %v5690, %v5694
        %5712 = vst [vmem:[#allocation4 + $0x1c] sm:$0xf] %v5517
        %5713 = vst [vmem:[#allocation4 + $0x40] sm:$0xf] %v5527
        %5714 = vst [vmem:[#allocation4 + $0x64] sm:$0xf] %v5541
        %5715 = vst [vmem:[#allocation4 + $0x88] sm:$0xf] %v5551
        %5716 = vst [vmem:[#allocation4 + $0xac] sm:$0xf] %v5565
        %5717 = vst [vmem:[#allocation4 + $0xd0] sm:$0xf] %v5575
        %5718 = vst [vmem:[#allocation4 + $0xf4] sm:$0xf] %v5589
        %5719 = vst [vmem:[#allocation4 + $0x118] sm:$0xf] %v5599
        %5720 = vst [vmem:[#allocation4 + $0x13c] sm:$0xf] %v5613
        %5721 = vst [vmem:[#allocation4 + $0x160] sm:$0xf] %v5623
        %5722 = vst [vmem:[#allocation4 + $0x184] sm:$0xf] %v5637
        %5723 = vst [vmem:[#allocation4 + $0x1a8] sm:$0xf] %v5647
        %5724 = vst [vmem:[#allocation4 + $0x1cc] sm:$0xf] %v5661
        %5725 = vst [vmem:[#allocation4 + $0x1f0] sm:$0xf] %v5671
        %5726 = vst [vmem:[#allocation4 + $0x214] sm:$0xf] %v5685
        %5727 = vst [vmem:[#allocation4 + $0x238] sm:$0xf] %v5695
        %v5728 = vld [vmem:[%s5447] sm:$0xe]
        %v5729 = vld [vmem:[%s5447 + $0x4] sm:$0xf]
        %v5730 = vld [vmem:[%s5447 + $0x8] sm:$0x1]
        %v5731 = vld [vmem:[%s5447 + $0xc] sm:$0xe]
        %v5732 = vld [vmem:[%s5447 + $0x10] sm:$0xf]
        %v5733 = vld [vmem:[%s5447 + $0x14] sm:$0x1]
        %v5734 = vld [vmem:[%s5447 + $0x18] sm:$0xe]
        %v5735 = vld [vmem:[%s5447 + $0x1c] sm:$0xf]
        %v5736 = vld [vmem:[%s5447 + $0x20] sm:$0x1]
        %v5737 = vld [vmem:[%s5447 + $0x24] sm:$0xe]
        %v5738 = vld [vmem:[%s5447 + $0x28] sm:$0xf]
        %v5739 = vld [vmem:[%s5447 + $0x2c] sm:$0x1]
        %v5740 = vld [vmem:[%s5447 + $0x30] sm:$0xe]
        %v5741 = vld [vmem:[%s5447 + $0x34] sm:$0xf]
        %v5742 = vld [vmem:[%s5447 + $0x38] sm:$0x1]
        %v5743 = vld [vmem:[%s5447 + $0x3c] sm:$0xe]
        %v5744 = vld [vmem:[%s5447 + $0x40] sm:$0xf]
        %v5745 = vld [vmem:[%s5447 + $0x44] sm:$0x1]
        %v5746 = vld [vmem:[%s5447 + $0x48] sm:$0xe]
        %v5747 = vld [vmem:[%s5447 + $0x4c] sm:$0xf]
        %v5748 = vld [vmem:[%s5447 + $0x50] sm:$0x1]
        %v5749 = vld [vmem:[%s5447 + $0x54] sm:$0xe]
        %v5750 = vld [vmem:[%s5447 + $0x58] sm:$0xf]
        %v5751 = vld [vmem:[%s5447 + $0x5c] sm:$0x1]
        %v5776 = vrot.slane %v5728, 5
        %v5777 = vrot.slane %v5776, 4
        %v5778 = vrot.slane %v5729, 5
        %v5779 = vsel %vm1331, %v5777, %v5778
        %v5780 = vrot.slane %v5778, 4
        %v5781 = vrot.slane %v5730, 5
        %v5782 = vsel %vm1331, %v5780, %v5781
        %v5783 = vrot.slane %v5731, 5
        %v5784 = vrot.slane %v5783, 4
        %v5785 = vrot.slane %v5732, 5
        %v5786 = vsel %vm1331, %v5784, %v5785
        %v5787 = vrot.slane %v5785, 4
        %v5788 = vrot.slane %v5733, 5
        %v5789 = vsel %vm1331, %v5787, %v5788
        %v5790 = vrot.slane %v5734, 5
        %v5791 = vrot.slane %v5790, 4
        %v5792 = vrot.slane %v5735, 5
        %v5793 = vsel %vm1331, %v5791, %v5792
        %v5794 = vrot.slane %v5792, 4
        %v5795 = vrot.slane %v5736, 5
        %v5796 = vsel %vm1331, %v5794, %v5795
        %v5797 = vrot.slane %v5737, 5
        %v5798 = vrot.slane %v5797, 4
        %v5799 = vrot.slane %v5738, 5
        %v5800 = vsel %vm1331, %v5798, %v5799
        %v5801 = vrot.slane %v5799, 4
        %v5802 = vrot.slane %v5739, 5
        %v5803 = vsel %vm1331, %v5801, %v5802
        %v5804 = vrot.slane %v5740, 5
        %v5805 = vrot.slane %v5804, 4
        %v5806 = vrot.slane %v5741, 5
        %v5807 = vsel %vm1331, %v5805, %v5806
        %v5808 = vrot.slane %v5806, 4
        %v5809 = vrot.slane %v5742, 5
        %v5810 = vsel %vm1331, %v5808, %v5809
        %v5811 = vrot.slane %v5743, 5
        %v5812 = vrot.slane %v5811, 4
        %v5813 = vrot.slane %v5744, 5
        %v5814 = vsel %vm1331, %v5812, %v5813
        %v5815 = vrot.slane %v5813, 4
        %v5816 = vrot.slane %v5745, 5
        %v5817 = vsel %vm1331, %v5815, %v5816
        %v5818 = vrot.slane %v5746, 5
        %v5819 = vrot.slane %v5818, 4
        %v5820 = vrot.slane %v5747, 5
        %v5821 = vsel %vm1331, %v5819, %v5820
        %v5822 = vrot.slane %v5820, 4
        %v5823 = vrot.slane %v5748, 5
        %v5824 = vsel %vm1331, %v5822, %v5823
        %v5825 = vrot.slane %v5749, 5
        %v5826 = vrot.slane %v5825, 4
        %v5827 = vrot.slane %v5750, 5
        %v5828 = vsel %vm1331, %v5826, %v5827
        %v5829 = vrot.slane %v5827, 4
        %v5830 = vrot.slane %v5751, 5
        %v5831 = vsel %vm1331, %v5829, %v5830
        %5848 = vst [vmem:[#allocation4 + $0x20] sm:$0xf] %v5779
        %5849 = vst [vmem:[#allocation4 + $0x44] sm:$0xf] %v5782
        %5850 = vst [vmem:[#allocation4 + $0x68] sm:$0xf] %v5786
        %5851 = vst [vmem:[#allocation4 + $0x8c] sm:$0xf] %v5789
        %5852 = vst [vmem:[#allocation4 + $0xb0] sm:$0xf] %v5793
        %5853 = vst [vmem:[#allocation4 + $0xd4] sm:$0xf] %v5796
        %5854 = vst [vmem:[#allocation4 + $0xf8] sm:$0xf] %v5800
        %5855 = vst [vmem:[#allocation4 + $0x11c] sm:$0xf] %v5803
        %5856 = vst [vmem:[#allocation4 + $0x140] sm:$0xf] %v5807
        %5857 = vst [vmem:[#allocation4 + $0x164] sm:$0xf] %v5810
        %5858 = vst [vmem:[#allocation4 + $0x188] sm:$0xf] %v5814
        %5859 = vst [vmem:[#allocation4 + $0x1ac] sm:$0xf] %v5817
        %5860 = vst [vmem:[#allocation4 + $0x1d0] sm:$0xf] %v5821
        %5861 = vst [vmem:[#allocation4 + $0x1f4] sm:$0xf] %v5824
        %5862 = vst [vmem:[#allocation4 + $0x218] sm:$0xf] %v5828
        %5863 = vst [vmem:[#allocation4 + $0x23c] sm:$0xf] %v5831
        %v5864 = vld [vmem:[#allocation4] sm:$0xff]
        %v5865 = vld [vmem:[#allocation4 + $0x8] sm:$0xff]
        %v5866 = vld [vmem:[#allocation4 + $0x10] sm:$0xff]
        %v5867 = vld [vmem:[#allocation4 + $0x18] sm:$0xff]
        %v5868 = vld [vmem:[#allocation4 + $0x20] sm:$0xf]
        %v5869 = vld [vmem:[#allocation4 + $0x24] sm:$0xff]
        %v5870 = vld [vmem:[#allocation4 + $0x2c] sm:$0xff]
        %v5871 = vld [vmem:[#allocation4 + $0x34] sm:$0xff]
        %v5872 = vld [vmem:[#allocation4 + $0x3c] sm:$0xff]
        %v5873 = vld [vmem:[#allocation4 + $0x44] sm:$0xf]
        %v5874 = vld [vmem:[#allocation4 + $0x48] sm:$0xff]
        %v5875 = vld [vmem:[#allocation4 + $0x50] sm:$0xff]
        %v5876 = vld [vmem:[#allocation4 + $0x58] sm:$0xff]
        %v5877 = vld [vmem:[#allocation4 + $0x60] sm:$0xff]
        %v5878 = vld [vmem:[#allocation4 + $0x68] sm:$0xf]
        %v5879 = vld [vmem:[#allocation4 + $0x6c] sm:$0xff]
        %v5880 = vld [vmem:[#allocation4 + $0x74] sm:$0xff]
        %v5881 = vld [vmem:[#allocation4 + $0x7c] sm:$0xff]
        %v5882 = vld [vmem:[#allocation4 + $0x84] sm:$0xff]
        %v5883 = vld [vmem:[#allocation4 + $0x8c] sm:$0xf]
        %v5884 = vld [vmem:[#allocation4 + $0x90] sm:$0xff]
        %v5885 = vld [vmem:[#allocation4 + $0x98] sm:$0xff]
        %v5886 = vld [vmem:[#allocation4 + $0xa0] sm:$0xff]
        %v5887 = vld [vmem:[#allocation4 + $0xa8] sm:$0xff]
        %v5888 = vld [vmem:[#allocation4 + $0xb0] sm:$0xf]
        %v5889 = vld [vmem:[#allocation4 + $0xb4] sm:$0xff]
        %v5890 = vld [vmem:[#allocation4 + $0xbc] sm:$0xff]
        %v5891 = vld [vmem:[#allocation4 + $0xc4] sm:$0xff]
        %v5892 = vld [vmem:[#allocation4 + $0xcc] sm:$0xff]
        %v5893 = vld [vmem:[#allocation4 + $0xd4] sm:$0xf]
        %v5894 = vld [vmem:[#allocation4 + $0xd8] sm:$0xff]
        %v5895 = vld [vmem:[#allocation4 + $0xe0] sm:$0xff]
        %v5896 = vld [vmem:[#allocation4 + $0xe8] sm:$0xff]
        %v5897 = vld [vmem:[#allocation4 + $0xf0] sm:$0xff]
        %v5898 = vld [vmem:[#allocation4 + $0xf8] sm:$0xf]
        %v5899 = vld [vmem:[#allocation4 + $0xfc] sm:$0xff]
        %v5900 = vld [vmem:[#allocation4 + $0x104] sm:$0xff]
        %v5901 = vld [vmem:[#allocation4 + $0x10c] sm:$0xff]
        %v5902 = vld [vmem:[#allocation4 + $0x114] sm:$0xff]
        %v5903 = vld [vmem:[#allocation4 + $0x11c] sm:$0xf]
        %v5904 = vld [vmem:[#allocation4 + $0x120] sm:$0xff]
        %v5905 = vld [vmem:[#allocation4 + $0x128] sm:$0xff]
        %v5906 = vld [vmem:[#allocation4 + $0x130] sm:$0xff]
        %v5907 = vld [vmem:[#allocation4 + $0x138] sm:$0xff]
        %v5908 = vld [vmem:[#allocation4 + $0x140] sm:$0xf]
        %v5909 = vld [vmem:[#allocation4 + $0x144] sm:$0xff]
        %v5910 = vld [vmem:[#allocation4 + $0x14c] sm:$0xff]
        %v5911 = vld [vmem:[#allocation4 + $0x154] sm:$0xff]
        %v5912 = vld [vmem:[#allocation4 + $0x15c] sm:$0xff]
        %v5913 = vld [vmem:[#allocation4 + $0x164] sm:$0xf]
        %v5914 = vld [vmem:[#allocation4 + $0x168] sm:$0xff]
        %v5915 = vld [vmem:[#allocation4 + $0x170] sm:$0xff]
        %v5916 = vld [vmem:[#allocation4 + $0x178] sm:$0xff]
        %v5917 = vld [vmem:[#allocation4 + $0x180] sm:$0xff]
        %v5918 = vld [vmem:[#allocation4 + $0x188] sm:$0xf]
        %v5919 = vld [vmem:[#allocation4 + $0x18c] sm:$0xff]
        %v5920 = vld [vmem:[#allocation4 + $0x194] sm:$0xff]
        %v5921 = vld [vmem:[#allocation4 + $0x19c] sm:$0xff]
        %v5922 = vld [vmem:[#allocation4 + $0x1a4] sm:$0xff]
        %v5923 = vld [vmem:[#allocation4 + $0x1ac] sm:$0xf]
        %v5924 = vld [vmem:[#allocation4 + $0x1b0] sm:$0xff]
        %v5925 = vld [vmem:[#allocation4 + $0x1b8] sm:$0xff]
        %v5926 = vld [vmem:[#allocation4 + $0x1c0] sm:$0xff]
        %v5927 = vld [vmem:[#allocation4 + $0x1c8] sm:$0xff]
        %v5928 = vld [vmem:[#allocation4 + $0x1d0] sm:$0xf]
        %v5929 = vld [vmem:[#allocation4 + $0x1d4] sm:$0xff]
        %v5930 = vld [vmem:[#allocation4 + $0x1dc] sm:$0xff]
        %v5931 = vld [vmem:[#allocation4 + $0x1e4] sm:$0xff]
        %v5932 = vld [vmem:[#allocation4 + $0x1ec] sm:$0xff]
        %v5933 = vld [vmem:[#allocation4 + $0x1f4] sm:$0xf]
        %v5934 = vld [vmem:[#allocation4 + $0x1f8] sm:$0xff]
        %v5935 = vld [vmem:[#allocation4 + $0x200] sm:$0xff]
        %v5936 = vld [vmem:[#allocation4 + $0x208] sm:$0xff]
        %v5937 = vld [vmem:[#allocation4 + $0x210] sm:$0xff]
        %v5938 = vld [vmem:[#allocation4 + $0x218] sm:$0xf]
        %v5939 = vld [vmem:[#allocation4 + $0x21c] sm:$0xff]
        %v5940 = vld [vmem:[#allocation4 + $0x224] sm:$0xff]
        %v5941 = vld [vmem:[#allocation4 + $0x22c] sm:$0xff]
        %v5942 = vld [vmem:[#allocation4 + $0x234] sm:$0xff]
        %v5943 = vld [vmem:[#allocation4 + $0x23c] sm:$0xf]
        %v5944 = vld [vmem:[#allocation13] sm:$0xf]
        %v5945 = vld [vmem:[#allocation13 + $0x4] sm:$0xf]
        %v5946 = vld [vmem:[#allocation13 + $0x8] sm:$0xf]
        %v5947 = vld [vmem:[#allocation13 + $0xc] sm:$0xf]
        %v5948 = vld [vmem:[#allocation13 + $0x10] sm:$0xf]
        %v5949 = vld [vmem:[#allocation13 + $0x14] sm:$0xf]
        %v5950 = vld [vmem:[#allocation13 + $0x18] sm:$0xf]
        %v5951 = vld [vmem:[#allocation13 + $0x1c] sm:$0xf]
        %v5952 = vld [vmem:[#allocation13 + $0x20] sm:$0xf]
        %v5953 = vld [vmem:[#allocation13 + $0x24] sm:$0xf]
        %v5954 = vld [vmem:[#allocation13 + $0x28] sm:$0xf]
        %v5955 = vld [vmem:[#allocation13 + $0x2c] sm:$0xf]
        %v5956 = vld [vmem:[#allocation13 + $0x30] sm:$0xf]
        %v5957 = vld [vmem:[#allocation13 + $0x34] sm:$0xf]
        %v5958 = vld [vmem:[#allocation13 + $0x38] sm:$0xf]
        %v5959 = vld [vmem:[#allocation13 + $0x3c] sm:$0xf]
        %v5960 = vld [vmem:[#allocation13 + $0x40] sm:$0xf]
        %v5961 = vld [vmem:[#allocation13 + $0x44] sm:$0xf]
        %v5962 = vld [vmem:[#allocation13 + $0x48] sm:$0xf]
        %v5963 = vld [vmem:[#allocation13 + $0x4c] sm:$0xf]
        %v5964 = vld [vmem:[#allocation13 + $0x50] sm:$0xf]
        %v5965 = vld [vmem:[#allocation13 + $0x54] sm:$0xf]
        %v5966 = vld [vmem:[#allocation13 + $0x58] sm:$0xf]
        %v5967 = vld [vmem:[#allocation13 + $0x5c] sm:$0xf]
        %v5968 = vld [vmem:[#allocation13 + $0x60] sm:$0xf]
        %v5969 = vld [vmem:[#allocation13 + $0x64] sm:$0xf]
        %v5970 = vld [vmem:[#allocation13 + $0x68] sm:$0xf]
        %v5971 = vld [vmem:[#allocation13 + $0x6c] sm:$0xf]
        %v5972 = vld [vmem:[#allocation13 + $0x70] sm:$0xf]
        %v5973 = vld [vmem:[#allocation13 + $0x74] sm:$0xf]
        %v5974 = vld [vmem:[#allocation13 + $0x78] sm:$0xf]
        %v5975 = vld [vmem:[#allocation13 + $0x7c] sm:$0xf]
        %v5976 = vld [vmem:[#allocation13 + $0x80] sm:$0xf]
        %v5977 = vld [vmem:[#allocation13 + $0x84] sm:$0xf]
        %v5978 = vld [vmem:[#allocation13 + $0x88] sm:$0xf]
        %v5979 = vld [vmem:[#allocation13 + $0x8c] sm:$0xf]
        %v5980 = vld [vmem:[#allocation13 + $0x90] sm:$0xf]
        %v5981 = vld [vmem:[#allocation13 + $0x94] sm:$0xf]
        %v5982 = vld [vmem:[#allocation13 + $0x98] sm:$0xf]
        %v5983 = vld [vmem:[#allocation13 + $0x9c] sm:$0xf]
        %v5984 = vld [vmem:[#allocation13 + $0xa0] sm:$0xf]
        %v5985 = vld [vmem:[#allocation13 + $0xa4] sm:$0xf]
        %v5986 = vld [vmem:[#allocation13 + $0xa8] sm:$0xf]
        %v5987 = vld [vmem:[#allocation13 + $0xac] sm:$0xf]
        %v5988 = vld [vmem:[#allocation13 + $0xb0] sm:$0xf]
        %v5989 = vld [vmem:[#allocation13 + $0xb4] sm:$0xf]
        %v5990 = vld [vmem:[#allocation13 + $0xb8] sm:$0xf]
        %v5991 = vld [vmem:[#allocation13 + $0xbc] sm:$0xf]
        %v5992 = vld [vmem:[#allocation13 + $0xc0] sm:$0xf]
        %v5993 = vld [vmem:[#allocation13 + $0xc4] sm:$0xf]
        %v5994 = vld [vmem:[#allocation13 + $0xc8] sm:$0xf]
        %v5995 = vld [vmem:[#allocation13 + $0xcc] sm:$0xf]
        %v5996 = vld [vmem:[#allocation13 + $0xd0] sm:$0xf]
        %v5997 = vld [vmem:[#allocation13 + $0xd4] sm:$0xf]
        %v5998 = vld [vmem:[#allocation13 + $0xd8] sm:$0xf]
        %v5999 = vld [vmem:[#allocation13 + $0xdc] sm:$0xf]
        %v6000 = vld [vmem:[#allocation13 + $0xe0] sm:$0xf]
        %v6001 = vld [vmem:[#allocation13 + $0xe4] sm:$0xf]
        %v6002 = vld [vmem:[#allocation13 + $0xe8] sm:$0xf]
        %v6003 = vld [vmem:[#allocation13 + $0xec] sm:$0xf]
        %v6004 = vld [vmem:[#allocation13 + $0xf0] sm:$0xf]
        %v6005 = vld [vmem:[#allocation13 + $0xf4] sm:$0xf]
        %v6006 = vld [vmem:[#allocation13 + $0xf8] sm:$0xf]
        %v6007 = vld [vmem:[#allocation13 + $0xfc] sm:$0xf]
        %v6008 = vld [vmem:[#allocation13 + $0x100] sm:$0xf]
        %v6009 = vld [vmem:[#allocation13 + $0x104] sm:$0xf]
        %v6010 = vld [vmem:[#allocation13 + $0x108] sm:$0xf]
        %v6011 = vld [vmem:[#allocation13 + $0x10c] sm:$0xf]
        %v6012 = vld [vmem:[#allocation13 + $0x110] sm:$0xf]
        %v6013 = vld [vmem:[#allocation13 + $0x114] sm:$0xf]
        %v6014 = vld [vmem:[#allocation13 + $0x118] sm:$0xf]
        %v6015 = vld [vmem:[#allocation13 + $0x11c] sm:$0xf]
        %v6016 = vld [vmem:[#allocation13 + $0x120] sm:$0xf]
        %v6017 = vld [vmem:[#allocation13 + $0x124] sm:$0xf]
        %v6018 = vld [vmem:[#allocation13 + $0x128] sm:$0xf]
        %v6019 = vld [vmem:[#allocation13 + $0x12c] sm:$0xf]
        %v6020 = vld [vmem:[#allocation13 + $0x130] sm:$0xf]
        %v6021 = vld [vmem:[#allocation13 + $0x134] sm:$0xf]
        %v6022 = vld [vmem:[#allocation13 + $0x138] sm:$0xf]
        %v6023 = vld [vmem:[#allocation13 + $0x13c] sm:$0xf]
        %v6024 = vld [vmem:[#allocation13 + $0x140] sm:$0xf]
        %v6025 = vld [vmem:[#allocation13 + $0x144] sm:$0xf]
        %v6026 = vld [vmem:[#allocation13 + $0x148] sm:$0xf]
        %v6027 = vld [vmem:[#allocation13 + $0x14c] sm:$0xf]
        %v6028 = vld [vmem:[#allocation13 + $0x150] sm:$0xf]
        %v6029 = vld [vmem:[#allocation13 + $0x154] sm:$0xf]
        %v6030 = vld [vmem:[#allocation13 + $0x158] sm:$0xf]
        %v6031 = vld [vmem:[#allocation13 + $0x15c] sm:$0xf]
        %v6032 = vld [vmem:[#allocation13 + $0x160] sm:$0xf]
        %v6033 = vld [vmem:[#allocation13 + $0x164] sm:$0xf]
        %v6034 = vld [vmem:[#allocation13 + $0x168] sm:$0xf]
        %v6035 = vld [vmem:[#allocation13 + $0x16c] sm:$0xf]
        %v6036 = vld [vmem:[#allocation13 + $0x170] sm:$0xf]
        %v6037 = vld [vmem:[#allocation13 + $0x174] sm:$0xf]
        %v6038 = vld [vmem:[#allocation13 + $0x178] sm:$0xf]
        %v6039 = vld [vmem:[#allocation13 + $0x17c] sm:$0xf]
        %v6040 = vld [vmem:[#allocation13 + $0x180] sm:$0xf]
        %v6041 = vld [vmem:[#allocation13 + $0x184] sm:$0xf]
        %v6042 = vld [vmem:[#allocation13 + $0x188] sm:$0xf]
        %v6043 = vld [vmem:[#allocation13 + $0x18c] sm:$0xf]
        %v6044 = vld [vmem:[#allocation13 + $0x190] sm:$0xf]
        %v6045 = vld [vmem:[#allocation13 + $0x194] sm:$0xf]
        %v6046 = vld [vmem:[#allocation13 + $0x198] sm:$0xf]
        %v6047 = vld [vmem:[#allocation13 + $0x19c] sm:$0xf]
        %v6048 = vld [vmem:[#allocation13 + $0x1a0] sm:$0xf]
        %v6049 = vld [vmem:[#allocation13 + $0x1a4] sm:$0xf]
        %v6050 = vld [vmem:[#allocation13 + $0x1a8] sm:$0xf]
        %v6051 = vld [vmem:[#allocation13 + $0x1ac] sm:$0xf]
        %v6052 = vld [vmem:[#allocation13 + $0x1b0] sm:$0xf]
        %v6053 = vld [vmem:[#allocation13 + $0x1b4] sm:$0xf]
        %v6054 = vld [vmem:[#allocation13 + $0x1b8] sm:$0xf]
        %v6055 = vld [vmem:[#allocation13 + $0x1bc] sm:$0xf]
        %v6056 = vld [vmem:[#allocation13 + $0x1c0] sm:$0xf]
        %v6057 = vld [vmem:[#allocation13 + $0x1c4] sm:$0xf]
        %v6058 = vld [vmem:[#allocation13 + $0x1c8] sm:$0xf]
        %v6059 = vld [vmem:[#allocation13 + $0x1cc] sm:$0xf]
        %v6060 = vld [vmem:[#allocation13 + $0x1d0] sm:$0xf]
        %v6061 = vld [vmem:[#allocation13 + $0x1d4] sm:$0xf]
        %v6062 = vld [vmem:[#allocation13 + $0x1d8] sm:$0xf]
        %v6063 = vld [vmem:[#allocation13 + $0x1dc] sm:$0xf]
        %v6064 = vld [vmem:[#allocation13 + $0x1e0] sm:$0xf]
        %v6065 = vld [vmem:[#allocation13 + $0x1e4] sm:$0xf]
        %v6066 = vld [vmem:[#allocation13 + $0x1e8] sm:$0xf]
        %v6067 = vld [vmem:[#allocation13 + $0x1ec] sm:$0xf]
        %v6068 = vld [vmem:[#allocation13 + $0x1f0] sm:$0xf]
        %v6069 = vld [vmem:[#allocation13 + $0x1f4] sm:$0xf]
        %v6070 = vld [vmem:[#allocation13 + $0x1f8] sm:$0xf]
        %v6071 = vld [vmem:[#allocation13 + $0x1fc] sm:$0xf]
        %v6072 = vld [vmem:[#allocation13 + $0x200] sm:$0xf]
        %v6073 = vld [vmem:[#allocation13 + $0x204] sm:$0xf]
        %v6074 = vld [vmem:[#allocation13 + $0x208] sm:$0xf]
        %v6075 = vld [vmem:[#allocation13 + $0x20c] sm:$0xf]
        %v6076 = vld [vmem:[#allocation13 + $0x210] sm:$0xf]
        %v6077 = vld [vmem:[#allocation13 + $0x214] sm:$0xf]
        %v6078 = vld [vmem:[#allocation13 + $0x218] sm:$0xf]
        %v6079 = vld [vmem:[#allocation13 + $0x21c] sm:$0xf]
        %v6080 = vld [vmem:[#allocation13 + $0x220] sm:$0xf]
        %v6081 = vld [vmem:[#allocation13 + $0x224] sm:$0xf]
        %v6082 = vld [vmem:[#allocation13 + $0x228] sm:$0xf]
        %v6083 = vld [vmem:[#allocation13 + $0x22c] sm:$0xf]
        %v6084 = vld [vmem:[#allocation13 + $0x230] sm:$0xf]
        %v6085 = vld [vmem:[#allocation13 + $0x234] sm:$0xf]
        %v6086 = vld [vmem:[#allocation13 + $0x238] sm:$0xf]
        %v6087 = vld [vmem:[#allocation13 + $0x23c] sm:$0xf]
        %v6088 = vld [vmem:[%s389] sm:$0xf]
        %v6089 = vld [vmem:[%s389 + $0x4] sm:$0xf]
        %v6090 = vld [vmem:[%s389 + $0x8] sm:$0xf]
        %v6091 = vld [vmem:[%s389 + $0xc] sm:$0xf]
        %v6092 = vld [vmem:[%s389 + $0x10] sm:$0xf]
        %v6093 = vld [vmem:[%s389 + $0x14] sm:$0xf]
        %v6094 = vld [vmem:[%s389 + $0x18] sm:$0xf]
        %v6095 = vld [vmem:[%s389 + $0x1c] sm:$0xf]
        %v6096 = vld [vmem:[%s389 + $0x20] sm:$0xf]
        %v6097 = vld [vmem:[%s389 + $0x24] sm:$0xf]
        %v6098 = vld [vmem:[%s389 + $0x28] sm:$0xf]
        %v6099 = vld [vmem:[%s389 + $0x2c] sm:$0xf]
        %v6100 = vld [vmem:[%s389 + $0x30] sm:$0xf]
        %v6101 = vld [vmem:[%s389 + $0x34] sm:$0xf]
        %v6102 = vld [vmem:[%s389 + $0x38] sm:$0xf]
        %v6103 = vld [vmem:[%s389 + $0x3c] sm:$0xf]
        %v6104 = vunpack.c.l.bf16 %v6088
        %v6105 = vunpack.c.l.bf16 %v6089
        %v6106 = vunpack.c.l.bf16 %v6090
        %v6107 = vunpack.c.l.bf16 %v6091
        %v6108 = vunpack.c.l.bf16 %v6092
        %v6109 = vunpack.c.l.bf16 %v6093
        %v6110 = vunpack.c.l.bf16 %v6094
        %v6111 = vunpack.c.l.bf16 %v6095
        %v6112 = vunpack.c.l.bf16 %v6096
        %v6113 = vunpack.c.l.bf16 %v6097
        %v6114 = vunpack.c.l.bf16 %v6098
        %v6115 = vunpack.c.l.bf16 %v6099
        %v6116 = vunpack.c.l.bf16 %v6100
        %v6117 = vunpack.c.l.bf16 %v6101
        %v6118 = vunpack.c.l.bf16 %v6102
        %v6119 = vunpack.c.l.bf16 %v6103
        %v6120 = vld [vmem:[%s6] sm:$0x1]
        %v6122 = vlaneseq
        %v6123 = vshrl.u32 %v6122, 7
        %v6124 = vsub.s32 0, %v6123
        %v6125 = vrot.slane %v6120, %v6124
        %v6207 = vunpack.c.l.b16 %v5864
        %v6208 = vunpack.c.h.b16 %v5864
        %v6209 = vunpack.c.l.b16 %v5865
        %v6210 = vunpack.c.h.b16 %v5865
        %v6211 = vunpack.c.l.b16 %v5866
        %v6212 = vunpack.c.h.b16 %v5866
        %v6213 = vunpack.c.l.b16 %v5867
        %v6214 = vunpack.c.h.b16 %v5867
        %v6215 = vunpack.c.l.b16 %v5868
        %v6216 = vunpack.c.l.b16 %v5869
        %v6217 = vunpack.c.h.b16 %v5869
        %v6218 = vunpack.c.l.b16 %v5870
        %v6219 = vunpack.c.h.b16 %v5870
        %v6220 = vunpack.c.l.b16 %v5871
        %v6221 = vunpack.c.h.b16 %v5871
        %v6222 = vunpack.c.l.b16 %v5872
        %v6223 = vunpack.c.h.b16 %v5872
        %v6224 = vunpack.c.l.b16 %v5873
        %v6225 = vunpack.c.l.b16 %v5874
        %v6226 = vunpack.c.h.b16 %v5874
        %v6227 = vunpack.c.l.b16 %v5875
        %v6228 = vunpack.c.h.b16 %v5875
        %v6229 = vunpack.c.l.b16 %v5876
        %v6230 = vunpack.c.h.b16 %v5876
        %v6231 = vunpack.c.l.b16 %v5877
        %v6232 = vunpack.c.h.b16 %v5877
        %v6233 = vunpack.c.l.b16 %v5878
        %v6234 = vunpack.c.l.b16 %v5879
        %v6235 = vunpack.c.h.b16 %v5879
        %v6236 = vunpack.c.l.b16 %v5880
        %v6237 = vunpack.c.h.b16 %v5880
        %v6238 = vunpack.c.l.b16 %v5881
        %v6239 = vunpack.c.h.b16 %v5881
        %v6240 = vunpack.c.l.b16 %v5882
        %v6241 = vunpack.c.h.b16 %v5882
        %v6242 = vunpack.c.l.b16 %v5883
        %v6243 = vunpack.c.l.b16 %v5884
        %v6244 = vunpack.c.h.b16 %v5884
        %v6245 = vunpack.c.l.b16 %v5885
        %v6246 = vunpack.c.h.b16 %v5885
        %v6247 = vunpack.c.l.b16 %v5886
        %v6248 = vunpack.c.h.b16 %v5886
        %v6249 = vunpack.c.l.b16 %v5887
        %v6250 = vunpack.c.h.b16 %v5887
        %v6251 = vunpack.c.l.b16 %v5888
        %v6252 = vunpack.c.l.b16 %v5889
        %v6253 = vunpack.c.h.b16 %v5889
        %v6254 = vunpack.c.l.b16 %v5890
        %v6255 = vunpack.c.h.b16 %v5890
        %v6256 = vunpack.c.l.b16 %v5891
        %v6257 = vunpack.c.h.b16 %v5891
        %v6258 = vunpack.c.l.b16 %v5892
        %v6259 = vunpack.c.h.b16 %v5892
        %v6260 = vunpack.c.l.b16 %v5893
        %v6261 = vunpack.c.l.b16 %v5894
        %v6262 = vunpack.c.h.b16 %v5894
        %v6263 = vunpack.c.l.b16 %v5895
        %v6264 = vunpack.c.h.b16 %v5895
        %v6265 = vunpack.c.l.b16 %v5896
        %v6266 = vunpack.c.h.b16 %v5896
        %v6267 = vunpack.c.l.b16 %v5897
        %v6268 = vunpack.c.h.b16 %v5897
        %v6269 = vunpack.c.l.b16 %v5898
        %v6270 = vunpack.c.l.b16 %v5899
        %v6271 = vunpack.c.h.b16 %v5899
        %v6272 = vunpack.c.l.b16 %v5900
        %v6273 = vunpack.c.h.b16 %v5900
        %v6274 = vunpack.c.l.b16 %v5901
        %v6275 = vunpack.c.h.b16 %v5901
        %v6276 = vunpack.c.l.b16 %v5902
        %v6277 = vunpack.c.h.b16 %v5902
        %v6278 = vunpack.c.l.b16 %v5903
        %v6279 = vunpack.c.l.b16 %v5904
        %v6280 = vunpack.c.h.b16 %v5904
        %v6281 = vunpack.c.l.b16 %v5905
        %v6282 = vunpack.c.h.b16 %v5905
        %v6283 = vunpack.c.l.b16 %v5906
        %v6284 = vunpack.c.h.b16 %v5906
        %v6285 = vunpack.c.l.b16 %v5907
        %v6286 = vunpack.c.h.b16 %v5907
        %v6287 = vunpack.c.l.b16 %v5908
        %v6288 = vunpack.c.l.b16 %v5909
        %v6289 = vunpack.c.h.b16 %v5909
        %v6290 = vunpack.c.l.b16 %v5910
        %v6291 = vunpack.c.h.b16 %v5910
        %v6292 = vunpack.c.l.b16 %v5911
        %v6293 = vunpack.c.h.b16 %v5911
        %v6294 = vunpack.c.l.b16 %v5912
        %v6295 = vunpack.c.h.b16 %v5912
        %v6296 = vunpack.c.l.b16 %v5913
        %v6297 = vunpack.c.l.b16 %v5914
        %v6298 = vunpack.c.h.b16 %v5914
        %v6299 = vunpack.c.l.b16 %v5915
        %v6300 = vunpack.c.h.b16 %v5915
        %v6301 = vunpack.c.l.b16 %v5916
        %v6302 = vunpack.c.h.b16 %v5916
        %v6303 = vunpack.c.l.b16 %v5917
        %v6304 = vunpack.c.h.b16 %v5917
        %v6305 = vunpack.c.l.b16 %v5918
        %v6306 = vunpack.c.l.b16 %v5919
        %v6307 = vunpack.c.h.b16 %v5919
        %v6308 = vunpack.c.l.b16 %v5920
        %v6309 = vunpack.c.h.b16 %v5920
        %v6310 = vunpack.c.l.b16 %v5921
        %v6311 = vunpack.c.h.b16 %v5921
        %v6312 = vunpack.c.l.b16 %v5922
        %v6313 = vunpack.c.h.b16 %v5922
        %v6314 = vunpack.c.l.b16 %v5923
        %v6315 = vunpack.c.l.b16 %v5924
        %v6316 = vunpack.c.h.b16 %v5924
        %v6317 = vunpack.c.l.b16 %v5925
        %v6318 = vunpack.c.h.b16 %v5925
        %v6319 = vunpack.c.l.b16 %v5926
        %v6320 = vunpack.c.h.b16 %v5926
        %v6321 = vunpack.c.l.b16 %v5927
        %v6322 = vunpack.c.h.b16 %v5927
        %v6323 = vunpack.c.l.b16 %v5928
        %v6324 = vunpack.c.l.b16 %v5929
        %v6325 = vunpack.c.h.b16 %v5929
        %v6326 = vunpack.c.l.b16 %v5930
        %v6327 = vunpack.c.h.b16 %v5930
        %v6328 = vunpack.c.l.b16 %v5931
        %v6329 = vunpack.c.h.b16 %v5931
        %v6330 = vunpack.c.l.b16 %v5932
        %v6331 = vunpack.c.h.b16 %v5932
        %v6332 = vunpack.c.l.b16 %v5933
        %v6333 = vunpack.c.l.b16 %v5934
        %v6334 = vunpack.c.h.b16 %v5934
        %v6335 = vunpack.c.l.b16 %v5935
        %v6336 = vunpack.c.h.b16 %v5935
        %v6337 = vunpack.c.l.b16 %v5936
        %v6338 = vunpack.c.h.b16 %v5936
        %v6339 = vunpack.c.l.b16 %v5937
        %v6340 = vunpack.c.h.b16 %v5937
        %v6341 = vunpack.c.l.b16 %v5938
        %v6342 = vunpack.c.l.b16 %v5939
        %v6343 = vunpack.c.h.b16 %v5939
        %v6344 = vunpack.c.l.b16 %v5940
        %v6345 = vunpack.c.h.b16 %v5940
        %v6346 = vunpack.c.l.b16 %v5941
        %v6347 = vunpack.c.h.b16 %v5941
        %v6348 = vunpack.c.l.b16 %v5942
        %v6349 = vunpack.c.h.b16 %v5942
        %v6350 = vunpack.c.l.b16 %v5943
        %v6351 = vpack.c.b16 %v6216, %v6207
        %v6352 = vpack.c.b16 %v6217, %v6208
        %v6353 = vpack.c.b16 %v6218, %v6209
        %v6354 = vpack.c.b16 %v6219, %v6210
        %v6355 = vpack.c.b16 %v6220, %v6211
        %v6356 = vpack.c.b16 %v6221, %v6212
        %v6357 = vpack.c.b16 %v6222, %v6213
        %v6358 = vpack.c.b16 %v6223, %v6214
        %v6359 = vpack.c.b16 %v6224, %v6215
        %v6360 = vpack.c.b16 %v6234, %v6225
        %v6361 = vpack.c.b16 %v6235, %v6226
        %v6362 = vpack.c.b16 %v6236, %v6227
        %v6363 = vpack.c.b16 %v6237, %v6228
        %v6364 = vpack.c.b16 %v6238, %v6229
        %v6365 = vpack.c.b16 %v6239, %v6230
        %v6366 = vpack.c.b16 %v6240, %v6231
        %v6367 = vpack.c.b16 %v6241, %v6232
        %v6368 = vpack.c.b16 %v6242, %v6233
        %v6369 = vpack.c.b16 %v6252, %v6243
        %v6370 = vpack.c.b16 %v6253, %v6244
        %v6371 = vpack.c.b16 %v6254, %v6245
        %v6372 = vpack.c.b16 %v6255, %v6246
        %v6373 = vpack.c.b16 %v6256, %v6247
        %v6374 = vpack.c.b16 %v6257, %v6248
        %v6375 = vpack.c.b16 %v6258, %v6249
        %v6376 = vpack.c.b16 %v6259, %v6250
        %v6377 = vpack.c.b16 %v6260, %v6251
        %v6378 = vpack.c.b16 %v6270, %v6261
        %v6379 = vpack.c.b16 %v6271, %v6262
        %v6380 = vpack.c.b16 %v6272, %v6263
        %v6381 = vpack.c.b16 %v6273, %v6264
        %v6382 = vpack.c.b16 %v6274, %v6265
        %v6383 = vpack.c.b16 %v6275, %v6266
        %v6384 = vpack.c.b16 %v6276, %v6267
        %v6385 = vpack.c.b16 %v6277, %v6268
        %v6386 = vpack.c.b16 %v6278, %v6269
        %v6387 = vpack.c.b16 %v6288, %v6279
        %v6388 = vpack.c.b16 %v6289, %v6280
        %v6389 = vpack.c.b16 %v6290, %v6281
        %v6390 = vpack.c.b16 %v6291, %v6282
        %v6391 = vpack.c.b16 %v6292, %v6283
        %v6392 = vpack.c.b16 %v6293, %v6284
        %v6393 = vpack.c.b16 %v6294, %v6285
        %v6394 = vpack.c.b16 %v6295, %v6286
        %v6395 = vpack.c.b16 %v6296, %v6287
        %v6396 = vpack.c.b16 %v6306, %v6297
        %v6397 = vpack.c.b16 %v6307, %v6298
        %v6398 = vpack.c.b16 %v6308, %v6299
        %v6399 = vpack.c.b16 %v6309, %v6300
        %v6400 = vpack.c.b16 %v6310, %v6301
        %v6401 = vpack.c.b16 %v6311, %v6302
        %v6402 = vpack.c.b16 %v6312, %v6303
        %v6403 = vpack.c.b16 %v6313, %v6304
        %v6404 = vpack.c.b16 %v6314, %v6305
        %v6405 = vpack.c.b16 %v6324, %v6315
        %v6406 = vpack.c.b16 %v6325, %v6316
        %v6407 = vpack.c.b16 %v6326, %v6317
        %v6408 = vpack.c.b16 %v6327, %v6318
        %v6409 = vpack.c.b16 %v6328, %v6319
        %v6410 = vpack.c.b16 %v6329, %v6320
        %v6411 = vpack.c.b16 %v6330, %v6321
        %v6412 = vpack.c.b16 %v6331, %v6322
        %v6413 = vpack.c.b16 %v6332, %v6323
        %v6414 = vpack.c.b16 %v6342, %v6333
        %v6415 = vpack.c.b16 %v6343, %v6334
        %v6416 = vpack.c.b16 %v6344, %v6335
        %v6417 = vpack.c.b16 %v6345, %v6336
        %v6418 = vpack.c.b16 %v6346, %v6337
        %v6419 = vpack.c.b16 %v6347, %v6338
        %v6420 = vpack.c.b16 %v6348, %v6339
        %v6421 = vpack.c.b16 %v6349, %v6340
        %v6422 = vpack.c.b16 %v6350, %v6341
        %v6639 = vunpack.c.l.b16 %v5944
        %v6640 = vunpack.c.l.b16 %v5945
        %v6641 = vunpack.c.l.b16 %v5946
        %v6642 = vunpack.c.l.b16 %v5947
        %v6643 = vunpack.c.l.b16 %v5948
        %v6644 = vunpack.c.l.b16 %v5949
        %v6645 = vunpack.c.l.b16 %v5950
        %v6646 = vunpack.c.l.b16 %v5951
        %v6647 = vunpack.c.l.b16 %v5952
        %v6648 = vunpack.c.l.b16 %v5953
        %v6649 = vunpack.c.l.b16 %v5954
        %v6650 = vunpack.c.l.b16 %v5955
        %v6651 = vunpack.c.l.b16 %v5956
        %v6652 = vunpack.c.l.b16 %v5957
        %v6653 = vunpack.c.l.b16 %v5958
        %v6654 = vunpack.c.l.b16 %v5959
        %v6655 = vunpack.c.l.b16 %v5960
        %v6656 = vunpack.c.l.b16 %v5961
        %v6657 = vunpack.c.l.b16 %v5962
        %v6658 = vunpack.c.l.b16 %v5963
        %v6659 = vunpack.c.l.b16 %v5964
        %v6660 = vunpack.c.l.b16 %v5965
        %v6661 = vunpack.c.l.b16 %v5966
        %v6662 = vunpack.c.l.b16 %v5967
        %v6663 = vunpack.c.l.b16 %v5968
        %v6664 = vunpack.c.l.b16 %v5969
        %v6665 = vunpack.c.l.b16 %v5970
        %v6666 = vunpack.c.l.b16 %v5971
        %v6667 = vunpack.c.l.b16 %v5972
        %v6668 = vunpack.c.l.b16 %v5973
        %v6669 = vunpack.c.l.b16 %v5974
        %v6670 = vunpack.c.l.b16 %v5975
        %v6671 = vunpack.c.l.b16 %v5976
        %v6672 = vunpack.c.l.b16 %v5977
        %v6673 = vunpack.c.l.b16 %v5978
        %v6674 = vunpack.c.l.b16 %v5979
        %v6675 = vunpack.c.l.b16 %v5980
        %v6676 = vunpack.c.l.b16 %v5981
        %v6677 = vunpack.c.l.b16 %v5982
        %v6678 = vunpack.c.l.b16 %v5983
        %v6679 = vunpack.c.l.b16 %v5984
        %v6680 = vunpack.c.l.b16 %v5985
        %v6681 = vunpack.c.l.b16 %v5986
        %v6682 = vunpack.c.l.b16 %v5987
        %v6683 = vunpack.c.l.b16 %v5988
        %v6684 = vunpack.c.l.b16 %v5989
        %v6685 = vunpack.c.l.b16 %v5990
        %v6686 = vunpack.c.l.b16 %v5991
        %v6687 = vunpack.c.l.b16 %v5992
        %v6688 = vunpack.c.l.b16 %v5993
        %v6689 = vunpack.c.l.b16 %v5994
        %v6690 = vunpack.c.l.b16 %v5995
        %v6691 = vunpack.c.l.b16 %v5996
        %v6692 = vunpack.c.l.b16 %v5997
        %v6693 = vunpack.c.l.b16 %v5998
        %v6694 = vunpack.c.l.b16 %v5999
        %v6695 = vunpack.c.l.b16 %v6000
        %v6696 = vunpack.c.l.b16 %v6001
        %v6697 = vunpack.c.l.b16 %v6002
        %v6698 = vunpack.c.l.b16 %v6003
        %v6699 = vunpack.c.l.b16 %v6004
        %v6700 = vunpack.c.l.b16 %v6005
        %v6701 = vunpack.c.l.b16 %v6006
        %v6702 = vunpack.c.l.b16 %v6007
        %v6703 = vunpack.c.l.b16 %v6008
        %v6704 = vunpack.c.l.b16 %v6009
        %v6705 = vunpack.c.l.b16 %v6010
        %v6706 = vunpack.c.l.b16 %v6011
        %v6707 = vunpack.c.l.b16 %v6012
        %v6708 = vunpack.c.l.b16 %v6013
        %v6709 = vunpack.c.l.b16 %v6014
        %v6710 = vunpack.c.l.b16 %v6015
        %v6711 = vunpack.c.l.b16 %v6016
        %v6712 = vunpack.c.l.b16 %v6017
        %v6713 = vunpack.c.l.b16 %v6018
        %v6714 = vunpack.c.l.b16 %v6019
        %v6715 = vunpack.c.l.b16 %v6020
        %v6716 = vunpack.c.l.b16 %v6021
        %v6717 = vunpack.c.l.b16 %v6022
        %v6718 = vunpack.c.l.b16 %v6023
        %v6719 = vunpack.c.l.b16 %v6024
        %v6720 = vunpack.c.l.b16 %v6025
        %v6721 = vunpack.c.l.b16 %v6026
        %v6722 = vunpack.c.l.b16 %v6027
        %v6723 = vunpack.c.l.b16 %v6028
        %v6724 = vunpack.c.l.b16 %v6029
        %v6725 = vunpack.c.l.b16 %v6030
        %v6726 = vunpack.c.l.b16 %v6031
        %v6727 = vunpack.c.l.b16 %v6032
        %v6728 = vunpack.c.l.b16 %v6033
        %v6729 = vunpack.c.l.b16 %v6034
        %v6730 = vunpack.c.l.b16 %v6035
        %v6731 = vunpack.c.l.b16 %v6036
        %v6732 = vunpack.c.l.b16 %v6037
        %v6733 = vunpack.c.l.b16 %v6038
        %v6734 = vunpack.c.l.b16 %v6039
        %v6735 = vunpack.c.l.b16 %v6040
        %v6736 = vunpack.c.l.b16 %v6041
        %v6737 = vunpack.c.l.b16 %v6042
        %v6738 = vunpack.c.l.b16 %v6043
        %v6739 = vunpack.c.l.b16 %v6044
        %v6740 = vunpack.c.l.b16 %v6045
        %v6741 = vunpack.c.l.b16 %v6046
        %v6742 = vunpack.c.l.b16 %v6047
        %v6743 = vunpack.c.l.b16 %v6048
        %v6744 = vunpack.c.l.b16 %v6049
        %v6745 = vunpack.c.l.b16 %v6050
        %v6746 = vunpack.c.l.b16 %v6051
        %v6747 = vunpack.c.l.b16 %v6052
        %v6748 = vunpack.c.l.b16 %v6053
        %v6749 = vunpack.c.l.b16 %v6054
        %v6750 = vunpack.c.l.b16 %v6055
        %v6751 = vunpack.c.l.b16 %v6056
        %v6752 = vunpack.c.l.b16 %v6057
        %v6753 = vunpack.c.l.b16 %v6058
        %v6754 = vunpack.c.l.b16 %v6059
        %v6755 = vunpack.c.l.b16 %v6060
        %v6756 = vunpack.c.l.b16 %v6061
        %v6757 = vunpack.c.l.b16 %v6062
        %v6758 = vunpack.c.l.b16 %v6063
        %v6759 = vunpack.c.l.b16 %v6064
        %v6760 = vunpack.c.l.b16 %v6065
        %v6761 = vunpack.c.l.b16 %v6066
        %v6762 = vunpack.c.l.b16 %v6067
        %v6763 = vunpack.c.l.b16 %v6068
        %v6764 = vunpack.c.l.b16 %v6069
        %v6765 = vunpack.c.l.b16 %v6070
        %v6766 = vunpack.c.l.b16 %v6071
        %v6767 = vunpack.c.l.b16 %v6072
        %v6768 = vunpack.c.l.b16 %v6073
        %v6769 = vunpack.c.l.b16 %v6074
        %v6770 = vunpack.c.l.b16 %v6075
        %v6771 = vunpack.c.l.b16 %v6076
        %v6772 = vunpack.c.l.b16 %v6077
        %v6773 = vunpack.c.l.b16 %v6078
        %v6774 = vunpack.c.l.b16 %v6079
        %v6775 = vunpack.c.l.b16 %v6080
        %v6776 = vunpack.c.l.b16 %v6081
        %v6777 = vunpack.c.l.b16 %v6082
        %v6778 = vunpack.c.l.b16 %v6083
        %v6779 = vunpack.c.l.b16 %v6084
        %v6780 = vunpack.c.l.b16 %v6085
        %v6781 = vunpack.c.l.b16 %v6086
        %v6782 = vunpack.c.l.b16 %v6087
        %v6783 = vpack.c.b16 %v6640, %v6639
        %v6784 = vpack.c.b16 %v6642, %v6641
        %v6785 = vpack.c.b16 %v6644, %v6643
        %v6786 = vpack.c.b16 %v6646, %v6645
        %v6787 = vpack.c.b16 %v6648, %v6647
        %v6788 = vpack.c.b16 %v6650, %v6649
        %v6789 = vpack.c.b16 %v6652, %v6651
        %v6790 = vpack.c.b16 %v6654, %v6653
        %v6791 = vpack.c.b16 %v6656, %v6655
        %v6792 = vpack.c.b16 %v6658, %v6657
        %v6793 = vpack.c.b16 %v6660, %v6659
        %v6794 = vpack.c.b16 %v6662, %v6661
        %v6795 = vpack.c.b16 %v6664, %v6663
        %v6796 = vpack.c.b16 %v6666, %v6665
        %v6797 = vpack.c.b16 %v6668, %v6667
        %v6798 = vpack.c.b16 %v6670, %v6669
        %v6799 = vpack.c.b16 %v6672, %v6671
        %v6800 = vpack.c.b16 %v6674, %v6673
        %v6801 = vpack.c.b16 %v6676, %v6675
        %v6802 = vpack.c.b16 %v6678, %v6677
        %v6803 = vpack.c.b16 %v6680, %v6679
        %v6804 = vpack.c.b16 %v6682, %v6681
        %v6805 = vpack.c.b16 %v6684, %v6683
        %v6806 = vpack.c.b16 %v6686, %v6685
        %v6807 = vpack.c.b16 %v6688, %v6687
        %v6808 = vpack.c.b16 %v6690, %v6689
        %v6809 = vpack.c.b16 %v6692, %v6691
        %v6810 = vpack.c.b16 %v6694, %v6693
        %v6811 = vpack.c.b16 %v6696, %v6695
        %v6812 = vpack.c.b16 %v6698, %v6697
        %v6813 = vpack.c.b16 %v6700, %v6699
        %v6814 = vpack.c.b16 %v6702, %v6701
        %v6815 = vpack.c.b16 %v6704, %v6703
        %v6816 = vpack.c.b16 %v6706, %v6705
        %v6817 = vpack.c.b16 %v6708, %v6707
        %v6818 = vpack.c.b16 %v6710, %v6709
        %v6819 = vpack.c.b16 %v6712, %v6711
        %v6820 = vpack.c.b16 %v6714, %v6713
        %v6821 = vpack.c.b16 %v6716, %v6715
        %v6822 = vpack.c.b16 %v6718, %v6717
        %v6823 = vpack.c.b16 %v6720, %v6719
        %v6824 = vpack.c.b16 %v6722, %v6721
        %v6825 = vpack.c.b16 %v6724, %v6723
        %v6826 = vpack.c.b16 %v6726, %v6725
        %v6827 = vpack.c.b16 %v6728, %v6727
        %v6828 = vpack.c.b16 %v6730, %v6729
        %v6829 = vpack.c.b16 %v6732, %v6731
        %v6830 = vpack.c.b16 %v6734, %v6733
        %v6831 = vpack.c.b16 %v6736, %v6735
        %v6832 = vpack.c.b16 %v6738, %v6737
        %v6833 = vpack.c.b16 %v6740, %v6739
        %v6834 = vpack.c.b16 %v6742, %v6741
        %v6835 = vpack.c.b16 %v6744, %v6743
        %v6836 = vpack.c.b16 %v6746, %v6745
        %v6837 = vpack.c.b16 %v6748, %v6747
        %v6838 = vpack.c.b16 %v6750, %v6749
        %v6839 = vpack.c.b16 %v6752, %v6751
        %v6840 = vpack.c.b16 %v6754, %v6753
        %v6841 = vpack.c.b16 %v6756, %v6755
        %v6842 = vpack.c.b16 %v6758, %v6757
        %v6843 = vpack.c.b16 %v6760, %v6759
        %v6844 = vpack.c.b16 %v6762, %v6761
        %v6845 = vpack.c.b16 %v6764, %v6763
        %v6846 = vpack.c.b16 %v6766, %v6765
        %v6847 = vpack.c.b16 %v6768, %v6767
        %v6848 = vpack.c.b16 %v6770, %v6769
        %v6849 = vpack.c.b16 %v6772, %v6771
        %v6850 = vpack.c.b16 %v6774, %v6773
        %v6851 = vpack.c.b16 %v6776, %v6775
        %v6852 = vpack.c.b16 %v6778, %v6777
        %v6853 = vpack.c.b16 %v6780, %v6779
        %v6854 = vpack.c.b16 %v6782, %v6781
        %6927 = vmatprep.subr.bf16.mxu0 0
        %6928 = vmatpush1.bf16.msra.mxu0 %v6790
        %6929 = vmatprep.subr.bf16.mxu0 0
        %6930 = vmatpush1.bf16.msra.mxu0 %v6789
        %6931 = vmatprep.subr.bf16.mxu0 0
        %6932 = vmatpush1.bf16.msra.mxu0 %v6788
        %6933 = vmatprep.subr.bf16.mxu0 0
        %6934 = vmatpush1.bf16.msra.mxu0 %v6787
        %6935 = vmatprep.subr.bf16.mxu0 0
        %6936 = vmatpush1.bf16.msra.mxu0 %v6786
        %6937 = vmatprep.subr.bf16.mxu0 0
        %6938 = vmatpush1.bf16.msra.mxu0 %v6785
        %6939 = vmatprep.subr.bf16.mxu0 0
        %6940 = vmatpush1.bf16.msra.mxu0 %v6784
        %6941 = vmatprep.subr.bf16.mxu0 0
        %6942 = vmatpush1.bf16.msra.mxu0 %v6783
        %6943 = vmatprep.subr.bf16.mxu0 0
        %6944 = vmatpush2.bf16.msra.mxu0 %v6798
        %6945 = vmatprep.subr.bf16.mxu0 0
        %6946 = vmatpush2.bf16.msra.mxu0 %v6797
        %6947 = vmatprep.subr.bf16.mxu0 0
        %6948 = vmatpush2.bf16.msra.mxu0 %v6796
        %6949 = vmatprep.subr.bf16.mxu0 0
        %6950 = vmatpush2.bf16.msra.mxu0 %v6795
        %6951 = vmatprep.subr.bf16.mxu0 0
        %6952 = vmatpush2.bf16.msra.mxu0 %v6794
        %6953 = vmatprep.subr.bf16.mxu0 0
        %6954 = vmatpush2.bf16.msra.mxu0 %v6793
        %6955 = vmatprep.subr.bf16.mxu0 0
        %6956 = vmatpush2.bf16.msra.mxu0 %v6792
        %6957 = vmatprep.subr.bf16.mxu0 0
        %6958 = vmatpush2.bf16.msra.mxu0 %v6791
        %6959 = vmatprep.mubr.bf16.mxu0 %v6352
        %6960 = vmatmul.mubr.bf16.gmra.mxu0 %v6351
        %v6961 = vpop.f32.mrf.mxu0
        %v6962 = vadd.f32 %v6125, %v6961
        %v6963 = vpop.f32.mrf.mxu0
        %v6964 = vpop.f32.mrf.mxu0
        %v6965 = vadd.f32 %v6125, %v6964
        %v6966 = vpop.f32.mrf.mxu0
        %6967 = vmatprep.mubr.bf16.mxu0 %v6361
        %6968 = vmatmul.mubr.bf16.gmra.mxu0 %v6360
        %v6969 = vpop.f32.mrf.mxu0
        %v6970 = vadd.f32 %v6125, %v6969
        %v6971 = vpop.f32.mrf.mxu0
        %v6972 = vpop.f32.mrf.mxu0
        %v6973 = vadd.f32 %v6125, %v6972
        %v6974 = vpop.f32.mrf.mxu0
        %6975 = vmatprep.mubr.bf16.mxu0 %v6370
        %6976 = vmatmul.mubr.bf16.gmra.mxu0 %v6369
        %v6977 = vpop.f32.mrf.mxu0
        %v6978 = vadd.f32 %v6125, %v6977
        %v6979 = vpop.f32.mrf.mxu0
        %v6980 = vpop.f32.mrf.mxu0
        %v6981 = vadd.f32 %v6125, %v6980
        %v6982 = vpop.f32.mrf.mxu0
        %6983 = vmatprep.mubr.bf16.mxu0 %v6379
        %6984 = vmatmul.mubr.bf16.gmra.mxu0 %v6378
        %v6985 = vpop.f32.mrf.mxu0
        %v6986 = vadd.f32 %v6125, %v6985
        %v6987 = vpop.f32.mrf.mxu0
        %v6988 = vpop.f32.mrf.mxu0
        %v6989 = vadd.f32 %v6125, %v6988
        %v6990 = vpop.f32.mrf.mxu0
        %6991 = vmatprep.mubr.bf16.mxu0 %v6388
        %6992 = vmatmul.mubr.bf16.gmra.mxu0 %v6387
        %v6993 = vpop.f32.mrf.mxu0
        %v6994 = vadd.f32 %v6125, %v6993
        %v6995 = vpop.f32.mrf.mxu0
        %v6996 = vpop.f32.mrf.mxu0
        %v6997 = vadd.f32 %v6125, %v6996
        %v6998 = vpop.f32.mrf.mxu0
        %6999 = vmatprep.mubr.bf16.mxu0 %v6397
        %7000 = vmatmul.mubr.bf16.gmra.mxu0 %v6396
        %v7001 = vpop.f32.mrf.mxu0
        %v7002 = vadd.f32 %v6125, %v7001
        %v7003 = vpop.f32.mrf.mxu0
        %v7004 = vpop.f32.mrf.mxu0
        %v7005 = vadd.f32 %v6125, %v7004
        %v7006 = vpop.f32.mrf.mxu0
        %7007 = vmatprep.mubr.bf16.mxu0 %v6406
        %7008 = vmatmul.mubr.bf16.gmra.mxu0 %v6405
        %v7009 = vpop.f32.mrf.mxu0
        %v7010 = vadd.f32 %v6125, %v7009
        %v7011 = vpop.f32.mrf.mxu0
        %v7012 = vpop.f32.mrf.mxu0
        %v7013 = vadd.f32 %v6125, %v7012
        %v7014 = vpop.f32.mrf.mxu0
        %7015 = vmatprep.mubr.bf16.mxu0 %v6415
        %7016 = vmatmul.mubr.bf16.gmra.mxu0 %v6414
        %v7017 = vpop.f32.mrf.mxu0
        %v7018 = vadd.f32 %v6125, %v7017
        %v7019 = vpop.f32.mrf.mxu0
        %v7020 = vpop.f32.mrf.mxu0
        %v7021 = vadd.f32 %v6125, %v7020
        %v7022 = vpop.f32.mrf.mxu0
        %7023 = vdwg.mxu0
        %7024 = vmatprep.subr.bf16.mxu0 0
        %7025 = vmatpush1.bf16.msra.mxu0 %v6806
        %7026 = vmatprep.subr.bf16.mxu0 0
        %7027 = vmatpush1.bf16.msra.mxu0 %v6805
        %7028 = vmatprep.subr.bf16.mxu0 0
        %7029 = vmatpush1.bf16.msra.mxu0 %v6804
        %7030 = vmatprep.subr.bf16.mxu0 0
        %7031 = vmatpush1.bf16.msra.mxu0 %v6803
        %7032 = vmatprep.subr.bf16.mxu0 0
        %7033 = vmatpush1.bf16.msra.mxu0 %v6802
        %7034 = vmatprep.subr.bf16.mxu0 0
        %7035 = vmatpush1.bf16.msra.mxu0 %v6801
        %7036 = vmatprep.subr.bf16.mxu0 0
        %7037 = vmatpush1.bf16.msra.mxu0 %v6800
        %7038 = vmatprep.subr.bf16.mxu0 0
        %7039 = vmatpush1.bf16.msra.mxu0 %v6799
        %7040 = vmatprep.subr.bf16.mxu0 0
        %7041 = vmatpush2.bf16.msra.mxu0 %v6814
        %7042 = vmatprep.subr.bf16.mxu0 0
        %7043 = vmatpush2.bf16.msra.mxu0 %v6813
        %7044 = vmatprep.subr.bf16.mxu0 0
        %7045 = vmatpush2.bf16.msra.mxu0 %v6812
        %7046 = vmatprep.subr.bf16.mxu0 0
        %7047 = vmatpush2.bf16.msra.mxu0 %v6811
        %7048 = vmatprep.subr.bf16.mxu0 0
        %7049 = vmatpush2.bf16.msra.mxu0 %v6810
        %7050 = vmatprep.subr.bf16.mxu0 0
        %7051 = vmatpush2.bf16.msra.mxu0 %v6809
        %7052 = vmatprep.subr.bf16.mxu0 0
        %7053 = vmatpush2.bf16.msra.mxu0 %v6808
        %7054 = vmatprep.subr.bf16.mxu0 0
        %7055 = vmatpush2.bf16.msra.mxu0 %v6807
        %7056 = vmatprep.mubr.bf16.mxu0 %v6354
        %7057 = vmatmul.mubr.bf16.gmra.mxu0 %v6353
        %v7058 = vpop.f32.mrf.mxu0
        %v7059 = vadd.f32 %v6962, %v7058
        %v7060 = vpop.f32.mrf.mxu0
        %v7061 = vpop.f32.mrf.mxu0
        %v7062 = vadd.f32 %v6965, %v7061
        %v7063 = vpop.f32.mrf.mxu0
        %7064 = vmatprep.mubr.bf16.mxu0 %v6363
        %7065 = vmatmul.mubr.bf16.gmra.mxu0 %v6362
        %v7066 = vpop.f32.mrf.mxu0
        %v7067 = vadd.f32 %v6970, %v7066
        %v7068 = vpop.f32.mrf.mxu0
        %v7069 = vpop.f32.mrf.mxu0
        %v7070 = vadd.f32 %v6973, %v7069
        %v7071 = vpop.f32.mrf.mxu0
        %7072 = vmatprep.mubr.bf16.mxu0 %v6372
        %7073 = vmatmul.mubr.bf16.gmra.mxu0 %v6371
        %v7074 = vpop.f32.mrf.mxu0
        %v7075 = vadd.f32 %v6978, %v7074
        %v7076 = vpop.f32.mrf.mxu0
        %v7077 = vpop.f32.mrf.mxu0
        %v7078 = vadd.f32 %v6981, %v7077
        %v7079 = vpop.f32.mrf.mxu0
        %7080 = vmatprep.mubr.bf16.mxu0 %v6381
        %7081 = vmatmul.mubr.bf16.gmra.mxu0 %v6380
        %v7082 = vpop.f32.mrf.mxu0
        %v7083 = vadd.f32 %v6986, %v7082
        %v7084 = vpop.f32.mrf.mxu0
        %v7085 = vpop.f32.mrf.mxu0
        %v7086 = vadd.f32 %v6989, %v7085
        %v7087 = vpop.f32.mrf.mxu0
        %7088 = vmatprep.mubr.bf16.mxu0 %v6390
        %7089 = vmatmul.mubr.bf16.gmra.mxu0 %v6389
        %v7090 = vpop.f32.mrf.mxu0
        %v7091 = vadd.f32 %v6994, %v7090
        %v7092 = vpop.f32.mrf.mxu0
        %v7093 = vpop.f32.mrf.mxu0
        %v7094 = vadd.f32 %v6997, %v7093
        %v7095 = vpop.f32.mrf.mxu0
        %7096 = vmatprep.mubr.bf16.mxu0 %v6399
        %7097 = vmatmul.mubr.bf16.gmra.mxu0 %v6398
        %v7098 = vpop.f32.mrf.mxu0
        %v7099 = vadd.f32 %v7002, %v7098
        %v7100 = vpop.f32.mrf.mxu0
        %v7101 = vpop.f32.mrf.mxu0
        %v7102 = vadd.f32 %v7005, %v7101
        %v7103 = vpop.f32.mrf.mxu0
        %7104 = vmatprep.mubr.bf16.mxu0 %v6408
        %7105 = vmatmul.mubr.bf16.gmra.mxu0 %v6407
        %v7106 = vpop.f32.mrf.mxu0
        %v7107 = vadd.f32 %v7010, %v7106
        %v7108 = vpop.f32.mrf.mxu0
        %v7109 = vpop.f32.mrf.mxu0
        %v7110 = vadd.f32 %v7013, %v7109
        %v7111 = vpop.f32.mrf.mxu0
        %7112 = vmatprep.mubr.bf16.mxu0 %v6417
        %7113 = vmatmul.mubr.bf16.gmra.mxu0 %v6416
        %v7114 = vpop.f32.mrf.mxu0
        %v7115 = vadd.f32 %v7018, %v7114
        %v7116 = vpop.f32.mrf.mxu0
        %v7117 = vpop.f32.mrf.mxu0
        %v7118 = vadd.f32 %v7021, %v7117
        %v7119 = vpop.f32.mrf.mxu0
        %7120 = vdwg.mxu0
        %7121 = vmatprep.subr.bf16.mxu0 0
        %7122 = vmatpush1.bf16.msra.mxu0 %v6822
        %7123 = vmatprep.subr.bf16.mxu0 0
        %7124 = vmatpush1.bf16.msra.mxu0 %v6821
        %7125 = vmatprep.subr.bf16.mxu0 0
        %7126 = vmatpush1.bf16.msra.mxu0 %v6820
        %7127 = vmatprep.subr.bf16.mxu0 0
        %7128 = vmatpush1.bf16.msra.mxu0 %v6819
        %7129 = vmatprep.subr.bf16.mxu0 0
        %7130 = vmatpush1.bf16.msra.mxu0 %v6818
        %7131 = vmatprep.subr.bf16.mxu0 0
        %7132 = vmatpush1.bf16.msra.mxu0 %v6817
        %7133 = vmatprep.subr.bf16.mxu0 0
        %7134 = vmatpush1.bf16.msra.mxu0 %v6816
        %7135 = vmatprep.subr.bf16.mxu0 0
        %7136 = vmatpush1.bf16.msra.mxu0 %v6815
        %7137 = vmatprep.subr.bf16.mxu0 0
        %7138 = vmatpush2.bf16.msra.mxu0 %v6830
        %7139 = vmatprep.subr.bf16.mxu0 0
        %7140 = vmatpush2.bf16.msra.mxu0 %v6829
        %7141 = vmatprep.subr.bf16.mxu0 0
        %7142 = vmatpush2.bf16.msra.mxu0 %v6828
        %7143 = vmatprep.subr.bf16.mxu0 0
        %7144 = vmatpush2.bf16.msra.mxu0 %v6827
        %7145 = vmatprep.subr.bf16.mxu0 0
        %7146 = vmatpush2.bf16.msra.mxu0 %v6826
        %7147 = vmatprep.subr.bf16.mxu0 0
        %7148 = vmatpush2.bf16.msra.mxu0 %v6825
        %7149 = vmatprep.subr.bf16.mxu0 0
        %7150 = vmatpush2.bf16.msra.mxu0 %v6824
        %7151 = vmatprep.subr.bf16.mxu0 0
        %7152 = vmatpush2.bf16.msra.mxu0 %v6823
        %7153 = vmatprep.mubr.bf16.mxu0 %v6356
        %7154 = vmatmul.mubr.bf16.gmra.mxu0 %v6355
        %v7155 = vpop.f32.mrf.mxu0
        %v7156 = vadd.f32 %v7059, %v7155
        %v7157 = vpop.f32.mrf.mxu0
        %v7158 = vpop.f32.mrf.mxu0
        %v7159 = vadd.f32 %v7062, %v7158
        %v7160 = vpop.f32.mrf.mxu0
        %7161 = vmatprep.mubr.bf16.mxu0 %v6365
        %7162 = vmatmul.mubr.bf16.gmra.mxu0 %v6364
        %v7163 = vpop.f32.mrf.mxu0
        %v7164 = vadd.f32 %v7067, %v7163
        %v7165 = vpop.f32.mrf.mxu0
        %v7166 = vpop.f32.mrf.mxu0
        %v7167 = vadd.f32 %v7070, %v7166
        %v7168 = vpop.f32.mrf.mxu0
        %7169 = vmatprep.mubr.bf16.mxu0 %v6374
        %7170 = vmatmul.mubr.bf16.gmra.mxu0 %v6373
        %v7171 = vpop.f32.mrf.mxu0
        %v7172 = vadd.f32 %v7075, %v7171
        %v7173 = vpop.f32.mrf.mxu0
        %v7174 = vpop.f32.mrf.mxu0
        %v7175 = vadd.f32 %v7078, %v7174
        %v7176 = vpop.f32.mrf.mxu0
        %7177 = vmatprep.mubr.bf16.mxu0 %v6383
        %7178 = vmatmul.mubr.bf16.gmra.mxu0 %v6382
        %v7179 = vpop.f32.mrf.mxu0
        %v7180 = vadd.f32 %v7083, %v7179
        %v7181 = vpop.f32.mrf.mxu0
        %v7182 = vpop.f32.mrf.mxu0
        %v7183 = vadd.f32 %v7086, %v7182
        %v7184 = vpop.f32.mrf.mxu0
        %7185 = vmatprep.mubr.bf16.mxu0 %v6392
        %7186 = vmatmul.mubr.bf16.gmra.mxu0 %v6391
        %v7187 = vpop.f32.mrf.mxu0
        %v7188 = vadd.f32 %v7091, %v7187
        %v7189 = vpop.f32.mrf.mxu0
        %v7190 = vpop.f32.mrf.mxu0
        %v7191 = vadd.f32 %v7094, %v7190
        %v7192 = vpop.f32.mrf.mxu0
        %7193 = vmatprep.mubr.bf16.mxu0 %v6401
        %7194 = vmatmul.mubr.bf16.gmra.mxu0 %v6400
        %v7195 = vpop.f32.mrf.mxu0
        %v7196 = vadd.f32 %v7099, %v7195
        %v7197 = vpop.f32.mrf.mxu0
        %v7198 = vpop.f32.mrf.mxu0
        %v7199 = vadd.f32 %v7102, %v7198
        %v7200 = vpop.f32.mrf.mxu0
        %7201 = vmatprep.mubr.bf16.mxu0 %v6410
        %7202 = vmatmul.mubr.bf16.gmra.mxu0 %v6409
        %v7203 = vpop.f32.mrf.mxu0
        %v7204 = vadd.f32 %v7107, %v7203
        %v7205 = vpop.f32.mrf.mxu0
        %v7206 = vpop.f32.mrf.mxu0
        %v7207 = vadd.f32 %v7110, %v7206
        %v7208 = vpop.f32.mrf.mxu0
        %7209 = vmatprep.mubr.bf16.mxu0 %v6419
        %7210 = vmatmul.mubr.bf16.gmra.mxu0 %v6418
        %v7211 = vpop.f32.mrf.mxu0
        %v7212 = vadd.f32 %v7115, %v7211
        %v7213 = vpop.f32.mrf.mxu0
        %v7214 = vpop.f32.mrf.mxu0
        %v7215 = vadd.f32 %v7118, %v7214
        %v7216 = vpop.f32.mrf.mxu0
        %7217 = vdwg.mxu0
        %7218 = vmatprep.subr.bf16.mxu0 0
        %7219 = vmatpush1.bf16.msra.mxu0 %v6838
        %7220 = vmatprep.subr.bf16.mxu0 0
        %7221 = vmatpush1.bf16.msra.mxu0 %v6837
        %7222 = vmatprep.subr.bf16.mxu0 0
        %7223 = vmatpush1.bf16.msra.mxu0 %v6836
        %7224 = vmatprep.subr.bf16.mxu0 0
        %7225 = vmatpush1.bf16.msra.mxu0 %v6835
        %7226 = vmatprep.subr.bf16.mxu0 0
        %7227 = vmatpush1.bf16.msra.mxu0 %v6834
        %7228 = vmatprep.subr.bf16.mxu0 0
        %7229 = vmatpush1.bf16.msra.mxu0 %v6833
        %7230 = vmatprep.subr.bf16.mxu0 0
        %7231 = vmatpush1.bf16.msra.mxu0 %v6832
        %7232 = vmatprep.subr.bf16.mxu0 0
        %7233 = vmatpush1.bf16.msra.mxu0 %v6831
        %7234 = vmatprep.subr.bf16.mxu0 0
        %7235 = vmatpush2.bf16.msra.mxu0 %v6846
        %7236 = vmatprep.subr.bf16.mxu0 0
        %7237 = vmatpush2.bf16.msra.mxu0 %v6845
        %7238 = vmatprep.subr.bf16.mxu0 0
        %7239 = vmatpush2.bf16.msra.mxu0 %v6844
        %7240 = vmatprep.subr.bf16.mxu0 0
        %7241 = vmatpush2.bf16.msra.mxu0 %v6843
        %7242 = vmatprep.subr.bf16.mxu0 0
        %7243 = vmatpush2.bf16.msra.mxu0 %v6842
        %7244 = vmatprep.subr.bf16.mxu0 0
        %7245 = vmatpush2.bf16.msra.mxu0 %v6841
        %7246 = vmatprep.subr.bf16.mxu0 0
        %7247 = vmatpush2.bf16.msra.mxu0 %v6840
        %7248 = vmatprep.subr.bf16.mxu0 0
        %7249 = vmatpush2.bf16.msra.mxu0 %v6839
        %7250 = vmatprep.mubr.bf16.mxu0 %v6358
        %7251 = vmatmul.mubr.bf16.gmra.mxu0 %v6357
        %v7252 = vpop.f32.mrf.mxu0
        %v7253 = vadd.f32 %v7156, %v7252
        %v7254 = vpop.f32.mrf.mxu0
        %v7255 = vpop.f32.mrf.mxu0
        %v7256 = vadd.f32 %v7159, %v7255
        %v7257 = vpop.f32.mrf.mxu0
        %7258 = vmatprep.mubr.bf16.mxu0 %v6367
        %7259 = vmatmul.mubr.bf16.gmra.mxu0 %v6366
        %v7260 = vpop.f32.mrf.mxu0
        %v7261 = vadd.f32 %v7164, %v7260
        %v7262 = vpop.f32.mrf.mxu0
        %v7263 = vpop.f32.mrf.mxu0
        %v7264 = vadd.f32 %v7167, %v7263
        %v7265 = vpop.f32.mrf.mxu0
        %7266 = vmatprep.mubr.bf16.mxu0 %v6376
        %7267 = vmatmul.mubr.bf16.gmra.mxu0 %v6375
        %v7268 = vpop.f32.mrf.mxu0
        %v7269 = vadd.f32 %v7172, %v7268
        %v7270 = vpop.f32.mrf.mxu0
        %v7271 = vpop.f32.mrf.mxu0
        %v7272 = vadd.f32 %v7175, %v7271
        %v7273 = vpop.f32.mrf.mxu0
        %7274 = vmatprep.mubr.bf16.mxu0 %v6385
        %7275 = vmatmul.mubr.bf16.gmra.mxu0 %v6384
        %v7276 = vpop.f32.mrf.mxu0
        %v7277 = vadd.f32 %v7180, %v7276
        %v7278 = vpop.f32.mrf.mxu0
        %v7279 = vpop.f32.mrf.mxu0
        %v7280 = vadd.f32 %v7183, %v7279
        %v7281 = vpop.f32.mrf.mxu0
        %7282 = vmatprep.mubr.bf16.mxu0 %v6394
        %7283 = vmatmul.mubr.bf16.gmra.mxu0 %v6393
        %v7284 = vpop.f32.mrf.mxu0
        %v7285 = vadd.f32 %v7188, %v7284
        %v7286 = vpop.f32.mrf.mxu0
        %v7287 = vpop.f32.mrf.mxu0
        %v7288 = vadd.f32 %v7191, %v7287
        %v7289 = vpop.f32.mrf.mxu0
        %7290 = vmatprep.mubr.bf16.mxu0 %v6403
        %7291 = vmatmul.mubr.bf16.gmra.mxu0 %v6402
        %v7292 = vpop.f32.mrf.mxu0
        %v7293 = vadd.f32 %v7196, %v7292
        %v7294 = vpop.f32.mrf.mxu0
        %v7295 = vpop.f32.mrf.mxu0
        %v7296 = vadd.f32 %v7199, %v7295
        %v7297 = vpop.f32.mrf.mxu0
        %7298 = vmatprep.mubr.bf16.mxu0 %v6412
        %7299 = vmatmul.mubr.bf16.gmra.mxu0 %v6411
        %v7300 = vpop.f32.mrf.mxu0
        %v7301 = vadd.f32 %v7204, %v7300
        %v7302 = vpop.f32.mrf.mxu0
        %v7303 = vpop.f32.mrf.mxu0
        %v7304 = vadd.f32 %v7207, %v7303
        %v7305 = vpop.f32.mrf.mxu0
        %7306 = vmatprep.mubr.bf16.mxu0 %v6421
        %7307 = vmatmul.mubr.bf16.gmra.mxu0 %v6420
        %v7308 = vpop.f32.mrf.mxu0
        %v7309 = vadd.f32 %v7212, %v7308
        %v7310 = vpop.f32.mrf.mxu0
        %v7311 = vpop.f32.mrf.mxu0
        %v7312 = vadd.f32 %v7215, %v7311
        %v7313 = vpop.f32.mrf.mxu0
        %7314 = vdwg.mxu0
        %7315 = vmatprep.subr.bf16.mxu0 0
        %7316 = vmatpush1.bf16.msra.mxu0 %v6854
        %7317 = vmatprep.subr.bf16.mxu0 0
        %7318 = vmatpush1.bf16.msra.mxu0 %v6853
        %7319 = vmatprep.subr.bf16.mxu0 0
        %7320 = vmatpush1.bf16.msra.mxu0 %v6852
        %7321 = vmatprep.subr.bf16.mxu0 0
        %7322 = vmatpush1.bf16.msra.mxu0 %v6851
        %7323 = vmatprep.subr.bf16.mxu0 0
        %7324 = vmatpush1.bf16.msra.mxu0 %v6850
        %7325 = vmatprep.subr.bf16.mxu0 0
        %7326 = vmatpush1.bf16.msra.mxu0 %v6849
        %7327 = vmatprep.subr.bf16.mxu0 0
        %7328 = vmatpush1.bf16.msra.mxu0 %v6848
        %7329 = vmatprep.subr.bf16.mxu0 0
        %7330 = vmatpush1.bf16.msra.mxu0 %v6847
        %7331 = vmatprep.subr.bf16.mxu0 0
        %7332 = vmatpush2.bf16.msra.mxu0 0
        %7333 = vmatprep.subr.bf16.mxu0 0
        %7334 = vmatpush2.bf16.msra.mxu0 0
        %7335 = vmatprep.subr.bf16.mxu0 0
        %7336 = vmatpush2.bf16.msra.mxu0 0
        %7337 = vmatprep.subr.bf16.mxu0 0
        %7338 = vmatpush2.bf16.msra.mxu0 0
        %7339 = vmatprep.subr.bf16.mxu0 0
        %7340 = vmatpush2.bf16.msra.mxu0 0
        %7341 = vmatprep.subr.bf16.mxu0 0
        %7342 = vmatpush2.bf16.msra.mxu0 0
        %7343 = vmatprep.subr.bf16.mxu0 0
        %7344 = vmatpush2.bf16.msra.mxu0 0
        %7345 = vmatprep.subr.bf16.mxu0 0
        %7346 = vmatpush2.bf16.msra.mxu0 0
        %7347 = vmatprep.mubr.bf16.mxu0 0
        %7348 = vmatmul.mubr.bf16.gmra.mxu0 %v6359
        %v7349 = vpop.f32.mrf.mxu0
        %v7350 = vadd.f32 %v7253, %v7349
        %v7351 = vpop.f32.mrf.mxu0
        %v7352 = vpop.f32.mrf.mxu0
        %v7353 = vadd.f32 %v7256, %v7352
        %v7354 = vpop.f32.mrf.mxu0
        %7355 = vmatprep.mubr.bf16.mxu0 0
        %7356 = vmatmul.mubr.bf16.gmra.mxu0 %v6368
        %v7357 = vpop.f32.mrf.mxu0
        %v7358 = vadd.f32 %v7261, %v7357
        %v7359 = vpop.f32.mrf.mxu0
        %v7360 = vpop.f32.mrf.mxu0
        %v7361 = vadd.f32 %v7264, %v7360
        %v7362 = vpop.f32.mrf.mxu0
        %7363 = vmatprep.mubr.bf16.mxu0 0
        %7364 = vmatmul.mubr.bf16.gmra.mxu0 %v6377
        %v7365 = vpop.f32.mrf.mxu0
        %v7366 = vadd.f32 %v7269, %v7365
        %v7367 = vpop.f32.mrf.mxu0
        %v7368 = vpop.f32.mrf.mxu0
        %v7369 = vadd.f32 %v7272, %v7368
        %v7370 = vpop.f32.mrf.mxu0
        %7371 = vmatprep.mubr.bf16.mxu0 0
        %7372 = vmatmul.mubr.bf16.gmra.mxu0 %v6386
        %v7373 = vpop.f32.mrf.mxu0
        %v7374 = vadd.f32 %v7277, %v7373
        %v7375 = vpop.f32.mrf.mxu0
        %v7376 = vpop.f32.mrf.mxu0
        %v7377 = vadd.f32 %v7280, %v7376
        %v7378 = vpop.f32.mrf.mxu0
        %7379 = vmatprep.mubr.bf16.mxu0 0
        %7380 = vmatmul.mubr.bf16.gmra.mxu0 %v6395
        %v7381 = vpop.f32.mrf.mxu0
        %v7382 = vadd.f32 %v7285, %v7381
        %v7383 = vpop.f32.mrf.mxu0
        %v7384 = vpop.f32.mrf.mxu0
        %v7385 = vadd.f32 %v7288, %v7384
        %v7386 = vpop.f32.mrf.mxu0
        %7387 = vmatprep.mubr.bf16.mxu0 0
        %7388 = vmatmul.mubr.bf16.gmra.mxu0 %v6404
        %v7389 = vpop.f32.mrf.mxu0
        %v7390 = vadd.f32 %v7293, %v7389
        %v7391 = vpop.f32.mrf.mxu0
        %v7392 = vpop.f32.mrf.mxu0
        %v7393 = vadd.f32 %v7296, %v7392
        %v7394 = vpop.f32.mrf.mxu0
        %7395 = vmatprep.mubr.bf16.mxu0 0
        %7396 = vmatmul.mubr.bf16.gmra.mxu0 %v6413
        %v7397 = vpop.f32.mrf.mxu0
        %v7398 = vadd.f32 %v7301, %v7397
        %v7399 = vpop.f32.mrf.mxu0
        %v7400 = vpop.f32.mrf.mxu0
        %v7401 = vadd.f32 %v7304, %v7400
        %v7402 = vpop.f32.mrf.mxu0
        %7403 = vmatprep.mubr.bf16.mxu0 0
        %7404 = vmatmul.mubr.bf16.gmra.mxu0 %v6422
        %v7405 = vpop.f32.mrf.mxu0
        %v7406 = vadd.f32 %v7309, %v7405
        %v7407 = vpop.f32.mrf.mxu0
        %v7408 = vpop.f32.mrf.mxu0
        %v7409 = vadd.f32 %v7312, %v7408
        %v7410 = vpop.f32.mrf.mxu0
        %7411 = vdwg.mxu0
        %v7412 = vadd.f32 %v7350, %v6104
        %v7413 = vadd.f32 %v7353, %v6105
        %v7414 = vadd.f32 %v7358, %v6106
        %v7415 = vadd.f32 %v7361, %v6107
        %v7416 = vadd.f32 %v7366, %v6108
        %v7417 = vadd.f32 %v7369, %v6109
        %v7418 = vadd.f32 %v7374, %v6110
        %v7419 = vadd.f32 %v7377, %v6111
        %v7420 = vadd.f32 %v7382, %v6112
        %v7421 = vadd.f32 %v7385, %v6113
        %v7422 = vadd.f32 %v7390, %v6114
        %v7423 = vadd.f32 %v7393, %v6115
        %v7424 = vadd.f32 %v7398, %v6116
        %v7425 = vadd.f32 %v7401, %v6117
        %v7426 = vadd.f32 %v7406, %v6118
        %v7427 = vadd.f32 %v7409, %v6119
        %v7428 = vmax.f32 %v7412, 0.0
        %v7429 = vmax.f32 %v7413, 0.0
        %v7430 = vmax.f32 %v7414, 0.0
        %v7431 = vmax.f32 %v7415, 0.0
        %v7432 = vmax.f32 %v7416, 0.0
        %v7433 = vmax.f32 %v7417, 0.0
        %v7434 = vmax.f32 %v7418, 0.0
        %v7435 = vmax.f32 %v7419, 0.0
        %v7436 = vmax.f32 %v7420, 0.0
        %v7437 = vmax.f32 %v7421, 0.0
        %v7438 = vmax.f32 %v7422, 0.0
        %v7439 = vmax.f32 %v7423, 0.0
        %v7440 = vmax.f32 %v7424, 0.0
        %v7441 = vmax.f32 %v7425, 0.0
        %v7442 = vmax.f32 %v7426, 0.0
        %v7443 = vmax.f32 %v7427, 0.0
        %v7444 = vpack.c.bf16 %v7429, %v7428
        %v7445 = vpack.c.bf16 %v7431, %v7430
        %v7446 = vpack.c.bf16 %v7433, %v7432
        %v7447 = vpack.c.bf16 %v7435, %v7434
        %v7448 = vpack.c.bf16 %v7437, %v7436
        %v7449 = vpack.c.bf16 %v7439, %v7438
        %v7450 = vpack.c.bf16 %v7441, %v7440
        %v7451 = vpack.c.bf16 %v7443, %v7442
        %v7460 = vunpack.c.l.b16 %v7444
        %v7461 = vunpack.c.h.b16 %v7444
        %v7462 = vunpack.c.l.b16 %v7445
        %v7463 = vunpack.c.h.b16 %v7445
        %v7464 = vunpack.c.l.b16 %v7446
        %v7465 = vunpack.c.h.b16 %v7446
        %v7466 = vunpack.c.l.b16 %v7447
        %v7467 = vunpack.c.h.b16 %v7447
        %v7468 = vunpack.c.l.b16 %v7448
        %v7469 = vunpack.c.h.b16 %v7448
        %v7470 = vunpack.c.l.b16 %v7449
        %v7471 = vunpack.c.h.b16 %v7449
        %v7472 = vunpack.c.l.b16 %v7450
        %v7473 = vunpack.c.h.b16 %v7450
        %v7474 = vunpack.c.l.b16 %v7451
        %v7475 = vunpack.c.h.b16 %v7451
        %v7476 = vpack.c.b16 %v7460, %v7460
        %v7477 = vpack.c.b16 %v7461, %v7461
        %v7478 = vpack.c.b16 %v7462, %v7462
        %v7479 = vpack.c.b16 %v7463, %v7463
        %v7480 = vpack.c.b16 %v7464, %v7464
        %v7481 = vpack.c.b16 %v7465, %v7465
        %v7482 = vpack.c.b16 %v7466, %v7466
        %v7483 = vpack.c.b16 %v7467, %v7467
        %v7484 = vpack.c.b16 %v7468, %v7468
        %v7485 = vpack.c.b16 %v7469, %v7469
        %v7486 = vpack.c.b16 %v7470, %v7470
        %v7487 = vpack.c.b16 %v7471, %v7471
        %v7488 = vpack.c.b16 %v7472, %v7472
        %v7489 = vpack.c.b16 %v7473, %v7473
        %v7490 = vpack.c.b16 %v7474, %v7474
        %v7491 = vpack.c.b16 %v7475, %v7475
        %7508 = vst [vmem:[%s455] sm:$0xf] %v7476
        %7509 = vst [vmem:[%s455 + $0x4] sm:$0xf] %v7477
        %7510 = vst [vmem:[%s455 + $0x8] sm:$0xf] %v7478
        %7511 = vst [vmem:[%s455 + $0xc] sm:$0xf] %v7479
        %7512 = vst [vmem:[%s455 + $0x10] sm:$0xf] %v7480
        %7513 = vst [vmem:[%s455 + $0x14] sm:$0xf] %v7481
        %7514 = vst [vmem:[%s455 + $0x18] sm:$0xf] %v7482
        %7515 = vst [vmem:[%s455 + $0x1c] sm:$0xf] %v7483
        %7516 = vst [vmem:[%s455 + $0x20] sm:$0xf] %v7484
        %7517 = vst [vmem:[%s455 + $0x24] sm:$0xf] %v7485
        %7518 = vst [vmem:[%s455 + $0x28] sm:$0xf] %v7486
        %7519 = vst [vmem:[%s455 + $0x2c] sm:$0xf] %v7487
        %7520 = vst [vmem:[%s455 + $0x30] sm:$0xf] %v7488
        %7521 = vst [vmem:[%s455 + $0x34] sm:$0xf] %v7489
        %7522 = vst [vmem:[%s455 + $0x38] sm:$0xf] %v7490
        %7523 = vst [vmem:[%s455 + $0x3c] sm:$0xf] %v7491
        %s7524 = sand.u32 %s234, 1
        %s7525 = scalar_lea.sflag [#allocation7], %s7524
        %s7526 = sand.u32 %s234, 1
        %s7527 = smul.addr %s7526, 64
        %s7528 = scalar_lea.vmem [#allocation14], %s7527
        // Predicated region
        $region77: #{tpu_custom_call.1} parent=47 // pred_check
          %p7529 = pneg %p244
        $region78: #{tpu_custom_call.1} parent=47 // pred_check_branch
          %7531 = sbr.rel (%p7529) target = $region80
        $region79: #{tpu_custom_call.1} parent=47 // pred_region
          %s7532 = smul.u32 8, %s33
          %s7534 = ssub.s32 1024, 1024
          %7535 = vsyncadd %s7525, %s7534
          %s7536 = smul.addr %s7532, 2
          %s7537 = smul.addr %s32, 32
          %s7538 = sadd.s32 %s7536, %s7537
          %s7539 = smul.addr %s7538, 64
          %s7540 = scalar_lea.hbm %s7, %s7539
          %s7541 = sshll.u32 %s7528, 4
          %s7542 = int_to_ptr.vmem [resolvable:$true] %s7541
          %7547 = dma.vmem_to_hbm [thread:$0]  %s7542, 1024, %s7540, %s7525, 64, 64, 4
        $region80: #{tpu_custom_call.1} parent=47 // pred_fallthru
          _
      $region48: #{tpu_custom_call.1} parent=5 // pred_fallthru
        _
      %p7548 = scmp.le.s32.totalorder 2, %s23
      // Predicated region
      $region81: #{tpu_custom_call.1} parent=5 // pred_check
        %p7549 = pneg %p7548
      $region82: #{tpu_custom_call.1} parent=5 // pred_check_branch
        %7551 = sbr.rel (%p7549) target = $region84
      $region83: #{tpu_custom_call.1} parent=5 // pred_region
        %s7552 = ssub.s32 %s23, 2
        // Predicated region
        $region85: #{tpu_custom_call.1} parent=83 // pred_check
          %p7553 = pneg %p250
        $region86: #{tpu_custom_call.1} parent=83 // pred_check_branch
          %7555 = sbr.rel (%p7553) target = $region88
        $region87: #{tpu_custom_call.1} parent=83 // pred_region
          %s7556 = sand.u32 %s235, 1
          %s7557 = scalar_lea.sflag [#allocation7], %s7556
          %s7558 = sand.u32 %s235, 1
          %s7559 = smul.addr %s7558, 64
          %s7560 = scalar_lea.vmem [#allocation14], %s7559
          %7561 = dma.done %s7557, 1024
        $region88: #{tpu_custom_call.1} parent=83 // pred_fallthru
          _
      $region84: #{tpu_custom_call.1} parent=5 // pred_fallthru
        _
    $region6: #{tpu_custom_call.1} parent=1 // loop_footer
      %s27 = sadd.s32 1, %s23
    $region7: #{tpu_custom_call.1} parent=1 // loop_footer_branch
      %22 = sbr.rel target = $region3
    $region8: #{tpu_custom_call.1} parent=1 // loop_exit
      _
    %7562 = vsyncpa [#allocation6], 1
    %s7563 = scalar_lea.sflag [#allocation6], 1
    %7564 = vsyncpa %s7563, 1
    %7565 = vsyncpa [#allocation9], 1
    %s7566 = scalar_lea.sflag [#allocation9], 1
    %7567 = vsyncpa %s7566, 1
    %7568 = vsyncpa [#allocation12], 1
    %7569 = vsyncpa [#allocation7], 1
    %s7570 = scalar_lea.sflag [#allocation7], 1
    %7571 = vsyncpa %s7570, 1

</llo_original>
